<compile_context>
chip_gen: v7x
topology: tpu7x:2x2x1
jax: 0.10.0
libtpu: 0.0.40
codegen_flags: <defaults>
</compile_context>

<pallas_src>
import functools
import math

import jax
import jax.numpy as jnp
from jax.experimental import pallas as pl
from jax.experimental.pallas import tpu as pltpu

MM_DTYPE = jnp.bfloat16            # MXU operand dtype (accumulation is fp32)
ACT_DTYPE = jnp.bfloat16           # inter-kernel activation spill dtype
LN_EPS = 1e-5


def _chip_tuning():
    """(row_tile_pref, vmem_limit_bytes) per chip family."""
    try:
        vmem = getattr(pltpu.get_tpu_info(), "vmem_capacity_bytes", None)
    except Exception:
        vmem = None
    if vmem is not None and vmem >= 96 * 1024 * 1024:
        return 512, 100 * 1024 * 1024          # v5e / v6e: 128 MiB physical VMEM
    return 256, 48 * 1024 * 1024               # v7x (64 MiB) and unknown chips


_ROW_TILE_PREF, _VMEM_LIMIT = _chip_tuning()


def _cparams(n_axes):
    return pltpu.CompilerParams(
        dimension_semantics=("parallel",) * n_axes,
        vmem_limit_bytes=_VMEM_LIMIT,
    )


def _gelu_tanh(x):
    # TODO(synk): PyTorch nn.GELU() default is the exact erf form; erf has no
    # Mosaic lowering, so in-kernel GELUs use the tanh approximation (|err|~1e-3).
    # The tiny (B,1,C) ctx_global GELU stays in plain JAX with exact erf.
    c = math.sqrt(2.0 / math.pi)
    return 0.5 * x * (1.0 + jnp.tanh(c * (x + 0.044715 * x * x * x)))


def _pick_row_tile(M, pref):
    """Largest multiple-of-8 divisor of M that is <= pref; otherwise pad M."""
    t = min(pref, M)
    t -= t % 8
    while t >= 8:
        if M % t == 0:
            return t, M
        t -= 8
    return pref, pl.cdiv(M, pref) * pref


def _pick_seq_tile(L, pref):
    t = min(pref, L)
    t -= t % 8
    while t >= 8:
        if L % t == 0:
            return t
        t -= 8
    return L


def _pick_chan_tile(C):
    for t in (256, 128):
        if C % t == 0:
            return t
    # TODO(synk): pad C to a multiple of 128 (folding zeros into weights / LN
    # params) for lane-dense blocks at odd channel counts such as C=96.
    return C


def _pad_rows(x, mp):
    m = x.shape[0]
    return x if mp == m else jnp.pad(x, ((0, mp - m), (0, 0)))


# --------------------- (1) norm1 + f + split + gate softmax ---------------------


def _norm1_f_kernel(x_ref, g_ref, b_ref, wq_ref, bq_ref, wc_ref, bc_ref,
                    wg_ref, bg_ref, q_ref, ctx_ref, gate_ref, *, eps):
    x = x_ref[...].astype(jnp.float32)
    mu = jnp.mean(x, axis=-1, keepdims=True)
    xc = x - mu
    var = jnp.mean(xc * xc, axis=-1, keepdims=True)          # biased var (PyTorch LN)
    xn = xc * jax.lax.rsqrt(var + eps) * g_ref[...] + b_ref[...]
    xb = xn.astype(MM_DTYPE)
    q = jnp.dot(xb, wq_ref[...], preferred_element_type=jnp.float32) + bq_ref[...]
    ctx = jnp.dot(xb, wc_ref[...], preferred_element_type=jnp.float32) + bc_ref[...]
    gl = jnp.dot(xb, wg_ref[...], preferred_element_type=jnp.float32) + bg_ref[...]
    m = jnp.max(gl, axis=-1, keepdims=True)
    e = jnp.exp(gl - m)
    gates = e / jnp.sum(e, axis=-1, keepdims=True)            # softmax over fl+1 gates
    q_ref[...] = q.astype(q_ref.dtype)
    ctx_ref[...] = ctx.astype(ctx_ref.dtype)
    gate_ref[...] = gates.astype(gate_ref.dtype)


def norm1_f_proj(x, ln_g, ln_b, wq, bq, wc, bc, wg, bg):
    M, C = x.shape
    G = wg.shape[1]
    tm, Mp = _pick_row_tile(M, _ROW_TILE_PREF)
    xp = _pad_rows(x, Mp)
    rep = lambda i: (0, 0)
    row = lambda i: (i, 0)
    # TODO(synk): constant-index weight blocks could be pipeline_mode=pl.Buffered(1)
    # to halve their VMEM footprint (most useful on v7x's 64 MiB VMEM).
    q, ctx, gates = pl.pallas_call(
        functools.partial(_norm1_f_kernel, eps=LN_EPS),
        out_shape=(jax.ShapeDtypeStruct((Mp, C), ACT_DTYPE),
                   jax.ShapeDtypeStruct((Mp, C), ACT_DTYPE),
                   jax.ShapeDtypeStruct((Mp, G), ACT_DTYPE)),
        grid=(Mp // tm,),
        in_specs=[
            pl.BlockSpec((tm, C), row),
            pl.BlockSpec((1, C), rep), pl.BlockSpec((1, C), rep),
            pl.BlockSpec((C, C), rep), pl.BlockSpec((1, C), rep),
            pl.BlockSpec((C, C), rep), pl.BlockSpec((1, C), rep),
            pl.BlockSpec((C, G), rep), pl.BlockSpec((1, G), rep),
        ],
        out_specs=(pl.BlockSpec((tm, C), row),
                   pl.BlockSpec((tm, C), row),
                   pl.BlockSpec((tm, G), row)),
        compiler_params=_cparams(1),
    )(xp, ln_g.reshape(1, C), ln_b.reshape(1, C),
      wq, bq.reshape(1, C), wc, bc.reshape(1, C), wg, bg.reshape(1, G))
    if Mp != M:
        q, ctx, gates = q[:M], ctx[:M], gates[:M]
    return q, ctx, gates


# ---------- (2) ALL focal levels fused: dwconv -> GELU -> gated accumulation ----------


def _focal_levels_kernel(ctx_ref, gates_ref, *rest, ks, H, W, h_off, w_off):
    fl = len(ks)
    w_refs = rest[:fl]
    acc_ref, mean_ref, pad_scr = rest[fl], rest[fl + 1], rest[fl + 2]
    tc = acc_ref.shape[-1]

    # Zero-halo scratch: borders are never written, only the interior per level.
    pad_scr[...] = jnp.zeros_like(pad_scr)

    ctx = ctx_ref[0].astype(jnp.float32)                      # (H, W, tc)
    gates = gates_ref[0].astype(jnp.float32)                  # (H, W, G)
    acc = jnp.zeros((H, W, tc), jnp.float32)

    for l, k in enumerate(ks):
        pad = k // 2
        # refresh interior with the current-level input (in-kernel "jnp.pad")
        pad_scr[pl.ds(h_off, H), pl.ds(w_off, W), :] = ctx
        w = w_refs[l][...].astype(jnp.float32)                # (k, k, tc)
        y0 = h_off - pad
        x0 = w_off - pad
        conv = jnp.zeros((H, W, tc), jnp.float32)
        # TODO(synk): the W (sublane) axis shift could use pltpu.roll (XLU slot)
        # instead of k unaligned slices; kept as hoisted slices (k relayouts/level).
        for kx in range(k):
            slab = pad_scr[:, pl.ds(x0 + kx, W), :]           # (Hp, W, tc)
            for ky in range(k):
                conv = conv + slab[y0 + ky:y0 + ky + H] * w[ky, kx]
        ctx = _gelu_tanh(conv)
        acc = acc + ctx * gates[:, :, l:l + 1]

    acc_ref[0] = acc.astype(acc_ref.dtype)
    # spatial mean of ctx_all for ctx_global (avoids re-reading (B,H,W,C) from HBM)
    mean_ref[...] = jnp.mean(acc, axis=(0, 1)).reshape(1, 1, tc)


def focal_levels(ctx_sp, gates_sp, focal_ws):
    B, H, W, C = ctx_sp.shape
    G = gates_sp.shape[-1]
    ks = [w.shape[0] for w in focal_ws]
    pad_max = max(k // 2 for k in ks)
    h_off = pad_max
    w_off = ((pad_max + 7) // 8) * 8          # sublane-aligned interior store offset
    Hp = h_off + H + pad_max
    Wp = w_off + W + pad_max
    tc = _pick_chan_tile(C)
    nc = C // tc

    in_specs = [
        pl.BlockSpec((1, H, W, tc), lambda b, c: (b, 0, 0, c)),
        pl.BlockSpec((1, H, W, G), lambda b, c: (b, 0, 0, 0)),
    ] + [pl.BlockSpec((k, k, tc), lambda b, c: (0, 0, c)) for k in ks]

    acc, mean = pl.pallas_call(
        functools.partial(_focal_levels_kernel, ks=tuple(ks), H=H, W=W,
                          h_off=h_off, w_off=w_off),
        out_shape=(jax.ShapeDtypeStruct((B, H, W, C), ACT_DTYPE),
                   jax.ShapeDtypeStruct((B, 1, C), jnp.float32)),
        grid=(B, nc),
        in_specs=in_specs,
        out_specs=(pl.BlockSpec((1, H, W, tc), lambda b, c: (b, 0, 0, c)),
                   pl.BlockSpec((1, 1, tc), lambda b, c: (b, 0, c))),
        scratch_shapes=[pltpu.VMEM((Hp, Wp, tc), jnp.float32)],
        compiler_params=_cparams(2),
    )(ctx_sp, gates_sp, *focal_ws)
    return acc, mean


# ------------- (3) global combine + h (1x1) + q*modulator + proj (fused) -------------


def _combine_mod_proj_kernel(ctx_ref, glob_ref, g_ref, q_ref, hw_ref, pw_ref, pb_ref,
                             o_ref, *, inv_denom, gate_col):
    ctx = ctx_ref[0].astype(jnp.float32)                              # (tl, C)
    glob = glob_ref[0].astype(jnp.float32)                            # (1, C)
    gate = g_ref[0][:, gate_col:gate_col + 1].astype(jnp.float32)     # (tl, 1)
    mod_in = (ctx + glob * gate) * inv_denom
    modulator = jnp.dot(mod_in.astype(MM_DTYPE), hw_ref[...],
                        preferred_element_type=jnp.float32)           # h: 1x1, no bias
    xo = q_ref[0].astype(jnp.float32) * modulator
    y = jnp.dot(xo.astype(MM_DTYPE), pw_ref[...],
                preferred_element_type=jnp.float32) + pb_ref[...]
    o_ref[0] = y.astype(o_ref.dtype)


def combine_mod_proj(ctx_all, ctx_glob, gates, q, h_w, proj_w, proj_b, focal_level,
                     out_dtype):
    B, L, C = ctx_all.shape
    G = gates.shape[-1]
    tl = _pick_seq_tile(L, _ROW_TILE_PREF)
    nl = L // tl
    rep = lambda b, j: (0, 0)
    seq = lambda b, j: (b, j, 0)
    return pl.pallas_call(
        functools.partial(_combine_mod_proj_kernel,
                          inv_denom=1.0 / float(focal_level + 1),
                          gate_col=focal_level),
        out_shape=jax.ShapeDtypeStruct((B, L, C), out_dtype),
        grid=(B, nl),
        in_specs=[
            pl.BlockSpec((1, tl, C), seq),
            pl.BlockSpec((1, 1, C), lambda b, j: (b, 0, 0)),
            pl.BlockSpec((1, tl, G), seq),
            pl.BlockSpec((1, tl, C), seq),
            pl.BlockSpec((C, C), rep),
            pl.BlockSpec((C, C), rep),
            pl.BlockSpec((1, C), rep),
        ],
        out_specs=pl.BlockSpec((1, tl, C), seq),
        compiler_params=_cparams(2),
    )(ctx_all, ctx_glob, gates, q, h_w, proj_w, proj_b.reshape(1, C))


# ------------- (4) norm2 -> fc1 -> GELU -> fc2 -> +residual (fully fused MLP) -------------


def _norm2_mlp_kernel(x_ref, g_ref, b_ref, w1_ref, b1_ref, w2_ref, b2_ref, o_ref, *, eps):
    x = x_ref[...].astype(jnp.float32)                    # x1: LN input AND residual
    mu = jnp.mean(x, axis=-1, keepdims=True)
    xc = x - mu
    var = jnp.mean(xc * xc, axis=-1, keepdims=True)
    xn = xc * jax.lax.rsqrt(var + eps) * g_ref[...] + b_ref[...]
    h = jnp.dot(xn.astype(MM_DTYPE), w1_ref[...],
                preferred_element_type=jnp.float32) + b1_ref[...]
    h = _gelu_tanh(h)                                      # hidden stays in VMEM
    y = jnp.dot(h.astype(MM_DTYPE), w2_ref[...],
                preferred_element_type=jnp.float32) + b2_ref[...]
    o_ref[...] = (x + y).astype(o_ref.dtype)


def norm2_mlp_residual(x, ln_g, ln_b, w1, b1, w2, b2):
    M, C = x.shape
    Hd = w1.shape[1]
    tm, Mp = _pick_row_tile(M, _ROW_TILE_PREF)
    xp = _pad_rows(x, Mp)
    rep = lambda i: (0, 0)
    row = lambda i: (i, 0)
    out = pl.pallas_call(
        functools.partial(_norm2_mlp_kernel, eps=LN_EPS),
        out_shape=jax.ShapeDtypeStruct((Mp, C), x.dtype),
        grid=(Mp // tm,),
        in_specs=[
            pl.BlockSpec((tm, C), row),
            pl.BlockSpec((1, C), rep), pl.BlockSpec((1, C), rep),
            pl.BlockSpec((C, Hd), rep), pl.BlockSpec((1, Hd), rep),
            pl.BlockSpec((Hd, C), rep), pl.BlockSpec((1, C), rep),
        ],
        out_specs=pl.BlockSpec((tm, C), row),
        compiler_params=_cparams(1),
    )(xp, ln_g.reshape(1, C), ln_b.reshape(1, C),
      w1, b1.reshape(1, Hd), w2, b2.reshape(1, C))
    return out if Mp == M else out[:M]


# ----------------------------------- Forward pass -----------------------------------


def focalnet_block_fwd(x, p, H, W):
    """FocalNetBlock.forward (use_postln=False, use_layerscale=False,
    drop=0, drop_path=0, out_dim=dim).  x: (B, L, C)."""
    B, L, C = x.shape
    assert L == H * W
    fl = len(p["focal_w"])
    assert fl >= 1
    G = fl + 1
    M = B * L

    # (1) norm1 -> f -> split q/ctx/gates -> per-pixel gate softmax (bf16 outputs)
    q, ctx, gates = norm1_f_proj(x.reshape(M, C), p["norm1_g"], p["norm1_b"],
                                 p["f_wq"], p["f_bq"], p["f_wc"], p["f_bc"],
                                 p["f_wg"], p["f_bg"])

    # (2) all focal levels fused: dwconv -> GELU -> gated accumulation (+ spatial mean)
    ctx_all_sp, ctx_mean = focal_levels(ctx.reshape(B, H, W, C),
                                        gates.reshape(B, H, W, G),
                                        p["focal_w"])

    # (3) ctx_global = exact-erf GELU of the (B,1,C) spatial mean (tiny, plain JAX)
    ctx_glob = jax.nn.gelu(ctx_mean, approximate=False)      # fp32

    # (4) (ctx_all + ctx_glob*gate)/(fl+1) -> h (1x1) -> q*modulator -> proj (fused)
    x1 = combine_mod_proj(ctx_all_sp.reshape(B, L, C), ctx_glob,
                          gates.reshape(B, L, G), q.reshape(B, L, C),
                          p["h_w"], p["proj_w"], p["proj_b"], fl,
                          out_dtype=x.dtype)

    # (5) norm2 -> fc1 -> GELU -> fc2 -> +residual (single fused kernel)
    out = norm2_mlp_residual(x1.reshape(M, C), p["norm2_g"], p["norm2_b"],
                             p["fc1_w"], p["fc1_b"], p["fc2_w"], p["fc2_b"])
    return out.reshape(B, L, C)


# ---------------------------------- Parameter setup ----------------------------------


def init_params(key, C, focal_level, focal_window, mlp_ratio=4.0, focal_factor=2):
    keys = iter(jax.random.split(key, 64))

    def w(shape, scale=0.02, dtype=jnp.float32):
        return (scale * jax.random.normal(next(keys), shape, jnp.float32)).astype(dtype)

    hidden = int(C * mlp_ratio)
    G = focal_level + 1
    kernel_sizes = [focal_factor * k + focal_window for k in range(focal_level)]

    return {
        "norm1_g": jnp.ones((C,), jnp.float32), "norm1_b": jnp.zeros((C,), jnp.float32),
        "norm2_g": jnp.ones((C,), jnp.float32), "norm2_b": jnp.zeros((C,), jnp.float32),
        # FocalModulation.f (dim -> 2*dim + fl + 1) split into lane-dense q/ctx/gate parts.
        "f_wq": w((C, C), dtype=MM_DTYPE), "f_bq": w((C,)),
        "f_wc": w((C, C), dtype=MM_DTYPE), "f_bc": w((C,)),
        "f_wg": w((C, G), dtype=MM_DTYPE), "f_bg": w((G,)),
        "h_w": w((C, C), dtype=MM_DTYPE),                       # 1x1 conv, bias=False
        "proj_w": w((C, C), dtype=MM_DTYPE), "proj_b": w((C,)),
        "focal_w": [w((ks, ks, C)) for ks in kernel_sizes],     # depthwise weights (fp32, VPU)
        "fc1_w": w((C, hidden), dtype=MM_DTYPE), "fc1_b": w((hidden,)),
        "fc2_w": w((hidden, C), dtype=MM_DTYPE), "fc2_b": w((C,)),
    }


if __name__ == "__main__":
    key = jax.random.PRNGKey(0)
    kp, kx = jax.random.split(key)

    B, C, H, W = 2, 32, 16, 16
    focal_level, focal_window = 2, 3          # depthwise kernel sizes 3 and 5
    L = H * W

    params = init_params(kp, C, focal_level, focal_window, mlp_ratio=4.0)
    x = jax.random.normal(kx, (B, L, C), jnp.float32)   # (B, L, C) like the PyTorch block

    fwd = jax.jit(focalnet_block_fwd, static_argnums=(2, 3))
    out = fwd(x, params, H, W)
    out = jax.block_until_ready(out)

    assert out.shape == (B, L, C)
    assert bool(jnp.all(jnp.isfinite(out)))
    print("KERNEL_OK")
</pallas_src>

<mosaic_0001>
module attributes {stable_mosaic.version = 11 : i64} {
  func.func @_norm1_f_kernel(%arg0: i32, %arg1: memref<256x32xf32, #tpu.memory_space<vmem>>, %arg2: memref<1x32xf32, #tpu.memory_space<vmem>>, %arg3: memref<1x32xf32, #tpu.memory_space<vmem>>, %arg4: memref<32x32xbf16, #tpu.memory_space<vmem>>, %arg5: memref<1x32xf32, #tpu.memory_space<vmem>>, %arg6: memref<32x32xbf16, #tpu.memory_space<vmem>>, %arg7: memref<1x32xf32, #tpu.memory_space<vmem>>, %arg8: memref<32x3xbf16, #tpu.memory_space<vmem>>, %arg9: memref<1x3xf32, #tpu.memory_space<vmem>>, %arg10: memref<256x32xbf16, #tpu.memory_space<vmem>>, %arg11: memref<256x32xbf16, #tpu.memory_space<vmem>>, %arg12: memref<256x3xbf16, #tpu.memory_space<vmem>>) attributes {dimension_semantics = [#tpu.dimension_semantics<parallel>], iteration_bounds = array<i64: 2>, scalar_prefetch = 0 : i64, scratch_operands = 0 : i64, tpu.core_type = #tpu.core_type<tc>, window_params = [{transform_indices = @transform_0, window_bounds = array<i64: 256, 32>}, {pipeline_mode = #tpu.pipeline_mode<synchronous>, transform_indices = @transform_1, window_bounds = array<i64: 1, 32>}, {pipeline_mode = #tpu.pipeline_mode<synchronous>, transform_indices = @transform_2, window_bounds = array<i64: 1, 32>}, {pipeline_mode = #tpu.pipeline_mode<synchronous>, transform_indices = @transform_3, window_bounds = array<i64: 32, 32>}, {pipeline_mode = #tpu.pipeline_mode<synchronous>, transform_indices = @transform_4, window_bounds = array<i64: 1, 32>}, {pipeline_mode = #tpu.pipeline_mode<synchronous>, transform_indices = @transform_5, window_bounds = array<i64: 32, 32>}, {pipeline_mode = #tpu.pipeline_mode<synchronous>, transform_indices = @transform_6, window_bounds = array<i64: 1, 32>}, {pipeline_mode = #tpu.pipeline_mode<synchronous>, transform_indices = @transform_7, window_bounds = array<i64: 32, 3>}, {pipeline_mode = #tpu.pipeline_mode<synchronous>, transform_indices = @transform_8, window_bounds = array<i64: 1, 3>}, {transform_indices = @transform_9, window_bounds = array<i64: 256, 32>}, {transform_indices = @transform_10, window_bounds = array<i64: 256, 32>}, {transform_indices = @transform_11, window_bounds = array<i64: 256, 3>}]} {
    %c0 = arith.constant 0 : index
    %c0_0 = arith.constant 0 : index
    %0 = vector.load %arg1[%c0, %c0_0] : memref<256x32xf32, #tpu.memory_space<vmem>>, vector<256x32xf32>
    %cst = arith.constant dense<0.000000e+00> : vector<256xf32>
    %1 = vector.multi_reduction <add>, %0, %cst [1] : vector<256x32xf32> to vector<256xf32>
    %2 = vector.shape_cast %1 : vector<256xf32> to vector<256x1xf32>
    %cst_1 = arith.constant 3.200000e+01 : f32
    %3 = vector.broadcast %cst_1 : f32 to vector<256x1xf32>
    %4 = arith.divf %2, %3 : vector<256x1xf32>
    %5 = vector.broadcast %4 : vector<256x1xf32> to vector<256x32xf32>
    %6 = arith.subf %0, %5 : vector<256x32xf32>
    %7 = arith.mulf %6, %6 : vector<256x32xf32>
    %cst_2 = arith.constant dense<0.000000e+00> : vector<256xf32>
    %8 = vector.multi_reduction <add>, %7, %cst_2 [1] : vector<256x32xf32> to vector<256xf32>
    %9 = vector.shape_cast %8 : vector<256xf32> to vector<256x1xf32>
    %cst_3 = arith.constant 3.200000e+01 : f32
    %10 = vector.broadcast %cst_3 : f32 to vector<256x1xf32>
    %11 = arith.divf %9, %10 : vector<256x1xf32>
    %cst_4 = arith.constant 9.99999974E-6 : f32
    %12 = vector.broadcast %cst_4 : f32 to vector<256x1xf32>
    %13 = arith.addf %11, %12 : vector<256x1xf32>
    %14 = math.rsqrt %13 : vector<256x1xf32>
    %15 = vector.broadcast %14 : vector<256x1xf32> to vector<256x32xf32>
    %16 = arith.mulf %6, %15 : vector<256x32xf32>
    %c0_5 = arith.constant 0 : index
    %c0_6 = arith.constant 0 : index
    %17 = vector.load %arg2[%c0_5, %c0_6] : memref<1x32xf32, #tpu.memory_space<vmem>>, vector<1x32xf32>
    %18 = vector.broadcast %17 : vector<1x32xf32> to vector<256x32xf32>
    %19 = arith.mulf %16, %18 : vector<256x32xf32>
    %c0_7 = arith.constant 0 : index
    %c0_8 = arith.constant 0 : index
    %20 = vector.load %arg3[%c0_7, %c0_8] : memref<1x32xf32, #tpu.memory_space<vmem>>, vector<1x32xf32>
    %21 = vector.broadcast %20 : vector<1x32xf32> to vector<256x32xf32>
    %22 = arith.addf %19, %21 : vector<256x32xf32>
    %23 = arith.truncf %22 : vector<256x32xf32> to vector<256x32xbf16>
    %c0_9 = arith.constant 0 : index
    %c0_10 = arith.constant 0 : index
    %24 = vector.load %arg4[%c0_9, %c0_10] : memref<32x32xbf16, #tpu.memory_space<vmem>>, vector<32x32xbf16>
    %cst_11 = arith.constant dense<0.000000e+00> : vector<256x32xf32>
    %25 = tpu.matmul %23, %24, %cst_11 {dimension_numbers = #tpu.dot_dimension_numbers<[1], [0], [0], [1], [0, 0, 1, 1], [], []>} : vector<256x32xbf16>, vector<32x32xbf16>, vector<256x32xf32> -> vector<256x32xf32>
    %c0_12 = arith.constant 0 : index
    %c0_13 = arith.constant 0 : index
    %26 = vector.load %arg5[%c0_12, %c0_13] : memref<1x32xf32, #tpu.memory_space<vmem>>, vector<1x32xf32>
    %27 = vector.broadcast %26 : vector<1x32xf32> to vector<256x32xf32>
    %28 = arith.addf %25, %27 : vector<256x32xf32>
    %c0_14 = arith.constant 0 : index
    %c0_15 = arith.constant 0 : index
    %29 = vector.load %arg6[%c0_14, %c0_15] : memref<32x32xbf16, #tpu.memory_space<vmem>>, vector<32x32xbf16>
    %cst_16 = arith.constant dense<0.000000e+00> : vector<256x32xf32>
    %30 = tpu.matmul %23, %29, %cst_16 {dimension_numbers = #tpu.dot_dimension_numbers<[1], [0], [0], [1], [0, 0, 1, 1], [], []>} : vector<256x32xbf16>, vector<32x32xbf16>, vector<256x32xf32> -> vector<256x32xf32>
    %c0_17 = arith.constant 0 : index
    %c0_18 = arith.constant 0 : index
    %31 = vector.load %arg7[%c0_17, %c0_18] : memref<1x32xf32, #tpu.memory_space<vmem>>, vector<1x32xf32>
    %32 = vector.broadcast %31 : vector<1x32xf32> to vector<256x32xf32>
    %33 = arith.addf %30, %32 : vector<256x32xf32>
    %c0_19 = arith.constant 0 : index
    %c0_20 = arith.constant 0 : index
    %34 = vector.load %arg8[%c0_19, %c0_20] : memref<32x3xbf16, #tpu.memory_space<vmem>>, vector<32x3xbf16>
    %cst_21 = arith.constant dense<0.000000e+00> : vector<256x3xf32>
    %35 = tpu.matmul %23, %34, %cst_21 {dimension_numbers = #tpu.dot_dimension_numbers<[1], [0], [0], [1], [0, 0, 1, 1], [], []>} : vector<256x32xbf16>, vector<32x3xbf16>, vector<256x3xf32> -> vector<256x3xf32>
    %c0_22 = arith.constant 0 : index
    %c0_23 = arith.constant 0 : index
    %36 = vector.load %arg9[%c0_22, %c0_23] : memref<1x3xf32, #tpu.memory_space<vmem>>, vector<1x3xf32>
    %37 = vector.broadcast %36 : vector<1x3xf32> to vector<256x3xf32>
    %38 = arith.addf %35, %37 : vector<256x3xf32>
    %cst_24 = arith.constant dense<0xFF800000> : vector<256xf32>
    %39 = vector.multi_reduction <maximumf>, %38, %cst_24 [1] : vector<256x3xf32> to vector<256xf32>
    %40 = vector.shape_cast %39 : vector<256xf32> to vector<256x1xf32>
    %41 = vector.broadcast %40 : vector<256x1xf32> to vector<256x3xf32>
    %42 = arith.subf %38, %41 : vector<256x3xf32>
    %43 = math.exp %42 : vector<256x3xf32>
    %cst_25 = arith.constant dense<0.000000e+00> : vector<256xf32>
    %44 = vector.multi_reduction <add>, %43, %cst_25 [1] : vector<256x3xf32> to vector<256xf32>
    %45 = vector.shape_cast %44 : vector<256xf32> to vector<256x1xf32>
    %46 = vector.broadcast %45 : vector<256x1xf32> to vector<256x3xf32>
    %47 = arith.divf %43, %46 : vector<256x3xf32>
    %48 = arith.truncf %28 : vector<256x32xf32> to vector<256x32xbf16>
    %c0_26 = arith.constant 0 : index
    %c0_27 = arith.constant 0 : index
    %49 = vector.load %arg10[%c0_26, %c0_27] : memref<256x32xbf16, #tpu.memory_space<vmem>>, vector<256x32xbf16>
    tpu.vector_store %arg10[%c0_26, %c0_27], %48 {strides = array<i32>} : memref<256x32xbf16, #tpu.memory_space<vmem>>, vector<256x32xbf16>,
    %50 = arith.truncf %33 : vector<256x32xf32> to vector<256x32xbf16>
    %c0_28 = arith.constant 0 : index
    %c0_29 = arith.constant 0 : index
    %51 = vector.load %arg11[%c0_28, %c0_29] : memref<256x32xbf16, #tpu.memory_space<vmem>>, vector<256x32xbf16>
    tpu.vector_store %arg11[%c0_28, %c0_29], %50 {strides = array<i32>} : memref<256x32xbf16, #tpu.memory_space<vmem>>, vector<256x32xbf16>,
    %52 = arith.truncf %47 : vector<256x3xf32> to vector<256x3xbf16>
    %c0_30 = arith.constant 0 : index
    %c0_31 = arith.constant 0 : index
    %53 = vector.load %arg12[%c0_30, %c0_31] : memref<256x3xbf16, #tpu.memory_space<vmem>>, vector<256x3xbf16>
    tpu.vector_store %arg12[%c0_30, %c0_31], %52 {strides = array<i32>} : memref<256x3xbf16, #tpu.memory_space<vmem>>, vector<256x3xbf16>,
    return
  }
  func.func @transform_0(%arg0: i32) -> (i32, i32) {
    %c0_i32 = arith.constant 0 : i32
    %c0_i32_0 = arith.constant 0 : i32
    return %arg0, %c0_i32 : i32, i32
  }
  func.func @transform_1(%arg0: i32) -> (i32, i32) {
    %c0_i32 = arith.constant 0 : i32
    %c0_i32_0 = arith.constant 0 : i32
    %c0_i32_1 = arith.constant 0 : i32
    return %c0_i32, %c0_i32_0 : i32, i32
  }
  func.func @transform_2(%arg0: i32) -> (i32, i32) {
    %c0_i32 = arith.constant 0 : i32
    %c0_i32_0 = arith.constant 0 : i32
    %c0_i32_1 = arith.constant 0 : i32
    return %c0_i32, %c0_i32_0 : i32, i32
  }
  func.func @transform_3(%arg0: i32) -> (i32, i32) {
    %c0_i32 = arith.constant 0 : i32
    %c0_i32_0 = arith.constant 0 : i32
    %c0_i32_1 = arith.constant 0 : i32
    return %c0_i32, %c0_i32_0 : i32, i32
  }
  func.func @transform_4(%arg0: i32) -> (i32, i32) {
    %c0_i32 = arith.constant 0 : i32
    %c0_i32_0 = arith.constant 0 : i32
    %c0_i32_1 = arith.constant 0 : i32
    return %c0_i32, %c0_i32_0 : i32, i32
  }
  func.func @transform_5(%arg0: i32) -> (i32, i32) {
    %c0_i32 = arith.constant 0 : i32
    %c0_i32_0 = arith.constant 0 : i32
    %c0_i32_1 = arith.constant 0 : i32
    return %c0_i32, %c0_i32_0 : i32, i32
  }
  func.func @transform_6(%arg0: i32) -> (i32, i32) {
    %c0_i32 = arith.constant 0 : i32
    %c0_i32_0 = arith.constant 0 : i32
    %c0_i32_1 = arith.constant 0 : i32
    return %c0_i32, %c0_i32_0 : i32, i32
  }
  func.func @transform_7(%arg0: i32) -> (i32, i32) {
    %c0_i32 = arith.constant 0 : i32
    %c0_i32_0 = arith.constant 0 : i32
    %c0_i32_1 = arith.constant 0 : i32
    return %c0_i32, %c0_i32_0 : i32, i32
  }
  func.func @transform_8(%arg0: i32) -> (i32, i32) {
    %c0_i32 = arith.constant 0 : i32
    %c0_i32_0 = arith.constant 0 : i32
    %c0_i32_1 = arith.constant 0 : i32
    return %c0_i32, %c0_i32_0 : i32, i32
  }
  func.func @transform_9(%arg0: i32) -> (i32, i32) {
    %c0_i32 = arith.constant 0 : i32
    %c0_i32_0 = arith.constant 0 : i32
    return %arg0, %c0_i32 : i32, i32
  }
  func.func @transform_10(%arg0: i32) -> (i32, i32) {
    %c0_i32 = arith.constant 0 : i32
    %c0_i32_0 = arith.constant 0 : i32
    return %arg0, %c0_i32 : i32, i32
  }
  func.func @transform_11(%arg0: i32) -> (i32, i32) {
    %c0_i32 = arith.constant 0 : i32
    %c0_i32_0 = arith.constant 0 : i32
    return %arg0, %c0_i32 : i32, i32
  }
}

module attributes {stable_mosaic.version = 11 : i64} {
  func.func @_focal_levels_kernel(%arg0: i32, %arg1: i32, %arg2: memref<1x16x16x32xbf16, #tpu.memory_space<vmem>>, %arg3: memref<1x16x16x3xbf16, #tpu.memory_space<vmem>>, %arg4: memref<3x3x32xf32, #tpu.memory_space<vmem>>, %arg5: memref<5x5x32xf32, #tpu.memory_space<vmem>>, %arg6: memref<1x16x16x32xbf16, #tpu.memory_space<vmem>>, %arg7: memref<1x1x32xf32, #tpu.memory_space<vmem>>, %arg8: memref<20x26x32xf32, #tpu.memory_space<vmem>>) attributes {dimension_semantics = [#tpu.dimension_semantics<parallel>, #tpu.dimension_semantics<parallel>], iteration_bounds = array<i64: 2, 1>, scalar_prefetch = 0 : i64, scratch_operands = 1 : i64, tpu.core_type = #tpu.core_type<tc>, window_params = [{transform_indices = @transform_0, window_bounds = array<i64: 1, 16, 16, 32>}, {transform_indices = @transform_1, window_bounds = array<i64: 1, 16, 16, 3>}, {transform_indices = @transform_2, window_bounds = array<i64: 3, 3, 32>}, {transform_indices = @transform_3, window_bounds = array<i64: 5, 5, 32>}, {transform_indices = @transform_4, window_bounds = array<i64: 1, 16, 16, 32>}, {transform_indices = @transform_5, window_bounds = array<i64: 1, 1, 32>}]} {
    %cst = arith.constant 0.000000e+00 : f32
    %0 = vector.broadcast %cst : f32 to vector<20x26x32xf32>
    %c0 = arith.constant 0 : index
    %c0_0 = arith.constant 0 : index
    %c0_1 = arith.constant 0 : index
    %1 = vector.load %arg8[%c0, %c0_0, %c0_1] : memref<20x26x32xf32, #tpu.memory_space<vmem>>, vector<20x26x32xf32>
    tpu.vector_store %arg8[%c0, %c0_0, %c0_1], %0 {strides = array<i32>} : memref<20x26x32xf32, #tpu.memory_space<vmem>>, vector<20x26x32xf32>,
    %c0_2 = arith.constant 0 : index
    %c0_3 = arith.constant 0 : index
    %c0_4 = arith.constant 0 : index
    %c0_5 = arith.constant 0 : index
    %2 = vector.load %arg2[%c0_2, %c0_3, %c0_4, %c0_5] : memref<1x16x16x32xbf16, #tpu.memory_space<vmem>>, vector<1x16x16x32xbf16>
    %3 = vector.shape_cast %2 : vector<1x16x16x32xbf16> to vector<16x16x32xbf16>
    %4 = arith.extf %3 : vector<16x16x32xbf16> to vector<16x16x32xf32>
    %c0_6 = arith.constant 0 : index
    %c0_7 = arith.constant 0 : index
    %c0_8 = arith.constant 0 : index
    %c0_9 = arith.constant 0 : index
    %5 = vector.load %arg3[%c0_6, %c0_7, %c0_8, %c0_9] : memref<1x16x16x3xbf16, #tpu.memory_space<vmem>>, vector<1x16x16x3xbf16>
    %6 = vector.shape_cast %5 : vector<1x16x16x3xbf16> to vector<16x16x3xbf16>
    %7 = arith.extf %6 : vector<16x16x3xbf16> to vector<16x16x3xf32>
    %cst_10 = arith.constant 0.000000e+00 : f32
    %8 = vector.broadcast %cst_10 : f32 to vector<16x16x32xf32>
    %c2 = arith.constant 2 : index
    %c8 = arith.constant 8 : index
    %c0_11 = arith.constant 0 : index
    %9 = vector.load %arg8[%c2, %c8, %c0_11] : memref<20x26x32xf32, #tpu.memory_space<vmem>>, vector<16x16x32xf32>
    tpu.vector_store %arg8[%c2, %c8, %c0_11], %4 {strides = array<i32>} : memref<20x26x32xf32, #tpu.memory_space<vmem>>, vector<16x16x32xf32>,
    %c0_12 = arith.constant 0 : index
    %c0_13 = arith.constant 0 : index
    %c0_14 = arith.constant 0 : index
    %10 = vector.load %arg4[%c0_12, %c0_13, %c0_14] : memref<3x3x32xf32, #tpu.memory_space<vmem>>, vector<3x3x32xf32>
    %cst_15 = arith.constant 0.000000e+00 : f32
    %11 = vector.broadcast %cst_15 : f32 to vector<16x16x32xf32>
    %c0_16 = arith.constant 0 : index
    %c7 = arith.constant 7 : index
    %c0_17 = arith.constant 0 : index
    %12 = vector.load %arg8[%c0_16, %c7, %c0_17] : memref<20x26x32xf32, #tpu.memory_space<vmem>>, vector<20x16x32xf32>
    %13 = vector.extract_strided_slice %12 {offsets = [1, 0, 0], sizes = [16, 16, 32], strides = [1, 1, 1]} : vector<20x16x32xf32> to vector<16x16x32xf32>
    %14 = vector.extract_strided_slice %10 {offsets = [0, 0, 0], sizes = [1, 1, 32], strides = [1, 1, 1]} : vector<3x3x32xf32> to vector<1x1x32xf32>
    %15 = vector.shape_cast %14 : vector<1x1x32xf32> to vector<32xf32>
    %16 = vector.shape_cast %15 : vector<32xf32> to vector<1x1x32xf32>
    %17 = vector.broadcast %16 : vector<1x1x32xf32> to vector<16x16x32xf32>
    %18 = arith.mulf %13, %17 : vector<16x16x32xf32>
    %19 = arith.addf %11, %18 : vector<16x16x32xf32>
    %20 = vector.extract_strided_slice %12 {offsets = [2, 0, 0], sizes = [16, 16, 32], strides = [1, 1, 1]} : vector<20x16x32xf32> to vector<16x16x32xf32>
    %21 = vector.extract_strided_slice %10 {offsets = [1, 0, 0], sizes = [1, 1, 32], strides = [1, 1, 1]} : vector<3x3x32xf32> to vector<1x1x32xf32>
    %22 = vector.shape_cast %21 : vector<1x1x32xf32> to vector<32xf32>
    %23 = vector.shape_cast %22 : vector<32xf32> to vector<1x1x32xf32>
    %24 = vector.broadcast %23 : vector<1x1x32xf32> to vector<16x16x32xf32>
    %25 = arith.mulf %20, %24 : vector<16x16x32xf32>
    %26 = arith.addf %19, %25 : vector<16x16x32xf32>
    %27 = vector.extract_strided_slice %12 {offsets = [3, 0, 0], sizes = [16, 16, 32], strides = [1, 1, 1]} : vector<20x16x32xf32> to vector<16x16x32xf32>
    %28 = vector.extract_strided_slice %10 {offsets = [2, 0, 0], sizes = [1, 1, 32], strides = [1, 1, 1]} : vector<3x3x32xf32> to vector<1x1x32xf32>
    %29 = vector.shape_cast %28 : vector<1x1x32xf32> to vector<32xf32>
    %30 = vector.shape_cast %29 : vector<32xf32> to vector<1x1x32xf32>
    %31 = vector.broadcast %30 : vector<1x1x32xf32> to vector<16x16x32xf32>
    %32 = arith.mulf %27, %31 : vector<16x16x32xf32>
    %33 = arith.addf %26, %32 : vector<16x16x32xf32>
    %c0_18 = arith.constant 0 : index
    %c8_19 = arith.constant 8 : index
    %c0_20 = arith.constant 0 : index
    %34 = vector.load %arg8[%c0_18, %c8_19, %c0_20] : memref<20x26x32xf32, #tpu.memory_space<vmem>>, vector<20x16x32xf32>
    %35 = vector.extract_strided_slice %34 {offsets = [1, 0, 0], sizes = [16, 16, 32], strides = [1, 1, 1]} : vector<20x16x32xf32> to vector<16x16x32xf32>
    %36 = vector.extract_strided_slice %10 {offsets = [0, 1, 0], sizes = [1, 1, 32], strides = [1, 1, 1]} : vector<3x3x32xf32> to vector<1x1x32xf32>
    %37 = vector.shape_cast %36 : vector<1x1x32xf32> to vector<32xf32>
    %38 = vector.shape_cast %37 : vector<32xf32> to vector<1x1x32xf32>
    %39 = vector.broadcast %38 : vector<1x1x32xf32> to vector<16x16x32xf32>
    %40 = arith.mulf %35, %39 : vector<16x16x32xf32>
    %41 = arith.addf %33, %40 : vector<16x16x32xf32>
    %42 = vector.extract_strided_slice %34 {offsets = [2, 0, 0], sizes = [16, 16, 32], strides = [1, 1, 1]} : vector<20x16x32xf32> to vector<16x16x32xf32>
    %43 = vector.extract_strided_slice %10 {offsets = [1, 1, 0], sizes = [1, 1, 32], strides = [1, 1, 1]} : vector<3x3x32xf32> to vector<1x1x32xf32>
    %44 = vector.shape_cast %43 : vector<1x1x32xf32> to vector<32xf32>
    %45 = vector.shape_cast %44 : vector<32xf32> to vector<1x1x32xf32>
    %46 = vector.broadcast %45 : vector<1x1x32xf32> to vector<16x16x32xf32>
    %47 = arith.mulf %42, %46 : vector<16x16x32xf32>
    %48 = arith.addf %41, %47 : vector<16x16x32xf32>
    %49 = vector.extract_strided_slice %34 {offsets = [3, 0, 0], sizes = [16, 16, 32], strides = [1, 1, 1]} : vector<20x16x32xf32> to vector<16x16x32xf32>
    %50 = vector.extract_strided_slice %10 {offsets = [2, 1, 0], sizes = [1, 1, 32], strides = [1, 1, 1]} : vector<3x3x32xf32> to vector<1x1x32xf32>
    %51 = vector.shape_cast %50 : vector<1x1x32xf32> to vector<32xf32>
    %52 = vector.shape_cast %51 : vector<32xf32> to vector<1x1x32xf32>
    %53 = vector.broadcast %52 : vector<1x1x32xf32> to vector<16x16x32xf32>
    %54 = arith.mulf %49, %53 : vector<16x16x32xf32>
    %55 = arith.addf %48, %54 : vector<16x16x32xf32>
    %c0_21 = arith.constant 0 : index
    %c9 = arith.constant 9 : index
    %c0_22 = arith.constant 0 : index
    %56 = vector.load %arg8[%c0_21, %c9, %c0_22] : memref<20x26x32xf32, #tpu.memory_space<vmem>>, vector<20x16x32xf32>
    %57 = vector.extract_strided_slice %56 {offsets = [1, 0, 0], sizes = [16, 16, 32], strides = [1, 1, 1]} : vector<20x16x32xf32> to vector<16x16x32xf32>
    %58 = vector.extract_strided_slice %10 {offsets = [0, 2, 0], sizes = [1, 1, 32], strides = [1, 1, 1]} : vector<3x3x32xf32> to vector<1x1x32xf32>
    %59 = vector.shape_cast %58 : vector<1x1x32xf32> to vector<32xf32>
    %60 = vector.shape_cast %59 : vector<32xf32> to vector<1x1x32xf32>
    %61 = vector.broadcast %60 : vector<1x1x32xf32> to vector<16x16x32xf32>
    %62 = arith.mulf %57, %61 : vector<16x16x32xf32>
    %63 = arith.addf %55, %62 : vector<16x16x32xf32>
    %64 = vector.extract_strided_slice %56 {offsets = [2, 0, 0], sizes = [16, 16, 32], strides = [1, 1, 1]} : vector<20x16x32xf32> to vector<16x16x32xf32>
    %65 = vector.extract_strided_slice %10 {offsets = [1, 2, 0], sizes = [1, 1, 32], strides = [1, 1, 1]} : vector<3x3x32xf32> to vector<1x1x32xf32>
    %66 = vector.shape_cast %65 : vector<1x1x32xf32> to vector<32xf32>
    %67 = vector.shape_cast %66 : vector<32xf32> to vector<1x1x32xf32>
    %68 = vector.broadcast %67 : vector<1x1x32xf32> to vector<16x16x32xf32>
    %69 = arith.mulf %64, %68 : vector<16x16x32xf32>
    %70 = arith.addf %63, %69 : vector<16x16x32xf32>
    %71 = vector.extract_strided_slice %56 {offsets = [3, 0, 0], sizes = [16, 16, 32], strides = [1, 1, 1]} : vector<20x16x32xf32> to vector<16x16x32xf32>
    %72 = vector.extract_strided_slice %10 {offsets = [2, 2, 0], sizes = [1, 1, 32], strides = [1, 1, 1]} : vector<3x3x32xf32> to vector<1x1x32xf32>
    %73 = vector.shape_cast %72 : vector<1x1x32xf32> to vector<32xf32>
    %74 = vector.shape_cast %73 : vector<32xf32> to vector<1x1x32xf32>
    %75 = vector.broadcast %74 : vector<1x1x32xf32> to vector<16x16x32xf32>
    %76 = arith.mulf %71, %75 : vector<16x16x32xf32>
    %77 = arith.addf %70, %76 : vector<16x16x32xf32>
    %cst_23 = arith.constant 5.000000e-01 : f32
    %78 = vector.broadcast %cst_23 : f32 to vector<16x16x32xf32>
    %79 = arith.mulf %78, %77 : vector<16x16x32xf32>
    %cst_24 = arith.constant 4.471500e-02 : f32
    %80 = vector.broadcast %cst_24 : f32 to vector<16x16x32xf32>
    %81 = arith.mulf %80, %77 : vector<16x16x32xf32>
    %82 = arith.mulf %81, %77 : vector<16x16x32xf32>
    %83 = arith.mulf %82, %77 : vector<16x16x32xf32>
    %84 = arith.addf %77, %83 : vector<16x16x32xf32>
    %cst_25 = arith.constant 0.797884583 : f32
    %85 = vector.broadcast %cst_25 : f32 to vector<16x16x32xf32>
    %86 = arith.mulf %85, %84 : vector<16x16x32xf32>
    %87 = math.tanh %86 : vector<16x16x32xf32>
    %cst_26 = arith.constant 1.000000e+00 : f32
    %88 = vector.broadcast %cst_26 : f32 to vector<16x16x32xf32>
    %89 = arith.addf %88, %87 : vector<16x16x32xf32>
    %90 = arith.mulf %79, %89 : vector<16x16x32xf32>
    %91 = vector.extract_strided_slice %7 {offsets = [0, 0, 0], sizes = [16, 16, 1], strides = [1, 1, 1]} : vector<16x16x3xf32> to vector<16x16x1xf32>
    %92 = vector.broadcast %91 : vector<16x16x1xf32> to vector<16x16x32xf32>
    %93 = arith.mulf %90, %92 : vector<16x16x32xf32>
    %94 = arith.addf %8, %93 : vector<16x16x32xf32>
    %c2_27 = arith.constant 2 : index
    %c8_28 = arith.constant 8 : index
    %c0_29 = arith.constant 0 : index
    %95 = vector.load %arg8[%c2_27, %c8_28, %c0_29] : memref<20x26x32xf32, #tpu.memory_space<vmem>>, vector<16x16x32xf32>
    tpu.vector_store %arg8[%c2_27, %c8_28, %c0_29], %90 {strides = array<i32>} : memref<20x26x32xf32, #tpu.memory_space<vmem>>, vector<16x16x32xf32>,
    %c0_30 = arith.constant 0 : index
    %c0_31 = arith.constant 0 : index
    %c0_32 = arith.constant 0 : index
    %96 = vector.load %arg5[%c0_30, %c0_31, %c0_32] : memref<5x5x32xf32, #tpu.memory_space<vmem>>, vector<5x5x32xf32>
    %cst_33 = arith.constant 0.000000e+00 : f32
    %97 = vector.broadcast %cst_33 : f32 to vector<16x16x32xf32>
    %c0_34 = arith.constant 0 : index
    %c6 = arith.constant 6 : index
    %c0_35 = arith.constant 0 : index
    %98 = vector.load %arg8[%c0_34, %c6, %c0_35] : memref<20x26x32xf32, #tpu.memory_space<vmem>>, vector<20x16x32xf32>
    %99 = vector.extract_strided_slice %98 {offsets = [0, 0, 0], sizes = [16, 16, 32], strides = [1, 1, 1]} : vector<20x16x32xf32> to vector<16x16x32xf32>
    %100 = vector.extract_strided_slice %96 {offsets = [0, 0, 0], sizes = [1, 1, 32], strides = [1, 1, 1]} : vector<5x5x32xf32> to vector<1x1x32xf32>
    %101 = vector.shape_cast %100 : vector<1x1x32xf32> to vector<32xf32>
    %102 = vector.shape_cast %101 : vector<32xf32> to vector<1x1x32xf32>
    %103 = vector.broadcast %102 : vector<1x1x32xf32> to vector<16x16x32xf32>
    %104 = arith.mulf %99, %103 : vector<16x16x32xf32>
    %105 = arith.addf %97, %104 : vector<16x16x32xf32>
    %106 = vector.extract_strided_slice %98 {offsets = [1, 0, 0], sizes = [16, 16, 32], strides = [1, 1, 1]} : vector<20x16x32xf32> to vector<16x16x32xf32>
    %107 = vector.extract_strided_slice %96 {offsets = [1, 0, 0], sizes = [1, 1, 32], strides = [1, 1, 1]} : vector<5x5x32xf32> to vector<1x1x32xf32>
    %108 = vector.shape_cast %107 : vector<1x1x32xf32> to vector<32xf32>
    %109 = vector.shape_cast %108 : vector<32xf32> to vector<1x1x32xf32>
    %110 = vector.broadcast %109 : vector<1x1x32xf32> to vector<16x16x32xf32>
    %111 = arith.mulf %106, %110 : vector<16x16x32xf32>
    %112 = arith.addf %105, %111 : vector<16x16x32xf32>
    %113 = vector.extract_strided_slice %98 {offsets = [2, 0, 0], sizes = [16, 16, 32], strides = [1, 1, 1]} : vector<20x16x32xf32> to vector<16x16x32xf32>
    %114 = vector.extract_strided_slice %96 {offsets = [2, 0, 0], sizes = [1, 1, 32], strides = [1, 1, 1]} : vector<5x5x32xf32> to vector<1x1x32xf32>
    %115 = vector.shape_cast %114 : vector<1x1x32xf32> to vector<32xf32>
    %116 = vector.shape_cast %115 : vector<32xf32> to vector<1x1x32xf32>
    %117 = vector.broadcast %116 : vector<1x1x32xf32> to vector<16x16x32xf32>
    %118 = arith.mulf %113, %117 : vector<16x16x32xf32>
    %119 = arith.addf %112, %118 : vector<16x16x32xf32>
    %120 = vector.extract_strided_slice %98 {offsets = [3, 0, 0], sizes = [16, 16, 32], strides = [1, 1, 1]} : vector<20x16x32xf32> to vector<16x16x32xf32>
    %121 = vector.extract_strided_slice %96 {offsets = [3, 0, 0], sizes = [1, 1, 32], strides = [1, 1, 1]} : vector<5x5x32xf32> to vector<1x1x32xf32>
    %122 = vector.shape_cast %121 : vector<1x1x32xf32> to vector<32xf32>
    %123 = vector.shape_cast %122 : vector<32xf32> to vector<1x1x32xf32>
    %124 = vector.broadcast %123 : vector<1x1x32xf32> to vector<16x16x32xf32>
    %125 = arith.mulf %120, %124 : vector<16x16x32xf32>
    %126 = arith.addf %119, %125 : vector<16x16x32xf32>
    %127 = vector.extract_strided_slice %98 {offsets = [4, 0, 0], sizes = [16, 16, 32], strides = [1, 1, 1]} : vector<20x16x32xf32> to vector<16x16x32xf32>
    %128 = vector.extract_strided_slice %96 {offsets = [4, 0, 0], sizes = [1, 1, 32], strides = [1, 1, 1]} : vector<5x5x32xf32> to vector<1x1x32xf32>
    %129 = vector.shape_cast %128 : vector<1x1x32xf32> to vector<32xf32>
    %130 = vector.shape_cast %129 : vector<32xf32> to vector<1x1x32xf32>
    %131 = vector.broadcast %130 : vector<1x1x32xf32> to vector<16x16x32xf32>
    %132 = arith.mulf %127, %131 : vector<16x16x32xf32>
    %133 = arith.addf %126, %132 : vector<16x16x32xf32>
    %c0_36 = arith.constant 0 : index
    %c7_37 = arith.constant 7 : index
    %c0_38 = arith.constant 0 : index
    %134 = vector.load %arg8[%c0_36, %c7_37, %c0_38] : memref<20x26x32xf32, #tpu.memory_space<vmem>>, vector<20x16x32xf32>
    %135 = vector.extract_strided_slice %134 {offsets = [0, 0, 0], sizes = [16, 16, 32], strides = [1, 1, 1]} : vector<20x16x32xf32> to vector<16x16x32xf32>
    %136 = vector.extract_strided_slice %96 {offsets = [0, 1, 0], sizes = [1, 1, 32], strides = [1, 1, 1]} : vector<5x5x32xf32> to vector<1x1x32xf32>
    %137 = vector.shape_cast %136 : vector<1x1x32xf32> to vector<32xf32>
    %138 = vector.shape_cast %137 : vector<32xf32> to vector<1x1x32xf32>
    %139 = vector.broadcast %138 : vector<1x1x32xf32> to vector<16x16x32xf32>
    %140 = arith.mulf %135, %139 : vector<16x16x32xf32>
    %141 = arith.addf %133, %140 : vector<16x16x32xf32>
    %142 = vector.extract_strided_slice %134 {offsets = [1, 0, 0], sizes = [16, 16, 32], strides = [1, 1, 1]} : vector<20x16x32xf32> to vector<16x16x32xf32>
    %143 = vector.extract_strided_slice %96 {offsets = [1, 1, 0], sizes = [1, 1, 32], strides = [1, 1, 1]} : vector<5x5x32xf32> to vector<1x1x32xf32>
    %144 = vector.shape_cast %143 : vector<1x1x32xf32> to vector<32xf32>
    %145 = vector.shape_cast %144 : vector<32xf32> to vector<1x1x32xf32>
    %146 = vector.broadcast %145 : vector<1x1x32xf32> to vector<16x16x32xf32>
    %147 = arith.mulf %142, %146 : vector<16x16x32xf32>
    %148 = arith.addf %141, %147 : vector<16x16x32xf32>
    %149 = vector.extract_strided_slice %134 {offsets = [2, 0, 0], sizes = [16, 16, 32], strides = [1, 1, 1]} : vector<20x16x32xf32> to vector<16x16x32xf32>
    %150 = vector.extract_strided_slice %96 {offsets = [2, 1, 0], sizes = [1, 1, 32], strides = [1, 1, 1]} : vector<5x5x32xf32> to vector<1x1x32xf32>
    %151 = vector.shape_cast %150 : vector<1x1x32xf32> to vector<32xf32>
    %152 = vector.shape_cast %151 : vector<32xf32> to vector<1x1x32xf32>
    %153 = vector.broadcast %152 : vector<1x1x32xf32> to vector<16x16x32xf32>
    %154 = arith.mulf %149, %153 : vector<16x16x32xf32>
    %155 = arith.addf %148, %154 : vector<16x16x32xf32>
    %156 = vector.extract_strided_slice %134 {offsets = [3, 0, 0], sizes = [16, 16, 32], strides = [1, 1, 1]} : vector<20x16x32xf32> to vector<16x16x32xf32>
    %157 = vector.extract_strided_slice %96 {offsets = [3, 1, 0], sizes = [1, 1, 32], strides = [1, 1, 1]} : vector<5x5x32xf32> to vector<1x1x32xf32>
    %158 = vector.shape_cast %157 : vector<1x1x32xf32> to vector<32xf32>
    %159 = vector.shape_cast %158 : vector<32xf32> to vector<1x1x32xf32>
    %160 = vector.broadcast %159 : vector<1x1x32xf32> to vector<16x16x32xf32>
    %161 = arith.mulf %156, %160 : vector<16x16x32xf32>
    %162 = arith.addf %155, %161 : vector<16x16x32xf32>
    %163 = vector.extract_strided_slice %134 {offsets = [4, 0, 0], sizes = [16, 16, 32], strides = [1, 1, 1]} : vector<20x16x32xf32> to vector<16x16x32xf32>
    %164 = vector.extract_strided_slice %96 {offsets = [4, 1, 0], sizes = [1, 1, 32], strides = [1, 1, 1]} : vector<5x5x32xf32> to vector<1x1x32xf32>
    %165 = vector.shape_cast %164 : vector<1x1x32xf32> to vector<32xf32>
    %166 = vector.shape_cast %165 : vector<32xf32> to vector<1x1x32xf32>
    %167 = vector.broadcast %166 : vector<1x1x32xf32> to vector<16x16x32xf32>
    %168 = arith.mulf %163, %167 : vector<16x16x32xf32>
    %169 = arith.addf %162, %168 : vector<16x16x32xf32>
    %c0_39 = arith.constant 0 : index
    %c8_40 = arith.constant 8 : index
    %c0_41 = arith.constant 0 : index
    %170 = vector.load %arg8[%c0_39, %c8_40, %c0_41] : memref<20x26x32xf32, #tpu.memory_space<vmem>>, vector<20x16x32xf32>
    %171 = vector.extract_strided_slice %170 {offsets = [0, 0, 0], sizes = [16, 16, 32], strides = [1, 1, 1]} : vector<20x16x32xf32> to vector<16x16x32xf32>
    %172 = vector.extract_strided_slice %96 {offsets = [0, 2, 0], sizes = [1, 1, 32], strides = [1, 1, 1]} : vector<5x5x32xf32> to vector<1x1x32xf32>
    %173 = vector.shape_cast %172 : vector<1x1x32xf32> to vector<32xf32>
    %174 = vector.shape_cast %173 : vector<32xf32> to vector<1x1x32xf32>
    %175 = vector.broadcast %174 : vector<1x1x32xf32> to vector<16x16x32xf32>
    %176 = arith.mulf %171, %175 : vector<16x16x32xf32>
    %177 = arith.addf %169, %176 : vector<16x16x32xf32>
    %178 = vector.extract_strided_slice %170 {offsets = [1, 0, 0], sizes = [16, 16, 32], strides = [1, 1, 1]} : vector<20x16x32xf32> to vector<16x16x32xf32>
    %179 = vector.extract_strided_slice %96 {offsets = [1, 2, 0], sizes = [1, 1, 32], strides = [1, 1, 1]} : vector<5x5x32xf32> to vector<1x1x32xf32>
    %180 = vector.shape_cast %179 : vector<1x1x32xf32> to vector<32xf32>
    %181 = vector.shape_cast %180 : vector<32xf32> to vector<1x1x32xf32>
    %182 = vector.broadcast %181 : vector<1x1x32xf32> to vector<16x16x32xf32>
    %183 = arith.mulf %178, %182 : vector<16x16x32xf32>
    %184 = arith.addf %177, %183 : vector<16x16x32xf32>
    %185 = vector.extract_strided_slice %170 {offsets = [2, 0, 0], sizes = [16, 16, 32], strides = [1, 1, 1]} : vector<20x16x32xf32> to vector<16x16x32xf32>
    %186 = vector.extract_strided_slice %96 {offsets = [2, 2, 0], sizes = [1, 1, 32], strides = [1, 1, 1]} : vector<5x5x32xf32> to vector<1x1x32xf32>
    %187 = vector.shape_cast %186 : vector<1x1x32xf32> to vector<32xf32>
    %188 = vector.shape_cast %187 : vector<32xf32> to vector<1x1x32xf32>
    %189 = vector.broadcast %188 : vector<1x1x32xf32> to vector<16x16x32xf32>
    %190 = arith.mulf %185, %189 : vector<16x16x32xf32>
    %191 = arith.addf %184, %190 : vector<16x16x32xf32>
    %192 = vector.extract_strided_slice %170 {offsets = [3, 0, 0], sizes = [16, 16, 32], strides = [1, 1, 1]} : vector<20x16x32xf32> to vector<16x16x32xf32>
    %193 = vector.extract_strided_slice %96 {offsets = [3, 2, 0], sizes = [1, 1, 32], strides = [1, 1, 1]} : vector<5x5x32xf32> to vector<1x1x32xf32>
    %194 = vector.shape_cast %193 : vector<1x1x32xf32> to vector<32xf32>
    %195 = vector.shape_cast %194 : vector<32xf32> to vector<1x1x32xf32>
    %196 = vector.broadcast %195 : vector<1x1x32xf32> to vector<16x16x32xf32>
    %197 = arith.mulf %192, %196 : vector<16x16x32xf32>
    %198 = arith.addf %191, %197 : vector<16x16x32xf32>
    %199 = vector.extract_strided_slice %170 {offsets = [4, 0, 0], sizes = [16, 16, 32], strides = [1, 1, 1]} : vector<20x16x32xf32> to vector<16x16x32xf32>
    %200 = vector.extract_strided_slice %96 {offsets = [4, 2, 0], sizes = [1, 1, 32], strides = [1, 1, 1]} : vector<5x5x32xf32> to vector<1x1x32xf32>
    %201 = vector.shape_cast %200 : vector<1x1x32xf32> to vector<32xf32>
    %202 = vector.shape_cast %201 : vector<32xf32> to vector<1x1x32xf32>
    %203 = vector.broadcast %202 : vector<1x1x32xf32> to vector<16x16x32xf32>
    %204 = arith.mulf %199, %203 : vector<16x16x32xf32>
    %205 = arith.addf %198, %204 : vector<16x16x32xf32>
    %c0_42 = arith.constant 0 : index
    %c9_43 = arith.constant 9 : index
    %c0_44 = arith.constant 0 : index
    %206 = vector.load %arg8[%c0_42, %c9_43, %c0_44] : memref<20x26x32xf32, #tpu.memory_space<vmem>>, vector<20x16x32xf32>
    %207 = vector.extract_strided_slice %206 {offsets = [0, 0, 0], sizes = [16, 16, 32], strides = [1, 1, 1]} : vector<20x16x32xf32> to vector<16x16x32xf32>
    %208 = vector.extract_strided_slice %96 {offsets = [0, 3, 0], sizes = [1, 1, 32], strides = [1, 1, 1]} : vector<5x5x32xf32> to vector<1x1x32xf32>
    %209 = vector.shape_cast %208 : vector<1x1x32xf32> to vector<32xf32>
    %210 = vector.shape_cast %209 : vector<32xf32> to vector<1x1x32xf32>
    %211 = vector.broadcast %210 : vector<1x1x32xf32> to vector<16x16x32xf32>
    %212 = arith.mulf %207, %211 : vector<16x16x32xf32>
    %213 = arith.addf %205, %212 : vector<16x16x32xf32>
    %214 = vector.extract_strided_slice %206 {offsets = [1, 0, 0], sizes = [16, 16, 32], strides = [1, 1, 1]} : vector<20x16x32xf32> to vector<16x16x32xf32>
    %215 = vector.extract_strided_slice %96 {offsets = [1, 3, 0], sizes = [1, 1, 32], strides = [1, 1, 1]} : vector<5x5x32xf32> to vector<1x1x32xf32>
    %216 = vector.shape_cast %215 : vector<1x1x32xf32> to vector<32xf32>
    %217 = vector.shape_cast %216 : vector<32xf32> to vector<1x1x32xf32>
    %218 = vector.broadcast %217 : vector<1x1x32xf32> to vector<16x16x32xf32>
    %219 = arith.mulf %214, %218 : vector<16x16x32xf32>
    %220 = arith.addf %213, %219 : vector<16x16x32xf32>
    %221 = vector.extract_strided_slice %206 {offsets = [2, 0, 0], sizes = [16, 16, 32], strides = [1, 1, 1]} : vector<20x16x32xf32> to vector<16x16x32xf32>
    %222 = vector.extract_strided_slice %96 {offsets = [2, 3, 0], sizes = [1, 1, 32], strides = [1, 1, 1]} : vector<5x5x32xf32> to vector<1x1x32xf32>
    %223 = vector.shape_cast %222 : vector<1x1x32xf32> to vector<32xf32>
    %224 = vector.shape_cast %223 : vector<32xf32> to vector<1x1x32xf32>
    %225 = vector.broadcast %224 : vector<1x1x32xf32> to vector<16x16x32xf32>
    %226 = arith.mulf %221, %225 : vector<16x16x32xf32>
    %227 = arith.addf %220, %226 : vector<16x16x32xf32>
    %228 = vector.extract_strided_slice %206 {offsets = [3, 0, 0], sizes = [16, 16, 32], strides = [1, 1, 1]} : vector<20x16x32xf32> to vector<16x16x32xf32>
    %229 = vector.extract_strided_slice %96 {offsets = [3, 3, 0], sizes = [1, 1, 32], strides = [1, 1, 1]} : vector<5x5x32xf32> to vector<1x1x32xf32>
    %230 = vector.shape_cast %229 : vector<1x1x32xf32> to vector<32xf32>
    %231 = vector.shape_cast %230 : vector<32xf32> to vector<1x1x32xf32>
    %232 = vector.broadcast %231 : vector<1x1x32xf32> to vector<16x16x32xf32>
    %233 = arith.mulf %228, %232 : vector<16x16x32xf32>
    %234 = arith.addf %227, %233 : vector<16x16x32xf32>
    %235 = vector.extract_strided_slice %206 {offsets = [4, 0, 0], sizes = [16, 16, 32], strides = [1, 1, 1]} : vector<20x16x32xf32> to vector<16x16x32xf32>
    %236 = vector.extract_strided_slice %96 {offsets = [4, 3, 0], sizes = [1, 1, 32], strides = [1, 1, 1]} : vector<5x5x32xf32> to vector<1x1x32xf32>
    %237 = vector.shape_cast %236 : vector<1x1x32xf32> to vector<32xf32>
    %238 = vector.shape_cast %237 : vector<32xf32> to vector<1x1x32xf32>
    %239 = vector.broadcast %238 : vector<1x1x32xf32> to vector<16x16x32xf32>
    %240 = arith.mulf %235, %239 : vector<16x16x32xf32>
    %241 = arith.addf %234, %240 : vector<16x16x32xf32>
    %c0_45 = arith.constant 0 : index
    %c10 = arith.constant 10 : index
    %c0_46 = arith.constant 0 : index
    %242 = vector.load %arg8[%c0_45, %c10, %c0_46] : memref<20x26x32xf32, #tpu.memory_space<vmem>>, vector<20x16x32xf32>
    %243 = vector.extract_strided_slice %242 {offsets = [0, 0, 0], sizes = [16, 16, 32], strides = [1, 1, 1]} : vector<20x16x32xf32> to vector<16x16x32xf32>
    %244 = vector.extract_strided_slice %96 {offsets = [0, 4, 0], sizes = [1, 1, 32], strides = [1, 1, 1]} : vector<5x5x32xf32> to vector<1x1x32xf32>
    %245 = vector.shape_cast %244 : vector<1x1x32xf32> to vector<32xf32>
    %246 = vector.shape_cast %245 : vector<32xf32> to vector<1x1x32xf32>
    %247 = vector.broadcast %246 : vector<1x1x32xf32> to vector<16x16x32xf32>
    %248 = arith.mulf %243, %247 : vector<16x16x32xf32>
    %249 = arith.addf %241, %248 : vector<16x16x32xf32>
    %250 = vector.extract_strided_slice %242 {offsets = [1, 0, 0], sizes = [16, 16, 32], strides = [1, 1, 1]} : vector<20x16x32xf32> to vector<16x16x32xf32>
    %251 = vector.extract_strided_slice %96 {offsets = [1, 4, 0], sizes = [1, 1, 32], strides = [1, 1, 1]} : vector<5x5x32xf32> to vector<1x1x32xf32>
    %252 = vector.shape_cast %251 : vector<1x1x32xf32> to vector<32xf32>
    %253 = vector.shape_cast %252 : vector<32xf32> to vector<1x1x32xf32>
    %254 = vector.broadcast %253 : vector<1x1x32xf32> to vector<16x16x32xf32>
    %255 = arith.mulf %250, %254 : vector<16x16x32xf32>
    %256 = arith.addf %249, %255 : vector<16x16x32xf32>
    %257 = vector.extract_strided_slice %242 {offsets = [2, 0, 0], sizes = [16, 16, 32], strides = [1, 1, 1]} : vector<20x16x32xf32> to vector<16x16x32xf32>
    %258 = vector.extract_strided_slice %96 {offsets = [2, 4, 0], sizes = [1, 1, 32], strides = [1, 1, 1]} : vector<5x5x32xf32> to vector<1x1x32xf32>
    %259 = vector.shape_cast %258 : vector<1x1x32xf32> to vector<32xf32>
    %260 = vector.shape_cast %259 : vector<32xf32> to vector<1x1x32xf32>
    %261 = vector.broadcast %260 : vector<1x1x32xf32> to vector<16x16x32xf32>
    %262 = arith.mulf %257, %261 : vector<16x16x32xf32>
    %263 = arith.addf %256, %262 : vector<16x16x32xf32>
    %264 = vector.extract_strided_slice %242 {offsets = [3, 0, 0], sizes = [16, 16, 32], strides = [1, 1, 1]} : vector<20x16x32xf32> to vector<16x16x32xf32>
    %265 = vector.extract_strided_slice %96 {offsets = [3, 4, 0], sizes = [1, 1, 32], strides = [1, 1, 1]} : vector<5x5x32xf32> to vector<1x1x32xf32>
    %266 = vector.shape_cast %265 : vector<1x1x32xf32> to vector<32xf32>
    %267 = vector.shape_cast %266 : vector<32xf32> to vector<1x1x32xf32>
    %268 = vector.broadcast %267 : vector<1x1x32xf32> to vector<16x16x32xf32>
    %269 = arith.mulf %264, %268 : vector<16x16x32xf32>
    %270 = arith.addf %263, %269 : vector<16x16x32xf32>
    %271 = vector.extract_strided_slice %242 {offsets = [4, 0, 0], sizes = [16, 16, 32], strides = [1, 1, 1]} : vector<20x16x32xf32> to vector<16x16x32xf32>
    %272 = vector.extract_strided_slice %96 {offsets = [4, 4, 0], sizes = [1, 1, 32], strides = [1, 1, 1]} : vector<5x5x32xf32> to vector<1x1x32xf32>
    %273 = vector.shape_cast %272 : vector<1x1x32xf32> to vector<32xf32>
    %274 = vector.shape_cast %273 : vector<32xf32> to vector<1x1x32xf32>
    %275 = vector.broadcast %274 : vector<1x1x32xf32> to vector<16x16x32xf32>
    %276 = arith.mulf %271, %275 : vector<16x16x32xf32>
    %277 = arith.addf %270, %276 : vector<16x16x32xf32>
    %cst_47 = arith.constant 5.000000e-01 : f32
    %278 = vector.broadcast %cst_47 : f32 to vector<16x16x32xf32>
    %279 = arith.mulf %278, %277 : vector<16x16x32xf32>
    %cst_48 = arith.constant 4.471500e-02 : f32
    %280 = vector.broadcast %cst_48 : f32 to vector<16x16x32xf32>
    %281 = arith.mulf %280, %277 : vector<16x16x32xf32>
    %282 = arith.mulf %281, %277 : vector<16x16x32xf32>
    %283 = arith.mulf %282, %277 : vector<16x16x32xf32>
    %284 = arith.addf %277, %283 : vector<16x16x32xf32>
    %cst_49 = arith.constant 0.797884583 : f32
    %285 = vector.broadcast %cst_49 : f32 to vector<16x16x32xf32>
    %286 = arith.mulf %285, %284 : vector<16x16x32xf32>
    %287 = math.tanh %286 : vector<16x16x32xf32>
    %cst_50 = arith.constant 1.000000e+00 : f32
    %288 = vector.broadcast %cst_50 : f32 to vector<16x16x32xf32>
    %289 = arith.addf %288, %287 : vector<16x16x32xf32>
    %290 = arith.mulf %279, %289 : vector<16x16x32xf32>
    %291 = vector.extract_strided_slice %7 {offsets = [0, 0, 1], sizes = [16, 16, 1], strides = [1, 1, 1]} : vector<16x16x3xf32> to vector<16x16x1xf32>
    %292 = vector.broadcast %291 : vector<16x16x1xf32> to vector<16x16x32xf32>
    %293 = arith.mulf %290, %292 : vector<16x16x32xf32>
    %294 = arith.addf %94, %293 : vector<16x16x32xf32>
    %295 = arith.truncf %294 : vector<16x16x32xf32> to vector<16x16x32xbf16>
    %c0_51 = arith.constant 0 : index
    %c0_52 = arith.constant 0 : index
    %c0_53 = arith.constant 0 : index
    %c0_54 = arith.constant 0 : index
    %296 = vector.load %arg6[%c0_51, %c0_52, %c0_53, %c0_54] : memref<1x16x16x32xbf16, #tpu.memory_space<vmem>>, vector<1x16x16x32xbf16>
    %297 = vector.shape_cast %296 : vector<1x16x16x32xbf16> to vector<16x16x32xbf16>
    %298 = vector.shape_cast %295 : vector<16x16x32xbf16> to vector<1x16x16x32xbf16>
    tpu.vector_store %arg6[%c0_51, %c0_52, %c0_53, %c0_54], %298 {strides = array<i32>} : memref<1x16x16x32xbf16, #tpu.memory_space<vmem>>, vector<1x16x16x32xbf16>,
    %cst_55 = arith.constant dense<0.000000e+00> : vector<32xf32>
    %299 = vector.multi_reduction <add>, %294, %cst_55 [0, 1] : vector<16x16x32xf32> to vector<32xf32>
    %cst_56 = arith.constant 2.560000e+02 : f32
    %300 = vector.broadcast %cst_56 : f32 to vector<32xf32>
    %301 = arith.divf %299, %300 : vector<32xf32>
    %302 = vector.shape_cast %301 : vector<32xf32> to vector<1x1x32xf32>
    %c0_57 = arith.constant 0 : index
    %c0_58 = arith.constant 0 : index
    %c0_59 = arith.constant 0 : index
    %303 = vector.load %arg7[%c0_57, %c0_58, %c0_59] : memref<1x1x32xf32, #tpu.memory_space<vmem>>, vector<1x1x32xf32>
    tpu.vector_store %arg7[%c0_57, %c0_58, %c0_59], %302 {strides = array<i32>} : memref<1x1x32xf32, #tpu.memory_space<vmem>>, vector<1x1x32xf32>,
    return
  }
  func.func @transform_0(%arg0: i32, %arg1: i32) -> (i32, i32, i32, i32) {
    %c0_i32 = arith.constant 0 : i32
    %c0_i32_0 = arith.constant 0 : i32
    %c0_i32_1 = arith.constant 0 : i32
    return %arg0, %c0_i32, %c0_i32_0, %arg1 : i32, i32, i32, i32
  }
  func.func @transform_1(%arg0: i32, %arg1: i32) -> (i32, i32, i32, i32) {
    %c0_i32 = arith.constant 0 : i32
    %c0_i32_0 = arith.constant 0 : i32
    %c0_i32_1 = arith.constant 0 : i32
    %c0_i32_2 = arith.constant 0 : i32
    return %arg0, %c0_i32, %c0_i32_0, %c0_i32_1 : i32, i32, i32, i32
  }
  func.func @transform_2(%arg0: i32, %arg1: i32) -> (i32, i32, i32) {
    %c0_i32 = arith.constant 0 : i32
    %c0_i32_0 = arith.constant 0 : i32
    %c0_i32_1 = arith.constant 0 : i32
    return %c0_i32, %c0_i32_0, %arg1 : i32, i32, i32
  }
  func.func @transform_3(%arg0: i32, %arg1: i32) -> (i32, i32, i32) {
    %c0_i32 = arith.constant 0 : i32
    %c0_i32_0 = arith.constant 0 : i32
    %c0_i32_1 = arith.constant 0 : i32
    return %c0_i32, %c0_i32_0, %arg1 : i32, i32, i32
  }
  func.func @transform_4(%arg0: i32, %arg1: i32) -> (i32, i32, i32, i32) {
    %c0_i32 = arith.constant 0 : i32
    %c0_i32_0 = arith.constant 0 : i32
    %c0_i32_1 = arith.constant 0 : i32
    return %arg0, %c0_i32, %c0_i32_0, %arg1 : i32, i32, i32, i32
  }
  func.func @transform_5(%arg0: i32, %arg1: i32) -> (i32, i32, i32) {
    %c0_i32 = arith.constant 0 : i32
    %c0_i32_0 = arith.constant 0 : i32
    return %arg0, %c0_i32, %arg1 : i32, i32, i32
  }
}

module attributes {stable_mosaic.version = 11 : i64} {
  func.func @_combine_mod_proj_kernel(%arg0: i32, %arg1: i32, %arg2: memref<1x256x32xbf16, #tpu.memory_space<vmem>>, %arg3: memref<1x1x32xf32, #tpu.memory_space<vmem>>, %arg4: memref<1x256x3xbf16, #tpu.memory_space<vmem>>, %arg5: memref<1x256x32xbf16, #tpu.memory_space<vmem>>, %arg6: memref<32x32xbf16, #tpu.memory_space<vmem>>, %arg7: memref<32x32xbf16, #tpu.memory_space<vmem>>, %arg8: memref<1x32xf32, #tpu.memory_space<vmem>>, %arg9: memref<1x256x32xf32, #tpu.memory_space<vmem>>) attributes {dimension_semantics = [#tpu.dimension_semantics<parallel>, #tpu.dimension_semantics<parallel>], iteration_bounds = array<i64: 2, 1>, scalar_prefetch = 0 : i64, scratch_operands = 0 : i64, tpu.core_type = #tpu.core_type<tc>, window_params = [{transform_indices = @transform_0, window_bounds = array<i64: 1, 256, 32>}, {transform_indices = @transform_1, window_bounds = array<i64: 1, 1, 32>}, {transform_indices = @transform_2, window_bounds = array<i64: 1, 256, 3>}, {transform_indices = @transform_3, window_bounds = array<i64: 1, 256, 32>}, {pipeline_mode = #tpu.pipeline_mode<synchronous>, transform_indices = @transform_4, window_bounds = array<i64: 32, 32>}, {pipeline_mode = #tpu.pipeline_mode<synchronous>, transform_indices = @transform_5, window_bounds = array<i64: 32, 32>}, {pipeline_mode = #tpu.pipeline_mode<synchronous>, transform_indices = @transform_6, window_bounds = array<i64: 1, 32>}, {transform_indices = @transform_7, window_bounds = array<i64: 1, 256, 32>}]} {
    %c0 = arith.constant 0 : index
    %c0_0 = arith.constant 0 : index
    %c0_1 = arith.constant 0 : index
    %0 = vector.load %arg2[%c0, %c0_0, %c0_1] : memref<1x256x32xbf16, #tpu.memory_space<vmem>>, vector<1x256x32xbf16>
    %1 = vector.shape_cast %0 : vector<1x256x32xbf16> to vector<256x32xbf16>
    %2 = arith.extf %1 : vector<256x32xbf16> to vector<256x32xf32>
    %c0_2 = arith.constant 0 : index
    %c0_3 = arith.constant 0 : index
    %c0_4 = arith.constant 0 : index
    %3 = vector.load %arg3[%c0_2, %c0_3, %c0_4] : memref<1x1x32xf32, #tpu.memory_space<vmem>>, vector<1x1x32xf32>
    %4 = vector.shape_cast %3 : vector<1x1x32xf32> to vector<1x32xf32>
    %c0_5 = arith.constant 0 : index
    %c0_6 = arith.constant 0 : index
    %c0_7 = arith.constant 0 : index
    %5 = vector.load %arg4[%c0_5, %c0_6, %c0_7] : memref<1x256x3xbf16, #tpu.memory_space<vmem>>, vector<1x256x3xbf16>
    %6 = vector.shape_cast %5 : vector<1x256x3xbf16> to vector<256x3xbf16>
    %7 = vector.extract_strided_slice %6 {offsets = [0, 2], sizes = [256, 1], strides = [1, 1]} : vector<256x3xbf16> to vector<256x1xbf16>
    %8 = arith.extf %7 : vector<256x1xbf16> to vector<256x1xf32>
    %9 = vector.broadcast %4 : vector<1x32xf32> to vector<256x32xf32>
    %10 = vector.broadcast %8 : vector<256x1xf32> to vector<256x32xf32>
    %11 = arith.mulf %9, %10 : vector<256x32xf32>
    %12 = arith.addf %2, %11 : vector<256x32xf32>
    %cst = arith.constant 0.333333343 : f32
    %13 = vector.broadcast %cst : f32 to vector<256x32xf32>
    %14 = arith.mulf %12, %13 : vector<256x32xf32>
    %15 = arith.truncf %14 : vector<256x32xf32> to vector<256x32xbf16>
    %c0_8 = arith.constant 0 : index
    %c0_9 = arith.constant 0 : index
    %16 = vector.load %arg6[%c0_8, %c0_9] : memref<32x32xbf16, #tpu.memory_space<vmem>>, vector<32x32xbf16>
    %cst_10 = arith.constant dense<0.000000e+00> : vector<256x32xf32>
    %17 = tpu.matmul %15, %16, %cst_10 {dimension_numbers = #tpu.dot_dimension_numbers<[1], [0], [0], [1], [0, 0, 1, 1], [], []>} : vector<256x32xbf16>, vector<32x32xbf16>, vector<256x32xf32> -> vector<256x32xf32>
    %c0_11 = arith.constant 0 : index
    %c0_12 = arith.constant 0 : index
    %c0_13 = arith.constant 0 : index
    %18 = vector.load %arg5[%c0_11, %c0_12, %c0_13] : memref<1x256x32xbf16, #tpu.memory_space<vmem>>, vector<1x256x32xbf16>
    %19 = vector.shape_cast %18 : vector<1x256x32xbf16> to vector<256x32xbf16>
    %20 = arith.extf %19 : vector<256x32xbf16> to vector<256x32xf32>
    %21 = arith.mulf %20, %17 : vector<256x32xf32>
    %22 = arith.truncf %21 : vector<256x32xf32> to vector<256x32xbf16>
    %c0_14 = arith.constant 0 : index
    %c0_15 = arith.constant 0 : index
    %23 = vector.load %arg7[%c0_14, %c0_15] : memref<32x32xbf16, #tpu.memory_space<vmem>>, vector<32x32xbf16>
    %cst_16 = arith.constant dense<0.000000e+00> : vector<256x32xf32>
    %24 = tpu.matmul %22, %23, %cst_16 {dimension_numbers = #tpu.dot_dimension_numbers<[1], [0], [0], [1], [0, 0, 1, 1], [], []>} : vector<256x32xbf16>, vector<32x32xbf16>, vector<256x32xf32> -> vector<256x32xf32>
    %c0_17 = arith.constant 0 : index
    %c0_18 = arith.constant 0 : index
    %25 = vector.load %arg8[%c0_17, %c0_18] : memref<1x32xf32, #tpu.memory_space<vmem>>, vector<1x32xf32>
    %26 = vector.broadcast %25 : vector<1x32xf32> to vector<256x32xf32>
    %27 = arith.addf %24, %26 : vector<256x32xf32>
    %c0_19 = arith.constant 0 : index
    %c0_20 = arith.constant 0 : index
    %c0_21 = arith.constant 0 : index
    %28 = vector.load %arg9[%c0_19, %c0_20, %c0_21] : memref<1x256x32xf32, #tpu.memory_space<vmem>>, vector<1x256x32xf32>
    %29 = vector.shape_cast %28 : vector<1x256x32xf32> to vector<256x32xf32>
    %30 = vector.shape_cast %27 : vector<256x32xf32> to vector<1x256x32xf32>
    tpu.vector_store %arg9[%c0_19, %c0_20, %c0_21], %30 {strides = array<i32>} : memref<1x256x32xf32, #tpu.memory_space<vmem>>, vector<1x256x32xf32>,
    return
  }
  func.func @transform_0(%arg0: i32, %arg1: i32) -> (i32, i32, i32) {
    %c0_i32 = arith.constant 0 : i32
    %c0_i32_0 = arith.constant 0 : i32
    return %arg0, %arg1, %c0_i32 : i32, i32, i32
  }
  func.func @transform_1(%arg0: i32, %arg1: i32) -> (i32, i32, i32) {
    %c0_i32 = arith.constant 0 : i32
    %c0_i32_0 = arith.constant 0 : i32
    %c0_i32_1 = arith.constant 0 : i32
    return %arg0, %c0_i32, %c0_i32_0 : i32, i32, i32
  }
  func.func @transform_2(%arg0: i32, %arg1: i32) -> (i32, i32, i32) {
    %c0_i32 = arith.constant 0 : i32
    %c0_i32_0 = arith.constant 0 : i32
    return %arg0, %arg1, %c0_i32 : i32, i32, i32
  }
  func.func @transform_3(%arg0: i32, %arg1: i32) -> (i32, i32, i32) {
    %c0_i32 = arith.constant 0 : i32
    %c0_i32_0 = arith.constant 0 : i32
    return %arg0, %arg1, %c0_i32 : i32, i32, i32
  }
  func.func @transform_4(%arg0: i32, %arg1: i32) -> (i32, i32) {
    %c0_i32 = arith.constant 0 : i32
    %c0_i32_0 = arith.constant 0 : i32
    %c0_i32_1 = arith.constant 0 : i32
    return %c0_i32, %c0_i32_0 : i32, i32
  }
  func.func @transform_5(%arg0: i32, %arg1: i32) -> (i32, i32) {
    %c0_i32 = arith.constant 0 : i32
    %c0_i32_0 = arith.constant 0 : i32
    %c0_i32_1 = arith.constant 0 : i32
    return %c0_i32, %c0_i32_0 : i32, i32
  }
  func.func @transform_6(%arg0: i32, %arg1: i32) -> (i32, i32) {
    %c0_i32 = arith.constant 0 : i32
    %c0_i32_0 = arith.constant 0 : i32
    %c0_i32_1 = arith.constant 0 : i32
    return %c0_i32, %c0_i32_0 : i32, i32
  }
  func.func @transform_7(%arg0: i32, %arg1: i32) -> (i32, i32, i32) {
    %c0_i32 = arith.constant 0 : i32
    %c0_i32_0 = arith.constant 0 : i32
    return %arg0, %arg1, %c0_i32 : i32, i32, i32
  }
}

module attributes {stable_mosaic.version = 11 : i64} {
  func.func @_norm2_mlp_kernel(%arg0: i32, %arg1: memref<256x32xf32, #tpu.memory_space<vmem>>, %arg2: memref<1x32xf32, #tpu.memory_space<vmem>>, %arg3: memref<1x32xf32, #tpu.memory_space<vmem>>, %arg4: memref<32x128xbf16, #tpu.memory_space<vmem>>, %arg5: memref<1x128xf32, #tpu.memory_space<vmem>>, %arg6: memref<128x32xbf16, #tpu.memory_space<vmem>>, %arg7: memref<1x32xf32, #tpu.memory_space<vmem>>, %arg8: memref<256x32xf32, #tpu.memory_space<vmem>>) attributes {dimension_semantics = [#tpu.dimension_semantics<parallel>], iteration_bounds = array<i64: 2>, scalar_prefetch = 0 : i64, scratch_operands = 0 : i64, tpu.core_type = #tpu.core_type<tc>, window_params = [{transform_indices = @transform_0, window_bounds = array<i64: 256, 32>}, {pipeline_mode = #tpu.pipeline_mode<synchronous>, transform_indices = @transform_1, window_bounds = array<i64: 1, 32>}, {pipeline_mode = #tpu.pipeline_mode<synchronous>, transform_indices = @transform_2, window_bounds = array<i64: 1, 32>}, {pipeline_mode = #tpu.pipeline_mode<synchronous>, transform_indices = @transform_3, window_bounds = array<i64: 32, 128>}, {pipeline_mode = #tpu.pipeline_mode<synchronous>, transform_indices = @transform_4, window_bounds = array<i64: 1, 128>}, {pipeline_mode = #tpu.pipeline_mode<synchronous>, transform_indices = @transform_5, window_bounds = array<i64: 128, 32>}, {pipeline_mode = #tpu.pipeline_mode<synchronous>, transform_indices = @transform_6, window_bounds = array<i64: 1, 32>}, {transform_indices = @transform_7, window_bounds = array<i64: 256, 32>}]} {
    %c0 = arith.constant 0 : index
    %c0_0 = arith.constant 0 : index
    %0 = vector.load %arg1[%c0, %c0_0] : memref<256x32xf32, #tpu.memory_space<vmem>>, vector<256x32xf32>
    %cst = arith.constant dense<0.000000e+00> : vector<256xf32>
    %1 = vector.multi_reduction <add>, %0, %cst [1] : vector<256x32xf32> to vector<256xf32>
    %2 = vector.shape_cast %1 : vector<256xf32> to vector<256x1xf32>
    %cst_1 = arith.constant 3.200000e+01 : f32
    %3 = vector.broadcast %cst_1 : f32 to vector<256x1xf32>
    %4 = arith.divf %2, %3 : vector<256x1xf32>
    %5 = vector.broadcast %4 : vector<256x1xf32> to vector<256x32xf32>
    %6 = arith.subf %0, %5 : vector<256x32xf32>
    %7 = arith.mulf %6, %6 : vector<256x32xf32>
    %cst_2 = arith.constant dense<0.000000e+00> : vector<256xf32>
    %8 = vector.multi_reduction <add>, %7, %cst_2 [1] : vector<256x32xf32> to vector<256xf32>
    %9 = vector.shape_cast %8 : vector<256xf32> to vector<256x1xf32>
    %cst_3 = arith.constant 3.200000e+01 : f32
    %10 = vector.broadcast %cst_3 : f32 to vector<256x1xf32>
    %11 = arith.divf %9, %10 : vector<256x1xf32>
    %cst_4 = arith.constant 9.99999974E-6 : f32
    %12 = vector.broadcast %cst_4 : f32 to vector<256x1xf32>
    %13 = arith.addf %11, %12 : vector<256x1xf32>
    %14 = math.rsqrt %13 : vector<256x1xf32>
    %15 = vector.broadcast %14 : vector<256x1xf32> to vector<256x32xf32>
    %16 = arith.mulf %6, %15 : vector<256x32xf32>
    %c0_5 = arith.constant 0 : index
    %c0_6 = arith.constant 0 : index
    %17 = vector.load %arg2[%c0_5, %c0_6] : memref<1x32xf32, #tpu.memory_space<vmem>>, vector<1x32xf32>
    %18 = vector.broadcast %17 : vector<1x32xf32> to vector<256x32xf32>
    %19 = arith.mulf %16, %18 : vector<256x32xf32>
    %c0_7 = arith.constant 0 : index
    %c0_8 = arith.constant 0 : index
    %20 = vector.load %arg3[%c0_7, %c0_8] : memref<1x32xf32, #tpu.memory_space<vmem>>, vector<1x32xf32>
    %21 = vector.broadcast %20 : vector<1x32xf32> to vector<256x32xf32>
    %22 = arith.addf %19, %21 : vector<256x32xf32>
    %23 = arith.truncf %22 : vector<256x32xf32> to vector<256x32xbf16>
    %c0_9 = arith.constant 0 : index
    %c0_10 = arith.constant 0 : index
    %24 = vector.load %arg4[%c0_9, %c0_10] : memref<32x128xbf16, #tpu.memory_space<vmem>>, vector<32x128xbf16>
    %cst_11 = arith.constant dense<0.000000e+00> : vector<256x128xf32>
    %25 = tpu.matmul %23, %24, %cst_11 {dimension_numbers = #tpu.dot_dimension_numbers<[1], [0], [0], [1], [0, 0, 1, 1], [], []>} : vector<256x32xbf16>, vector<32x128xbf16>, vector<256x128xf32> -> vector<256x128xf32>
    %c0_12 = arith.constant 0 : index
    %c0_13 = arith.constant 0 : index
    %26 = vector.load %arg5[%c0_12, %c0_13] : memref<1x128xf32, #tpu.memory_space<vmem>>, vector<1x128xf32>
    %27 = vector.broadcast %26 : vector<1x128xf32> to vector<256x128xf32>
    %28 = arith.addf %25, %27 : vector<256x128xf32>
    %cst_14 = arith.constant 5.000000e-01 : f32
    %29 = vector.broadcast %cst_14 : f32 to vector<256x128xf32>
    %30 = arith.mulf %29, %28 : vector<256x128xf32>
    %cst_15 = arith.constant 4.471500e-02 : f32
    %31 = vector.broadcast %cst_15 : f32 to vector<256x128xf32>
    %32 = arith.mulf %31, %28 : vector<256x128xf32>
    %33 = arith.mulf %32, %28 : vector<256x128xf32>
    %34 = arith.mulf %33, %28 : vector<256x128xf32>
    %35 = arith.addf %28, %34 : vector<256x128xf32>
    %cst_16 = arith.constant 0.797884583 : f32
    %36 = vector.broadcast %cst_16 : f32 to vector<256x128xf32>
    %37 = arith.mulf %36, %35 : vector<256x128xf32>
    %38 = math.tanh %37 : vector<256x128xf32>
    %cst_17 = arith.constant 1.000000e+00 : f32
    %39 = vector.broadcast %cst_17 : f32 to vector<256x128xf32>
    %40 = arith.addf %39, %38 : vector<256x128xf32>
    %41 = arith.mulf %30, %40 : vector<256x128xf32>
    %42 = arith.truncf %41 : vector<256x128xf32> to vector<256x128xbf16>
    %c0_18 = arith.constant 0 : index
    %c0_19 = arith.constant 0 : index
    %43 = vector.load %arg6[%c0_18, %c0_19] : memref<128x32xbf16, #tpu.memory_space<vmem>>, vector<128x32xbf16>
    %cst_20 = arith.constant dense<0.000000e+00> : vector<256x32xf32>
    %44 = tpu.matmul %42, %43, %cst_20 {dimension_numbers = #tpu.dot_dimension_numbers<[1], [0], [0], [1], [0, 0, 1, 1], [], []>} : vector<256x128xbf16>, vector<128x32xbf16>, vector<256x32xf32> -> vector<256x32xf32>
    %c0_21 = arith.constant 0 : index
    %c0_22 = arith.constant 0 : index
    %45 = vector.load %arg7[%c0_21, %c0_22] : memref<1x32xf32, #tpu.memory_space<vmem>>, vector<1x32xf32>
    %46 = vector.broadcast %45 : vector<1x32xf32> to vector<256x32xf32>
    %47 = arith.addf %44, %46 : vector<256x32xf32>
    %48 = arith.addf %0, %47 : vector<256x32xf32>
    %c0_23 = arith.constant 0 : index
    %c0_24 = arith.constant 0 : index
    %49 = vector.load %arg8[%c0_23, %c0_24] : memref<256x32xf32, #tpu.memory_space<vmem>>, vector<256x32xf32>
    tpu.vector_store %arg8[%c0_23, %c0_24], %48 {strides = array<i32>} : memref<256x32xf32, #tpu.memory_space<vmem>>, vector<256x32xf32>,
    return
  }
  func.func @transform_0(%arg0: i32) -> (i32, i32) {
    %c0_i32 = arith.constant 0 : i32
    %c0_i32_0 = arith.constant 0 : i32
    return %arg0, %c0_i32 : i32, i32
  }
  func.func @transform_1(%arg0: i32) -> (i32, i32) {
    %c0_i32 = arith.constant 0 : i32
    %c0_i32_0 = arith.constant 0 : i32
    %c0_i32_1 = arith.constant 0 : i32
    return %c0_i32, %c0_i32_0 : i32, i32
  }
  func.func @transform_2(%arg0: i32) -> (i32, i32) {
    %c0_i32 = arith.constant 0 : i32
    %c0_i32_0 = arith.constant 0 : i32
    %c0_i32_1 = arith.constant 0 : i32
    return %c0_i32, %c0_i32_0 : i32, i32
  }
  func.func @transform_3(%arg0: i32) -> (i32, i32) {
    %c0_i32 = arith.constant 0 : i32
    %c0_i32_0 = arith.constant 0 : i32
    %c0_i32_1 = arith.constant 0 : i32
    return %c0_i32, %c0_i32_0 : i32, i32
  }
  func.func @transform_4(%arg0: i32) -> (i32, i32) {
    %c0_i32 = arith.constant 0 : i32
    %c0_i32_0 = arith.constant 0 : i32
    %c0_i32_1 = arith.constant 0 : i32
    return %c0_i32, %c0_i32_0 : i32, i32
  }
  func.func @transform_5(%arg0: i32) -> (i32, i32) {
    %c0_i32 = arith.constant 0 : i32
    %c0_i32_0 = arith.constant 0 : i32
    %c0_i32_1 = arith.constant 0 : i32
    return %c0_i32, %c0_i32_0 : i32, i32
  }
  func.func @transform_6(%arg0: i32) -> (i32, i32) {
    %c0_i32 = arith.constant 0 : i32
    %c0_i32_0 = arith.constant 0 : i32
    %c0_i32_1 = arith.constant 0 : i32
    return %c0_i32, %c0_i32_0 : i32, i32
  }
  func.func @transform_7(%arg0: i32) -> (i32, i32) {
    %c0_i32 = arith.constant 0 : i32
    %c0_i32_0 = arith.constant 0 : i32
    return %arg0, %c0_i32 : i32, i32
  }
}

</mosaic_0001>

<llo_original>
// kernel: focalnet_block_fwd.4
$region0: #{focalnet_block_fwd.4}
  #allocation0 [shape = 'u32[]', space=smem, size = 0x4, offset = 0x4, fixed_abs, tag = 'smem constant byte address 0x4 - core index']
  #allocation1 [shape = 'u32[144,128]{1,0:T(1,128)}', space=vmem, size = 0x12000, scoped, tag = 'internal scratch']
  %s0 = inlined_call_operand.vmem [shape: f32[512,32], index: 0, kind: input, shape index: {}]
  %s1 = inlined_call_operand.vmem [shape: f32[1,32], index: 1, kind: input, shape index: {}]
  %s2 = inlined_call_operand.vmem [shape: f32[1,32], index: 2, kind: input, shape index: {}]
  %s3 = inlined_call_operand.vmem [shape: bf16[32,32], index: 3, kind: input, shape index: {}]
  %s4 = inlined_call_operand.vmem [shape: f32[1,32], index: 4, kind: input, shape index: {}]
  %s5 = inlined_call_operand.vmem [shape: bf16[32,32], index: 5, kind: input, shape index: {}]
  %s6 = inlined_call_operand.vmem [shape: f32[1,32], index: 6, kind: input, shape index: {}]
  %s7 = inlined_call_operand.vmem [shape: bf16[32,3], index: 7, kind: input, shape index: {}]
  %s8 = inlined_call_operand.vmem [shape: f32[1,3], index: 8, kind: input, shape index: {}]
  %s9 = inlined_call_operand.vmem [shape: bf16[512,32], index: 9, kind: output, shape index: {0}]
  %s10 = inlined_call_operand.vmem [shape: bf16[512,32], index: 10, kind: output, shape index: {1}]
  %s11 = inlined_call_operand.vmem [shape: bf16[512,3], index: 11, kind: output, shape index: {2}]
  %12 = xla_tuple %s9, %s10, %s11
  %s13 = sld [smem:[#allocation0]]
  $region85: #{focalnet_block_fwd.4} parent=0
    _
  %s15 = ssub.s32 1, %s13
  %s16 = scalar_select 0, %s15, %s13
  loop: start=0, step=1, limit=4
  $region2: #{focalnet_block_fwd.4} parent=0 // loop_pre_header
    _
  $region3: #{focalnet_block_fwd.4} parent=0 // loop_header
    %s18 = sphi 0, %s22
    %p19 = scmp.ge.s32.totalorder %s18, 4
    %s28 = sphi 0, %s30
    %s31 = sphi 0, %s28
    %s32 = sphi 0, %s31
    %s48 = sphi 0, %s32
    %s52 = sphi 0, %s52
    %s54 = sphi 0, %s52
    %s55 = sphi 0, %s54
    %s69 = sphi 0, %s55
    %s73 = sphi 0, %s73
    %s75 = sphi 0, %s73
    %s76 = sphi 0, %s75
    %s90 = sphi 0, %s76
    %s94 = sphi 0, %s94
    %s96 = sphi 0, %s94
    %s97 = sphi 0, %s96
    %s111 = sphi 0, %s97
    %s115 = sphi 0, %s115
    %s117 = sphi 0, %s115
    %s118 = sphi 0, %s117
    %s132 = sphi 0, %s118
    %s136 = sphi 0, %s136
    %s138 = sphi 0, %s136
    %s139 = sphi 0, %s138
    %s153 = sphi 0, %s139
    %s157 = sphi 0, %s157
    %s159 = sphi 0, %s157
    %s160 = sphi 0, %s159
    %s174 = sphi 0, %s160
    %s178 = sphi 0, %s178
    %s180 = sphi 0, %s178
    %s181 = sphi 0, %s180
    %s195 = sphi 0, %s181
    %s199 = sphi 0, %s199
    %s201 = sphi 0, %s199
    %s202 = sphi 0, %s201
    %s216 = sphi 0, %s202
    %s222 = sphi 0, %s224
    %s225 = sphi 0, %s222
    %s226 = sphi 0, %s225
    %s242 = sphi 0, %s226
    %s248 = sphi 0, %s250
    %s251 = sphi 0, %s248
    %s252 = sphi 0, %s251
    %s268 = sphi 0, %s252
    %s274 = sphi 0, %s276
    %s277 = sphi 0, %s274
    %s278 = sphi 0, %s277
    %s294 = sphi 0, %s278
  $region4: #{focalnet_block_fwd.4} parent=0 // loop_header_branch
    %21 = sbr.rel (%p19) target = $region8
  $region5: #{focalnet_block_fwd.4} parent=0 // loop_body
    %s23 = ssub.s32 %s18, 1
    %s24 = ssub.s32 %s18, 2
    %s25 = sadd.s32 %s18, 1
    %s26 = ssub.s32 %s18, %s25
    %p27 = scmp.eq.s32.totalorder %s26, 0
    %s29 = sadd.s32 %s28, 1
    %s30 = scalar_select %p27, %s28, %s29
    %p33 = pneg %p27
    %p34 = scmp.eq.s32.totalorder %s18, 1
    %p35 = por %p33, %p34
    %p36 = scmp.ne.s32.totalorder %s28, %s31
    %p37 = scmp.eq.s32.totalorder %s18, 0
    %p38 = por %p36, %p37
    %p39 = scmp.ne.s32.totalorder %s28, %s31
    %p40 = scmp.eq.s32.totalorder %s23, 1
    %p41 = por %p39, %p40
    %p42 = scmp.ne.s32.totalorder %s31, %s32
    %p43 = scmp.eq.s32.totalorder %s23, 0
    %p44 = por %p42, %p43
    %p45 = scmp.ne.s32.totalorder %s31, %s32
    %p46 = scmp.eq.s32.totalorder %s24, 1
    %p47 = por %p45, %p46
    %p49 = scmp.ne.s32.totalorder %s32, %s48
    %p50 = scmp.eq.s32.totalorder %s24, 0
    %p51 = por %p49, %p50
    %s53 = sadd.s32 %s52, 1
    %p56 = scmp.eq.s32.totalorder %s18, 1
    %p57 = scmp.ne.s32.totalorder %s52, %s54
    %p58 = scmp.eq.s32.totalorder %s18, 0
    %p59 = por %p57, %p58
    %p60 = scmp.ne.s32.totalorder %s52, %s54
    %p61 = scmp.eq.s32.totalorder %s23, 1
    %p62 = por %p60, %p61
    %p63 = scmp.ne.s32.totalorder %s54, %s55
    %p64 = scmp.eq.s32.totalorder %s23, 0
    %p65 = por %p63, %p64
    %p66 = scmp.ne.s32.totalorder %s54, %s55
    %p67 = scmp.eq.s32.totalorder %s24, 1
    %p68 = por %p66, %p67
    %p70 = scmp.ne.s32.totalorder %s55, %s69
    %p71 = scmp.eq.s32.totalorder %s24, 0
    %p72 = por %p70, %p71
    %s74 = sadd.s32 %s73, 1
    %p77 = scmp.eq.s32.totalorder %s18, 1
    %p78 = scmp.ne.s32.totalorder %s73, %s75
    %p79 = scmp.eq.s32.totalorder %s18, 0
    %p80 = por %p78, %p79
    %p81 = scmp.ne.s32.totalorder %s73, %s75
    %p82 = scmp.eq.s32.totalorder %s23, 1
    %p83 = por %p81, %p82
    %p84 = scmp.ne.s32.totalorder %s75, %s76
    %p85 = scmp.eq.s32.totalorder %s23, 0
    %p86 = por %p84, %p85
    %p87 = scmp.ne.s32.totalorder %s75, %s76
    %p88 = scmp.eq.s32.totalorder %s24, 1
    %p89 = por %p87, %p88
    %p91 = scmp.ne.s32.totalorder %s76, %s90
    %p92 = scmp.eq.s32.totalorder %s24, 0
    %p93 = por %p91, %p92
    %s95 = sadd.s32 %s94, 1
    %p98 = scmp.eq.s32.totalorder %s18, 1
    %p99 = scmp.ne.s32.totalorder %s94, %s96
    %p100 = scmp.eq.s32.totalorder %s18, 0
    %p101 = por %p99, %p100
    %p102 = scmp.ne.s32.totalorder %s94, %s96
    %p103 = scmp.eq.s32.totalorder %s23, 1
    %p104 = por %p102, %p103
    %p105 = scmp.ne.s32.totalorder %s96, %s97
    %p106 = scmp.eq.s32.totalorder %s23, 0
    %p107 = por %p105, %p106
    %p108 = scmp.ne.s32.totalorder %s96, %s97
    %p109 = scmp.eq.s32.totalorder %s24, 1
    %p110 = por %p108, %p109
    %p112 = scmp.ne.s32.totalorder %s97, %s111
    %p113 = scmp.eq.s32.totalorder %s24, 0
    %p114 = por %p112, %p113
    %s116 = sadd.s32 %s115, 1
    %p119 = scmp.eq.s32.totalorder %s18, 1
    %p120 = scmp.ne.s32.totalorder %s115, %s117
    %p121 = scmp.eq.s32.totalorder %s18, 0
    %p122 = por %p120, %p121
    %p123 = scmp.ne.s32.totalorder %s115, %s117
    %p124 = scmp.eq.s32.totalorder %s23, 1
    %p125 = por %p123, %p124
    %p126 = scmp.ne.s32.totalorder %s117, %s118
    %p127 = scmp.eq.s32.totalorder %s23, 0
    %p128 = por %p126, %p127
    %p129 = scmp.ne.s32.totalorder %s117, %s118
    %p130 = scmp.eq.s32.totalorder %s24, 1
    %p131 = por %p129, %p130
    %p133 = scmp.ne.s32.totalorder %s118, %s132
    %p134 = scmp.eq.s32.totalorder %s24, 0
    %p135 = por %p133, %p134
    %s137 = sadd.s32 %s136, 1
    %p140 = scmp.eq.s32.totalorder %s18, 1
    %p141 = scmp.ne.s32.totalorder %s136, %s138
    %p142 = scmp.eq.s32.totalorder %s18, 0
    %p143 = por %p141, %p142
    %p144 = scmp.ne.s32.totalorder %s136, %s138
    %p145 = scmp.eq.s32.totalorder %s23, 1
    %p146 = por %p144, %p145
    %p147 = scmp.ne.s32.totalorder %s138, %s139
    %p148 = scmp.eq.s32.totalorder %s23, 0
    %p149 = por %p147, %p148
    %p150 = scmp.ne.s32.totalorder %s138, %s139
    %p151 = scmp.eq.s32.totalorder %s24, 1
    %p152 = por %p150, %p151
    %p154 = scmp.ne.s32.totalorder %s139, %s153
    %p155 = scmp.eq.s32.totalorder %s24, 0
    %p156 = por %p154, %p155
    %s158 = sadd.s32 %s157, 1
    %p161 = scmp.eq.s32.totalorder %s18, 1
    %p162 = scmp.ne.s32.totalorder %s157, %s159
    %p163 = scmp.eq.s32.totalorder %s18, 0
    %p164 = por %p162, %p163
    %p165 = scmp.ne.s32.totalorder %s157, %s159
    %p166 = scmp.eq.s32.totalorder %s23, 1
    %p167 = por %p165, %p166
    %p168 = scmp.ne.s32.totalorder %s159, %s160
    %p169 = scmp.eq.s32.totalorder %s23, 0
    %p170 = por %p168, %p169
    %p171 = scmp.ne.s32.totalorder %s159, %s160
    %p172 = scmp.eq.s32.totalorder %s24, 1
    %p173 = por %p171, %p172
    %p175 = scmp.ne.s32.totalorder %s160, %s174
    %p176 = scmp.eq.s32.totalorder %s24, 0
    %p177 = por %p175, %p176
    %s179 = sadd.s32 %s178, 1
    %p182 = scmp.eq.s32.totalorder %s18, 1
    %p183 = scmp.ne.s32.totalorder %s178, %s180
    %p184 = scmp.eq.s32.totalorder %s18, 0
    %p185 = por %p183, %p184
    %p186 = scmp.ne.s32.totalorder %s178, %s180
    %p187 = scmp.eq.s32.totalorder %s23, 1
    %p188 = por %p186, %p187
    %p189 = scmp.ne.s32.totalorder %s180, %s181
    %p190 = scmp.eq.s32.totalorder %s23, 0
    %p191 = por %p189, %p190
    %p192 = scmp.ne.s32.totalorder %s180, %s181
    %p193 = scmp.eq.s32.totalorder %s24, 1
    %p194 = por %p192, %p193
    %p196 = scmp.ne.s32.totalorder %s181, %s195
    %p197 = scmp.eq.s32.totalorder %s24, 0
    %p198 = por %p196, %p197
    %s200 = sadd.s32 %s199, 1
    %p203 = scmp.eq.s32.totalorder %s18, 1
    %p204 = scmp.ne.s32.totalorder %s199, %s201
    %p205 = scmp.eq.s32.totalorder %s18, 0
    %p206 = por %p204, %p205
    %p207 = scmp.ne.s32.totalorder %s199, %s201
    %p208 = scmp.eq.s32.totalorder %s23, 1
    %p209 = por %p207, %p208
    %p210 = scmp.ne.s32.totalorder %s201, %s202
    %p211 = scmp.eq.s32.totalorder %s23, 0
    %p212 = por %p210, %p211
    %p213 = scmp.ne.s32.totalorder %s201, %s202
    %p214 = scmp.eq.s32.totalorder %s24, 1
    %p215 = por %p213, %p214
    %p217 = scmp.ne.s32.totalorder %s202, %s216
    %p218 = scmp.eq.s32.totalorder %s24, 0
    %p219 = por %p217, %p218
    %s220 = ssub.s32 %s18, %s25
    %p221 = scmp.eq.s32.totalorder %s220, 0
    %s223 = sadd.s32 %s222, 1
    %s224 = scalar_select %p221, %s222, %s223
    %p227 = pneg %p221
    %p228 = scmp.eq.s32.totalorder %s18, 1
    %p229 = por %p227, %p228
    %p230 = scmp.ne.s32.totalorder %s222, %s225
    %p231 = scmp.eq.s32.totalorder %s18, 0
    %p232 = por %p230, %p231
    %p233 = scmp.ne.s32.totalorder %s222, %s225
    %p234 = scmp.eq.s32.totalorder %s23, 1
    %p235 = por %p233, %p234
    %p236 = scmp.ne.s32.totalorder %s225, %s226
    %p237 = scmp.eq.s32.totalorder %s23, 0
    %p238 = por %p236, %p237
    %p239 = scmp.ne.s32.totalorder %s225, %s226
    %p240 = scmp.eq.s32.totalorder %s24, 1
    %p241 = por %p239, %p240
    %p243 = scmp.ne.s32.totalorder %s226, %s242
    %p244 = scmp.eq.s32.totalorder %s24, 0
    %p245 = por %p243, %p244
    %s246 = ssub.s32 %s18, %s25
    %p247 = scmp.eq.s32.totalorder %s246, 0
    %s249 = sadd.s32 %s248, 1
    %s250 = scalar_select %p247, %s248, %s249
    %p253 = pneg %p247
    %p254 = scmp.eq.s32.totalorder %s18, 1
    %p255 = por %p253, %p254
    %p256 = scmp.ne.s32.totalorder %s248, %s251
    %p257 = scmp.eq.s32.totalorder %s18, 0
    %p258 = por %p256, %p257
    %p259 = scmp.ne.s32.totalorder %s248, %s251
    %p260 = scmp.eq.s32.totalorder %s23, 1
    %p261 = por %p259, %p260
    %p262 = scmp.ne.s32.totalorder %s251, %s252
    %p263 = scmp.eq.s32.totalorder %s23, 0
    %p264 = por %p262, %p263
    %p265 = scmp.ne.s32.totalorder %s251, %s252
    %p266 = scmp.eq.s32.totalorder %s24, 1
    %p267 = por %p265, %p266
    %p269 = scmp.ne.s32.totalorder %s252, %s268
    %p270 = scmp.eq.s32.totalorder %s24, 0
    %p271 = por %p269, %p270
    %s272 = ssub.s32 %s18, %s25
    %p273 = scmp.eq.s32.totalorder %s272, 0
    %s275 = sadd.s32 %s274, 1
    %s276 = scalar_select %p273, %s274, %s275
    %p279 = pneg %p273
    %p280 = scmp.eq.s32.totalorder %s18, 1
    %p281 = por %p279, %p280
    %p282 = scmp.ne.s32.totalorder %s274, %s277
    %p283 = scmp.eq.s32.totalorder %s18, 0
    %p284 = por %p282, %p283
    %p285 = scmp.ne.s32.totalorder %s274, %s277
    %p286 = scmp.eq.s32.totalorder %s23, 1
    %p287 = por %p285, %p286
    %p288 = scmp.ne.s32.totalorder %s277, %s278
    %p289 = scmp.eq.s32.totalorder %s23, 0
    %p290 = por %p288, %p289
    %p291 = scmp.ne.s32.totalorder %s277, %s278
    %p292 = scmp.eq.s32.totalorder %s24, 1
    %p293 = por %p291, %p292
    %p295 = scmp.ne.s32.totalorder %s278, %s294
    %p296 = scmp.eq.s32.totalorder %s24, 0
    %p297 = por %p295, %p296
    %p298 = scmp.le.s32.totalorder 1, %s18
    %p299 = scmp.lt.s32.totalorder %s18, 3
    %p300 = pnand %p298, %p299
    %p301 = pneg %p300
    // Predicated region
    $region9: #{focalnet_block_fwd.4} parent=5 // pred_check
      _
    $region10: #{focalnet_block_fwd.4} parent=5 // pred_check_branch
      %303 = sbr.rel (%p300) target = $region12
    $region11: #{focalnet_block_fwd.4} parent=5 // pred_region
      %s304 = ssub.s32 %s18, 1
      // Predicated region
      $region13: #{focalnet_block_fwd.4} parent=11 // pred_check
        %p305 = pneg %p65
      $region14: #{focalnet_block_fwd.4} parent=11 // pred_check_branch
        %307 = sbr.rel (%p305) target = $region16
      $region15: #{focalnet_block_fwd.4} parent=11 // pred_region
        _
      $region16: #{focalnet_block_fwd.4} parent=11 // pred_fallthru
        _
      // Predicated region
      $region17: #{focalnet_block_fwd.4} parent=11 // pred_check
        %p308 = pneg %p86
      $region18: #{focalnet_block_fwd.4} parent=11 // pred_check_branch
        %310 = sbr.rel (%p308) target = $region20
      $region19: #{focalnet_block_fwd.4} parent=11 // pred_region
        _
      $region20: #{focalnet_block_fwd.4} parent=11 // pred_fallthru
        _
      // Predicated region
      $region21: #{focalnet_block_fwd.4} parent=11 // pred_check
        %p311 = pneg %p107
      $region22: #{focalnet_block_fwd.4} parent=11 // pred_check_branch
        %313 = sbr.rel (%p311) target = $region24
      $region23: #{focalnet_block_fwd.4} parent=11 // pred_region
        _
      $region24: #{focalnet_block_fwd.4} parent=11 // pred_fallthru
        _
      // Predicated region
      $region25: #{focalnet_block_fwd.4} parent=11 // pred_check
        %p314 = pneg %p128
      $region26: #{focalnet_block_fwd.4} parent=11 // pred_check_branch
        %316 = sbr.rel (%p314) target = $region28
      $region27: #{focalnet_block_fwd.4} parent=11 // pred_region
        _
      $region28: #{focalnet_block_fwd.4} parent=11 // pred_fallthru
        _
      // Predicated region
      $region29: #{focalnet_block_fwd.4} parent=11 // pred_check
        %p317 = pneg %p149
      $region30: #{focalnet_block_fwd.4} parent=11 // pred_check_branch
        %319 = sbr.rel (%p317) target = $region32
      $region31: #{focalnet_block_fwd.4} parent=11 // pred_region
        _
      $region32: #{focalnet_block_fwd.4} parent=11 // pred_fallthru
        _
      // Predicated region
      $region33: #{focalnet_block_fwd.4} parent=11 // pred_check
        %p320 = pneg %p170
      $region34: #{focalnet_block_fwd.4} parent=11 // pred_check_branch
        %322 = sbr.rel (%p320) target = $region36
      $region35: #{focalnet_block_fwd.4} parent=11 // pred_region
        _
      $region36: #{focalnet_block_fwd.4} parent=11 // pred_fallthru
        _
      // Predicated region
      $region37: #{focalnet_block_fwd.4} parent=11 // pred_check
        %p323 = pneg %p191
      $region38: #{focalnet_block_fwd.4} parent=11 // pred_check_branch
        %325 = sbr.rel (%p323) target = $region40
      $region39: #{focalnet_block_fwd.4} parent=11 // pred_region
        _
      $region40: #{focalnet_block_fwd.4} parent=11 // pred_fallthru
        _
      // Predicated region
      $region41: #{focalnet_block_fwd.4} parent=11 // pred_check
        %p326 = pneg %p212
      $region42: #{focalnet_block_fwd.4} parent=11 // pred_check_branch
        %328 = sbr.rel (%p326) target = $region44
      $region43: #{focalnet_block_fwd.4} parent=11 // pred_region
        _
      $region44: #{focalnet_block_fwd.4} parent=11 // pred_fallthru
        _
    $region12: #{focalnet_block_fwd.4} parent=5 // pred_fallthru
      _
    %p329 = scmp.lt.s32.totalorder %s18, 2
    // Predicated region
    $region45: #{focalnet_block_fwd.4} parent=5 // pred_check
      %p330 = pneg %p329
    $region46: #{focalnet_block_fwd.4} parent=5 // pred_check_branch
      %332 = sbr.rel (%p330) target = $region48
    $region47: #{focalnet_block_fwd.4} parent=5 // pred_region
      // Predicated region
      $region49: #{focalnet_block_fwd.4} parent=47 // pred_check
        %p333 = pneg %p38
      $region50: #{focalnet_block_fwd.4} parent=47 // pred_check_branch
        %335 = sbr.rel (%p333) target = $region52
      $region51: #{focalnet_block_fwd.4} parent=47 // pred_region
        %s336 = smul.u32 32, %s18
        %p337 = scmp.lt.s32.totalorder %s336, 63
        %s338 = scalar_select %p337, %s336, 63
        %s339 = smul.addr %s338, 8
        %s340 = scalar_lea.vmem %s0, %s339
        %s341 = smul.u32 32, %s18
      $region52: #{focalnet_block_fwd.4} parent=47 // pred_fallthru
        _
    $region48: #{focalnet_block_fwd.4} parent=5 // pred_fallthru
      _
    %p342 = scmp.le.s32.totalorder 1, %s18
    %p343 = scmp.lt.s32.totalorder %s18, 3
    %p344 = pnand %p342, %p343
    %p345 = pneg %p344
    // Predicated region
    $region53: #{focalnet_block_fwd.4} parent=5 // pred_check
      _
    $region54: #{focalnet_block_fwd.4} parent=5 // pred_check_branch
      %347 = sbr.rel (%p344) target = $region56
    $region55: #{focalnet_block_fwd.4} parent=5 // pred_region
      %s348 = ssub.s32 %s18, 1
      %s349 = smul.u32 32, %s23
      %p350 = scmp.lt.s32.totalorder %s349, 63
      %s351 = scalar_select %p350, %s349, 63
      %s352 = smul.addr %s351, 8
      %s353 = scalar_lea.vmem %s0, %s352
      %p354 = pneg %p44
      %p355 = pneg %p41
      %p356 = pneg %p65
      %p357 = pneg %p62
      %p358 = pneg %p86
      %p359 = pneg %p83
      %p360 = pneg %p107
      %p361 = pneg %p104
      %p362 = pneg %p128
      %p363 = pneg %p125
      %p364 = pneg %p149
      %p365 = pneg %p146
      %p366 = pneg %p170
      %p367 = pneg %p167
      %p368 = pneg %p191
      %p369 = pneg %p188
      %p370 = pneg %p212
      %p371 = pneg %p209
      %p372 = pneg %p238
      %p373 = pneg %p235
      %s374 = smul.u32 32, %s23
      %p375 = scmp.lt.s32.totalorder %s374, 63
      %s376 = scalar_select %p375, %s374, 63
      %s377 = smul.addr %s376, 4
      %s378 = scalar_lea.vmem %s9, %s377
      %p379 = pneg %p264
      %p380 = pneg %p261
      %s381 = smul.u32 32, %s23
      %p382 = scmp.lt.s32.totalorder %s381, 63
      %s383 = scalar_select %p382, %s381, 63
      %s384 = smul.addr %s383, 4
      %s385 = scalar_lea.vmem %s10, %s384
      %p386 = pneg %p290
      %p387 = pneg %p287
      %s388 = smul.u32 32, %s23
      %p389 = scmp.lt.s32.totalorder %s388, 63
      %s390 = scalar_select %p389, %s388, 63
      %s391 = smul.addr %s390, 4
      %s392 = scalar_lea.vmem %s11, %s391
      %s393 = smul.u32 32, %s23
      %p394 = scmp.lt.s32.totalorder %s393, 63
      %s395 = scalar_select %p394, %s393, 63
      %s396 = smul.addr %s395, 8
      %s397 = scalar_lea.vmem %s0, %s396
      %s398 = smul.u32 32, %s23
      %s399 = smul.u32 32, %s23
      %p400 = scmp.lt.s32.totalorder %s399, 63
      %s401 = scalar_select %p400, %s399, 63
      %s402 = smul.addr %s401, 4
      %s403 = scalar_lea.vmem %s9, %s402
      %s404 = smul.u32 32, %s23
      %s405 = smul.u32 32, %s23
      %p406 = scmp.lt.s32.totalorder %s405, 63
      %s407 = scalar_select %p406, %s405, 63
      %s408 = smul.addr %s407, 4
      %s409 = scalar_lea.vmem %s10, %s408
      %s410 = smul.u32 32, %s23
      %s411 = smul.u32 32, %s23
      %p412 = scmp.lt.s32.totalorder %s411, 63
      %s413 = scalar_select %p412, %s411, 63
      %s414 = smul.addr %s413, 4
      %s415 = scalar_lea.vmem %s11, %s414
      %s416 = smul.u32 32, %s23
      %v418 = vld [vmem:[%s397] sm:$0xff]
      %v419 = vld [vmem:[%s397 + $0x8] sm:$0xff]
      %v420 = vld [vmem:[%s397 + $0x10] sm:$0xff]
      %v421 = vld [vmem:[%s397 + $0x18] sm:$0xff]
      %v422 = vld [vmem:[%s397 + $0x20] sm:$0xff]
      %v423 = vld [vmem:[%s397 + $0x28] sm:$0xff]
      %v424 = vld [vmem:[%s397 + $0x30] sm:$0xff]
      %v425 = vld [vmem:[%s397 + $0x38] sm:$0xff]
      %v426 = vld [vmem:[%s397 + $0x40] sm:$0xff]
      %v427 = vld [vmem:[%s397 + $0x48] sm:$0xff]
      %v428 = vld [vmem:[%s397 + $0x50] sm:$0xff]
      %v429 = vld [vmem:[%s397 + $0x58] sm:$0xff]
      %v430 = vld [vmem:[%s397 + $0x60] sm:$0xff]
      %v431 = vld [vmem:[%s397 + $0x68] sm:$0xff]
      %v432 = vld [vmem:[%s397 + $0x70] sm:$0xff]
      %v433 = vld [vmem:[%s397 + $0x78] sm:$0xff]
      %v434 = vld [vmem:[%s397 + $0x80] sm:$0xff]
      %v435 = vld [vmem:[%s397 + $0x88] sm:$0xff]
      %v436 = vld [vmem:[%s397 + $0x90] sm:$0xff]
      %v437 = vld [vmem:[%s397 + $0x98] sm:$0xff]
      %v438 = vld [vmem:[%s397 + $0xa0] sm:$0xff]
      %v439 = vld [vmem:[%s397 + $0xa8] sm:$0xff]
      %v440 = vld [vmem:[%s397 + $0xb0] sm:$0xff]
      %v441 = vld [vmem:[%s397 + $0xb8] sm:$0xff]
      %v442 = vld [vmem:[%s397 + $0xc0] sm:$0xff]
      %v443 = vld [vmem:[%s397 + $0xc8] sm:$0xff]
      %v444 = vld [vmem:[%s397 + $0xd0] sm:$0xff]
      %v445 = vld [vmem:[%s397 + $0xd8] sm:$0xff]
      %v446 = vld [vmem:[%s397 + $0xe0] sm:$0xff]
      %v447 = vld [vmem:[%s397 + $0xe8] sm:$0xff]
      %v448 = vld [vmem:[%s397 + $0xf0] sm:$0xff]
      %v449 = vld [vmem:[%s397 + $0xf8] sm:$0xff]
      %vm450 = vcmask 261120
      %v451 = vsel %vm450, %v418, 0.0
      %452 = vadd.xlane.f32.xlu0 %v451
      %v453 = vpop.xlane.xlu0 %452
      %v454 = vsel %vm450, %v419, 0.0
      %455 = vadd.xlane.f32.xlu0 %v454
      %v456 = vpop.xlane.xlu0 %455
      %v457 = vsel %vm450, %v420, 0.0
      %458 = vadd.xlane.f32.xlu0 %v457
      %v459 = vpop.xlane.xlu0 %458
      %v460 = vsel %vm450, %v421, 0.0
      %461 = vadd.xlane.f32.xlu0 %v460
      %v462 = vpop.xlane.xlu0 %461
      %v463 = vsel %vm450, %v422, 0.0
      %464 = vadd.xlane.f32.xlu0 %v463
      %v465 = vpop.xlane.xlu0 %464
      %v466 = vsel %vm450, %v423, 0.0
      %467 = vadd.xlane.f32.xlu0 %v466
      %v468 = vpop.xlane.xlu0 %467
      %v469 = vsel %vm450, %v424, 0.0
      %470 = vadd.xlane.f32.xlu0 %v469
      %v471 = vpop.xlane.xlu0 %470
      %v472 = vsel %vm450, %v425, 0.0
      %473 = vadd.xlane.f32.xlu0 %v472
      %v474 = vpop.xlane.xlu0 %473
      %v475 = vsel %vm450, %v426, 0.0
      %476 = vadd.xlane.f32.xlu0 %v475
      %v477 = vpop.xlane.xlu0 %476
      %v478 = vsel %vm450, %v427, 0.0
      %479 = vadd.xlane.f32.xlu0 %v478
      %v480 = vpop.xlane.xlu0 %479
      %v481 = vsel %vm450, %v428, 0.0
      %482 = vadd.xlane.f32.xlu0 %v481
      %v483 = vpop.xlane.xlu0 %482
      %v484 = vsel %vm450, %v429, 0.0
      %485 = vadd.xlane.f32.xlu0 %v484
      %v486 = vpop.xlane.xlu0 %485
      %v487 = vsel %vm450, %v430, 0.0
      %488 = vadd.xlane.f32.xlu0 %v487
      %v489 = vpop.xlane.xlu0 %488
      %v490 = vsel %vm450, %v431, 0.0
      %491 = vadd.xlane.f32.xlu0 %v490
      %v492 = vpop.xlane.xlu0 %491
      %v493 = vsel %vm450, %v432, 0.0
      %494 = vadd.xlane.f32.xlu0 %v493
      %v495 = vpop.xlane.xlu0 %494
      %v496 = vsel %vm450, %v433, 0.0
      %497 = vadd.xlane.f32.xlu0 %v496
      %v498 = vpop.xlane.xlu0 %497
      %v499 = vsel %vm450, %v434, 0.0
      %500 = vadd.xlane.f32.xlu0 %v499
      %v501 = vpop.xlane.xlu0 %500
      %v502 = vsel %vm450, %v435, 0.0
      %503 = vadd.xlane.f32.xlu0 %v502
      %v504 = vpop.xlane.xlu0 %503
      %v505 = vsel %vm450, %v436, 0.0
      %506 = vadd.xlane.f32.xlu0 %v505
      %v507 = vpop.xlane.xlu0 %506
      %v508 = vsel %vm450, %v437, 0.0
      %509 = vadd.xlane.f32.xlu0 %v508
      %v510 = vpop.xlane.xlu0 %509
      %v511 = vsel %vm450, %v438, 0.0
      %512 = vadd.xlane.f32.xlu0 %v511
      %v513 = vpop.xlane.xlu0 %512
      %v514 = vsel %vm450, %v439, 0.0
      %515 = vadd.xlane.f32.xlu0 %v514
      %v516 = vpop.xlane.xlu0 %515
      %v517 = vsel %vm450, %v440, 0.0
      %518 = vadd.xlane.f32.xlu0 %v517
      %v519 = vpop.xlane.xlu0 %518
      %v520 = vsel %vm450, %v441, 0.0
      %521 = vadd.xlane.f32.xlu0 %v520
      %v522 = vpop.xlane.xlu0 %521
      %v523 = vsel %vm450, %v442, 0.0
      %524 = vadd.xlane.f32.xlu0 %v523
      %v525 = vpop.xlane.xlu0 %524
      %v526 = vsel %vm450, %v443, 0.0
      %527 = vadd.xlane.f32.xlu0 %v526
      %v528 = vpop.xlane.xlu0 %527
      %v529 = vsel %vm450, %v444, 0.0
      %530 = vadd.xlane.f32.xlu0 %v529
      %v531 = vpop.xlane.xlu0 %530
      %v532 = vsel %vm450, %v445, 0.0
      %533 = vadd.xlane.f32.xlu0 %v532
      %v534 = vpop.xlane.xlu0 %533
      %v535 = vsel %vm450, %v446, 0.0
      %536 = vadd.xlane.f32.xlu0 %v535
      %v537 = vpop.xlane.xlu0 %536
      %v538 = vsel %vm450, %v447, 0.0
      %539 = vadd.xlane.f32.xlu0 %v538
      %v540 = vpop.xlane.xlu0 %539
      %v541 = vsel %vm450, %v448, 0.0
      %542 = vadd.xlane.f32.xlu0 %v541
      %v543 = vpop.xlane.xlu0 %542
      %v544 = vsel %vm450, %v449, 0.0
      %545 = vadd.xlane.f32.xlu0 %v544
      %v546 = vpop.xlane.xlu0 %545
      %v547 = vrcp.pop 32.0
      %v548 = vmul.f32 %v453, %v547
      %v549 = vmul.f32 %v456, %v547
      %v550 = vmul.f32 %v459, %v547
      %v551 = vmul.f32 %v462, %v547
      %v552 = vmul.f32 %v465, %v547
      %v553 = vmul.f32 %v468, %v547
      %v554 = vmul.f32 %v471, %v547
      %v555 = vmul.f32 %v474, %v547
      %v556 = vmul.f32 %v477, %v547
      %v557 = vmul.f32 %v480, %v547
      %v558 = vmul.f32 %v483, %v547
      %v559 = vmul.f32 %v486, %v547
      %v560 = vmul.f32 %v489, %v547
      %v561 = vmul.f32 %v492, %v547
      %v562 = vmul.f32 %v495, %v547
      %v563 = vmul.f32 %v498, %v547
      %v564 = vmul.f32 %v501, %v547
      %v565 = vmul.f32 %v504, %v547
      %v566 = vmul.f32 %v507, %v547
      %v567 = vmul.f32 %v510, %v547
      %v568 = vmul.f32 %v513, %v547
      %v569 = vmul.f32 %v516, %v547
      %v570 = vmul.f32 %v519, %v547
      %v571 = vmul.f32 %v522, %v547
      %v572 = vmul.f32 %v525, %v547
      %v573 = vmul.f32 %v528, %v547
      %v574 = vmul.f32 %v531, %v547
      %v575 = vmul.f32 %v534, %v547
      %v576 = vmul.f32 %v537, %v547
      %v577 = vmul.f32 %v540, %v547
      %v578 = vmul.f32 %v543, %v547
      %v579 = vmul.f32 %v546, %v547
      %v580 = vsub.f32 %v418, %v548
      %v581 = vsub.f32 %v419, %v549
      %v582 = vsub.f32 %v420, %v550
      %v583 = vsub.f32 %v421, %v551
      %v584 = vsub.f32 %v422, %v552
      %v585 = vsub.f32 %v423, %v553
      %v586 = vsub.f32 %v424, %v554
      %v587 = vsub.f32 %v425, %v555
      %v588 = vsub.f32 %v426, %v556
      %v589 = vsub.f32 %v427, %v557
      %v590 = vsub.f32 %v428, %v558
      %v591 = vsub.f32 %v429, %v559
      %v592 = vsub.f32 %v430, %v560
      %v593 = vsub.f32 %v431, %v561
      %v594 = vsub.f32 %v432, %v562
      %v595 = vsub.f32 %v433, %v563
      %v596 = vsub.f32 %v434, %v564
      %v597 = vsub.f32 %v435, %v565
      %v598 = vsub.f32 %v436, %v566
      %v599 = vsub.f32 %v437, %v567
      %v600 = vsub.f32 %v438, %v568
      %v601 = vsub.f32 %v439, %v569
      %v602 = vsub.f32 %v440, %v570
      %v603 = vsub.f32 %v441, %v571
      %v604 = vsub.f32 %v442, %v572
      %v605 = vsub.f32 %v443, %v573
      %v606 = vsub.f32 %v444, %v574
      %v607 = vsub.f32 %v445, %v575
      %v608 = vsub.f32 %v446, %v576
      %v609 = vsub.f32 %v447, %v577
      %v610 = vsub.f32 %v448, %v578
      %v611 = vsub.f32 %v449, %v579
      %v612 = vmul.f32 %v580, %v580
      %v613 = vmul.f32 %v581, %v581
      %v614 = vmul.f32 %v582, %v582
      %v615 = vmul.f32 %v583, %v583
      %v616 = vmul.f32 %v584, %v584
      %v617 = vmul.f32 %v585, %v585
      %v618 = vmul.f32 %v586, %v586
      %v619 = vmul.f32 %v587, %v587
      %v620 = vmul.f32 %v588, %v588
      %v621 = vmul.f32 %v589, %v589
      %v622 = vmul.f32 %v590, %v590
      %v623 = vmul.f32 %v591, %v591
      %v624 = vmul.f32 %v592, %v592
      %v625 = vmul.f32 %v593, %v593
      %v626 = vmul.f32 %v594, %v594
      %v627 = vmul.f32 %v595, %v595
      %v628 = vmul.f32 %v596, %v596
      %v629 = vmul.f32 %v597, %v597
      %v630 = vmul.f32 %v598, %v598
      %v631 = vmul.f32 %v599, %v599
      %v632 = vmul.f32 %v600, %v600
      %v633 = vmul.f32 %v601, %v601
      %v634 = vmul.f32 %v602, %v602
      %v635 = vmul.f32 %v603, %v603
      %v636 = vmul.f32 %v604, %v604
      %v637 = vmul.f32 %v605, %v605
      %v638 = vmul.f32 %v606, %v606
      %v639 = vmul.f32 %v607, %v607
      %v640 = vmul.f32 %v608, %v608
      %v641 = vmul.f32 %v609, %v609
      %v642 = vmul.f32 %v610, %v610
      %v643 = vmul.f32 %v611, %v611
      %v644 = vsel %vm450, %v612, 0.0
      %645 = vadd.xlane.f32.xlu0 %v644
      %v646 = vpop.xlane.xlu0 %645
      %v647 = vsel %vm450, %v613, 0.0
      %648 = vadd.xlane.f32.xlu0 %v647
      %v649 = vpop.xlane.xlu0 %648
      %v650 = vsel %vm450, %v614, 0.0
      %651 = vadd.xlane.f32.xlu0 %v650
      %v652 = vpop.xlane.xlu0 %651
      %v653 = vsel %vm450, %v615, 0.0
      %654 = vadd.xlane.f32.xlu0 %v653
      %v655 = vpop.xlane.xlu0 %654
      %v656 = vsel %vm450, %v616, 0.0
      %657 = vadd.xlane.f32.xlu0 %v656
      %v658 = vpop.xlane.xlu0 %657
      %v659 = vsel %vm450, %v617, 0.0
      %660 = vadd.xlane.f32.xlu0 %v659
      %v661 = vpop.xlane.xlu0 %660
      %v662 = vsel %vm450, %v618, 0.0
      %663 = vadd.xlane.f32.xlu0 %v662
      %v664 = vpop.xlane.xlu0 %663
      %v665 = vsel %vm450, %v619, 0.0
      %666 = vadd.xlane.f32.xlu0 %v665
      %v667 = vpop.xlane.xlu0 %666
      %v668 = vsel %vm450, %v620, 0.0
      %669 = vadd.xlane.f32.xlu0 %v668
      %v670 = vpop.xlane.xlu0 %669
      %v671 = vsel %vm450, %v621, 0.0
      %672 = vadd.xlane.f32.xlu0 %v671
      %v673 = vpop.xlane.xlu0 %672
      %v674 = vsel %vm450, %v622, 0.0
      %675 = vadd.xlane.f32.xlu0 %v674
      %v676 = vpop.xlane.xlu0 %675
      %v677 = vsel %vm450, %v623, 0.0
      %678 = vadd.xlane.f32.xlu0 %v677
      %v679 = vpop.xlane.xlu0 %678
      %v680 = vsel %vm450, %v624, 0.0
      %681 = vadd.xlane.f32.xlu0 %v680
      %v682 = vpop.xlane.xlu0 %681
      %v683 = vsel %vm450, %v625, 0.0
      %684 = vadd.xlane.f32.xlu0 %v683
      %v685 = vpop.xlane.xlu0 %684
      %v686 = vsel %vm450, %v626, 0.0
      %687 = vadd.xlane.f32.xlu0 %v686
      %v688 = vpop.xlane.xlu0 %687
      %v689 = vsel %vm450, %v627, 0.0
      %690 = vadd.xlane.f32.xlu0 %v689
      %v691 = vpop.xlane.xlu0 %690
      %v692 = vsel %vm450, %v628, 0.0
      %693 = vadd.xlane.f32.xlu0 %v692
      %v694 = vpop.xlane.xlu0 %693
      %v695 = vsel %vm450, %v629, 0.0
      %696 = vadd.xlane.f32.xlu0 %v695
      %v697 = vpop.xlane.xlu0 %696
      %v698 = vsel %vm450, %v630, 0.0
      %699 = vadd.xlane.f32.xlu0 %v698
      %v700 = vpop.xlane.xlu0 %699
      %v701 = vsel %vm450, %v631, 0.0
      %702 = vadd.xlane.f32.xlu0 %v701
      %v703 = vpop.xlane.xlu0 %702
      %v704 = vsel %vm450, %v632, 0.0
      %705 = vadd.xlane.f32.xlu0 %v704
      %v706 = vpop.xlane.xlu0 %705
      %v707 = vsel %vm450, %v633, 0.0
      %708 = vadd.xlane.f32.xlu0 %v707
      %v709 = vpop.xlane.xlu0 %708
      %v710 = vsel %vm450, %v634, 0.0
      %711 = vadd.xlane.f32.xlu0 %v710
      %v712 = vpop.xlane.xlu0 %711
      %v713 = vsel %vm450, %v635, 0.0
      %714 = vadd.xlane.f32.xlu0 %v713
      %v715 = vpop.xlane.xlu0 %714
      %v716 = vsel %vm450, %v636, 0.0
      %717 = vadd.xlane.f32.xlu0 %v716
      %v718 = vpop.xlane.xlu0 %717
      %v719 = vsel %vm450, %v637, 0.0
      %720 = vadd.xlane.f32.xlu0 %v719
      %v721 = vpop.xlane.xlu0 %720
      %v722 = vsel %vm450, %v638, 0.0
      %723 = vadd.xlane.f32.xlu0 %v722
      %v724 = vpop.xlane.xlu0 %723
      %v725 = vsel %vm450, %v639, 0.0
      %726 = vadd.xlane.f32.xlu0 %v725
      %v727 = vpop.xlane.xlu0 %726
      %v728 = vsel %vm450, %v640, 0.0
      %729 = vadd.xlane.f32.xlu0 %v728
      %v730 = vpop.xlane.xlu0 %729
      %v731 = vsel %vm450, %v641, 0.0
      %732 = vadd.xlane.f32.xlu0 %v731
      %v733 = vpop.xlane.xlu0 %732
      %v734 = vsel %vm450, %v642, 0.0
      %735 = vadd.xlane.f32.xlu0 %v734
      %v736 = vpop.xlane.xlu0 %735
      %v737 = vsel %vm450, %v643, 0.0
      %738 = vadd.xlane.f32.xlu0 %v737
      %v739 = vpop.xlane.xlu0 %738
      %v740 = vmul.f32 %v646, %v547
      %v741 = vmul.f32 %v649, %v547
      %v742 = vmul.f32 %v652, %v547
      %v743 = vmul.f32 %v655, %v547
      %v744 = vmul.f32 %v658, %v547
      %v745 = vmul.f32 %v661, %v547
      %v746 = vmul.f32 %v664, %v547
      %v747 = vmul.f32 %v667, %v547
      %v748 = vmul.f32 %v670, %v547
      %v749 = vmul.f32 %v673, %v547
      %v750 = vmul.f32 %v676, %v547
      %v751 = vmul.f32 %v679, %v547
      %v752 = vmul.f32 %v682, %v547
      %v753 = vmul.f32 %v685, %v547
      %v754 = vmul.f32 %v688, %v547
      %v755 = vmul.f32 %v691, %v547
      %v756 = vmul.f32 %v694, %v547
      %v757 = vmul.f32 %v697, %v547
      %v758 = vmul.f32 %v700, %v547
      %v759 = vmul.f32 %v703, %v547
      %v760 = vmul.f32 %v706, %v547
      %v761 = vmul.f32 %v709, %v547
      %v762 = vmul.f32 %v712, %v547
      %v763 = vmul.f32 %v715, %v547
      %v764 = vmul.f32 %v718, %v547
      %v765 = vmul.f32 %v721, %v547
      %v766 = vmul.f32 %v724, %v547
      %v767 = vmul.f32 %v727, %v547
      %v768 = vmul.f32 %v730, %v547
      %v769 = vmul.f32 %v733, %v547
      %v770 = vmul.f32 %v736, %v547
      %v771 = vmul.f32 %v739, %v547
      %v772 = vadd.f32 %v740, 1e-05
      %v773 = vadd.f32 %v741, 1e-05
      %v774 = vadd.f32 %v742, 1e-05
      %v775 = vadd.f32 %v743, 1e-05
      %v776 = vadd.f32 %v744, 1e-05
      %v777 = vadd.f32 %v745, 1e-05
      %v778 = vadd.f32 %v746, 1e-05
      %v779 = vadd.f32 %v747, 1e-05
      %v780 = vadd.f32 %v748, 1e-05
      %v781 = vadd.f32 %v749, 1e-05
      %v782 = vadd.f32 %v750, 1e-05
      %v783 = vadd.f32 %v751, 1e-05
      %v784 = vadd.f32 %v752, 1e-05
      %v785 = vadd.f32 %v753, 1e-05
      %v786 = vadd.f32 %v754, 1e-05
      %v787 = vadd.f32 %v755, 1e-05
      %v788 = vadd.f32 %v756, 1e-05
      %v789 = vadd.f32 %v757, 1e-05
      %v790 = vadd.f32 %v758, 1e-05
      %v791 = vadd.f32 %v759, 1e-05
      %v792 = vadd.f32 %v760, 1e-05
      %v793 = vadd.f32 %v761, 1e-05
      %v794 = vadd.f32 %v762, 1e-05
      %v795 = vadd.f32 %v763, 1e-05
      %v796 = vadd.f32 %v764, 1e-05
      %v797 = vadd.f32 %v765, 1e-05
      %v798 = vadd.f32 %v766, 1e-05
      %v799 = vadd.f32 %v767, 1e-05
      %v800 = vadd.f32 %v768, 1e-05
      %v801 = vadd.f32 %v769, 1e-05
      %v802 = vadd.f32 %v770, 1e-05
      %v803 = vadd.f32 %v771, 1e-05
      %v804 = vrsqrt.pop %v772
      %v805 = vrsqrt.pop %v773
      %v806 = vrsqrt.pop %v774
      %v807 = vrsqrt.pop %v775
      %v808 = vrsqrt.pop %v776
      %v809 = vrsqrt.pop %v777
      %v810 = vrsqrt.pop %v778
      %v811 = vrsqrt.pop %v779
      %v812 = vrsqrt.pop %v780
      %v813 = vrsqrt.pop %v781
      %v814 = vrsqrt.pop %v782
      %v815 = vrsqrt.pop %v783
      %v816 = vrsqrt.pop %v784
      %v817 = vrsqrt.pop %v785
      %v818 = vrsqrt.pop %v786
      %v819 = vrsqrt.pop %v787
      %v820 = vrsqrt.pop %v788
      %v821 = vrsqrt.pop %v789
      %v822 = vrsqrt.pop %v790
      %v823 = vrsqrt.pop %v791
      %v824 = vrsqrt.pop %v792
      %v825 = vrsqrt.pop %v793
      %v826 = vrsqrt.pop %v794
      %v827 = vrsqrt.pop %v795
      %v828 = vrsqrt.pop %v796
      %v829 = vrsqrt.pop %v797
      %v830 = vrsqrt.pop %v798
      %v831 = vrsqrt.pop %v799
      %v832 = vrsqrt.pop %v800
      %v833 = vrsqrt.pop %v801
      %v834 = vrsqrt.pop %v802
      %v835 = vrsqrt.pop %v803
      %v836 = vmul.f32 %v580, %v804
      %v837 = vmul.f32 %v581, %v805
      %v838 = vmul.f32 %v582, %v806
      %v839 = vmul.f32 %v583, %v807
      %v840 = vmul.f32 %v584, %v808
      %v841 = vmul.f32 %v585, %v809
      %v842 = vmul.f32 %v586, %v810
      %v843 = vmul.f32 %v587, %v811
      %v844 = vmul.f32 %v588, %v812
      %v845 = vmul.f32 %v589, %v813
      %v846 = vmul.f32 %v590, %v814
      %v847 = vmul.f32 %v591, %v815
      %v848 = vmul.f32 %v592, %v816
      %v849 = vmul.f32 %v593, %v817
      %v850 = vmul.f32 %v594, %v818
      %v851 = vmul.f32 %v595, %v819
      %v852 = vmul.f32 %v596, %v820
      %v853 = vmul.f32 %v597, %v821
      %v854 = vmul.f32 %v598, %v822
      %v855 = vmul.f32 %v599, %v823
      %v856 = vmul.f32 %v600, %v824
      %v857 = vmul.f32 %v601, %v825
      %v858 = vmul.f32 %v602, %v826
      %v859 = vmul.f32 %v603, %v827
      %v860 = vmul.f32 %v604, %v828
      %v861 = vmul.f32 %v605, %v829
      %v862 = vmul.f32 %v606, %v830
      %v863 = vmul.f32 %v607, %v831
      %v864 = vmul.f32 %v608, %v832
      %v865 = vmul.f32 %v609, %v833
      %v866 = vmul.f32 %v610, %v834
      %v867 = vmul.f32 %v611, %v835
      %v868 = vld [vmem:[%s1] sm:$0x1]
      %v870 = vlaneseq
      %v871 = vshrl.u32 %v870, 7
      %v872 = vsub.s32 0, %v871
      %v873 = vrot.slane %v868, %v872
      %v875 = vmul.f32 %v836, %v873
      %v876 = vmul.f32 %v837, %v873
      %v877 = vmul.f32 %v838, %v873
      %v878 = vmul.f32 %v839, %v873
      %v879 = vmul.f32 %v840, %v873
      %v880 = vmul.f32 %v841, %v873
      %v881 = vmul.f32 %v842, %v873
      %v882 = vmul.f32 %v843, %v873
      %v883 = vmul.f32 %v844, %v873
      %v884 = vmul.f32 %v845, %v873
      %v885 = vmul.f32 %v846, %v873
      %v886 = vmul.f32 %v847, %v873
      %v887 = vmul.f32 %v848, %v873
      %v888 = vmul.f32 %v849, %v873
      %v889 = vmul.f32 %v850, %v873
      %v890 = vmul.f32 %v851, %v873
      %v891 = vmul.f32 %v852, %v873
      %v892 = vmul.f32 %v853, %v873
      %v893 = vmul.f32 %v854, %v873
      %v894 = vmul.f32 %v855, %v873
      %v895 = vmul.f32 %v856, %v873
      %v896 = vmul.f32 %v857, %v873
      %v897 = vmul.f32 %v858, %v873
      %v898 = vmul.f32 %v859, %v873
      %v899 = vmul.f32 %v860, %v873
      %v900 = vmul.f32 %v861, %v873
      %v901 = vmul.f32 %v862, %v873
      %v902 = vmul.f32 %v863, %v873
      %v903 = vmul.f32 %v864, %v873
      %v904 = vmul.f32 %v865, %v873
      %v905 = vmul.f32 %v866, %v873
      %v906 = vmul.f32 %v867, %v873
      %v907 = vld [vmem:[%s2] sm:$0x1]
      %v909 = vlaneseq
      %v910 = vshrl.u32 %v909, 7
      %v911 = vsub.s32 0, %v910
      %v912 = vrot.slane %v907, %v911
      %v914 = vadd.f32 %v875, %v912
      %v915 = vadd.f32 %v876, %v912
      %v916 = vadd.f32 %v877, %v912
      %v917 = vadd.f32 %v878, %v912
      %v918 = vadd.f32 %v879, %v912
      %v919 = vadd.f32 %v880, %v912
      %v920 = vadd.f32 %v881, %v912
      %v921 = vadd.f32 %v882, %v912
      %v922 = vadd.f32 %v883, %v912
      %v923 = vadd.f32 %v884, %v912
      %v924 = vadd.f32 %v885, %v912
      %v925 = vadd.f32 %v886, %v912
      %v926 = vadd.f32 %v887, %v912
      %v927 = vadd.f32 %v888, %v912
      %v928 = vadd.f32 %v889, %v912
      %v929 = vadd.f32 %v890, %v912
      %v930 = vadd.f32 %v891, %v912
      %v931 = vadd.f32 %v892, %v912
      %v932 = vadd.f32 %v893, %v912
      %v933 = vadd.f32 %v894, %v912
      %v934 = vadd.f32 %v895, %v912
      %v935 = vadd.f32 %v896, %v912
      %v936 = vadd.f32 %v897, %v912
      %v937 = vadd.f32 %v898, %v912
      %v938 = vadd.f32 %v899, %v912
      %v939 = vadd.f32 %v900, %v912
      %v940 = vadd.f32 %v901, %v912
      %v941 = vadd.f32 %v902, %v912
      %v942 = vadd.f32 %v903, %v912
      %v943 = vadd.f32 %v904, %v912
      %v944 = vadd.f32 %v905, %v912
      %v945 = vadd.f32 %v906, %v912
      %v946 = vpack.c.bf16 %v915, %v914
      %v947 = vpack.c.bf16 %v917, %v916
      %v948 = vpack.c.bf16 %v919, %v918
      %v949 = vpack.c.bf16 %v921, %v920
      %v950 = vpack.c.bf16 %v923, %v922
      %v951 = vpack.c.bf16 %v925, %v924
      %v952 = vpack.c.bf16 %v927, %v926
      %v953 = vpack.c.bf16 %v929, %v928
      %v954 = vpack.c.bf16 %v931, %v930
      %v955 = vpack.c.bf16 %v933, %v932
      %v956 = vpack.c.bf16 %v935, %v934
      %v957 = vpack.c.bf16 %v937, %v936
      %v958 = vpack.c.bf16 %v939, %v938
      %v959 = vpack.c.bf16 %v941, %v940
      %v960 = vpack.c.bf16 %v943, %v942
      %v961 = vpack.c.bf16 %v945, %v944
      %v962 = vld [vmem:[%s3] sm:$0xf]
      %v963 = vld [vmem:[%s3 + $0x4] sm:$0xf]
      %v964 = vld [vmem:[%s3 + $0x8] sm:$0xf]
      %v965 = vld [vmem:[%s3 + $0xc] sm:$0xf]
      %v966 = vld [vmem:[%s4] sm:$0x1]
      %v968 = vlaneseq
      %v969 = vshrl.u32 %v968, 7
      %v970 = vsub.s32 0, %v969
      %v971 = vrot.slane %v966, %v970
      %v977 = vunpack.c.l.b16 %v962
      %v978 = vunpack.c.l.b16 %v963
      %v979 = vunpack.c.l.b16 %v964
      %v980 = vunpack.c.l.b16 %v965
      %v981 = vpack.c.b16 %v978, %v977
      %v982 = vpack.c.b16 %v980, %v979
      %v986 = vsel %vm450, %v946, 0
      %v989 = vsel %vm450, %v947, 0
      %v992 = vsel %vm450, %v948, 0
      %v995 = vsel %vm450, %v949, 0
      %v998 = vsel %vm450, %v950, 0
      %v1001 = vsel %vm450, %v951, 0
      %v1004 = vsel %vm450, %v952, 0
      %v1007 = vsel %vm450, %v953, 0
      %v1010 = vsel %vm450, %v954, 0
      %v1013 = vsel %vm450, %v955, 0
      %v1016 = vsel %vm450, %v956, 0
      %v1019 = vsel %vm450, %v957, 0
      %v1022 = vsel %vm450, %v958, 0
      %v1025 = vsel %vm450, %v959, 0
      %v1028 = vsel %vm450, %v960, 0
      %v1031 = vsel %vm450, %v961, 0
      %1033 = vmatprep.subr.bf16.mxu0 0
      %1034 = vmatpush1.bf16.msra.mxu0 %v981
      %1035 = vmatprep.subr.bf16.mxu0 0
      %1036 = vmatpush1.bf16.msra.mxu0 %v982
      %1037 = vmatprep.subr.bf16.mxu0 0
      %1038 = vmatpush1.bf16.msra.mxu0 0
      %1039 = vmatprep.subr.bf16.mxu0 0
      %1040 = vmatpush1.bf16.msra.mxu0 0
      %1041 = vmatprep.subr.bf16.mxu0 0
      %1042 = vmatpush1.bf16.msra.mxu0 0
      %1043 = vmatprep.subr.bf16.mxu0 0
      %1044 = vmatpush1.bf16.msra.mxu0 0
      %1045 = vmatprep.subr.bf16.mxu0 0
      %1046 = vmatpush1.bf16.msra.mxu0 0
      %1047 = vmatprep.subr.bf16.mxu0 0
      %1048 = vmatpush1.bf16.msra.mxu0 0
      %1049 = vmatprep.subr.bf16.mxu0 0
      %1050 = vmatpush1.bf16.msra.mxu0 0
      %1051 = vmatprep.subr.bf16.mxu0 0
      %1052 = vmatpush1.bf16.msra.mxu0 0
      %1053 = vmatprep.subr.bf16.mxu0 0
      %1054 = vmatpush1.bf16.msra.mxu0 0
      %1055 = vmatprep.subr.bf16.mxu0 0
      %1056 = vmatpush1.bf16.msra.mxu0 0
      %1057 = vmatprep.subr.bf16.mxu0 0
      %1058 = vmatpush1.bf16.msra.mxu0 0
      %1059 = vmatprep.subr.bf16.mxu0 0
      %1060 = vmatpush1.bf16.msra.mxu0 0
      %1061 = vmatprep.subr.bf16.mxu0 0
      %1062 = vmatpush1.bf16.msra.mxu0 0
      %1063 = vmatprep.subr.bf16.mxu0 0
      %1064 = vmatpush1.bf16.msra.mxu0 0
      %1065 = vmatprep.mubr.bf16.mxu0 0
      %1066 = vmatmul.mubr.bf16.gmra.mrb[0].mxu0 %v986
      %v1067 = vpop.f32.mrb[0].mxu0
      %v1068 = vadd.f32 %v971, %v1067
      %v1069 = vpop.f32.mrb[0].mxu0
      %v1070 = vpop.f32.mrb[0].mxu0
      %v1071 = vadd.f32 %v971, %v1070
      %v1072 = vpop.f32.mrb[0].mxu0
      %1073 = vmatprep.mubr.bf16.mxu0 0
      %1074 = vmatmul.mubr.bf16.gmra.mrb[0].mxu0 %v989
      %v1075 = vpop.f32.mrb[0].mxu0
      %v1076 = vadd.f32 %v971, %v1075
      %v1077 = vpop.f32.mrb[0].mxu0
      %v1078 = vpop.f32.mrb[0].mxu0
      %v1079 = vadd.f32 %v971, %v1078
      %v1080 = vpop.f32.mrb[0].mxu0
      %1081 = vmatprep.mubr.bf16.mxu0 0
      %1082 = vmatmul.mubr.bf16.gmra.mrb[0].mxu0 %v992
      %v1083 = vpop.f32.mrb[0].mxu0
      %v1084 = vadd.f32 %v971, %v1083
      %v1085 = vpop.f32.mrb[0].mxu0
      %v1086 = vpop.f32.mrb[0].mxu0
      %v1087 = vadd.f32 %v971, %v1086
      %v1088 = vpop.f32.mrb[0].mxu0
      %1089 = vmatprep.mubr.bf16.mxu0 0
      %1090 = vmatmul.mubr.bf16.gmra.mrb[0].mxu0 %v995
      %v1091 = vpop.f32.mrb[0].mxu0
      %v1092 = vadd.f32 %v971, %v1091
      %v1093 = vpop.f32.mrb[0].mxu0
      %v1094 = vpop.f32.mrb[0].mxu0
      %v1095 = vadd.f32 %v971, %v1094
      %v1096 = vpop.f32.mrb[0].mxu0
      %1097 = vmatprep.mubr.bf16.mxu0 0
      %1098 = vmatmul.mubr.bf16.gmra.mrb[0].mxu0 %v998
      %v1099 = vpop.f32.mrb[0].mxu0
      %v1100 = vadd.f32 %v971, %v1099
      %v1101 = vpop.f32.mrb[0].mxu0
      %v1102 = vpop.f32.mrb[0].mxu0
      %v1103 = vadd.f32 %v971, %v1102
      %v1104 = vpop.f32.mrb[0].mxu0
      %1105 = vmatprep.mubr.bf16.mxu0 0
      %1106 = vmatmul.mubr.bf16.gmra.mrb[0].mxu0 %v1001
      %v1107 = vpop.f32.mrb[0].mxu0
      %v1108 = vadd.f32 %v971, %v1107
      %v1109 = vpop.f32.mrb[0].mxu0
      %v1110 = vpop.f32.mrb[0].mxu0
      %v1111 = vadd.f32 %v971, %v1110
      %v1112 = vpop.f32.mrb[0].mxu0
      %1113 = vmatprep.mubr.bf16.mxu0 0
      %1114 = vmatmul.mubr.bf16.gmra.mrb[0].mxu0 %v1004
      %v1115 = vpop.f32.mrb[0].mxu0
      %v1116 = vadd.f32 %v971, %v1115
      %v1117 = vpop.f32.mrb[0].mxu0
      %v1118 = vpop.f32.mrb[0].mxu0
      %v1119 = vadd.f32 %v971, %v1118
      %v1120 = vpop.f32.mrb[0].mxu0
      %1121 = vmatprep.mubr.bf16.mxu0 0
      %1122 = vmatmul.mubr.bf16.gmra.mrb[0].mxu0 %v1007
      %v1123 = vpop.f32.mrb[0].mxu0
      %v1124 = vadd.f32 %v971, %v1123
      %v1125 = vpop.f32.mrb[0].mxu0
      %v1126 = vpop.f32.mrb[0].mxu0
      %v1127 = vadd.f32 %v971, %v1126
      %v1128 = vpop.f32.mrb[0].mxu0
      %1129 = vmatprep.mubr.bf16.mxu0 0
      %1130 = vmatmul.mubr.bf16.gmra.mrb[0].mxu0 %v1010
      %v1131 = vpop.f32.mrb[0].mxu0
      %v1132 = vadd.f32 %v971, %v1131
      %v1133 = vpop.f32.mrb[0].mxu0
      %v1134 = vpop.f32.mrb[0].mxu0
      %v1135 = vadd.f32 %v971, %v1134
      %v1136 = vpop.f32.mrb[0].mxu0
      %1137 = vmatprep.mubr.bf16.mxu0 0
      %1138 = vmatmul.mubr.bf16.gmra.mrb[0].mxu0 %v1013
      %v1139 = vpop.f32.mrb[0].mxu0
      %v1140 = vadd.f32 %v971, %v1139
      %v1141 = vpop.f32.mrb[0].mxu0
      %v1142 = vpop.f32.mrb[0].mxu0
      %v1143 = vadd.f32 %v971, %v1142
      %v1144 = vpop.f32.mrb[0].mxu0
      %1145 = vmatprep.mubr.bf16.mxu0 0
      %1146 = vmatmul.mubr.bf16.gmra.mrb[0].mxu0 %v1016
      %v1147 = vpop.f32.mrb[0].mxu0
      %v1148 = vadd.f32 %v971, %v1147
      %v1149 = vpop.f32.mrb[0].mxu0
      %v1150 = vpop.f32.mrb[0].mxu0
      %v1151 = vadd.f32 %v971, %v1150
      %v1152 = vpop.f32.mrb[0].mxu0
      %1153 = vmatprep.mubr.bf16.mxu0 0
      %1154 = vmatmul.mubr.bf16.gmra.mrb[0].mxu0 %v1019
      %v1155 = vpop.f32.mrb[0].mxu0
      %v1156 = vadd.f32 %v971, %v1155
      %v1157 = vpop.f32.mrb[0].mxu0
      %v1158 = vpop.f32.mrb[0].mxu0
      %v1159 = vadd.f32 %v971, %v1158
      %v1160 = vpop.f32.mrb[0].mxu0
      %1161 = vmatprep.mubr.bf16.mxu0 0
      %1162 = vmatmul.mubr.bf16.gmra.mrb[0].mxu0 %v1022
      %v1163 = vpop.f32.mrb[0].mxu0
      %v1164 = vadd.f32 %v971, %v1163
      %v1165 = vpop.f32.mrb[0].mxu0
      %v1166 = vpop.f32.mrb[0].mxu0
      %v1167 = vadd.f32 %v971, %v1166
      %v1168 = vpop.f32.mrb[0].mxu0
      %1169 = vmatprep.mubr.bf16.mxu0 0
      %1170 = vmatmul.mubr.bf16.gmra.mrb[0].mxu0 %v1025
      %v1171 = vpop.f32.mrb[0].mxu0
      %v1172 = vadd.f32 %v971, %v1171
      %v1173 = vpop.f32.mrb[0].mxu0
      %v1174 = vpop.f32.mrb[0].mxu0
      %v1175 = vadd.f32 %v971, %v1174
      %v1176 = vpop.f32.mrb[0].mxu0
      %1177 = vmatprep.mubr.bf16.mxu0 0
      %1178 = vmatmul.mubr.bf16.gmra.mrb[0].mxu0 %v1028
      %v1179 = vpop.f32.mrb[0].mxu0
      %v1180 = vadd.f32 %v971, %v1179
      %v1181 = vpop.f32.mrb[0].mxu0
      %v1182 = vpop.f32.mrb[0].mxu0
      %v1183 = vadd.f32 %v971, %v1182
      %v1184 = vpop.f32.mrb[0].mxu0
      %1185 = vmatprep.mubr.bf16.mxu0 0
      %1186 = vmatmul.mubr.bf16.gmra.mrb[0].mxu0 %v1031
      %v1187 = vpop.f32.mrb[0].mxu0
      %v1188 = vadd.f32 %v971, %v1187
      %v1189 = vpop.f32.mrb[0].mxu0
      %v1190 = vpop.f32.mrb[0].mxu0
      %v1191 = vadd.f32 %v971, %v1190
      %v1192 = vpop.f32.mrb[0].mxu0
      %1193 = vdwg.mxu0
      %v1194 = vld [vmem:[%s5] sm:$0xf]
      %v1195 = vld [vmem:[%s5 + $0x4] sm:$0xf]
      %v1196 = vld [vmem:[%s5 + $0x8] sm:$0xf]
      %v1197 = vld [vmem:[%s5 + $0xc] sm:$0xf]
      %v1198 = vld [vmem:[%s6] sm:$0x1]
      %v1200 = vlaneseq
      %v1201 = vshrl.u32 %v1200, 7
      %v1202 = vsub.s32 0, %v1201
      %v1203 = vrot.slane %v1198, %v1202
      %v1209 = vunpack.c.l.b16 %v1194
      %v1210 = vunpack.c.l.b16 %v1195
      %v1211 = vunpack.c.l.b16 %v1196
      %v1212 = vunpack.c.l.b16 %v1197
      %v1213 = vpack.c.b16 %v1210, %v1209
      %v1214 = vpack.c.b16 %v1212, %v1211
      %1217 = vmatprep.subr.bf16.mxu0 0
      %1218 = vmatpush1.bf16.msra.mxu0 %v1213
      %1219 = vmatprep.subr.bf16.mxu0 0
      %1220 = vmatpush1.bf16.msra.mxu0 %v1214
      %1221 = vmatprep.subr.bf16.mxu0 0
      %1222 = vmatpush1.bf16.msra.mxu0 0
      %1223 = vmatprep.subr.bf16.mxu0 0
      %1224 = vmatpush1.bf16.msra.mxu0 0
      %1225 = vmatprep.subr.bf16.mxu0 0
      %1226 = vmatpush1.bf16.msra.mxu0 0
      %1227 = vmatprep.subr.bf16.mxu0 0
      %1228 = vmatpush1.bf16.msra.mxu0 0
      %1229 = vmatprep.subr.bf16.mxu0 0
      %1230 = vmatpush1.bf16.msra.mxu0 0
      %1231 = vmatprep.subr.bf16.mxu0 0
      %1232 = vmatpush1.bf16.msra.mxu0 0
      %1233 = vmatprep.subr.bf16.mxu0 0
      %1234 = vmatpush1.bf16.msra.mxu0 0
      %1235 = vmatprep.subr.bf16.mxu0 0
      %1236 = vmatpush1.bf16.msra.mxu0 0
      %1237 = vmatprep.subr.bf16.mxu0 0
      %1238 = vmatpush1.bf16.msra.mxu0 0
      %1239 = vmatprep.subr.bf16.mxu0 0
      %1240 = vmatpush1.bf16.msra.mxu0 0
      %1241 = vmatprep.subr.bf16.mxu0 0
      %1242 = vmatpush1.bf16.msra.mxu0 0
      %1243 = vmatprep.subr.bf16.mxu0 0
      %1244 = vmatpush1.bf16.msra.mxu0 0
      %1245 = vmatprep.subr.bf16.mxu0 0
      %1246 = vmatpush1.bf16.msra.mxu0 0
      %1247 = vmatprep.subr.bf16.mxu0 0
      %1248 = vmatpush1.bf16.msra.mxu0 0
      %1249 = vmatprep.mubr.bf16.mxu0 0
      %1250 = vmatmul.mubr.bf16.gmra.mrb[0].mxu0 %v986
      %v1251 = vpop.f32.mrb[0].mxu0
      %v1252 = vadd.f32 %v1203, %v1251
      %v1253 = vpop.f32.mrb[0].mxu0
      %v1254 = vpop.f32.mrb[0].mxu0
      %v1255 = vadd.f32 %v1203, %v1254
      %v1256 = vpop.f32.mrb[0].mxu0
      %1257 = vmatprep.mubr.bf16.mxu0 0
      %1258 = vmatmul.mubr.bf16.gmra.mrb[0].mxu0 %v989
      %v1259 = vpop.f32.mrb[0].mxu0
      %v1260 = vadd.f32 %v1203, %v1259
      %v1261 = vpop.f32.mrb[0].mxu0
      %v1262 = vpop.f32.mrb[0].mxu0
      %v1263 = vadd.f32 %v1203, %v1262
      %v1264 = vpop.f32.mrb[0].mxu0
      %1265 = vmatprep.mubr.bf16.mxu0 0
      %1266 = vmatmul.mubr.bf16.gmra.mrb[0].mxu0 %v992
      %v1267 = vpop.f32.mrb[0].mxu0
      %v1268 = vadd.f32 %v1203, %v1267
      %v1269 = vpop.f32.mrb[0].mxu0
      %v1270 = vpop.f32.mrb[0].mxu0
      %v1271 = vadd.f32 %v1203, %v1270
      %v1272 = vpop.f32.mrb[0].mxu0
      %1273 = vmatprep.mubr.bf16.mxu0 0
      %1274 = vmatmul.mubr.bf16.gmra.mrb[0].mxu0 %v995
      %v1275 = vpop.f32.mrb[0].mxu0
      %v1276 = vadd.f32 %v1203, %v1275
      %v1277 = vpop.f32.mrb[0].mxu0
      %v1278 = vpop.f32.mrb[0].mxu0
      %v1279 = vadd.f32 %v1203, %v1278
      %v1280 = vpop.f32.mrb[0].mxu0
      %1281 = vmatprep.mubr.bf16.mxu0 0
      %1282 = vmatmul.mubr.bf16.gmra.mrb[0].mxu0 %v998
      %v1283 = vpop.f32.mrb[0].mxu0
      %v1284 = vadd.f32 %v1203, %v1283
      %v1285 = vpop.f32.mrb[0].mxu0
      %v1286 = vpop.f32.mrb[0].mxu0
      %v1287 = vadd.f32 %v1203, %v1286
      %v1288 = vpop.f32.mrb[0].mxu0
      %1289 = vmatprep.mubr.bf16.mxu0 0
      %1290 = vmatmul.mubr.bf16.gmra.mrb[0].mxu0 %v1001
      %v1291 = vpop.f32.mrb[0].mxu0
      %v1292 = vadd.f32 %v1203, %v1291
      %v1293 = vpop.f32.mrb[0].mxu0
      %v1294 = vpop.f32.mrb[0].mxu0
      %v1295 = vadd.f32 %v1203, %v1294
      %v1296 = vpop.f32.mrb[0].mxu0
      %1297 = vmatprep.mubr.bf16.mxu0 0
      %1298 = vmatmul.mubr.bf16.gmra.mrb[0].mxu0 %v1004
      %v1299 = vpop.f32.mrb[0].mxu0
      %v1300 = vadd.f32 %v1203, %v1299
      %v1301 = vpop.f32.mrb[0].mxu0
      %v1302 = vpop.f32.mrb[0].mxu0
      %v1303 = vadd.f32 %v1203, %v1302
      %v1304 = vpop.f32.mrb[0].mxu0
      %1305 = vmatprep.mubr.bf16.mxu0 0
      %1306 = vmatmul.mubr.bf16.gmra.mrb[0].mxu0 %v1007
      %v1307 = vpop.f32.mrb[0].mxu0
      %v1308 = vadd.f32 %v1203, %v1307
      %v1309 = vpop.f32.mrb[0].mxu0
      %v1310 = vpop.f32.mrb[0].mxu0
      %v1311 = vadd.f32 %v1203, %v1310
      %v1312 = vpop.f32.mrb[0].mxu0
      %1313 = vmatprep.mubr.bf16.mxu0 0
      %1314 = vmatmul.mubr.bf16.gmra.mrb[0].mxu0 %v1010
      %v1315 = vpop.f32.mrb[0].mxu0
      %v1316 = vadd.f32 %v1203, %v1315
      %v1317 = vpop.f32.mrb[0].mxu0
      %v1318 = vpop.f32.mrb[0].mxu0
      %v1319 = vadd.f32 %v1203, %v1318
      %v1320 = vpop.f32.mrb[0].mxu0
      %1321 = vmatprep.mubr.bf16.mxu0 0
      %1322 = vmatmul.mubr.bf16.gmra.mrb[0].mxu0 %v1013
      %v1323 = vpop.f32.mrb[0].mxu0
      %v1324 = vadd.f32 %v1203, %v1323
      %v1325 = vpop.f32.mrb[0].mxu0
      %v1326 = vpop.f32.mrb[0].mxu0
      %v1327 = vadd.f32 %v1203, %v1326
      %v1328 = vpop.f32.mrb[0].mxu0
      %1329 = vmatprep.mubr.bf16.mxu0 0
      %1330 = vmatmul.mubr.bf16.gmra.mrb[0].mxu0 %v1016
      %v1331 = vpop.f32.mrb[0].mxu0
      %v1332 = vadd.f32 %v1203, %v1331
      %v1333 = vpop.f32.mrb[0].mxu0
      %v1334 = vpop.f32.mrb[0].mxu0
      %v1335 = vadd.f32 %v1203, %v1334
      %v1336 = vpop.f32.mrb[0].mxu0
      %1337 = vmatprep.mubr.bf16.mxu0 0
      %1338 = vmatmul.mubr.bf16.gmra.mrb[0].mxu0 %v1019
      %v1339 = vpop.f32.mrb[0].mxu0
      %v1340 = vadd.f32 %v1203, %v1339
      %v1341 = vpop.f32.mrb[0].mxu0
      %v1342 = vpop.f32.mrb[0].mxu0
      %v1343 = vadd.f32 %v1203, %v1342
      %v1344 = vpop.f32.mrb[0].mxu0
      %1345 = vmatprep.mubr.bf16.mxu0 0
      %1346 = vmatmul.mubr.bf16.gmra.mrb[0].mxu0 %v1022
      %v1347 = vpop.f32.mrb[0].mxu0
      %v1348 = vadd.f32 %v1203, %v1347
      %v1349 = vpop.f32.mrb[0].mxu0
      %v1350 = vpop.f32.mrb[0].mxu0
      %v1351 = vadd.f32 %v1203, %v1350
      %v1352 = vpop.f32.mrb[0].mxu0
      %1353 = vmatprep.mubr.bf16.mxu0 0
      %1354 = vmatmul.mubr.bf16.gmra.mrb[0].mxu0 %v1025
      %v1355 = vpop.f32.mrb[0].mxu0
      %v1356 = vadd.f32 %v1203, %v1355
      %v1357 = vpop.f32.mrb[0].mxu0
      %v1358 = vpop.f32.mrb[0].mxu0
      %v1359 = vadd.f32 %v1203, %v1358
      %v1360 = vpop.f32.mrb[0].mxu0
      %1361 = vmatprep.mubr.bf16.mxu0 0
      %1362 = vmatmul.mubr.bf16.gmra.mrb[0].mxu0 %v1028
      %v1363 = vpop.f32.mrb[0].mxu0
      %v1364 = vadd.f32 %v1203, %v1363
      %v1365 = vpop.f32.mrb[0].mxu0
      %v1366 = vpop.f32.mrb[0].mxu0
      %v1367 = vadd.f32 %v1203, %v1366
      %v1368 = vpop.f32.mrb[0].mxu0
      %1369 = vmatprep.mubr.bf16.mxu0 0
      %1370 = vmatmul.mubr.bf16.gmra.mrb[0].mxu0 %v1031
      %v1371 = vpop.f32.mrb[0].mxu0
      %v1372 = vadd.f32 %v1203, %v1371
      %v1373 = vpop.f32.mrb[0].mxu0
      %v1374 = vpop.f32.mrb[0].mxu0
      %v1375 = vadd.f32 %v1203, %v1374
      %v1376 = vpop.f32.mrb[0].mxu0
      %1377 = vdwg.mxu0
      %v1378 = vld [vmem:[%s7] sm:$0xf]
      %v1379 = vld [vmem:[%s7 + $0x4] sm:$0xf]
      %v1380 = vld [vmem:[%s7 + $0x8] sm:$0xf]
      %v1381 = vld [vmem:[%s7 + $0xc] sm:$0xf]
      %v1382 = vld [vmem:[%s8] sm:$0x1]
      %v1384 = vlaneseq
      %v1385 = vshrl.u32 %v1384, 7
      %v1386 = vsub.s32 0, %v1385
      %v1387 = vrot.slane %v1382, %v1386
      %v1393 = vunpack.c.l.b16 %v1378
      %v1394 = vunpack.c.l.b16 %v1379
      %v1395 = vunpack.c.l.b16 %v1380
      %v1396 = vunpack.c.l.b16 %v1381
      %v1397 = vpack.c.b16 %v1394, %v1393
      %v1398 = vpack.c.b16 %v1396, %v1395
      %1401 = vmatprep.subr.bf16.mxu0 0
      %1402 = vmatpush1.bf16.msra.mxu0 %v1397
      %1403 = vmatprep.subr.bf16.mxu0 0
      %1404 = vmatpush1.bf16.msra.mxu0 %v1398
      %1405 = vmatprep.subr.bf16.mxu0 0
      %1406 = vmatpush1.bf16.msra.mxu0 0
      %1407 = vmatprep.subr.bf16.mxu0 0
      %1408 = vmatpush1.bf16.msra.mxu0 0
      %1409 = vmatprep.subr.bf16.mxu0 0
      %1410 = vmatpush1.bf16.msra.mxu0 0
      %1411 = vmatprep.subr.bf16.mxu0 0
      %1412 = vmatpush1.bf16.msra.mxu0 0
      %1413 = vmatprep.subr.bf16.mxu0 0
      %1414 = vmatpush1.bf16.msra.mxu0 0
      %1415 = vmatprep.subr.bf16.mxu0 0
      %1416 = vmatpush1.bf16.msra.mxu0 0
      %1417 = vmatprep.subr.bf16.mxu0 0
      %1418 = vmatpush1.bf16.msra.mxu0 0
      %1419 = vmatprep.subr.bf16.mxu0 0
      %1420 = vmatpush1.bf16.msra.mxu0 0
      %1421 = vmatprep.subr.bf16.mxu0 0
      %1422 = vmatpush1.bf16.msra.mxu0 0
      %1423 = vmatprep.subr.bf16.mxu0 0
      %1424 = vmatpush1.bf16.msra.mxu0 0
      %1425 = vmatprep.subr.bf16.mxu0 0
      %1426 = vmatpush1.bf16.msra.mxu0 0
      %1427 = vmatprep.subr.bf16.mxu0 0
      %1428 = vmatpush1.bf16.msra.mxu0 0
      %1429 = vmatprep.subr.bf16.mxu0 0
      %1430 = vmatpush1.bf16.msra.mxu0 0
      %1431 = vmatprep.subr.bf16.mxu0 0
      %1432 = vmatpush1.bf16.msra.mxu0 0
      %1433 = vmatprep.mubr.bf16.mxu0 0
      %1434 = vmatmul.mubr.bf16.gmra.mrb[0].mxu0 %v986
      %v1435 = vpop.f32.mrb[0].mxu0
      %v1436 = vadd.f32 %v1387, %v1435
      %v1437 = vpop.f32.mrb[0].mxu0
      %v1438 = vpop.f32.mrb[0].mxu0
      %v1439 = vadd.f32 %v1387, %v1438
      %v1440 = vpop.f32.mrb[0].mxu0
      %1441 = vmatprep.mubr.bf16.mxu0 0
      %1442 = vmatmul.mubr.bf16.gmra.mrb[0].mxu0 %v989
      %v1443 = vpop.f32.mrb[0].mxu0
      %v1444 = vadd.f32 %v1387, %v1443
      %v1445 = vpop.f32.mrb[0].mxu0
      %v1446 = vpop.f32.mrb[0].mxu0
      %v1447 = vadd.f32 %v1387, %v1446
      %v1448 = vpop.f32.mrb[0].mxu0
      %1449 = vmatprep.mubr.bf16.mxu0 0
      %1450 = vmatmul.mubr.bf16.gmra.mrb[0].mxu0 %v992
      %v1451 = vpop.f32.mrb[0].mxu0
      %v1452 = vadd.f32 %v1387, %v1451
      %v1453 = vpop.f32.mrb[0].mxu0
      %v1454 = vpop.f32.mrb[0].mxu0
      %v1455 = vadd.f32 %v1387, %v1454
      %v1456 = vpop.f32.mrb[0].mxu0
      %1457 = vmatprep.mubr.bf16.mxu0 0
      %1458 = vmatmul.mubr.bf16.gmra.mrb[0].mxu0 %v995
      %v1459 = vpop.f32.mrb[0].mxu0
      %v1460 = vadd.f32 %v1387, %v1459
      %v1461 = vpop.f32.mrb[0].mxu0
      %v1462 = vpop.f32.mrb[0].mxu0
      %v1463 = vadd.f32 %v1387, %v1462
      %v1464 = vpop.f32.mrb[0].mxu0
      %1465 = vmatprep.mubr.bf16.mxu0 0
      %1466 = vmatmul.mubr.bf16.gmra.mrb[0].mxu0 %v998
      %v1467 = vpop.f32.mrb[0].mxu0
      %v1468 = vadd.f32 %v1387, %v1467
      %v1469 = vpop.f32.mrb[0].mxu0
      %v1470 = vpop.f32.mrb[0].mxu0
      %v1471 = vadd.f32 %v1387, %v1470
      %v1472 = vpop.f32.mrb[0].mxu0
      %1473 = vmatprep.mubr.bf16.mxu0 0
      %1474 = vmatmul.mubr.bf16.gmra.mrb[0].mxu0 %v1001
      %v1475 = vpop.f32.mrb[0].mxu0
      %v1476 = vadd.f32 %v1387, %v1475
      %v1477 = vpop.f32.mrb[0].mxu0
      %v1478 = vpop.f32.mrb[0].mxu0
      %v1479 = vadd.f32 %v1387, %v1478
      %v1480 = vpop.f32.mrb[0].mxu0
      %1481 = vmatprep.mubr.bf16.mxu0 0
      %1482 = vmatmul.mubr.bf16.gmra.mrb[0].mxu0 %v1004
      %v1483 = vpop.f32.mrb[0].mxu0
      %v1484 = vadd.f32 %v1387, %v1483
      %v1485 = vpop.f32.mrb[0].mxu0
      %v1486 = vpop.f32.mrb[0].mxu0
      %v1487 = vadd.f32 %v1387, %v1486
      %v1488 = vpop.f32.mrb[0].mxu0
      %1489 = vmatprep.mubr.bf16.mxu0 0
      %1490 = vmatmul.mubr.bf16.gmra.mrb[0].mxu0 %v1007
      %v1491 = vpop.f32.mrb[0].mxu0
      %v1492 = vadd.f32 %v1387, %v1491
      %v1493 = vpop.f32.mrb[0].mxu0
      %v1494 = vpop.f32.mrb[0].mxu0
      %v1495 = vadd.f32 %v1387, %v1494
      %v1496 = vpop.f32.mrb[0].mxu0
      %1497 = vmatprep.mubr.bf16.mxu0 0
      %1498 = vmatmul.mubr.bf16.gmra.mrb[0].mxu0 %v1010
      %v1499 = vpop.f32.mrb[0].mxu0
      %v1500 = vadd.f32 %v1387, %v1499
      %v1501 = vpop.f32.mrb[0].mxu0
      %v1502 = vpop.f32.mrb[0].mxu0
      %v1503 = vadd.f32 %v1387, %v1502
      %v1504 = vpop.f32.mrb[0].mxu0
      %1505 = vmatprep.mubr.bf16.mxu0 0
      %1506 = vmatmul.mubr.bf16.gmra.mrb[0].mxu0 %v1013
      %v1507 = vpop.f32.mrb[0].mxu0
      %v1508 = vadd.f32 %v1387, %v1507
      %v1509 = vpop.f32.mrb[0].mxu0
      %v1510 = vpop.f32.mrb[0].mxu0
      %v1511 = vadd.f32 %v1387, %v1510
      %v1512 = vpop.f32.mrb[0].mxu0
      %1513 = vmatprep.mubr.bf16.mxu0 0
      %1514 = vmatmul.mubr.bf16.gmra.mrb[0].mxu0 %v1016
      %v1515 = vpop.f32.mrb[0].mxu0
      %v1516 = vadd.f32 %v1387, %v1515
      %v1517 = vpop.f32.mrb[0].mxu0
      %v1518 = vpop.f32.mrb[0].mxu0
      %v1519 = vadd.f32 %v1387, %v1518
      %v1520 = vpop.f32.mrb[0].mxu0
      %1521 = vmatprep.mubr.bf16.mxu0 0
      %1522 = vmatmul.mubr.bf16.gmra.mrb[0].mxu0 %v1019
      %v1523 = vpop.f32.mrb[0].mxu0
      %v1524 = vadd.f32 %v1387, %v1523
      %v1525 = vpop.f32.mrb[0].mxu0
      %v1526 = vpop.f32.mrb[0].mxu0
      %v1527 = vadd.f32 %v1387, %v1526
      %v1528 = vpop.f32.mrb[0].mxu0
      %1529 = vmatprep.mubr.bf16.mxu0 0
      %1530 = vmatmul.mubr.bf16.gmra.mrb[0].mxu0 %v1022
      %v1531 = vpop.f32.mrb[0].mxu0
      %v1532 = vadd.f32 %v1387, %v1531
      %v1533 = vpop.f32.mrb[0].mxu0
      %v1534 = vpop.f32.mrb[0].mxu0
      %v1535 = vadd.f32 %v1387, %v1534
      %v1536 = vpop.f32.mrb[0].mxu0
      %1537 = vmatprep.mubr.bf16.mxu0 0
      %1538 = vmatmul.mubr.bf16.gmra.mrb[0].mxu0 %v1025
      %v1539 = vpop.f32.mrb[0].mxu0
      %v1540 = vadd.f32 %v1387, %v1539
      %v1541 = vpop.f32.mrb[0].mxu0
      %v1542 = vpop.f32.mrb[0].mxu0
      %v1543 = vadd.f32 %v1387, %v1542
      %v1544 = vpop.f32.mrb[0].mxu0
      %1545 = vmatprep.mubr.bf16.mxu0 0
      %1546 = vmatmul.mubr.bf16.gmra.mrb[0].mxu0 %v1028
      %v1547 = vpop.f32.mrb[0].mxu0
      %v1548 = vadd.f32 %v1387, %v1547
      %v1549 = vpop.f32.mrb[0].mxu0
      %v1550 = vpop.f32.mrb[0].mxu0
      %v1551 = vadd.f32 %v1387, %v1550
      %v1552 = vpop.f32.mrb[0].mxu0
      %1553 = vmatprep.mubr.bf16.mxu0 0
      %1554 = vmatmul.mubr.bf16.gmra.mrb[0].mxu0 %v1031
      %v1555 = vpop.f32.mrb[0].mxu0
      %v1556 = vadd.f32 %v1387, %v1555
      %v1557 = vpop.f32.mrb[0].mxu0
      %v1558 = vpop.f32.mrb[0].mxu0
      %v1559 = vadd.f32 %v1387, %v1558
      %v1560 = vpop.f32.mrb[0].mxu0
      %1561 = vdwg.mxu0
      %vm1562 = vcmask 23552
      %v1563 = vsel %vm1562, %v1436, -inf
      %1564 = vmax.xlane.f32.xlu0 %v1563
      %v1565 = vpop.xlane.xlu0 %1564
      %v1566 = vsel %vm1562, %v1439, -inf
      %1567 = vmax.xlane.f32.xlu0 %v1566
      %v1568 = vpop.xlane.xlu0 %1567
      %v1569 = vsel %vm1562, %v1444, -inf
      %1570 = vmax.xlane.f32.xlu0 %v1569
      %v1571 = vpop.xlane.xlu0 %1570
      %v1572 = vsel %vm1562, %v1447, -inf
      %1573 = vmax.xlane.f32.xlu0 %v1572
      %v1574 = vpop.xlane.xlu0 %1573
      %v1575 = vsel %vm1562, %v1452, -inf
      %1576 = vmax.xlane.f32.xlu0 %v1575
      %v1577 = vpop.xlane.xlu0 %1576
      %v1578 = vsel %vm1562, %v1455, -inf
      %1579 = vmax.xlane.f32.xlu0 %v1578
      %v1580 = vpop.xlane.xlu0 %1579
      %v1581 = vsel %vm1562, %v1460, -inf
      %1582 = vmax.xlane.f32.xlu0 %v1581
      %v1583 = vpop.xlane.xlu0 %1582
      %v1584 = vsel %vm1562, %v1463, -inf
      %1585 = vmax.xlane.f32.xlu0 %v1584
      %v1586 = vpop.xlane.xlu0 %1585
      %v1587 = vsel %vm1562, %v1468, -inf
      %1588 = vmax.xlane.f32.xlu0 %v1587
      %v1589 = vpop.xlane.xlu0 %1588
      %v1590 = vsel %vm1562, %v1471, -inf
      %1591 = vmax.xlane.f32.xlu0 %v1590
      %v1592 = vpop.xlane.xlu0 %1591
      %v1593 = vsel %vm1562, %v1476, -inf
      %1594 = vmax.xlane.f32.xlu0 %v1593
      %v1595 = vpop.xlane.xlu0 %1594
      %v1596 = vsel %vm1562, %v1479, -inf
      %1597 = vmax.xlane.f32.xlu0 %v1596
      %v1598 = vpop.xlane.xlu0 %1597
      %v1599 = vsel %vm1562, %v1484, -inf
      %1600 = vmax.xlane.f32.xlu0 %v1599
      %v1601 = vpop.xlane.xlu0 %1600
      %v1602 = vsel %vm1562, %v1487, -inf
      %1603 = vmax.xlane.f32.xlu0 %v1602
      %v1604 = vpop.xlane.xlu0 %1603
      %v1605 = vsel %vm1562, %v1492, -inf
      %1606 = vmax.xlane.f32.xlu0 %v1605
      %v1607 = vpop.xlane.xlu0 %1606
      %v1608 = vsel %vm1562, %v1495, -inf
      %1609 = vmax.xlane.f32.xlu0 %v1608
      %v1610 = vpop.xlane.xlu0 %1609
      %v1611 = vsel %vm1562, %v1500, -inf
      %1612 = vmax.xlane.f32.xlu0 %v1611
      %v1613 = vpop.xlane.xlu0 %1612
      %v1614 = vsel %vm1562, %v1503, -inf
      %1615 = vmax.xlane.f32.xlu0 %v1614
      %v1616 = vpop.xlane.xlu0 %1615
      %v1617 = vsel %vm1562, %v1508, -inf
      %1618 = vmax.xlane.f32.xlu0 %v1617
      %v1619 = vpop.xlane.xlu0 %1618
      %v1620 = vsel %vm1562, %v1511, -inf
      %1621 = vmax.xlane.f32.xlu0 %v1620
      %v1622 = vpop.xlane.xlu0 %1621
      %v1623 = vsel %vm1562, %v1516, -inf
      %1624 = vmax.xlane.f32.xlu0 %v1623
      %v1625 = vpop.xlane.xlu0 %1624
      %v1626 = vsel %vm1562, %v1519, -inf
      %1627 = vmax.xlane.f32.xlu0 %v1626
      %v1628 = vpop.xlane.xlu0 %1627
      %v1629 = vsel %vm1562, %v1524, -inf
      %1630 = vmax.xlane.f32.xlu0 %v1629
      %v1631 = vpop.xlane.xlu0 %1630
      %v1632 = vsel %vm1562, %v1527, -inf
      %1633 = vmax.xlane.f32.xlu0 %v1632
      %v1634 = vpop.xlane.xlu0 %1633
      %v1635 = vsel %vm1562, %v1532, -inf
      %1636 = vmax.xlane.f32.xlu0 %v1635
      %v1637 = vpop.xlane.xlu0 %1636
      %v1638 = vsel %vm1562, %v1535, -inf
      %1639 = vmax.xlane.f32.xlu0 %v1638
      %v1640 = vpop.xlane.xlu0 %1639
      %v1641 = vsel %vm1562, %v1540, -inf
      %1642 = vmax.xlane.f32.xlu0 %v1641
      %v1643 = vpop.xlane.xlu0 %1642
      %v1644 = vsel %vm1562, %v1543, -inf
      %1645 = vmax.xlane.f32.xlu0 %v1644
      %v1646 = vpop.xlane.xlu0 %1645
      %v1647 = vsel %vm1562, %v1548, -inf
      %1648 = vmax.xlane.f32.xlu0 %v1647
      %v1649 = vpop.xlane.xlu0 %1648
      %v1650 = vsel %vm1562, %v1551, -inf
      %1651 = vmax.xlane.f32.xlu0 %v1650
      %v1652 = vpop.xlane.xlu0 %1651
      %v1653 = vsel %vm1562, %v1556, -inf
      %1654 = vmax.xlane.f32.xlu0 %v1653
      %v1655 = vpop.xlane.xlu0 %1654
      %v1656 = vsel %vm1562, %v1559, -inf
      %1657 = vmax.xlane.f32.xlu0 %v1656
      %v1658 = vpop.xlane.xlu0 %1657
      %v1659 = vsub.f32 %v1436, %v1565
      %v1660 = vsub.f32 %v1439, %v1568
      %v1661 = vsub.f32 %v1444, %v1571
      %v1662 = vsub.f32 %v1447, %v1574
      %v1663 = vsub.f32 %v1452, %v1577
      %v1664 = vsub.f32 %v1455, %v1580
      %v1665 = vsub.f32 %v1460, %v1583
      %v1666 = vsub.f32 %v1463, %v1586
      %v1667 = vsub.f32 %v1468, %v1589
      %v1668 = vsub.f32 %v1471, %v1592
      %v1669 = vsub.f32 %v1476, %v1595
      %v1670 = vsub.f32 %v1479, %v1598
      %v1671 = vsub.f32 %v1484, %v1601
      %v1672 = vsub.f32 %v1487, %v1604
      %v1673 = vsub.f32 %v1492, %v1607
      %v1674 = vsub.f32 %v1495, %v1610
      %v1675 = vsub.f32 %v1500, %v1613
      %v1676 = vsub.f32 %v1503, %v1616
      %v1677 = vsub.f32 %v1508, %v1619
      %v1678 = vsub.f32 %v1511, %v1622
      %v1679 = vsub.f32 %v1516, %v1625
      %v1680 = vsub.f32 %v1519, %v1628
      %v1681 = vsub.f32 %v1524, %v1631
      %v1682 = vsub.f32 %v1527, %v1634
      %v1683 = vsub.f32 %v1532, %v1637
      %v1684 = vsub.f32 %v1535, %v1640
      %v1685 = vsub.f32 %v1540, %v1643
      %v1686 = vsub.f32 %v1543, %v1646
      %v1687 = vsub.f32 %v1548, %v1649
      %v1688 = vsub.f32 %v1551, %v1652
      %v1689 = vsub.f32 %v1556, %v1655
      %v1690 = vsub.f32 %v1559, %v1658
      %v1691 = vmul.f32 %v1659, 1.442695
      %v1692 = vpow.pop %v1691
      %v1693 = vmul.f32 %v1660, 1.442695
      %v1694 = vpow.pop %v1693
      %v1695 = vmul.f32 %v1661, 1.442695
      %v1696 = vpow.pop %v1695
      %v1697 = vmul.f32 %v1662, 1.442695
      %v1698 = vpow.pop %v1697
      %v1699 = vmul.f32 %v1663, 1.442695
      %v1700 = vpow.pop %v1699
      %v1701 = vmul.f32 %v1664, 1.442695
      %v1702 = vpow.pop %v1701
      %v1703 = vmul.f32 %v1665, 1.442695
      %v1704 = vpow.pop %v1703
      %v1705 = vmul.f32 %v1666, 1.442695
      %v1706 = vpow.pop %v1705
      %v1707 = vmul.f32 %v1667, 1.442695
      %v1708 = vpow.pop %v1707
      %v1709 = vmul.f32 %v1668, 1.442695
      %v1710 = vpow.pop %v1709
      %v1711 = vmul.f32 %v1669, 1.442695
      %v1712 = vpow.pop %v1711
      %v1713 = vmul.f32 %v1670, 1.442695
      %v1714 = vpow.pop %v1713
      %v1715 = vmul.f32 %v1671, 1.442695
      %v1716 = vpow.pop %v1715
      %v1717 = vmul.f32 %v1672, 1.442695
      %v1718 = vpow.pop %v1717
      %v1719 = vmul.f32 %v1673, 1.442695
      %v1720 = vpow.pop %v1719
      %v1721 = vmul.f32 %v1674, 1.442695
      %v1722 = vpow.pop %v1721
      %v1723 = vmul.f32 %v1675, 1.442695
      %v1724 = vpow.pop %v1723
      %v1725 = vmul.f32 %v1676, 1.442695
      %v1726 = vpow.pop %v1725
      %v1727 = vmul.f32 %v1677, 1.442695
      %v1728 = vpow.pop %v1727
      %v1729 = vmul.f32 %v1678, 1.442695
      %v1730 = vpow.pop %v1729
      %v1731 = vmul.f32 %v1679, 1.442695
      %v1732 = vpow.pop %v1731
      %v1733 = vmul.f32 %v1680, 1.442695
      %v1734 = vpow.pop %v1733
      %v1735 = vmul.f32 %v1681, 1.442695
      %v1736 = vpow.pop %v1735
      %v1737 = vmul.f32 %v1682, 1.442695
      %v1738 = vpow.pop %v1737
      %v1739 = vmul.f32 %v1683, 1.442695
      %v1740 = vpow.pop %v1739
      %v1741 = vmul.f32 %v1684, 1.442695
      %v1742 = vpow.pop %v1741
      %v1743 = vmul.f32 %v1685, 1.442695
      %v1744 = vpow.pop %v1743
      %v1745 = vmul.f32 %v1686, 1.442695
      %v1746 = vpow.pop %v1745
      %v1747 = vmul.f32 %v1687, 1.442695
      %v1748 = vpow.pop %v1747
      %v1749 = vmul.f32 %v1688, 1.442695
      %v1750 = vpow.pop %v1749
      %v1751 = vmul.f32 %v1689, 1.442695
      %v1752 = vpow.pop %v1751
      %v1753 = vmul.f32 %v1690, 1.442695
      %v1754 = vpow.pop %v1753
      %v1755 = vsel %vm1562, %v1692, 0.0
      %1756 = vadd.xlane.f32.xlu0 %v1755
      %v1757 = vpop.xlane.xlu0 %1756
      %v1758 = vsel %vm1562, %v1694, 0.0
      %1759 = vadd.xlane.f32.xlu0 %v1758
      %v1760 = vpop.xlane.xlu0 %1759
      %v1761 = vsel %vm1562, %v1696, 0.0
      %1762 = vadd.xlane.f32.xlu0 %v1761
      %v1763 = vpop.xlane.xlu0 %1762
      %v1764 = vsel %vm1562, %v1698, 0.0
      %1765 = vadd.xlane.f32.xlu0 %v1764
      %v1766 = vpop.xlane.xlu0 %1765
      %v1767 = vsel %vm1562, %v1700, 0.0
      %1768 = vadd.xlane.f32.xlu0 %v1767
      %v1769 = vpop.xlane.xlu0 %1768
      %v1770 = vsel %vm1562, %v1702, 0.0
      %1771 = vadd.xlane.f32.xlu0 %v1770
      %v1772 = vpop.xlane.xlu0 %1771
      %v1773 = vsel %vm1562, %v1704, 0.0
      %1774 = vadd.xlane.f32.xlu0 %v1773
      %v1775 = vpop.xlane.xlu0 %1774
      %v1776 = vsel %vm1562, %v1706, 0.0
      %1777 = vadd.xlane.f32.xlu0 %v1776
      %v1778 = vpop.xlane.xlu0 %1777
      %v1779 = vsel %vm1562, %v1708, 0.0
      %1780 = vadd.xlane.f32.xlu0 %v1779
      %v1781 = vpop.xlane.xlu0 %1780
      %v1782 = vsel %vm1562, %v1710, 0.0
      %1783 = vadd.xlane.f32.xlu0 %v1782
      %v1784 = vpop.xlane.xlu0 %1783
      %v1785 = vsel %vm1562, %v1712, 0.0
      %1786 = vadd.xlane.f32.xlu0 %v1785
      %v1787 = vpop.xlane.xlu0 %1786
      %v1788 = vsel %vm1562, %v1714, 0.0
      %1789 = vadd.xlane.f32.xlu0 %v1788
      %v1790 = vpop.xlane.xlu0 %1789
      %v1791 = vsel %vm1562, %v1716, 0.0
      %1792 = vadd.xlane.f32.xlu0 %v1791
      %v1793 = vpop.xlane.xlu0 %1792
      %v1794 = vsel %vm1562, %v1718, 0.0
      %1795 = vadd.xlane.f32.xlu0 %v1794
      %v1796 = vpop.xlane.xlu0 %1795
      %v1797 = vsel %vm1562, %v1720, 0.0
      %1798 = vadd.xlane.f32.xlu0 %v1797
      %v1799 = vpop.xlane.xlu0 %1798
      %v1800 = vsel %vm1562, %v1722, 0.0
      %1801 = vadd.xlane.f32.xlu0 %v1800
      %v1802 = vpop.xlane.xlu0 %1801
      %v1803 = vsel %vm1562, %v1724, 0.0
      %1804 = vadd.xlane.f32.xlu0 %v1803
      %v1805 = vpop.xlane.xlu0 %1804
      %v1806 = vsel %vm1562, %v1726, 0.0
      %1807 = vadd.xlane.f32.xlu0 %v1806
      %v1808 = vpop.xlane.xlu0 %1807
      %v1809 = vsel %vm1562, %v1728, 0.0
      %1810 = vadd.xlane.f32.xlu0 %v1809
      %v1811 = vpop.xlane.xlu0 %1810
      %v1812 = vsel %vm1562, %v1730, 0.0
      %1813 = vadd.xlane.f32.xlu0 %v1812
      %v1814 = vpop.xlane.xlu0 %1813
      %v1815 = vsel %vm1562, %v1732, 0.0
      %1816 = vadd.xlane.f32.xlu0 %v1815
      %v1817 = vpop.xlane.xlu0 %1816
      %v1818 = vsel %vm1562, %v1734, 0.0
      %1819 = vadd.xlane.f32.xlu0 %v1818
      %v1820 = vpop.xlane.xlu0 %1819
      %v1821 = vsel %vm1562, %v1736, 0.0
      %1822 = vadd.xlane.f32.xlu0 %v1821
      %v1823 = vpop.xlane.xlu0 %1822
      %v1824 = vsel %vm1562, %v1738, 0.0
      %1825 = vadd.xlane.f32.xlu0 %v1824
      %v1826 = vpop.xlane.xlu0 %1825
      %v1827 = vsel %vm1562, %v1740, 0.0
      %1828 = vadd.xlane.f32.xlu0 %v1827
      %v1829 = vpop.xlane.xlu0 %1828
      %v1830 = vsel %vm1562, %v1742, 0.0
      %1831 = vadd.xlane.f32.xlu0 %v1830
      %v1832 = vpop.xlane.xlu0 %1831
      %v1833 = vsel %vm1562, %v1744, 0.0
      %1834 = vadd.xlane.f32.xlu0 %v1833
      %v1835 = vpop.xlane.xlu0 %1834
      %v1836 = vsel %vm1562, %v1746, 0.0
      %1837 = vadd.xlane.f32.xlu0 %v1836
      %v1838 = vpop.xlane.xlu0 %1837
      %v1839 = vsel %vm1562, %v1748, 0.0
      %1840 = vadd.xlane.f32.xlu0 %v1839
      %v1841 = vpop.xlane.xlu0 %1840
      %v1842 = vsel %vm1562, %v1750, 0.0
      %1843 = vadd.xlane.f32.xlu0 %v1842
      %v1844 = vpop.xlane.xlu0 %1843
      %v1845 = vsel %vm1562, %v1752, 0.0
      %1846 = vadd.xlane.f32.xlu0 %v1845
      %v1847 = vpop.xlane.xlu0 %1846
      %v1848 = vsel %vm1562, %v1754, 0.0
      %1849 = vadd.xlane.f32.xlu0 %v1848
      %v1850 = vpop.xlane.xlu0 %1849
      %v1851 = vrcp.pop %v1757
      %v1852 = vmul.f32 %v1692, %v1851
      %v1853 = vrcp.pop %v1760
      %v1854 = vmul.f32 %v1694, %v1853
      %v1855 = vrcp.pop %v1763
      %v1856 = vmul.f32 %v1696, %v1855
      %v1857 = vrcp.pop %v1766
      %v1858 = vmul.f32 %v1698, %v1857
      %v1859 = vrcp.pop %v1769
      %v1860 = vmul.f32 %v1700, %v1859
      %v1861 = vrcp.pop %v1772
      %v1862 = vmul.f32 %v1702, %v1861
      %v1863 = vrcp.pop %v1775
      %v1864 = vmul.f32 %v1704, %v1863
      %v1865 = vrcp.pop %v1778
      %v1866 = vmul.f32 %v1706, %v1865
      %v1867 = vrcp.pop %v1781
      %v1868 = vmul.f32 %v1708, %v1867
      %v1869 = vrcp.pop %v1784
      %v1870 = vmul.f32 %v1710, %v1869
      %v1871 = vrcp.pop %v1787
      %v1872 = vmul.f32 %v1712, %v1871
      %v1873 = vrcp.pop %v1790
      %v1874 = vmul.f32 %v1714, %v1873
      %v1875 = vrcp.pop %v1793
      %v1876 = vmul.f32 %v1716, %v1875
      %v1877 = vrcp.pop %v1796
      %v1878 = vmul.f32 %v1718, %v1877
      %v1879 = vrcp.pop %v1799
      %v1880 = vmul.f32 %v1720, %v1879
      %v1881 = vrcp.pop %v1802
      %v1882 = vmul.f32 %v1722, %v1881
      %v1883 = vrcp.pop %v1805
      %v1884 = vmul.f32 %v1724, %v1883
      %v1885 = vrcp.pop %v1808
      %v1886 = vmul.f32 %v1726, %v1885
      %v1887 = vrcp.pop %v1811
      %v1888 = vmul.f32 %v1728, %v1887
      %v1889 = vrcp.pop %v1814
      %v1890 = vmul.f32 %v1730, %v1889
      %v1891 = vrcp.pop %v1817
      %v1892 = vmul.f32 %v1732, %v1891
      %v1893 = vrcp.pop %v1820
      %v1894 = vmul.f32 %v1734, %v1893
      %v1895 = vrcp.pop %v1823
      %v1896 = vmul.f32 %v1736, %v1895
      %v1897 = vrcp.pop %v1826
      %v1898 = vmul.f32 %v1738, %v1897
      %v1899 = vrcp.pop %v1829
      %v1900 = vmul.f32 %v1740, %v1899
      %v1901 = vrcp.pop %v1832
      %v1902 = vmul.f32 %v1742, %v1901
      %v1903 = vrcp.pop %v1835
      %v1904 = vmul.f32 %v1744, %v1903
      %v1905 = vrcp.pop %v1838
      %v1906 = vmul.f32 %v1746, %v1905
      %v1907 = vrcp.pop %v1841
      %v1908 = vmul.f32 %v1748, %v1907
      %v1909 = vrcp.pop %v1844
      %v1910 = vmul.f32 %v1750, %v1909
      %v1911 = vrcp.pop %v1847
      %v1912 = vmul.f32 %v1752, %v1911
      %v1913 = vrcp.pop %v1850
      %v1914 = vmul.f32 %v1754, %v1913
      %v1915 = vpack.c.bf16 %v1071, %v1068
      %v1916 = vpack.c.bf16 %v1079, %v1076
      %v1917 = vpack.c.bf16 %v1087, %v1084
      %v1918 = vpack.c.bf16 %v1095, %v1092
      %v1919 = vpack.c.bf16 %v1103, %v1100
      %v1920 = vpack.c.bf16 %v1111, %v1108
      %v1921 = vpack.c.bf16 %v1119, %v1116
      %v1922 = vpack.c.bf16 %v1127, %v1124
      %v1923 = vpack.c.bf16 %v1135, %v1132
      %v1924 = vpack.c.bf16 %v1143, %v1140
      %v1925 = vpack.c.bf16 %v1151, %v1148
      %v1926 = vpack.c.bf16 %v1159, %v1156
      %v1927 = vpack.c.bf16 %v1167, %v1164
      %v1928 = vpack.c.bf16 %v1175, %v1172
      %v1929 = vpack.c.bf16 %v1183, %v1180
      %v1930 = vpack.c.bf16 %v1191, %v1188
      %v1947 = vunpack.c.l.b16 %v1915
      %v1948 = vunpack.c.h.b16 %v1915
      %v1949 = vunpack.c.l.b16 %v1916
      %v1950 = vunpack.c.h.b16 %v1916
      %v1951 = vunpack.c.l.b16 %v1917
      %v1952 = vunpack.c.h.b16 %v1917
      %v1953 = vunpack.c.l.b16 %v1918
      %v1954 = vunpack.c.h.b16 %v1918
      %v1955 = vunpack.c.l.b16 %v1919
      %v1956 = vunpack.c.h.b16 %v1919
      %v1957 = vunpack.c.l.b16 %v1920
      %v1958 = vunpack.c.h.b16 %v1920
      %v1959 = vunpack.c.l.b16 %v1921
      %v1960 = vunpack.c.h.b16 %v1921
      %v1961 = vunpack.c.l.b16 %v1922
      %v1962 = vunpack.c.h.b16 %v1922
      %v1963 = vunpack.c.l.b16 %v1923
      %v1964 = vunpack.c.h.b16 %v1923
      %v1965 = vunpack.c.l.b16 %v1924
      %v1966 = vunpack.c.h.b16 %v1924
      %v1967 = vunpack.c.l.b16 %v1925
      %v1968 = vunpack.c.h.b16 %v1925
      %v1969 = vunpack.c.l.b16 %v1926
      %v1970 = vunpack.c.h.b16 %v1926
      %v1971 = vunpack.c.l.b16 %v1927
      %v1972 = vunpack.c.h.b16 %v1927
      %v1973 = vunpack.c.l.b16 %v1928
      %v1974 = vunpack.c.h.b16 %v1928
      %v1975 = vunpack.c.l.b16 %v1929
      %v1976 = vunpack.c.h.b16 %v1929
      %v1977 = vunpack.c.l.b16 %v1930
      %v1978 = vunpack.c.h.b16 %v1930
      %v1979 = vpack.c.b16 %v1947, %v1947
      %v1980 = vpack.c.b16 %v1948, %v1948
      %v1981 = vpack.c.b16 %v1949, %v1949
      %v1982 = vpack.c.b16 %v1950, %v1950
      %v1983 = vpack.c.b16 %v1951, %v1951
      %v1984 = vpack.c.b16 %v1952, %v1952
      %v1985 = vpack.c.b16 %v1953, %v1953
      %v1986 = vpack.c.b16 %v1954, %v1954
      %v1987 = vpack.c.b16 %v1955, %v1955
      %v1988 = vpack.c.b16 %v1956, %v1956
      %v1989 = vpack.c.b16 %v1957, %v1957
      %v1990 = vpack.c.b16 %v1958, %v1958
      %v1991 = vpack.c.b16 %v1959, %v1959
      %v1992 = vpack.c.b16 %v1960, %v1960
      %v1993 = vpack.c.b16 %v1961, %v1961
      %v1994 = vpack.c.b16 %v1962, %v1962
      %v1995 = vpack.c.b16 %v1963, %v1963
      %v1996 = vpack.c.b16 %v1964, %v1964
      %v1997 = vpack.c.b16 %v1965, %v1965
      %v1998 = vpack.c.b16 %v1966, %v1966
      %v1999 = vpack.c.b16 %v1967, %v1967
      %v2000 = vpack.c.b16 %v1968, %v1968
      %v2001 = vpack.c.b16 %v1969, %v1969
      %v2002 = vpack.c.b16 %v1970, %v1970
      %v2003 = vpack.c.b16 %v1971, %v1971
      %v2004 = vpack.c.b16 %v1972, %v1972
      %v2005 = vpack.c.b16 %v1973, %v1973
      %v2006 = vpack.c.b16 %v1974, %v1974
      %v2007 = vpack.c.b16 %v1975, %v1975
      %v2008 = vpack.c.b16 %v1976, %v1976
      %v2009 = vpack.c.b16 %v1977, %v1977
      %v2010 = vpack.c.b16 %v1978, %v1978
      %vm2043 = vcmask 257024
      %2044 = vst.msk [vmem:[%s403] sm:$0xf] %vm2043, %v1979
      %2045 = vst.msk [vmem:[%s403 + $0x4] sm:$0xf] %vm2043, %v1980
      %2046 = vst.msk [vmem:[%s403 + $0x8] sm:$0xf] %vm2043, %v1981
      %2047 = vst.msk [vmem:[%s403 + $0xc] sm:$0xf] %vm2043, %v1982
      %2048 = vst.msk [vmem:[%s403 + $0x10] sm:$0xf] %vm2043, %v1983
      %2049 = vst.msk [vmem:[%s403 + $0x14] sm:$0xf] %vm2043, %v1984
      %2050 = vst.msk [vmem:[%s403 + $0x18] sm:$0xf] %vm2043, %v1985
      %2051 = vst.msk [vmem:[%s403 + $0x1c] sm:$0xf] %vm2043, %v1986
      %2052 = vst.msk [vmem:[%s403 + $0x20] sm:$0xf] %vm2043, %v1987
      %2053 = vst.msk [vmem:[%s403 + $0x24] sm:$0xf] %vm2043, %v1988
      %2054 = vst.msk [vmem:[%s403 + $0x28] sm:$0xf] %vm2043, %v1989
      %2055 = vst.msk [vmem:[%s403 + $0x2c] sm:$0xf] %vm2043, %v1990
      %2056 = vst.msk [vmem:[%s403 + $0x30] sm:$0xf] %vm2043, %v1991
      %2057 = vst.msk [vmem:[%s403 + $0x34] sm:$0xf] %vm2043, %v1992
      %2058 = vst.msk [vmem:[%s403 + $0x38] sm:$0xf] %vm2043, %v1993
      %2059 = vst.msk [vmem:[%s403 + $0x3c] sm:$0xf] %vm2043, %v1994
      %2060 = vst.msk [vmem:[%s403 + $0x40] sm:$0xf] %vm2043, %v1995
      %2061 = vst.msk [vmem:[%s403 + $0x44] sm:$0xf] %vm2043, %v1996
      %2062 = vst.msk [vmem:[%s403 + $0x48] sm:$0xf] %vm2043, %v1997
      %2063 = vst.msk [vmem:[%s403 + $0x4c] sm:$0xf] %vm2043, %v1998
      %2064 = vst.msk [vmem:[%s403 + $0x50] sm:$0xf] %vm2043, %v1999
      %2065 = vst.msk [vmem:[%s403 + $0x54] sm:$0xf] %vm2043, %v2000
      %2066 = vst.msk [vmem:[%s403 + $0x58] sm:$0xf] %vm2043, %v2001
      %2067 = vst.msk [vmem:[%s403 + $0x5c] sm:$0xf] %vm2043, %v2002
      %2068 = vst.msk [vmem:[%s403 + $0x60] sm:$0xf] %vm2043, %v2003
      %2069 = vst.msk [vmem:[%s403 + $0x64] sm:$0xf] %vm2043, %v2004
      %2070 = vst.msk [vmem:[%s403 + $0x68] sm:$0xf] %vm2043, %v2005
      %2071 = vst.msk [vmem:[%s403 + $0x6c] sm:$0xf] %vm2043, %v2006
      %2072 = vst.msk [vmem:[%s403 + $0x70] sm:$0xf] %vm2043, %v2007
      %2073 = vst.msk [vmem:[%s403 + $0x74] sm:$0xf] %vm2043, %v2008
      %2074 = vst.msk [vmem:[%s403 + $0x78] sm:$0xf] %vm2043, %v2009
      %2075 = vst.msk [vmem:[%s403 + $0x7c] sm:$0xf] %vm2043, %v2010
      %v2076 = vpack.c.bf16 %v1255, %v1252
      %v2077 = vpack.c.bf16 %v1263, %v1260
      %v2078 = vpack.c.bf16 %v1271, %v1268
      %v2079 = vpack.c.bf16 %v1279, %v1276
      %v2080 = vpack.c.bf16 %v1287, %v1284
      %v2081 = vpack.c.bf16 %v1295, %v1292
      %v2082 = vpack.c.bf16 %v1303, %v1300
      %v2083 = vpack.c.bf16 %v1311, %v1308
      %v2084 = vpack.c.bf16 %v1319, %v1316
      %v2085 = vpack.c.bf16 %v1327, %v1324
      %v2086 = vpack.c.bf16 %v1335, %v1332
      %v2087 = vpack.c.bf16 %v1343, %v1340
      %v2088 = vpack.c.bf16 %v1351, %v1348
      %v2089 = vpack.c.bf16 %v1359, %v1356
      %v2090 = vpack.c.bf16 %v1367, %v1364
      %v2091 = vpack.c.bf16 %v1375, %v1372
      %v2108 = vunpack.c.l.b16 %v2076
      %v2109 = vunpack.c.h.b16 %v2076
      %v2110 = vunpack.c.l.b16 %v2077
      %v2111 = vunpack.c.h.b16 %v2077
      %v2112 = vunpack.c.l.b16 %v2078
      %v2113 = vunpack.c.h.b16 %v2078
      %v2114 = vunpack.c.l.b16 %v2079
      %v2115 = vunpack.c.h.b16 %v2079
      %v2116 = vunpack.c.l.b16 %v2080
      %v2117 = vunpack.c.h.b16 %v2080
      %v2118 = vunpack.c.l.b16 %v2081
      %v2119 = vunpack.c.h.b16 %v2081
      %v2120 = vunpack.c.l.b16 %v2082
      %v2121 = vunpack.c.h.b16 %v2082
      %v2122 = vunpack.c.l.b16 %v2083
      %v2123 = vunpack.c.h.b16 %v2083
      %v2124 = vunpack.c.l.b16 %v2084
      %v2125 = vunpack.c.h.b16 %v2084
      %v2126 = vunpack.c.l.b16 %v2085
      %v2127 = vunpack.c.h.b16 %v2085
      %v2128 = vunpack.c.l.b16 %v2086
      %v2129 = vunpack.c.h.b16 %v2086
      %v2130 = vunpack.c.l.b16 %v2087
      %v2131 = vunpack.c.h.b16 %v2087
      %v2132 = vunpack.c.l.b16 %v2088
      %v2133 = vunpack.c.h.b16 %v2088
      %v2134 = vunpack.c.l.b16 %v2089
      %v2135 = vunpack.c.h.b16 %v2089
      %v2136 = vunpack.c.l.b16 %v2090
      %v2137 = vunpack.c.h.b16 %v2090
      %v2138 = vunpack.c.l.b16 %v2091
      %v2139 = vunpack.c.h.b16 %v2091
      %v2140 = vpack.c.b16 %v2108, %v2108
      %v2141 = vpack.c.b16 %v2109, %v2109
      %v2142 = vpack.c.b16 %v2110, %v2110
      %v2143 = vpack.c.b16 %v2111, %v2111
      %v2144 = vpack.c.b16 %v2112, %v2112
      %v2145 = vpack.c.b16 %v2113, %v2113
      %v2146 = vpack.c.b16 %v2114, %v2114
      %v2147 = vpack.c.b16 %v2115, %v2115
      %v2148 = vpack.c.b16 %v2116, %v2116
      %v2149 = vpack.c.b16 %v2117, %v2117
      %v2150 = vpack.c.b16 %v2118, %v2118
      %v2151 = vpack.c.b16 %v2119, %v2119
      %v2152 = vpack.c.b16 %v2120, %v2120
      %v2153 = vpack.c.b16 %v2121, %v2121
      %v2154 = vpack.c.b16 %v2122, %v2122
      %v2155 = vpack.c.b16 %v2123, %v2123
      %v2156 = vpack.c.b16 %v2124, %v2124
      %v2157 = vpack.c.b16 %v2125, %v2125
      %v2158 = vpack.c.b16 %v2126, %v2126
      %v2159 = vpack.c.b16 %v2127, %v2127
      %v2160 = vpack.c.b16 %v2128, %v2128
      %v2161 = vpack.c.b16 %v2129, %v2129
      %v2162 = vpack.c.b16 %v2130, %v2130
      %v2163 = vpack.c.b16 %v2131, %v2131
      %v2164 = vpack.c.b16 %v2132, %v2132
      %v2165 = vpack.c.b16 %v2133, %v2133
      %v2166 = vpack.c.b16 %v2134, %v2134
      %v2167 = vpack.c.b16 %v2135, %v2135
      %v2168 = vpack.c.b16 %v2136, %v2136
      %v2169 = vpack.c.b16 %v2137, %v2137
      %v2170 = vpack.c.b16 %v2138, %v2138
      %v2171 = vpack.c.b16 %v2139, %v2139
      %2204 = vst.msk [vmem:[%s409] sm:$0xf] %vm2043, %v2140
      %2205 = vst.msk [vmem:[%s409 + $0x4] sm:$0xf] %vm2043, %v2141
      %2206 = vst.msk [vmem:[%s409 + $0x8] sm:$0xf] %vm2043, %v2142
      %2207 = vst.msk [vmem:[%s409 + $0xc] sm:$0xf] %vm2043, %v2143
      %2208 = vst.msk [vmem:[%s409 + $0x10] sm:$0xf] %vm2043, %v2144
      %2209 = vst.msk [vmem:[%s409 + $0x14] sm:$0xf] %vm2043, %v2145
      %2210 = vst.msk [vmem:[%s409 + $0x18] sm:$0xf] %vm2043, %v2146
      %2211 = vst.msk [vmem:[%s409 + $0x1c] sm:$0xf] %vm2043, %v2147
      %2212 = vst.msk [vmem:[%s409 + $0x20] sm:$0xf] %vm2043, %v2148
      %2213 = vst.msk [vmem:[%s409 + $0x24] sm:$0xf] %vm2043, %v2149
      %2214 = vst.msk [vmem:[%s409 + $0x28] sm:$0xf] %vm2043, %v2150
      %2215 = vst.msk [vmem:[%s409 + $0x2c] sm:$0xf] %vm2043, %v2151
      %2216 = vst.msk [vmem:[%s409 + $0x30] sm:$0xf] %vm2043, %v2152
      %2217 = vst.msk [vmem:[%s409 + $0x34] sm:$0xf] %vm2043, %v2153
      %2218 = vst.msk [vmem:[%s409 + $0x38] sm:$0xf] %vm2043, %v2154
      %2219 = vst.msk [vmem:[%s409 + $0x3c] sm:$0xf] %vm2043, %v2155
      %2220 = vst.msk [vmem:[%s409 + $0x40] sm:$0xf] %vm2043, %v2156
      %2221 = vst.msk [vmem:[%s409 + $0x44] sm:$0xf] %vm2043, %v2157
      %2222 = vst.msk [vmem:[%s409 + $0x48] sm:$0xf] %vm2043, %v2158
      %2223 = vst.msk [vmem:[%s409 + $0x4c] sm:$0xf] %vm2043, %v2159
      %2224 = vst.msk [vmem:[%s409 + $0x50] sm:$0xf] %vm2043, %v2160
      %2225 = vst.msk [vmem:[%s409 + $0x54] sm:$0xf] %vm2043, %v2161
      %2226 = vst.msk [vmem:[%s409 + $0x58] sm:$0xf] %vm2043, %v2162
      %2227 = vst.msk [vmem:[%s409 + $0x5c] sm:$0xf] %vm2043, %v2163
      %2228 = vst.msk [vmem:[%s409 + $0x60] sm:$0xf] %vm2043, %v2164
      %2229 = vst.msk [vmem:[%s409 + $0x64] sm:$0xf] %vm2043, %v2165
      %2230 = vst.msk [vmem:[%s409 + $0x68] sm:$0xf] %vm2043, %v2166
      %2231 = vst.msk [vmem:[%s409 + $0x6c] sm:$0xf] %vm2043, %v2167
      %2232 = vst.msk [vmem:[%s409 + $0x70] sm:$0xf] %vm2043, %v2168
      %2233 = vst.msk [vmem:[%s409 + $0x74] sm:$0xf] %vm2043, %v2169
      %2234 = vst.msk [vmem:[%s409 + $0x78] sm:$0xf] %vm2043, %v2170
      %2235 = vst.msk [vmem:[%s409 + $0x7c] sm:$0xf] %vm2043, %v2171
      %v2236 = vpack.c.bf16 %v1854, %v1852
      %v2237 = vpack.c.bf16 %v1858, %v1856
      %v2238 = vpack.c.bf16 %v1862, %v1860
      %v2239 = vpack.c.bf16 %v1866, %v1864
      %v2240 = vpack.c.bf16 %v1870, %v1868
      %v2241 = vpack.c.bf16 %v1874, %v1872
      %v2242 = vpack.c.bf16 %v1878, %v1876
      %v2243 = vpack.c.bf16 %v1882, %v1880
      %v2244 = vpack.c.bf16 %v1886, %v1884
      %v2245 = vpack.c.bf16 %v1890, %v1888
      %v2246 = vpack.c.bf16 %v1894, %v1892
      %v2247 = vpack.c.bf16 %v1898, %v1896
      %v2248 = vpack.c.bf16 %v1902, %v1900
      %v2249 = vpack.c.bf16 %v1906, %v1904
      %v2250 = vpack.c.bf16 %v1910, %v1908
      %v2251 = vpack.c.bf16 %v1914, %v1912
      %v2268 = vunpack.c.l.b16 %v2236
      %v2269 = vunpack.c.h.b16 %v2236
      %v2270 = vunpack.c.l.b16 %v2237
      %v2271 = vunpack.c.h.b16 %v2237
      %v2272 = vunpack.c.l.b16 %v2238
      %v2273 = vunpack.c.h.b16 %v2238
      %v2274 = vunpack.c.l.b16 %v2239
      %v2275 = vunpack.c.h.b16 %v2239
      %v2276 = vunpack.c.l.b16 %v2240
      %v2277 = vunpack.c.h.b16 %v2240
      %v2278 = vunpack.c.l.b16 %v2241
      %v2279 = vunpack.c.h.b16 %v2241
      %v2280 = vunpack.c.l.b16 %v2242
      %v2281 = vunpack.c.h.b16 %v2242
      %v2282 = vunpack.c.l.b16 %v2243
      %v2283 = vunpack.c.h.b16 %v2243
      %v2284 = vunpack.c.l.b16 %v2244
      %v2285 = vunpack.c.h.b16 %v2244
      %v2286 = vunpack.c.l.b16 %v2245
      %v2287 = vunpack.c.h.b16 %v2245
      %v2288 = vunpack.c.l.b16 %v2246
      %v2289 = vunpack.c.h.b16 %v2246
      %v2290 = vunpack.c.l.b16 %v2247
      %v2291 = vunpack.c.h.b16 %v2247
      %v2292 = vunpack.c.l.b16 %v2248
      %v2293 = vunpack.c.h.b16 %v2248
      %v2294 = vunpack.c.l.b16 %v2249
      %v2295 = vunpack.c.h.b16 %v2249
      %v2296 = vunpack.c.l.b16 %v2250
      %v2297 = vunpack.c.h.b16 %v2250
      %v2298 = vunpack.c.l.b16 %v2251
      %v2299 = vunpack.c.h.b16 %v2251
      %v2300 = vpack.c.b16 %v2268, %v2268
      %v2301 = vpack.c.b16 %v2269, %v2269
      %v2302 = vpack.c.b16 %v2270, %v2270
      %v2303 = vpack.c.b16 %v2271, %v2271
      %v2304 = vpack.c.b16 %v2272, %v2272
      %v2305 = vpack.c.b16 %v2273, %v2273
      %v2306 = vpack.c.b16 %v2274, %v2274
      %v2307 = vpack.c.b16 %v2275, %v2275
      %v2308 = vpack.c.b16 %v2276, %v2276
      %v2309 = vpack.c.b16 %v2277, %v2277
      %v2310 = vpack.c.b16 %v2278, %v2278
      %v2311 = vpack.c.b16 %v2279, %v2279
      %v2312 = vpack.c.b16 %v2280, %v2280
      %v2313 = vpack.c.b16 %v2281, %v2281
      %v2314 = vpack.c.b16 %v2282, %v2282
      %v2315 = vpack.c.b16 %v2283, %v2283
      %v2316 = vpack.c.b16 %v2284, %v2284
      %v2317 = vpack.c.b16 %v2285, %v2285
      %v2318 = vpack.c.b16 %v2286, %v2286
      %v2319 = vpack.c.b16 %v2287, %v2287
      %v2320 = vpack.c.b16 %v2288, %v2288
      %v2321 = vpack.c.b16 %v2289, %v2289
      %v2322 = vpack.c.b16 %v2290, %v2290
      %v2323 = vpack.c.b16 %v2291, %v2291
      %v2324 = vpack.c.b16 %v2292, %v2292
      %v2325 = vpack.c.b16 %v2293, %v2293
      %v2326 = vpack.c.b16 %v2294, %v2294
      %v2327 = vpack.c.b16 %v2295, %v2295
      %v2328 = vpack.c.b16 %v2296, %v2296
      %v2329 = vpack.c.b16 %v2297, %v2297
      %v2330 = vpack.c.b16 %v2298, %v2298
      %v2331 = vpack.c.b16 %v2299, %v2299
      %vm2364 = vcmask 19456
      %2365 = vst.msk [vmem:[%s415] sm:$0xf] %vm2364, %v2300
      %2366 = vst.msk [vmem:[%s415 + $0x4] sm:$0xf] %vm2364, %v2301
      %2367 = vst.msk [vmem:[%s415 + $0x8] sm:$0xf] %vm2364, %v2302
      %2368 = vst.msk [vmem:[%s415 + $0xc] sm:$0xf] %vm2364, %v2303
      %2369 = vst.msk [vmem:[%s415 + $0x10] sm:$0xf] %vm2364, %v2304
      %2370 = vst.msk [vmem:[%s415 + $0x14] sm:$0xf] %vm2364, %v2305
      %2371 = vst.msk [vmem:[%s415 + $0x18] sm:$0xf] %vm2364, %v2306
      %2372 = vst.msk [vmem:[%s415 + $0x1c] sm:$0xf] %vm2364, %v2307
      %2373 = vst.msk [vmem:[%s415 + $0x20] sm:$0xf] %vm2364, %v2308
      %2374 = vst.msk [vmem:[%s415 + $0x24] sm:$0xf] %vm2364, %v2309
      %2375 = vst.msk [vmem:[%s415 + $0x28] sm:$0xf] %vm2364, %v2310
      %2376 = vst.msk [vmem:[%s415 + $0x2c] sm:$0xf] %vm2364, %v2311
      %2377 = vst.msk [vmem:[%s415 + $0x30] sm:$0xf] %vm2364, %v2312
      %2378 = vst.msk [vmem:[%s415 + $0x34] sm:$0xf] %vm2364, %v2313
      %2379 = vst.msk [vmem:[%s415 + $0x38] sm:$0xf] %vm2364, %v2314
      %2380 = vst.msk [vmem:[%s415 + $0x3c] sm:$0xf] %vm2364, %v2315
      %2381 = vst.msk [vmem:[%s415 + $0x40] sm:$0xf] %vm2364, %v2316
      %2382 = vst.msk [vmem:[%s415 + $0x44] sm:$0xf] %vm2364, %v2317
      %2383 = vst.msk [vmem:[%s415 + $0x48] sm:$0xf] %vm2364, %v2318
      %2384 = vst.msk [vmem:[%s415 + $0x4c] sm:$0xf] %vm2364, %v2319
      %2385 = vst.msk [vmem:[%s415 + $0x50] sm:$0xf] %vm2364, %v2320
      %2386 = vst.msk [vmem:[%s415 + $0x54] sm:$0xf] %vm2364, %v2321
      %2387 = vst.msk [vmem:[%s415 + $0x58] sm:$0xf] %vm2364, %v2322
      %2388 = vst.msk [vmem:[%s415 + $0x5c] sm:$0xf] %vm2364, %v2323
      %2389 = vst.msk [vmem:[%s415 + $0x60] sm:$0xf] %vm2364, %v2324
      %2390 = vst.msk [vmem:[%s415 + $0x64] sm:$0xf] %vm2364, %v2325
      %2391 = vst.msk [vmem:[%s415 + $0x68] sm:$0xf] %vm2364, %v2326
      %2392 = vst.msk [vmem:[%s415 + $0x6c] sm:$0xf] %vm2364, %v2327
      %2393 = vst.msk [vmem:[%s415 + $0x70] sm:$0xf] %vm2364, %v2328
      %2394 = vst.msk [vmem:[%s415 + $0x74] sm:$0xf] %vm2364, %v2329
      %2395 = vst.msk [vmem:[%s415 + $0x78] sm:$0xf] %vm2364, %v2330
      %2396 = vst.msk [vmem:[%s415 + $0x7c] sm:$0xf] %vm2364, %v2331
      %s2397 = smul.u32 32, %s23
      %p2398 = scmp.lt.s32.totalorder %s2397, 63
      %s2399 = scalar_select %p2398, %s2397, 63
      %s2400 = smul.addr %s2399, 4
      %s2401 = scalar_lea.vmem %s9, %s2400
      %s2402 = smul.u32 32, %s23
      %p2403 = scmp.lt.s32.totalorder %s2402, 63
      %s2404 = scalar_select %p2403, %s2402, 63
      %s2405 = smul.addr %s2404, 4
      %s2406 = scalar_lea.vmem %s10, %s2405
      %s2407 = smul.u32 32, %s23
      %p2408 = scmp.lt.s32.totalorder %s2407, 63
      %s2409 = scalar_select %p2408, %s2407, 63
      %s2410 = smul.addr %s2409, 4
      %s2411 = scalar_lea.vmem %s11, %s2410
      // Predicated region
      $region57: #{focalnet_block_fwd.4} parent=55 // pred_check
        %p2412 = pneg %p235
      $region58: #{focalnet_block_fwd.4} parent=55 // pred_check_branch
        %2414 = sbr.rel (%p2412) target = $region60
      $region59: #{focalnet_block_fwd.4} parent=55 // pred_region
        %s2415 = smul.u32 32, %s23
      $region60: #{focalnet_block_fwd.4} parent=55 // pred_fallthru
        _
      // Predicated region
      $region61: #{focalnet_block_fwd.4} parent=55 // pred_check
        %p2416 = pneg %p261
      $region62: #{focalnet_block_fwd.4} parent=55 // pred_check_branch
        %2418 = sbr.rel (%p2416) target = $region64
      $region63: #{focalnet_block_fwd.4} parent=55 // pred_region
        %s2419 = smul.u32 32, %s23
      $region64: #{focalnet_block_fwd.4} parent=55 // pred_fallthru
        _
      // Predicated region
      $region65: #{focalnet_block_fwd.4} parent=55 // pred_check
        %p2420 = pneg %p287
      $region66: #{focalnet_block_fwd.4} parent=55 // pred_check_branch
        %2422 = sbr.rel (%p2420) target = $region68
      $region67: #{focalnet_block_fwd.4} parent=55 // pred_region
        %s2423 = smul.u32 32, %s23
      $region68: #{focalnet_block_fwd.4} parent=55 // pred_fallthru
        _
    $region56: #{focalnet_block_fwd.4} parent=5 // pred_fallthru
      _
    %p2424 = scmp.le.s32.totalorder 2, %s18
    // Predicated region
    $region69: #{focalnet_block_fwd.4} parent=5 // pred_check
      %p2425 = pneg %p2424
    $region70: #{focalnet_block_fwd.4} parent=5 // pred_check_branch
      %2427 = sbr.rel (%p2425) target = $region72
    $region71: #{focalnet_block_fwd.4} parent=5 // pred_region
      %s2428 = ssub.s32 %s18, 2
      // Predicated region
      $region73: #{focalnet_block_fwd.4} parent=71 // pred_check
        %p2429 = pneg %p241
      $region74: #{focalnet_block_fwd.4} parent=71 // pred_check_branch
        %2431 = sbr.rel (%p2429) target = $region76
      $region75: #{focalnet_block_fwd.4} parent=71 // pred_region
        %s2432 = smul.u32 32, %s24
        %p2433 = scmp.lt.s32.totalorder %s2432, 63
        %s2434 = scalar_select %p2433, %s2432, 63
        %s2435 = smul.addr %s2434, 4
        %s2436 = scalar_lea.vmem %s9, %s2435
      $region76: #{focalnet_block_fwd.4} parent=71 // pred_fallthru
        _
      // Predicated region
      $region77: #{focalnet_block_fwd.4} parent=71 // pred_check
        %p2437 = pneg %p267
      $region78: #{focalnet_block_fwd.4} parent=71 // pred_check_branch
        %2439 = sbr.rel (%p2437) target = $region80
      $region79: #{focalnet_block_fwd.4} parent=71 // pred_region
        %s2440 = smul.u32 32, %s24
        %p2441 = scmp.lt.s32.totalorder %s2440, 63
        %s2442 = scalar_select %p2441, %s2440, 63
        %s2443 = smul.addr %s2442, 4
        %s2444 = scalar_lea.vmem %s10, %s2443
      $region80: #{focalnet_block_fwd.4} parent=71 // pred_fallthru
        _
      // Predicated region
      $region81: #{focalnet_block_fwd.4} parent=71 // pred_check
        %p2445 = pneg %p293
      $region82: #{focalnet_block_fwd.4} parent=71 // pred_check_branch
        %2447 = sbr.rel (%p2445) target = $region84
      $region83: #{focalnet_block_fwd.4} parent=71 // pred_region
        %s2448 = smul.u32 32, %s24
        %p2449 = scmp.lt.s32.totalorder %s2448, 63
        %s2450 = scalar_select %p2449, %s2448, 63
        %s2451 = smul.addr %s2450, 4
        %s2452 = scalar_lea.vmem %s11, %s2451
      $region84: #{focalnet_block_fwd.4} parent=71 // pred_fallthru
        _
    $region72: #{focalnet_block_fwd.4} parent=5 // pred_fallthru
      _
  $region6: #{focalnet_block_fwd.4} parent=0 // loop_footer
    %s22 = sadd.s32 1, %s18
  $region7: #{focalnet_block_fwd.4} parent=0 // loop_footer_branch
    %17 = sbr.rel target = $region3
  $region8: #{focalnet_block_fwd.4} parent=0 // loop_exit
    _

// kernel: focalnet_block_fwd.6
$region0: #{focalnet_block_fwd.6}
  #allocation0 [shape = 'u32[]', space=smem, size = 0x4, offset = 0x4, fixed_abs, tag = 'smem constant byte address 0x4 - core index']
  #allocation1 [shape = 'u32[144,128]{1,0:T(1,128)}', space=vmem, size = 0x12000, scoped, tag = 'internal scratch']
  %s0 = inlined_call_operand.vmem [shape: bf16[2,256,32], index: 0, kind: input, shape index: {}]
  %s1 = inlined_call_operand.vmem [shape: f32[2,1,32], index: 1, kind: input, shape index: {}]
  %s2 = inlined_call_operand.vmem [shape: bf16[2,256,3], index: 2, kind: input, shape index: {}]
  %s3 = inlined_call_operand.vmem [shape: bf16[2,256,32], index: 3, kind: input, shape index: {}]
  %s4 = inlined_call_operand.vmem [shape: bf16[32,32], index: 4, kind: input, shape index: {}]
  %s5 = inlined_call_operand.vmem [shape: bf16[32,32], index: 5, kind: input, shape index: {}]
  %s6 = inlined_call_operand.vmem [shape: f32[1,32], index: 6, kind: input, shape index: {}]
  %s7 = inlined_call_operand.vmem [shape: f32[2,256,32], index: 7, kind: output, shape index: {}]
  %s8 = sld [smem:[#allocation0]]
  $region61: #{focalnet_block_fwd.6} parent=0
    _
  %s10 = ssub.s32 1, %s8
  %s11 = scalar_select 0, %s10, %s8
  loop: start=0, step=1, limit=4
  $region2: #{focalnet_block_fwd.6} parent=0 // loop_pre_header
    _
  $region3: #{focalnet_block_fwd.6} parent=0 // loop_header
    %s13 = sphi 0, %s17
    %p14 = scmp.ge.s32.totalorder %s13, 4
    %s20 = sphi 0, %s32
    %s21 = sphi 0, %s28
    %s22 = sphi 0, %s20
    %s23 = sphi 0, %s21
    %s24 = sphi 0, %s22
    %s25 = sphi 0, %s23
    %s37 = sphi 0, %s39
    %s40 = sphi 0, %s37
    %s41 = sphi 0, %s40
    %s57 = sphi 0, %s41
    %s63 = sphi 0, %s65
    %s66 = sphi 0, %s63
    %s67 = sphi 0, %s66
    %s83 = sphi 0, %s67
    %s91 = sphi 0, %s93
    %s94 = sphi 0, %s91
    %s95 = sphi 0, %s94
    %s111 = sphi 0, %s95
    %s119 = sphi 0, %s121
    %s122 = sphi 0, %s119
    %s123 = sphi 0, %s122
    %s139 = sphi 0, %s123
    %s143 = sphi 0, %s143
    %s145 = sphi 0, %s143
    %s146 = sphi 0, %s145
    %s160 = sphi 0, %s146
    %s164 = sphi 0, %s164
    %s166 = sphi 0, %s164
    %s167 = sphi 0, %s166
    %s181 = sphi 0, %s167
    %s185 = sphi 0, %s185
    %s187 = sphi 0, %s185
    %s188 = sphi 0, %s187
    %s202 = sphi 0, %s188
    %s210 = sphi 0, %s212
    %s213 = sphi 0, %s210
    %s214 = sphi 0, %s213
    %s230 = sphi 0, %s214
  $region4: #{focalnet_block_fwd.6} parent=0 // loop_header_branch
    %16 = sbr.rel (%p14) target = $region8
  $region5: #{focalnet_block_fwd.6} parent=0 // loop_body
    %s18 = ssub.s32 %s13, 1
    %s19 = ssub.s32 %s13, 2
    %s26 = sadd.s32 1, %s21
    %p27 = scmp.ge.s32.totalorder %s26, 1
    %s28 = scalar_select %p27, 0, %s26
    %s29 = sadd.s32 1, %s20
    %s30 = scalar_select %p27, %s29, %s20
    %p31 = scmp.ge.s32.totalorder %s30, 2
    %s32 = scalar_select %p31, 0, %s30
    %s33 = ssub.s32 %s20, %s32
    %s34 = ssub.s32 %s21, %s28
    %s35 = sor.u32 %s33, %s34
    %p36 = scmp.eq.s32.totalorder %s35, 0
    %s38 = sadd.s32 %s37, 1
    %s39 = scalar_select %p36, %s37, %s38
    %p42 = pneg %p36
    %p43 = scmp.eq.s32.totalorder %s13, 1
    %p44 = por %p42, %p43
    %p45 = scmp.ne.s32.totalorder %s37, %s40
    %p46 = scmp.eq.s32.totalorder %s13, 0
    %p47 = por %p45, %p46
    %p48 = scmp.ne.s32.totalorder %s37, %s40
    %p49 = scmp.eq.s32.totalorder %s18, 1
    %p50 = por %p48, %p49
    %p51 = scmp.ne.s32.totalorder %s40, %s41
    %p52 = scmp.eq.s32.totalorder %s18, 0
    %p53 = por %p51, %p52
    %p54 = scmp.ne.s32.totalorder %s40, %s41
    %p55 = scmp.eq.s32.totalorder %s19, 1
    %p56 = por %p54, %p55
    %p58 = scmp.ne.s32.totalorder %s41, %s57
    %p59 = scmp.eq.s32.totalorder %s19, 0
    %p60 = por %p58, %p59
    %s61 = ssub.s32 %s20, %s32
    %p62 = scmp.eq.s32.totalorder %s61, 0
    %s64 = sadd.s32 %s63, 1
    %s65 = scalar_select %p62, %s63, %s64
    %p68 = pneg %p62
    %p69 = scmp.eq.s32.totalorder %s13, 1
    %p70 = por %p68, %p69
    %p71 = scmp.ne.s32.totalorder %s63, %s66
    %p72 = scmp.eq.s32.totalorder %s13, 0
    %p73 = por %p71, %p72
    %p74 = scmp.ne.s32.totalorder %s63, %s66
    %p75 = scmp.eq.s32.totalorder %s18, 1
    %p76 = por %p74, %p75
    %p77 = scmp.ne.s32.totalorder %s66, %s67
    %p78 = scmp.eq.s32.totalorder %s18, 0
    %p79 = por %p77, %p78
    %p80 = scmp.ne.s32.totalorder %s66, %s67
    %p81 = scmp.eq.s32.totalorder %s19, 1
    %p82 = por %p80, %p81
    %p84 = scmp.ne.s32.totalorder %s67, %s83
    %p85 = scmp.eq.s32.totalorder %s19, 0
    %p86 = por %p84, %p85
    %s87 = ssub.s32 %s20, %s32
    %s88 = ssub.s32 %s21, %s28
    %s89 = sor.u32 %s87, %s88
    %p90 = scmp.eq.s32.totalorder %s89, 0
    %s92 = sadd.s32 %s91, 1
    %s93 = scalar_select %p90, %s91, %s92
    %p96 = pneg %p90
    %p97 = scmp.eq.s32.totalorder %s13, 1
    %p98 = por %p96, %p97
    %p99 = scmp.ne.s32.totalorder %s91, %s94
    %p100 = scmp.eq.s32.totalorder %s13, 0
    %p101 = por %p99, %p100
    %p102 = scmp.ne.s32.totalorder %s91, %s94
    %p103 = scmp.eq.s32.totalorder %s18, 1
    %p104 = por %p102, %p103
    %p105 = scmp.ne.s32.totalorder %s94, %s95
    %p106 = scmp.eq.s32.totalorder %s18, 0
    %p107 = por %p105, %p106
    %p108 = scmp.ne.s32.totalorder %s94, %s95
    %p109 = scmp.eq.s32.totalorder %s19, 1
    %p110 = por %p108, %p109
    %p112 = scmp.ne.s32.totalorder %s95, %s111
    %p113 = scmp.eq.s32.totalorder %s19, 0
    %p114 = por %p112, %p113
    %s115 = ssub.s32 %s20, %s32
    %s116 = ssub.s32 %s21, %s28
    %s117 = sor.u32 %s115, %s116
    %p118 = scmp.eq.s32.totalorder %s117, 0
    %s120 = sadd.s32 %s119, 1
    %s121 = scalar_select %p118, %s119, %s120
    %p124 = pneg %p118
    %p125 = scmp.eq.s32.totalorder %s13, 1
    %p126 = por %p124, %p125
    %p127 = scmp.ne.s32.totalorder %s119, %s122
    %p128 = scmp.eq.s32.totalorder %s13, 0
    %p129 = por %p127, %p128
    %p130 = scmp.ne.s32.totalorder %s119, %s122
    %p131 = scmp.eq.s32.totalorder %s18, 1
    %p132 = por %p130, %p131
    %p133 = scmp.ne.s32.totalorder %s122, %s123
    %p134 = scmp.eq.s32.totalorder %s18, 0
    %p135 = por %p133, %p134
    %p136 = scmp.ne.s32.totalorder %s122, %s123
    %p137 = scmp.eq.s32.totalorder %s19, 1
    %p138 = por %p136, %p137
    %p140 = scmp.ne.s32.totalorder %s123, %s139
    %p141 = scmp.eq.s32.totalorder %s19, 0
    %p142 = por %p140, %p141
    %s144 = sadd.s32 %s143, 1
    %p147 = scmp.eq.s32.totalorder %s13, 1
    %p148 = scmp.ne.s32.totalorder %s143, %s145
    %p149 = scmp.eq.s32.totalorder %s13, 0
    %p150 = por %p148, %p149
    %p151 = scmp.ne.s32.totalorder %s143, %s145
    %p152 = scmp.eq.s32.totalorder %s18, 1
    %p153 = por %p151, %p152
    %p154 = scmp.ne.s32.totalorder %s145, %s146
    %p155 = scmp.eq.s32.totalorder %s18, 0
    %p156 = por %p154, %p155
    %p157 = scmp.ne.s32.totalorder %s145, %s146
    %p158 = scmp.eq.s32.totalorder %s19, 1
    %p159 = por %p157, %p158
    %p161 = scmp.ne.s32.totalorder %s146, %s160
    %p162 = scmp.eq.s32.totalorder %s19, 0
    %p163 = por %p161, %p162
    %s165 = sadd.s32 %s164, 1
    %p168 = scmp.eq.s32.totalorder %s13, 1
    %p169 = scmp.ne.s32.totalorder %s164, %s166
    %p170 = scmp.eq.s32.totalorder %s13, 0
    %p171 = por %p169, %p170
    %p172 = scmp.ne.s32.totalorder %s164, %s166
    %p173 = scmp.eq.s32.totalorder %s18, 1
    %p174 = por %p172, %p173
    %p175 = scmp.ne.s32.totalorder %s166, %s167
    %p176 = scmp.eq.s32.totalorder %s18, 0
    %p177 = por %p175, %p176
    %p178 = scmp.ne.s32.totalorder %s166, %s167
    %p179 = scmp.eq.s32.totalorder %s19, 1
    %p180 = por %p178, %p179
    %p182 = scmp.ne.s32.totalorder %s167, %s181
    %p183 = scmp.eq.s32.totalorder %s19, 0
    %p184 = por %p182, %p183
    %s186 = sadd.s32 %s185, 1
    %p189 = scmp.eq.s32.totalorder %s13, 1
    %p190 = scmp.ne.s32.totalorder %s185, %s187
    %p191 = scmp.eq.s32.totalorder %s13, 0
    %p192 = por %p190, %p191
    %p193 = scmp.ne.s32.totalorder %s185, %s187
    %p194 = scmp.eq.s32.totalorder %s18, 1
    %p195 = por %p193, %p194
    %p196 = scmp.ne.s32.totalorder %s187, %s188
    %p197 = scmp.eq.s32.totalorder %s18, 0
    %p198 = por %p196, %p197
    %p199 = scmp.ne.s32.totalorder %s187, %s188
    %p200 = scmp.eq.s32.totalorder %s19, 1
    %p201 = por %p199, %p200
    %p203 = scmp.ne.s32.totalorder %s188, %s202
    %p204 = scmp.eq.s32.totalorder %s19, 0
    %p205 = por %p203, %p204
    %s206 = ssub.s32 %s20, %s32
    %s207 = ssub.s32 %s21, %s28
    %s208 = sor.u32 %s206, %s207
    %p209 = scmp.eq.s32.totalorder %s208, 0
    %s211 = sadd.s32 %s210, 1
    %s212 = scalar_select %p209, %s210, %s211
    %p215 = pneg %p209
    %p216 = scmp.eq.s32.totalorder %s13, 1
    %p217 = por %p215, %p216
    %p218 = scmp.ne.s32.totalorder %s210, %s213
    %p219 = scmp.eq.s32.totalorder %s13, 0
    %p220 = por %p218, %p219
    %p221 = scmp.ne.s32.totalorder %s210, %s213
    %p222 = scmp.eq.s32.totalorder %s18, 1
    %p223 = por %p221, %p222
    %p224 = scmp.ne.s32.totalorder %s213, %s214
    %p225 = scmp.eq.s32.totalorder %s18, 0
    %p226 = por %p224, %p225
    %p227 = scmp.ne.s32.totalorder %s213, %s214
    %p228 = scmp.eq.s32.totalorder %s19, 1
    %p229 = por %p227, %p228
    %p231 = scmp.ne.s32.totalorder %s214, %s230
    %p232 = scmp.eq.s32.totalorder %s19, 0
    %p233 = por %p231, %p232
    %p234 = scmp.le.s32.totalorder 1, %s13
    %p235 = scmp.lt.s32.totalorder %s13, 3
    %p236 = pnand %p234, %p235
    %p237 = pneg %p236
    // Predicated region
    $region9: #{focalnet_block_fwd.6} parent=5 // pred_check
      _
    $region10: #{focalnet_block_fwd.6} parent=5 // pred_check_branch
      %239 = sbr.rel (%p236) target = $region12
    $region11: #{focalnet_block_fwd.6} parent=5 // pred_region
      %s240 = ssub.s32 %s13, 1
      // Predicated region
      $region13: #{focalnet_block_fwd.6} parent=11 // pred_check
        %p241 = pneg %p156
      $region14: #{focalnet_block_fwd.6} parent=11 // pred_check_branch
        %243 = sbr.rel (%p241) target = $region16
      $region15: #{focalnet_block_fwd.6} parent=11 // pred_region
        _
      $region16: #{focalnet_block_fwd.6} parent=11 // pred_fallthru
        _
      // Predicated region
      $region17: #{focalnet_block_fwd.6} parent=11 // pred_check
        %p244 = pneg %p177
      $region18: #{focalnet_block_fwd.6} parent=11 // pred_check_branch
        %246 = sbr.rel (%p244) target = $region20
      $region19: #{focalnet_block_fwd.6} parent=11 // pred_region
        _
      $region20: #{focalnet_block_fwd.6} parent=11 // pred_fallthru
        _
      // Predicated region
      $region21: #{focalnet_block_fwd.6} parent=11 // pred_check
        %p247 = pneg %p198
      $region22: #{focalnet_block_fwd.6} parent=11 // pred_check_branch
        %249 = sbr.rel (%p247) target = $region24
      $region23: #{focalnet_block_fwd.6} parent=11 // pred_region
        _
      $region24: #{focalnet_block_fwd.6} parent=11 // pred_fallthru
        _
    $region12: #{focalnet_block_fwd.6} parent=5 // pred_fallthru
      _
    %p250 = scmp.lt.s32.totalorder %s13, 2
    // Predicated region
    $region25: #{focalnet_block_fwd.6} parent=5 // pred_check
      %p251 = pneg %p250
    $region26: #{focalnet_block_fwd.6} parent=5 // pred_check_branch
      %253 = sbr.rel (%p251) target = $region28
    $region27: #{focalnet_block_fwd.6} parent=5 // pred_region
      // Predicated region
      $region29: #{focalnet_block_fwd.6} parent=27 // pred_check
        %p254 = pneg %p47
      $region30: #{focalnet_block_fwd.6} parent=27 // pred_check_branch
        %256 = sbr.rel (%p254) target = $region32
      $region31: #{focalnet_block_fwd.6} parent=27 // pred_region
        %s257 = smul.u32 32, %s21
        %p258 = scmp.lt.s32.totalorder %s20, 1
        %s259 = scalar_select %p258, %s20, 1
        %p260 = scmp.lt.s32.totalorder %s257, 31
        %s261 = scalar_select %p260, %s257, 31
        %s262 = smul.addr %s259, 32
        %s263 = sadd.s32 %s261, %s262
        %s264 = smul.addr %s263, 4
        %s265 = scalar_lea.vmem %s0, %s264
        %s266 = smul.u32 32, %s21
      $region32: #{focalnet_block_fwd.6} parent=27 // pred_fallthru
        _
      // Predicated region
      $region33: #{focalnet_block_fwd.6} parent=27 // pred_check
        %p267 = pneg %p73
      $region34: #{focalnet_block_fwd.6} parent=27 // pred_check_branch
        %269 = sbr.rel (%p267) target = $region36
      $region35: #{focalnet_block_fwd.6} parent=27 // pred_region
        %p270 = scmp.lt.s32.totalorder %s20, 1
        %s271 = scalar_select %p270, %s20, 1
        %s272 = scalar_lea.vmem %s1, %s271
      $region36: #{focalnet_block_fwd.6} parent=27 // pred_fallthru
        _
      // Predicated region
      $region37: #{focalnet_block_fwd.6} parent=27 // pred_check
        %p273 = pneg %p101
      $region38: #{focalnet_block_fwd.6} parent=27 // pred_check_branch
        %275 = sbr.rel (%p273) target = $region40
      $region39: #{focalnet_block_fwd.6} parent=27 // pred_region
        %s276 = smul.u32 32, %s21
        %p277 = scmp.lt.s32.totalorder %s20, 1
        %s278 = scalar_select %p277, %s20, 1
        %p279 = scmp.lt.s32.totalorder %s276, 31
        %s280 = scalar_select %p279, %s276, 31
        %s281 = smul.addr %s278, 32
        %s282 = sadd.s32 %s280, %s281
        %s283 = smul.addr %s282, 4
        %s284 = scalar_lea.vmem %s2, %s283
        %s285 = smul.u32 32, %s21
      $region40: #{focalnet_block_fwd.6} parent=27 // pred_fallthru
        _
      // Predicated region
      $region41: #{focalnet_block_fwd.6} parent=27 // pred_check
        %p286 = pneg %p129
      $region42: #{focalnet_block_fwd.6} parent=27 // pred_check_branch
        %288 = sbr.rel (%p286) target = $region44
      $region43: #{focalnet_block_fwd.6} parent=27 // pred_region
        %s289 = smul.u32 32, %s21
        %p290 = scmp.lt.s32.totalorder %s20, 1
        %s291 = scalar_select %p290, %s20, 1
        %p292 = scmp.lt.s32.totalorder %s289, 31
        %s293 = scalar_select %p292, %s289, 31
        %s294 = smul.addr %s291, 32
        %s295 = sadd.s32 %s293, %s294
        %s296 = smul.addr %s295, 4
        %s297 = scalar_lea.vmem %s3, %s296
        %s298 = smul.u32 32, %s21
      $region44: #{focalnet_block_fwd.6} parent=27 // pred_fallthru
        _
    $region28: #{focalnet_block_fwd.6} parent=5 // pred_fallthru
      _
    %p299 = scmp.le.s32.totalorder 1, %s13
    %p300 = scmp.lt.s32.totalorder %s13, 3
    %p301 = pnand %p299, %p300
    %p302 = pneg %p301
    // Predicated region
    $region45: #{focalnet_block_fwd.6} parent=5 // pred_check
      _
    $region46: #{focalnet_block_fwd.6} parent=5 // pred_check_branch
      %304 = sbr.rel (%p301) target = $region48
    $region47: #{focalnet_block_fwd.6} parent=5 // pred_region
      %s305 = ssub.s32 %s13, 1
      %s306 = smul.u32 32, %s23
      %p307 = scmp.lt.s32.totalorder %s22, 1
      %s308 = scalar_select %p307, %s22, 1
      %p309 = scmp.lt.s32.totalorder %s306, 31
      %s310 = scalar_select %p309, %s306, 31
      %s311 = smul.addr %s308, 32
      %s312 = sadd.s32 %s310, %s311
      %s313 = smul.addr %s312, 4
      %s314 = scalar_lea.vmem %s0, %s313
      %p315 = pneg %p53
      %p316 = pneg %p50
      %p317 = scmp.lt.s32.totalorder %s22, 1
      %s318 = scalar_select %p317, %s22, 1
      %s319 = scalar_lea.vmem %s1, %s318
      %p320 = pneg %p79
      %p321 = pneg %p76
      %s322 = smul.u32 32, %s23
      %p323 = scmp.lt.s32.totalorder %s22, 1
      %s324 = scalar_select %p323, %s22, 1
      %p325 = scmp.lt.s32.totalorder %s322, 31
      %s326 = scalar_select %p325, %s322, 31
      %s327 = smul.addr %s324, 32
      %s328 = sadd.s32 %s326, %s327
      %s329 = smul.addr %s328, 4
      %s330 = scalar_lea.vmem %s2, %s329
      %p331 = pneg %p107
      %p332 = pneg %p104
      %s333 = smul.u32 32, %s23
      %p334 = scmp.lt.s32.totalorder %s22, 1
      %s335 = scalar_select %p334, %s22, 1
      %p336 = scmp.lt.s32.totalorder %s333, 31
      %s337 = scalar_select %p336, %s333, 31
      %s338 = smul.addr %s335, 32
      %s339 = sadd.s32 %s337, %s338
      %s340 = smul.addr %s339, 4
      %s341 = scalar_lea.vmem %s3, %s340
      %p342 = pneg %p135
      %p343 = pneg %p132
      %p344 = pneg %p156
      %p345 = pneg %p153
      %p346 = pneg %p177
      %p347 = pneg %p174
      %p348 = pneg %p198
      %p349 = pneg %p195
      %p350 = pneg %p226
      %p351 = pneg %p223
      %s352 = smul.u32 32, %s23
      %p353 = scmp.lt.s32.totalorder %s22, 1
      %s354 = scalar_select %p353, %s22, 1
      %p355 = scmp.lt.s32.totalorder %s352, 31
      %s356 = scalar_select %p355, %s352, 31
      %s357 = smul.addr %s354, 32
      %s358 = sadd.s32 %s356, %s357
      %s359 = smul.addr %s358, 8
      %s360 = scalar_lea.vmem %s7, %s359
      %s361 = smul.u32 32, %s23
      %p362 = scmp.lt.s32.totalorder %s22, 1
      %s363 = scalar_select %p362, %s22, 1
      %p364 = scmp.lt.s32.totalorder %s361, 31
      %s365 = scalar_select %p364, %s361, 31
      %s366 = smul.addr %s363, 32
      %s367 = sadd.s32 %s365, %s366
      %s368 = smul.addr %s367, 4
      %s369 = scalar_lea.vmem %s0, %s368
      %s370 = smul.u32 32, %s23
      %p371 = scmp.lt.s32.totalorder %s22, 1
      %s372 = scalar_select %p371, %s22, 1
      %s373 = scalar_lea.vmem %s1, %s372
      %s374 = smul.u32 32, %s23
      %p375 = scmp.lt.s32.totalorder %s22, 1
      %s376 = scalar_select %p375, %s22, 1
      %p377 = scmp.lt.s32.totalorder %s374, 31
      %s378 = scalar_select %p377, %s374, 31
      %s379 = smul.addr %s376, 32
      %s380 = sadd.s32 %s378, %s379
      %s381 = smul.addr %s380, 4
      %s382 = scalar_lea.vmem %s2, %s381
      %s383 = smul.u32 32, %s23
      %s384 = smul.u32 32, %s23
      %p385 = scmp.lt.s32.totalorder %s22, 1
      %s386 = scalar_select %p385, %s22, 1
      %p387 = scmp.lt.s32.totalorder %s384, 31
      %s388 = scalar_select %p387, %s384, 31
      %s389 = smul.addr %s386, 32
      %s390 = sadd.s32 %s388, %s389
      %s391 = smul.addr %s390, 4
      %s392 = scalar_lea.vmem %s3, %s391
      %s393 = smul.u32 32, %s23
      %s394 = smul.u32 32, %s23
      %p395 = scmp.lt.s32.totalorder %s22, 1
      %s396 = scalar_select %p395, %s22, 1
      %p397 = scmp.lt.s32.totalorder %s394, 31
      %s398 = scalar_select %p397, %s394, 31
      %s399 = smul.addr %s396, 32
      %s400 = sadd.s32 %s398, %s399
      %s401 = smul.addr %s400, 8
      %s402 = scalar_lea.vmem %s7, %s401
      %s403 = smul.u32 32, %s23
      %v405 = vld [vmem:[%s369] sm:$0xf]
      %v406 = vld [vmem:[%s369 + $0x4] sm:$0xf]
      %v407 = vld [vmem:[%s369 + $0x8] sm:$0xf]
      %v408 = vld [vmem:[%s369 + $0xc] sm:$0xf]
      %v409 = vld [vmem:[%s369 + $0x10] sm:$0xf]
      %v410 = vld [vmem:[%s369 + $0x14] sm:$0xf]
      %v411 = vld [vmem:[%s369 + $0x18] sm:$0xf]
      %v412 = vld [vmem:[%s369 + $0x1c] sm:$0xf]
      %v413 = vld [vmem:[%s369 + $0x20] sm:$0xf]
      %v414 = vld [vmem:[%s369 + $0x24] sm:$0xf]
      %v415 = vld [vmem:[%s369 + $0x28] sm:$0xf]
      %v416 = vld [vmem:[%s369 + $0x2c] sm:$0xf]
      %v417 = vld [vmem:[%s369 + $0x30] sm:$0xf]
      %v418 = vld [vmem:[%s369 + $0x34] sm:$0xf]
      %v419 = vld [vmem:[%s369 + $0x38] sm:$0xf]
      %v420 = vld [vmem:[%s369 + $0x3c] sm:$0xf]
      %v421 = vld [vmem:[%s369 + $0x40] sm:$0xf]
      %v422 = vld [vmem:[%s369 + $0x44] sm:$0xf]
      %v423 = vld [vmem:[%s369 + $0x48] sm:$0xf]
      %v424 = vld [vmem:[%s369 + $0x4c] sm:$0xf]
      %v425 = vld [vmem:[%s369 + $0x50] sm:$0xf]
      %v426 = vld [vmem:[%s369 + $0x54] sm:$0xf]
      %v427 = vld [vmem:[%s369 + $0x58] sm:$0xf]
      %v428 = vld [vmem:[%s369 + $0x5c] sm:$0xf]
      %v429 = vld [vmem:[%s369 + $0x60] sm:$0xf]
      %v430 = vld [vmem:[%s369 + $0x64] sm:$0xf]
      %v431 = vld [vmem:[%s369 + $0x68] sm:$0xf]
      %v432 = vld [vmem:[%s369 + $0x6c] sm:$0xf]
      %v433 = vld [vmem:[%s369 + $0x70] sm:$0xf]
      %v434 = vld [vmem:[%s369 + $0x74] sm:$0xf]
      %v435 = vld [vmem:[%s369 + $0x78] sm:$0xf]
      %v436 = vld [vmem:[%s369 + $0x7c] sm:$0xf]
      %v437 = vunpack.c.l.bf16 %v405
      %v438 = vunpack.c.l.bf16 %v406
      %v439 = vunpack.c.l.bf16 %v407
      %v440 = vunpack.c.l.bf16 %v408
      %v441 = vunpack.c.l.bf16 %v409
      %v442 = vunpack.c.l.bf16 %v410
      %v443 = vunpack.c.l.bf16 %v411
      %v444 = vunpack.c.l.bf16 %v412
      %v445 = vunpack.c.l.bf16 %v413
      %v446 = vunpack.c.l.bf16 %v414
      %v447 = vunpack.c.l.bf16 %v415
      %v448 = vunpack.c.l.bf16 %v416
      %v449 = vunpack.c.l.bf16 %v417
      %v450 = vunpack.c.l.bf16 %v418
      %v451 = vunpack.c.l.bf16 %v419
      %v452 = vunpack.c.l.bf16 %v420
      %v453 = vunpack.c.l.bf16 %v421
      %v454 = vunpack.c.l.bf16 %v422
      %v455 = vunpack.c.l.bf16 %v423
      %v456 = vunpack.c.l.bf16 %v424
      %v457 = vunpack.c.l.bf16 %v425
      %v458 = vunpack.c.l.bf16 %v426
      %v459 = vunpack.c.l.bf16 %v427
      %v460 = vunpack.c.l.bf16 %v428
      %v461 = vunpack.c.l.bf16 %v429
      %v462 = vunpack.c.l.bf16 %v430
      %v463 = vunpack.c.l.bf16 %v431
      %v464 = vunpack.c.l.bf16 %v432
      %v465 = vunpack.c.l.bf16 %v433
      %v466 = vunpack.c.l.bf16 %v434
      %v467 = vunpack.c.l.bf16 %v435
      %v468 = vunpack.c.l.bf16 %v436
      %v469 = vld [vmem:[%s373] sm:$0x1]
      %v470 = vld [vmem:[%s382] sm:$0xf]
      %v471 = vld [vmem:[%s382 + $0x4] sm:$0xf]
      %v472 = vld [vmem:[%s382 + $0x8] sm:$0xf]
      %v473 = vld [vmem:[%s382 + $0xc] sm:$0xf]
      %v474 = vld [vmem:[%s382 + $0x10] sm:$0xf]
      %v475 = vld [vmem:[%s382 + $0x14] sm:$0xf]
      %v476 = vld [vmem:[%s382 + $0x18] sm:$0xf]
      %v477 = vld [vmem:[%s382 + $0x1c] sm:$0xf]
      %v478 = vld [vmem:[%s382 + $0x20] sm:$0xf]
      %v479 = vld [vmem:[%s382 + $0x24] sm:$0xf]
      %v480 = vld [vmem:[%s382 + $0x28] sm:$0xf]
      %v481 = vld [vmem:[%s382 + $0x2c] sm:$0xf]
      %v482 = vld [vmem:[%s382 + $0x30] sm:$0xf]
      %v483 = vld [vmem:[%s382 + $0x34] sm:$0xf]
      %v484 = vld [vmem:[%s382 + $0x38] sm:$0xf]
      %v485 = vld [vmem:[%s382 + $0x3c] sm:$0xf]
      %v486 = vld [vmem:[%s382 + $0x40] sm:$0xf]
      %v487 = vld [vmem:[%s382 + $0x44] sm:$0xf]
      %v488 = vld [vmem:[%s382 + $0x48] sm:$0xf]
      %v489 = vld [vmem:[%s382 + $0x4c] sm:$0xf]
      %v490 = vld [vmem:[%s382 + $0x50] sm:$0xf]
      %v491 = vld [vmem:[%s382 + $0x54] sm:$0xf]
      %v492 = vld [vmem:[%s382 + $0x58] sm:$0xf]
      %v493 = vld [vmem:[%s382 + $0x5c] sm:$0xf]
      %v494 = vld [vmem:[%s382 + $0x60] sm:$0xf]
      %v495 = vld [vmem:[%s382 + $0x64] sm:$0xf]
      %v496 = vld [vmem:[%s382 + $0x68] sm:$0xf]
      %v497 = vld [vmem:[%s382 + $0x6c] sm:$0xf]
      %v498 = vld [vmem:[%s382 + $0x70] sm:$0xf]
      %v499 = vld [vmem:[%s382 + $0x74] sm:$0xf]
      %v500 = vld [vmem:[%s382 + $0x78] sm:$0xf]
      %v501 = vld [vmem:[%s382 + $0x7c] sm:$0xf]
      %v502 = vunpack.c.l.bf16 %v470
      %v503 = vunpack.c.l.bf16 %v471
      %v504 = vunpack.c.l.bf16 %v472
      %v505 = vunpack.c.l.bf16 %v473
      %v506 = vunpack.c.l.bf16 %v474
      %v507 = vunpack.c.l.bf16 %v475
      %v508 = vunpack.c.l.bf16 %v476
      %v509 = vunpack.c.l.bf16 %v477
      %v510 = vunpack.c.l.bf16 %v478
      %v511 = vunpack.c.l.bf16 %v479
      %v512 = vunpack.c.l.bf16 %v480
      %v513 = vunpack.c.l.bf16 %v481
      %v514 = vunpack.c.l.bf16 %v482
      %v515 = vunpack.c.l.bf16 %v483
      %v516 = vunpack.c.l.bf16 %v484
      %v517 = vunpack.c.l.bf16 %v485
      %v518 = vunpack.c.l.bf16 %v486
      %v519 = vunpack.c.l.bf16 %v487
      %v520 = vunpack.c.l.bf16 %v488
      %v521 = vunpack.c.l.bf16 %v489
      %v522 = vunpack.c.l.bf16 %v490
      %v523 = vunpack.c.l.bf16 %v491
      %v524 = vunpack.c.l.bf16 %v492
      %v525 = vunpack.c.l.bf16 %v493
      %v526 = vunpack.c.l.bf16 %v494
      %v527 = vunpack.c.l.bf16 %v495
      %v528 = vunpack.c.l.bf16 %v496
      %v529 = vunpack.c.l.bf16 %v497
      %v530 = vunpack.c.l.bf16 %v498
      %v531 = vunpack.c.l.bf16 %v499
      %v532 = vunpack.c.l.bf16 %v500
      %v533 = vunpack.c.l.bf16 %v501
      %v535 = vlaneseq
      %v536 = vshrl.u32 %v535, 7
      %v537 = vsub.s32 0, %v536
      %v538 = vrot.slane %v469, %v537
      %541 = vset.pattern.permute.xlu0 2
      %542 = vperm.xlu0 %541, %v502
      %v543 = vpop.permute.xlu0 %542
      %546 = vset.pattern.permute.xlu0 2
      %547 = vperm.xlu0 %546, %v503
      %v548 = vpop.permute.xlu0 %547
      %551 = vset.pattern.permute.xlu0 2
      %552 = vperm.xlu0 %551, %v504
      %v553 = vpop.permute.xlu0 %552
      %556 = vset.pattern.permute.xlu0 2
      %557 = vperm.xlu0 %556, %v505
      %v558 = vpop.permute.xlu0 %557
      %561 = vset.pattern.permute.xlu0 2
      %562 = vperm.xlu0 %561, %v506
      %v563 = vpop.permute.xlu0 %562
      %566 = vset.pattern.permute.xlu0 2
      %567 = vperm.xlu0 %566, %v507
      %v568 = vpop.permute.xlu0 %567
      %571 = vset.pattern.permute.xlu0 2
      %572 = vperm.xlu0 %571, %v508
      %v573 = vpop.permute.xlu0 %572
      %576 = vset.pattern.permute.xlu0 2
      %577 = vperm.xlu0 %576, %v509
      %v578 = vpop.permute.xlu0 %577
      %581 = vset.pattern.permute.xlu0 2
      %582 = vperm.xlu0 %581, %v510
      %v583 = vpop.permute.xlu0 %582
      %586 = vset.pattern.permute.xlu0 2
      %587 = vperm.xlu0 %586, %v511
      %v588 = vpop.permute.xlu0 %587
      %591 = vset.pattern.permute.xlu0 2
      %592 = vperm.xlu0 %591, %v512
      %v593 = vpop.permute.xlu0 %592
      %596 = vset.pattern.permute.xlu0 2
      %597 = vperm.xlu0 %596, %v513
      %v598 = vpop.permute.xlu0 %597
      %601 = vset.pattern.permute.xlu0 2
      %602 = vperm.xlu0 %601, %v514
      %v603 = vpop.permute.xlu0 %602
      %606 = vset.pattern.permute.xlu0 2
      %607 = vperm.xlu0 %606, %v515
      %v608 = vpop.permute.xlu0 %607
      %611 = vset.pattern.permute.xlu0 2
      %612 = vperm.xlu0 %611, %v516
      %v613 = vpop.permute.xlu0 %612
      %616 = vset.pattern.permute.xlu0 2
      %617 = vperm.xlu0 %616, %v517
      %v618 = vpop.permute.xlu0 %617
      %621 = vset.pattern.permute.xlu0 2
      %622 = vperm.xlu0 %621, %v518
      %v623 = vpop.permute.xlu0 %622
      %626 = vset.pattern.permute.xlu0 2
      %627 = vperm.xlu0 %626, %v519
      %v628 = vpop.permute.xlu0 %627
      %631 = vset.pattern.permute.xlu0 2
      %632 = vperm.xlu0 %631, %v520
      %v633 = vpop.permute.xlu0 %632
      %636 = vset.pattern.permute.xlu0 2
      %637 = vperm.xlu0 %636, %v521
      %v638 = vpop.permute.xlu0 %637
      %641 = vset.pattern.permute.xlu0 2
      %642 = vperm.xlu0 %641, %v522
      %v643 = vpop.permute.xlu0 %642
      %646 = vset.pattern.permute.xlu0 2
      %647 = vperm.xlu0 %646, %v523
      %v648 = vpop.permute.xlu0 %647
      %651 = vset.pattern.permute.xlu0 2
      %652 = vperm.xlu0 %651, %v524
      %v653 = vpop.permute.xlu0 %652
      %656 = vset.pattern.permute.xlu0 2
      %657 = vperm.xlu0 %656, %v525
      %v658 = vpop.permute.xlu0 %657
      %661 = vset.pattern.permute.xlu0 2
      %662 = vperm.xlu0 %661, %v526
      %v663 = vpop.permute.xlu0 %662
      %666 = vset.pattern.permute.xlu0 2
      %667 = vperm.xlu0 %666, %v527
      %v668 = vpop.permute.xlu0 %667
      %671 = vset.pattern.permute.xlu0 2
      %672 = vperm.xlu0 %671, %v528
      %v673 = vpop.permute.xlu0 %672
      %676 = vset.pattern.permute.xlu0 2
      %677 = vperm.xlu0 %676, %v529
      %v678 = vpop.permute.xlu0 %677
      %681 = vset.pattern.permute.xlu0 2
      %682 = vperm.xlu0 %681, %v530
      %v683 = vpop.permute.xlu0 %682
      %686 = vset.pattern.permute.xlu0 2
      %687 = vperm.xlu0 %686, %v531
      %v688 = vpop.permute.xlu0 %687
      %691 = vset.pattern.permute.xlu0 2
      %692 = vperm.xlu0 %691, %v532
      %v693 = vpop.permute.xlu0 %692
      %696 = vset.pattern.permute.xlu0 2
      %697 = vperm.xlu0 %696, %v533
      %v698 = vpop.permute.xlu0 %697
      %v700 = vmul.f32 %v538, %v543
      %v701 = vmul.f32 %v538, %v548
      %v702 = vmul.f32 %v538, %v553
      %v703 = vmul.f32 %v538, %v558
      %v704 = vmul.f32 %v538, %v563
      %v705 = vmul.f32 %v538, %v568
      %v706 = vmul.f32 %v538, %v573
      %v707 = vmul.f32 %v538, %v578
      %v708 = vmul.f32 %v538, %v583
      %v709 = vmul.f32 %v538, %v588
      %v710 = vmul.f32 %v538, %v593
      %v711 = vmul.f32 %v538, %v598
      %v712 = vmul.f32 %v538, %v603
      %v713 = vmul.f32 %v538, %v608
      %v714 = vmul.f32 %v538, %v613
      %v715 = vmul.f32 %v538, %v618
      %v716 = vmul.f32 %v538, %v623
      %v717 = vmul.f32 %v538, %v628
      %v718 = vmul.f32 %v538, %v633
      %v719 = vmul.f32 %v538, %v638
      %v720 = vmul.f32 %v538, %v643
      %v721 = vmul.f32 %v538, %v648
      %v722 = vmul.f32 %v538, %v653
      %v723 = vmul.f32 %v538, %v658
      %v724 = vmul.f32 %v538, %v663
      %v725 = vmul.f32 %v538, %v668
      %v726 = vmul.f32 %v538, %v673
      %v727 = vmul.f32 %v538, %v678
      %v728 = vmul.f32 %v538, %v683
      %v729 = vmul.f32 %v538, %v688
      %v730 = vmul.f32 %v538, %v693
      %v731 = vmul.f32 %v538, %v698
      %v732 = vadd.f32 %v437, %v700
      %v733 = vadd.f32 %v438, %v701
      %v734 = vadd.f32 %v439, %v702
      %v735 = vadd.f32 %v440, %v703
      %v736 = vadd.f32 %v441, %v704
      %v737 = vadd.f32 %v442, %v705
      %v738 = vadd.f32 %v443, %v706
      %v739 = vadd.f32 %v444, %v707
      %v740 = vadd.f32 %v445, %v708
      %v741 = vadd.f32 %v446, %v709
      %v742 = vadd.f32 %v447, %v710
      %v743 = vadd.f32 %v448, %v711
      %v744 = vadd.f32 %v449, %v712
      %v745 = vadd.f32 %v450, %v713
      %v746 = vadd.f32 %v451, %v714
      %v747 = vadd.f32 %v452, %v715
      %v748 = vadd.f32 %v453, %v716
      %v749 = vadd.f32 %v454, %v717
      %v750 = vadd.f32 %v455, %v718
      %v751 = vadd.f32 %v456, %v719
      %v752 = vadd.f32 %v457, %v720
      %v753 = vadd.f32 %v458, %v721
      %v754 = vadd.f32 %v459, %v722
      %v755 = vadd.f32 %v460, %v723
      %v756 = vadd.f32 %v461, %v724
      %v757 = vadd.f32 %v462, %v725
      %v758 = vadd.f32 %v463, %v726
      %v759 = vadd.f32 %v464, %v727
      %v760 = vadd.f32 %v465, %v728
      %v761 = vadd.f32 %v466, %v729
      %v762 = vadd.f32 %v467, %v730
      %v763 = vadd.f32 %v468, %v731
      %v764 = vmul.f32 %v732, 0.33333334
      %v765 = vmul.f32 %v733, 0.33333334
      %v766 = vmul.f32 %v734, 0.33333334
      %v767 = vmul.f32 %v735, 0.33333334
      %v768 = vmul.f32 %v736, 0.33333334
      %v769 = vmul.f32 %v737, 0.33333334
      %v770 = vmul.f32 %v738, 0.33333334
      %v771 = vmul.f32 %v739, 0.33333334
      %v772 = vmul.f32 %v740, 0.33333334
      %v773 = vmul.f32 %v741, 0.33333334
      %v774 = vmul.f32 %v742, 0.33333334
      %v775 = vmul.f32 %v743, 0.33333334
      %v776 = vmul.f32 %v744, 0.33333334
      %v777 = vmul.f32 %v745, 0.33333334
      %v778 = vmul.f32 %v746, 0.33333334
      %v779 = vmul.f32 %v747, 0.33333334
      %v780 = vmul.f32 %v748, 0.33333334
      %v781 = vmul.f32 %v749, 0.33333334
      %v782 = vmul.f32 %v750, 0.33333334
      %v783 = vmul.f32 %v751, 0.33333334
      %v784 = vmul.f32 %v752, 0.33333334
      %v785 = vmul.f32 %v753, 0.33333334
      %v786 = vmul.f32 %v754, 0.33333334
      %v787 = vmul.f32 %v755, 0.33333334
      %v788 = vmul.f32 %v756, 0.33333334
      %v789 = vmul.f32 %v757, 0.33333334
      %v790 = vmul.f32 %v758, 0.33333334
      %v791 = vmul.f32 %v759, 0.33333334
      %v792 = vmul.f32 %v760, 0.33333334
      %v793 = vmul.f32 %v761, 0.33333334
      %v794 = vmul.f32 %v762, 0.33333334
      %v795 = vmul.f32 %v763, 0.33333334
      %v796 = vpack.c.bf16 %v765, %v764
      %v797 = vpack.c.bf16 %v767, %v766
      %v798 = vpack.c.bf16 %v769, %v768
      %v799 = vpack.c.bf16 %v771, %v770
      %v800 = vpack.c.bf16 %v773, %v772
      %v801 = vpack.c.bf16 %v775, %v774
      %v802 = vpack.c.bf16 %v777, %v776
      %v803 = vpack.c.bf16 %v779, %v778
      %v804 = vpack.c.bf16 %v781, %v780
      %v805 = vpack.c.bf16 %v783, %v782
      %v806 = vpack.c.bf16 %v785, %v784
      %v807 = vpack.c.bf16 %v787, %v786
      %v808 = vpack.c.bf16 %v789, %v788
      %v809 = vpack.c.bf16 %v791, %v790
      %v810 = vpack.c.bf16 %v793, %v792
      %v811 = vpack.c.bf16 %v795, %v794
      %v812 = vld [vmem:[%s4] sm:$0xf]
      %v813 = vld [vmem:[%s4 + $0x4] sm:$0xf]
      %v814 = vld [vmem:[%s4 + $0x8] sm:$0xf]
      %v815 = vld [vmem:[%s4 + $0xc] sm:$0xf]
      %v820 = vunpack.c.l.b16 %v812
      %v821 = vunpack.c.l.b16 %v813
      %v822 = vunpack.c.l.b16 %v814
      %v823 = vunpack.c.l.b16 %v815
      %v824 = vpack.c.b16 %v821, %v820
      %v825 = vpack.c.b16 %v823, %v822
      %vm828 = vcmask 261120
      %v830 = vsel %vm828, %v796, 0
      %v833 = vsel %vm828, %v797, 0
      %v836 = vsel %vm828, %v798, 0
      %v839 = vsel %vm828, %v799, 0
      %v842 = vsel %vm828, %v800, 0
      %v845 = vsel %vm828, %v801, 0
      %v848 = vsel %vm828, %v802, 0
      %v851 = vsel %vm828, %v803, 0
      %v854 = vsel %vm828, %v804, 0
      %v857 = vsel %vm828, %v805, 0
      %v860 = vsel %vm828, %v806, 0
      %v863 = vsel %vm828, %v807, 0
      %v866 = vsel %vm828, %v808, 0
      %v869 = vsel %vm828, %v809, 0
      %v872 = vsel %vm828, %v810, 0
      %v875 = vsel %vm828, %v811, 0
      %877 = vmatprep.subr.bf16.mxu0 0
      %878 = vmatpush1.bf16.msra.mxu0 %v824
      %879 = vmatprep.subr.bf16.mxu0 0
      %880 = vmatpush1.bf16.msra.mxu0 %v825
      %881 = vmatprep.subr.bf16.mxu0 0
      %882 = vmatpush1.bf16.msra.mxu0 0
      %883 = vmatprep.subr.bf16.mxu0 0
      %884 = vmatpush1.bf16.msra.mxu0 0
      %885 = vmatprep.subr.bf16.mxu0 0
      %886 = vmatpush1.bf16.msra.mxu0 0
      %887 = vmatprep.subr.bf16.mxu0 0
      %888 = vmatpush1.bf16.msra.mxu0 0
      %889 = vmatprep.subr.bf16.mxu0 0
      %890 = vmatpush1.bf16.msra.mxu0 0
      %891 = vmatprep.subr.bf16.mxu0 0
      %892 = vmatpush1.bf16.msra.mxu0 0
      %893 = vmatprep.subr.bf16.mxu0 0
      %894 = vmatpush1.bf16.msra.mxu0 0
      %895 = vmatprep.subr.bf16.mxu0 0
      %896 = vmatpush1.bf16.msra.mxu0 0
      %897 = vmatprep.subr.bf16.mxu0 0
      %898 = vmatpush1.bf16.msra.mxu0 0
      %899 = vmatprep.subr.bf16.mxu0 0
      %900 = vmatpush1.bf16.msra.mxu0 0
      %901 = vmatprep.subr.bf16.mxu0 0
      %902 = vmatpush1.bf16.msra.mxu0 0
      %903 = vmatprep.subr.bf16.mxu0 0
      %904 = vmatpush1.bf16.msra.mxu0 0
      %905 = vmatprep.subr.bf16.mxu0 0
      %906 = vmatpush1.bf16.msra.mxu0 0
      %907 = vmatprep.subr.bf16.mxu0 0
      %908 = vmatpush1.bf16.msra.mxu0 0
      %909 = vmatprep.mubr.bf16.mxu0 0
      %910 = vmatmul.mubr.bf16.gmra.mrb[0].mxu0 %v830
      %v911 = vpop.f32.mrb[0].mxu0
      %v912 = vadd.f32 0.0, %v911
      %v913 = vpop.f32.mrb[0].mxu0
      %v914 = vpop.f32.mrb[0].mxu0
      %v915 = vadd.f32 0.0, %v914
      %v916 = vpop.f32.mrb[0].mxu0
      %917 = vmatprep.mubr.bf16.mxu0 0
      %918 = vmatmul.mubr.bf16.gmra.mrb[0].mxu0 %v833
      %v919 = vpop.f32.mrb[0].mxu0
      %v920 = vadd.f32 0.0, %v919
      %v921 = vpop.f32.mrb[0].mxu0
      %v922 = vpop.f32.mrb[0].mxu0
      %v923 = vadd.f32 0.0, %v922
      %v924 = vpop.f32.mrb[0].mxu0
      %925 = vmatprep.mubr.bf16.mxu0 0
      %926 = vmatmul.mubr.bf16.gmra.mrb[0].mxu0 %v836
      %v927 = vpop.f32.mrb[0].mxu0
      %v928 = vadd.f32 0.0, %v927
      %v929 = vpop.f32.mrb[0].mxu0
      %v930 = vpop.f32.mrb[0].mxu0
      %v931 = vadd.f32 0.0, %v930
      %v932 = vpop.f32.mrb[0].mxu0
      %933 = vmatprep.mubr.bf16.mxu0 0
      %934 = vmatmul.mubr.bf16.gmra.mrb[0].mxu0 %v839
      %v935 = vpop.f32.mrb[0].mxu0
      %v936 = vadd.f32 0.0, %v935
      %v937 = vpop.f32.mrb[0].mxu0
      %v938 = vpop.f32.mrb[0].mxu0
      %v939 = vadd.f32 0.0, %v938
      %v940 = vpop.f32.mrb[0].mxu0
      %941 = vmatprep.mubr.bf16.mxu0 0
      %942 = vmatmul.mubr.bf16.gmra.mrb[0].mxu0 %v842
      %v943 = vpop.f32.mrb[0].mxu0
      %v944 = vadd.f32 0.0, %v943
      %v945 = vpop.f32.mrb[0].mxu0
      %v946 = vpop.f32.mrb[0].mxu0
      %v947 = vadd.f32 0.0, %v946
      %v948 = vpop.f32.mrb[0].mxu0
      %949 = vmatprep.mubr.bf16.mxu0 0
      %950 = vmatmul.mubr.bf16.gmra.mrb[0].mxu0 %v845
      %v951 = vpop.f32.mrb[0].mxu0
      %v952 = vadd.f32 0.0, %v951
      %v953 = vpop.f32.mrb[0].mxu0
      %v954 = vpop.f32.mrb[0].mxu0
      %v955 = vadd.f32 0.0, %v954
      %v956 = vpop.f32.mrb[0].mxu0
      %957 = vmatprep.mubr.bf16.mxu0 0
      %958 = vmatmul.mubr.bf16.gmra.mrb[0].mxu0 %v848
      %v959 = vpop.f32.mrb[0].mxu0
      %v960 = vadd.f32 0.0, %v959
      %v961 = vpop.f32.mrb[0].mxu0
      %v962 = vpop.f32.mrb[0].mxu0
      %v963 = vadd.f32 0.0, %v962
      %v964 = vpop.f32.mrb[0].mxu0
      %965 = vmatprep.mubr.bf16.mxu0 0
      %966 = vmatmul.mubr.bf16.gmra.mrb[0].mxu0 %v851
      %v967 = vpop.f32.mrb[0].mxu0
      %v968 = vadd.f32 0.0, %v967
      %v969 = vpop.f32.mrb[0].mxu0
      %v970 = vpop.f32.mrb[0].mxu0
      %v971 = vadd.f32 0.0, %v970
      %v972 = vpop.f32.mrb[0].mxu0
      %973 = vmatprep.mubr.bf16.mxu0 0
      %974 = vmatmul.mubr.bf16.gmra.mrb[0].mxu0 %v854
      %v975 = vpop.f32.mrb[0].mxu0
      %v976 = vadd.f32 0.0, %v975
      %v977 = vpop.f32.mrb[0].mxu0
      %v978 = vpop.f32.mrb[0].mxu0
      %v979 = vadd.f32 0.0, %v978
      %v980 = vpop.f32.mrb[0].mxu0
      %981 = vmatprep.mubr.bf16.mxu0 0
      %982 = vmatmul.mubr.bf16.gmra.mrb[0].mxu0 %v857
      %v983 = vpop.f32.mrb[0].mxu0
      %v984 = vadd.f32 0.0, %v983
      %v985 = vpop.f32.mrb[0].mxu0
      %v986 = vpop.f32.mrb[0].mxu0
      %v987 = vadd.f32 0.0, %v986
      %v988 = vpop.f32.mrb[0].mxu0
      %989 = vmatprep.mubr.bf16.mxu0 0
      %990 = vmatmul.mubr.bf16.gmra.mrb[0].mxu0 %v860
      %v991 = vpop.f32.mrb[0].mxu0
      %v992 = vadd.f32 0.0, %v991
      %v993 = vpop.f32.mrb[0].mxu0
      %v994 = vpop.f32.mrb[0].mxu0
      %v995 = vadd.f32 0.0, %v994
      %v996 = vpop.f32.mrb[0].mxu0
      %997 = vmatprep.mubr.bf16.mxu0 0
      %998 = vmatmul.mubr.bf16.gmra.mrb[0].mxu0 %v863
      %v999 = vpop.f32.mrb[0].mxu0
      %v1000 = vadd.f32 0.0, %v999
      %v1001 = vpop.f32.mrb[0].mxu0
      %v1002 = vpop.f32.mrb[0].mxu0
      %v1003 = vadd.f32 0.0, %v1002
      %v1004 = vpop.f32.mrb[0].mxu0
      %1005 = vmatprep.mubr.bf16.mxu0 0
      %1006 = vmatmul.mubr.bf16.gmra.mrb[0].mxu0 %v866
      %v1007 = vpop.f32.mrb[0].mxu0
      %v1008 = vadd.f32 0.0, %v1007
      %v1009 = vpop.f32.mrb[0].mxu0
      %v1010 = vpop.f32.mrb[0].mxu0
      %v1011 = vadd.f32 0.0, %v1010
      %v1012 = vpop.f32.mrb[0].mxu0
      %1013 = vmatprep.mubr.bf16.mxu0 0
      %1014 = vmatmul.mubr.bf16.gmra.mrb[0].mxu0 %v869
      %v1015 = vpop.f32.mrb[0].mxu0
      %v1016 = vadd.f32 0.0, %v1015
      %v1017 = vpop.f32.mrb[0].mxu0
      %v1018 = vpop.f32.mrb[0].mxu0
      %v1019 = vadd.f32 0.0, %v1018
      %v1020 = vpop.f32.mrb[0].mxu0
      %1021 = vmatprep.mubr.bf16.mxu0 0
      %1022 = vmatmul.mubr.bf16.gmra.mrb[0].mxu0 %v872
      %v1023 = vpop.f32.mrb[0].mxu0
      %v1024 = vadd.f32 0.0, %v1023
      %v1025 = vpop.f32.mrb[0].mxu0
      %v1026 = vpop.f32.mrb[0].mxu0
      %v1027 = vadd.f32 0.0, %v1026
      %v1028 = vpop.f32.mrb[0].mxu0
      %1029 = vmatprep.mubr.bf16.mxu0 0
      %1030 = vmatmul.mubr.bf16.gmra.mrb[0].mxu0 %v875
      %v1031 = vpop.f32.mrb[0].mxu0
      %v1032 = vadd.f32 0.0, %v1031
      %v1033 = vpop.f32.mrb[0].mxu0
      %v1034 = vpop.f32.mrb[0].mxu0
      %v1035 = vadd.f32 0.0, %v1034
      %v1036 = vpop.f32.mrb[0].mxu0
      %1037 = vdwg.mxu0
      %v1038 = vld [vmem:[%s392] sm:$0xf]
      %v1039 = vld [vmem:[%s392 + $0x4] sm:$0xf]
      %v1040 = vld [vmem:[%s392 + $0x8] sm:$0xf]
      %v1041 = vld [vmem:[%s392 + $0xc] sm:$0xf]
      %v1042 = vld [vmem:[%s392 + $0x10] sm:$0xf]
      %v1043 = vld [vmem:[%s392 + $0x14] sm:$0xf]
      %v1044 = vld [vmem:[%s392 + $0x18] sm:$0xf]
      %v1045 = vld [vmem:[%s392 + $0x1c] sm:$0xf]
      %v1046 = vld [vmem:[%s392 + $0x20] sm:$0xf]
      %v1047 = vld [vmem:[%s392 + $0x24] sm:$0xf]
      %v1048 = vld [vmem:[%s392 + $0x28] sm:$0xf]
      %v1049 = vld [vmem:[%s392 + $0x2c] sm:$0xf]
      %v1050 = vld [vmem:[%s392 + $0x30] sm:$0xf]
      %v1051 = vld [vmem:[%s392 + $0x34] sm:$0xf]
      %v1052 = vld [vmem:[%s392 + $0x38] sm:$0xf]
      %v1053 = vld [vmem:[%s392 + $0x3c] sm:$0xf]
      %v1054 = vld [vmem:[%s392 + $0x40] sm:$0xf]
      %v1055 = vld [vmem:[%s392 + $0x44] sm:$0xf]
      %v1056 = vld [vmem:[%s392 + $0x48] sm:$0xf]
      %v1057 = vld [vmem:[%s392 + $0x4c] sm:$0xf]
      %v1058 = vld [vmem:[%s392 + $0x50] sm:$0xf]
      %v1059 = vld [vmem:[%s392 + $0x54] sm:$0xf]
      %v1060 = vld [vmem:[%s392 + $0x58] sm:$0xf]
      %v1061 = vld [vmem:[%s392 + $0x5c] sm:$0xf]
      %v1062 = vld [vmem:[%s392 + $0x60] sm:$0xf]
      %v1063 = vld [vmem:[%s392 + $0x64] sm:$0xf]
      %v1064 = vld [vmem:[%s392 + $0x68] sm:$0xf]
      %v1065 = vld [vmem:[%s392 + $0x6c] sm:$0xf]
      %v1066 = vld [vmem:[%s392 + $0x70] sm:$0xf]
      %v1067 = vld [vmem:[%s392 + $0x74] sm:$0xf]
      %v1068 = vld [vmem:[%s392 + $0x78] sm:$0xf]
      %v1069 = vld [vmem:[%s392 + $0x7c] sm:$0xf]
      %v1070 = vunpack.c.l.bf16 %v1038
      %v1071 = vunpack.c.l.bf16 %v1039
      %v1072 = vunpack.c.l.bf16 %v1040
      %v1073 = vunpack.c.l.bf16 %v1041
      %v1074 = vunpack.c.l.bf16 %v1042
      %v1075 = vunpack.c.l.bf16 %v1043
      %v1076 = vunpack.c.l.bf16 %v1044
      %v1077 = vunpack.c.l.bf16 %v1045
      %v1078 = vunpack.c.l.bf16 %v1046
      %v1079 = vunpack.c.l.bf16 %v1047
      %v1080 = vunpack.c.l.bf16 %v1048
      %v1081 = vunpack.c.l.bf16 %v1049
      %v1082 = vunpack.c.l.bf16 %v1050
      %v1083 = vunpack.c.l.bf16 %v1051
      %v1084 = vunpack.c.l.bf16 %v1052
      %v1085 = vunpack.c.l.bf16 %v1053
      %v1086 = vunpack.c.l.bf16 %v1054
      %v1087 = vunpack.c.l.bf16 %v1055
      %v1088 = vunpack.c.l.bf16 %v1056
      %v1089 = vunpack.c.l.bf16 %v1057
      %v1090 = vunpack.c.l.bf16 %v1058
      %v1091 = vunpack.c.l.bf16 %v1059
      %v1092 = vunpack.c.l.bf16 %v1060
      %v1093 = vunpack.c.l.bf16 %v1061
      %v1094 = vunpack.c.l.bf16 %v1062
      %v1095 = vunpack.c.l.bf16 %v1063
      %v1096 = vunpack.c.l.bf16 %v1064
      %v1097 = vunpack.c.l.bf16 %v1065
      %v1098 = vunpack.c.l.bf16 %v1066
      %v1099 = vunpack.c.l.bf16 %v1067
      %v1100 = vunpack.c.l.bf16 %v1068
      %v1101 = vunpack.c.l.bf16 %v1069
      %v1102 = vmul.f32 %v1070, %v912
      %v1103 = vmul.f32 %v1071, %v915
      %v1104 = vmul.f32 %v1072, %v920
      %v1105 = vmul.f32 %v1073, %v923
      %v1106 = vmul.f32 %v1074, %v928
      %v1107 = vmul.f32 %v1075, %v931
      %v1108 = vmul.f32 %v1076, %v936
      %v1109 = vmul.f32 %v1077, %v939
      %v1110 = vmul.f32 %v1078, %v944
      %v1111 = vmul.f32 %v1079, %v947
      %v1112 = vmul.f32 %v1080, %v952
      %v1113 = vmul.f32 %v1081, %v955
      %v1114 = vmul.f32 %v1082, %v960
      %v1115 = vmul.f32 %v1083, %v963
      %v1116 = vmul.f32 %v1084, %v968
      %v1117 = vmul.f32 %v1085, %v971
      %v1118 = vmul.f32 %v1086, %v976
      %v1119 = vmul.f32 %v1087, %v979
      %v1120 = vmul.f32 %v1088, %v984
      %v1121 = vmul.f32 %v1089, %v987
      %v1122 = vmul.f32 %v1090, %v992
      %v1123 = vmul.f32 %v1091, %v995
      %v1124 = vmul.f32 %v1092, %v1000
      %v1125 = vmul.f32 %v1093, %v1003
      %v1126 = vmul.f32 %v1094, %v1008
      %v1127 = vmul.f32 %v1095, %v1011
      %v1128 = vmul.f32 %v1096, %v1016
      %v1129 = vmul.f32 %v1097, %v1019
      %v1130 = vmul.f32 %v1098, %v1024
      %v1131 = vmul.f32 %v1099, %v1027
      %v1132 = vmul.f32 %v1100, %v1032
      %v1133 = vmul.f32 %v1101, %v1035
      %v1134 = vpack.c.bf16 %v1103, %v1102
      %v1135 = vpack.c.bf16 %v1105, %v1104
      %v1136 = vpack.c.bf16 %v1107, %v1106
      %v1137 = vpack.c.bf16 %v1109, %v1108
      %v1138 = vpack.c.bf16 %v1111, %v1110
      %v1139 = vpack.c.bf16 %v1113, %v1112
      %v1140 = vpack.c.bf16 %v1115, %v1114
      %v1141 = vpack.c.bf16 %v1117, %v1116
      %v1142 = vpack.c.bf16 %v1119, %v1118
      %v1143 = vpack.c.bf16 %v1121, %v1120
      %v1144 = vpack.c.bf16 %v1123, %v1122
      %v1145 = vpack.c.bf16 %v1125, %v1124
      %v1146 = vpack.c.bf16 %v1127, %v1126
      %v1147 = vpack.c.bf16 %v1129, %v1128
      %v1148 = vpack.c.bf16 %v1131, %v1130
      %v1149 = vpack.c.bf16 %v1133, %v1132
      %v1150 = vld [vmem:[%s5] sm:$0xf]
      %v1151 = vld [vmem:[%s5 + $0x4] sm:$0xf]
      %v1152 = vld [vmem:[%s5 + $0x8] sm:$0xf]
      %v1153 = vld [vmem:[%s5 + $0xc] sm:$0xf]
      %v1154 = vld [vmem:[%s6] sm:$0x1]
      %v1156 = vlaneseq
      %v1157 = vshrl.u32 %v1156, 7
      %v1158 = vsub.s32 0, %v1157
      %v1159 = vrot.slane %v1154, %v1158
      %v1165 = vunpack.c.l.b16 %v1150
      %v1166 = vunpack.c.l.b16 %v1151
      %v1167 = vunpack.c.l.b16 %v1152
      %v1168 = vunpack.c.l.b16 %v1153
      %v1169 = vpack.c.b16 %v1166, %v1165
      %v1170 = vpack.c.b16 %v1168, %v1167
      %v1174 = vsel %vm828, %v1134, 0
      %v1177 = vsel %vm828, %v1135, 0
      %v1180 = vsel %vm828, %v1136, 0
      %v1183 = vsel %vm828, %v1137, 0
      %v1186 = vsel %vm828, %v1138, 0
      %v1189 = vsel %vm828, %v1139, 0
      %v1192 = vsel %vm828, %v1140, 0
      %v1195 = vsel %vm828, %v1141, 0
      %v1198 = vsel %vm828, %v1142, 0
      %v1201 = vsel %vm828, %v1143, 0
      %v1204 = vsel %vm828, %v1144, 0
      %v1207 = vsel %vm828, %v1145, 0
      %v1210 = vsel %vm828, %v1146, 0
      %v1213 = vsel %vm828, %v1147, 0
      %v1216 = vsel %vm828, %v1148, 0
      %v1219 = vsel %vm828, %v1149, 0
      %1221 = vmatprep.subr.bf16.mxu0 0
      %1222 = vmatpush1.bf16.msra.mxu0 %v1169
      %1223 = vmatprep.subr.bf16.mxu0 0
      %1224 = vmatpush1.bf16.msra.mxu0 %v1170
      %1225 = vmatprep.subr.bf16.mxu0 0
      %1226 = vmatpush1.bf16.msra.mxu0 0
      %1227 = vmatprep.subr.bf16.mxu0 0
      %1228 = vmatpush1.bf16.msra.mxu0 0
      %1229 = vmatprep.subr.bf16.mxu0 0
      %1230 = vmatpush1.bf16.msra.mxu0 0
      %1231 = vmatprep.subr.bf16.mxu0 0
      %1232 = vmatpush1.bf16.msra.mxu0 0
      %1233 = vmatprep.subr.bf16.mxu0 0
      %1234 = vmatpush1.bf16.msra.mxu0 0
      %1235 = vmatprep.subr.bf16.mxu0 0
      %1236 = vmatpush1.bf16.msra.mxu0 0
      %1237 = vmatprep.subr.bf16.mxu0 0
      %1238 = vmatpush1.bf16.msra.mxu0 0
      %1239 = vmatprep.subr.bf16.mxu0 0
      %1240 = vmatpush1.bf16.msra.mxu0 0
      %1241 = vmatprep.subr.bf16.mxu0 0
      %1242 = vmatpush1.bf16.msra.mxu0 0
      %1243 = vmatprep.subr.bf16.mxu0 0
      %1244 = vmatpush1.bf16.msra.mxu0 0
      %1245 = vmatprep.subr.bf16.mxu0 0
      %1246 = vmatpush1.bf16.msra.mxu0 0
      %1247 = vmatprep.subr.bf16.mxu0 0
      %1248 = vmatpush1.bf16.msra.mxu0 0
      %1249 = vmatprep.subr.bf16.mxu0 0
      %1250 = vmatpush1.bf16.msra.mxu0 0
      %1251 = vmatprep.subr.bf16.mxu0 0
      %1252 = vmatpush1.bf16.msra.mxu0 0
      %1253 = vmatprep.mubr.bf16.mxu0 0
      %1254 = vmatmul.mubr.bf16.gmra.mrb[0].mxu0 %v1174
      %v1255 = vpop.f32.mrb[0].mxu0
      %v1256 = vadd.f32 %v1159, %v1255
      %v1257 = vpop.f32.mrb[0].mxu0
      %v1258 = vpop.f32.mrb[0].mxu0
      %v1259 = vadd.f32 %v1159, %v1258
      %v1260 = vpop.f32.mrb[0].mxu0
      %1261 = vmatprep.mubr.bf16.mxu0 0
      %1262 = vmatmul.mubr.bf16.gmra.mrb[0].mxu0 %v1177
      %v1263 = vpop.f32.mrb[0].mxu0
      %v1264 = vadd.f32 %v1159, %v1263
      %v1265 = vpop.f32.mrb[0].mxu0
      %v1266 = vpop.f32.mrb[0].mxu0
      %v1267 = vadd.f32 %v1159, %v1266
      %v1268 = vpop.f32.mrb[0].mxu0
      %1269 = vmatprep.mubr.bf16.mxu0 0
      %1270 = vmatmul.mubr.bf16.gmra.mrb[0].mxu0 %v1180
      %v1271 = vpop.f32.mrb[0].mxu0
      %v1272 = vadd.f32 %v1159, %v1271
      %v1273 = vpop.f32.mrb[0].mxu0
      %v1274 = vpop.f32.mrb[0].mxu0
      %v1275 = vadd.f32 %v1159, %v1274
      %v1276 = vpop.f32.mrb[0].mxu0
      %1277 = vmatprep.mubr.bf16.mxu0 0
      %1278 = vmatmul.mubr.bf16.gmra.mrb[0].mxu0 %v1183
      %v1279 = vpop.f32.mrb[0].mxu0
      %v1280 = vadd.f32 %v1159, %v1279
      %v1281 = vpop.f32.mrb[0].mxu0
      %v1282 = vpop.f32.mrb[0].mxu0
      %v1283 = vadd.f32 %v1159, %v1282
      %v1284 = vpop.f32.mrb[0].mxu0
      %1285 = vmatprep.mubr.bf16.mxu0 0
      %1286 = vmatmul.mubr.bf16.gmra.mrb[0].mxu0 %v1186
      %v1287 = vpop.f32.mrb[0].mxu0
      %v1288 = vadd.f32 %v1159, %v1287
      %v1289 = vpop.f32.mrb[0].mxu0
      %v1290 = vpop.f32.mrb[0].mxu0
      %v1291 = vadd.f32 %v1159, %v1290
      %v1292 = vpop.f32.mrb[0].mxu0
      %1293 = vmatprep.mubr.bf16.mxu0 0
      %1294 = vmatmul.mubr.bf16.gmra.mrb[0].mxu0 %v1189
      %v1295 = vpop.f32.mrb[0].mxu0
      %v1296 = vadd.f32 %v1159, %v1295
      %v1297 = vpop.f32.mrb[0].mxu0
      %v1298 = vpop.f32.mrb[0].mxu0
      %v1299 = vadd.f32 %v1159, %v1298
      %v1300 = vpop.f32.mrb[0].mxu0
      %1301 = vmatprep.mubr.bf16.mxu0 0
      %1302 = vmatmul.mubr.bf16.gmra.mrb[0].mxu0 %v1192
      %v1303 = vpop.f32.mrb[0].mxu0
      %v1304 = vadd.f32 %v1159, %v1303
      %v1305 = vpop.f32.mrb[0].mxu0
      %v1306 = vpop.f32.mrb[0].mxu0
      %v1307 = vadd.f32 %v1159, %v1306
      %v1308 = vpop.f32.mrb[0].mxu0
      %1309 = vmatprep.mubr.bf16.mxu0 0
      %1310 = vmatmul.mubr.bf16.gmra.mrb[0].mxu0 %v1195
      %v1311 = vpop.f32.mrb[0].mxu0
      %v1312 = vadd.f32 %v1159, %v1311
      %v1313 = vpop.f32.mrb[0].mxu0
      %v1314 = vpop.f32.mrb[0].mxu0
      %v1315 = vadd.f32 %v1159, %v1314
      %v1316 = vpop.f32.mrb[0].mxu0
      %1317 = vmatprep.mubr.bf16.mxu0 0
      %1318 = vmatmul.mubr.bf16.gmra.mrb[0].mxu0 %v1198
      %v1319 = vpop.f32.mrb[0].mxu0
      %v1320 = vadd.f32 %v1159, %v1319
      %v1321 = vpop.f32.mrb[0].mxu0
      %v1322 = vpop.f32.mrb[0].mxu0
      %v1323 = vadd.f32 %v1159, %v1322
      %v1324 = vpop.f32.mrb[0].mxu0
      %1325 = vmatprep.mubr.bf16.mxu0 0
      %1326 = vmatmul.mubr.bf16.gmra.mrb[0].mxu0 %v1201
      %v1327 = vpop.f32.mrb[0].mxu0
      %v1328 = vadd.f32 %v1159, %v1327
      %v1329 = vpop.f32.mrb[0].mxu0
      %v1330 = vpop.f32.mrb[0].mxu0
      %v1331 = vadd.f32 %v1159, %v1330
      %v1332 = vpop.f32.mrb[0].mxu0
      %1333 = vmatprep.mubr.bf16.mxu0 0
      %1334 = vmatmul.mubr.bf16.gmra.mrb[0].mxu0 %v1204
      %v1335 = vpop.f32.mrb[0].mxu0
      %v1336 = vadd.f32 %v1159, %v1335
      %v1337 = vpop.f32.mrb[0].mxu0
      %v1338 = vpop.f32.mrb[0].mxu0
      %v1339 = vadd.f32 %v1159, %v1338
      %v1340 = vpop.f32.mrb[0].mxu0
      %1341 = vmatprep.mubr.bf16.mxu0 0
      %1342 = vmatmul.mubr.bf16.gmra.mrb[0].mxu0 %v1207
      %v1343 = vpop.f32.mrb[0].mxu0
      %v1344 = vadd.f32 %v1159, %v1343
      %v1345 = vpop.f32.mrb[0].mxu0
      %v1346 = vpop.f32.mrb[0].mxu0
      %v1347 = vadd.f32 %v1159, %v1346
      %v1348 = vpop.f32.mrb[0].mxu0
      %1349 = vmatprep.mubr.bf16.mxu0 0
      %1350 = vmatmul.mubr.bf16.gmra.mrb[0].mxu0 %v1210
      %v1351 = vpop.f32.mrb[0].mxu0
      %v1352 = vadd.f32 %v1159, %v1351
      %v1353 = vpop.f32.mrb[0].mxu0
      %v1354 = vpop.f32.mrb[0].mxu0
      %v1355 = vadd.f32 %v1159, %v1354
      %v1356 = vpop.f32.mrb[0].mxu0
      %1357 = vmatprep.mubr.bf16.mxu0 0
      %1358 = vmatmul.mubr.bf16.gmra.mrb[0].mxu0 %v1213
      %v1359 = vpop.f32.mrb[0].mxu0
      %v1360 = vadd.f32 %v1159, %v1359
      %v1361 = vpop.f32.mrb[0].mxu0
      %v1362 = vpop.f32.mrb[0].mxu0
      %v1363 = vadd.f32 %v1159, %v1362
      %v1364 = vpop.f32.mrb[0].mxu0
      %1365 = vmatprep.mubr.bf16.mxu0 0
      %1366 = vmatmul.mubr.bf16.gmra.mrb[0].mxu0 %v1216
      %v1367 = vpop.f32.mrb[0].mxu0
      %v1368 = vadd.f32 %v1159, %v1367
      %v1369 = vpop.f32.mrb[0].mxu0
      %v1370 = vpop.f32.mrb[0].mxu0
      %v1371 = vadd.f32 %v1159, %v1370
      %v1372 = vpop.f32.mrb[0].mxu0
      %1373 = vmatprep.mubr.bf16.mxu0 0
      %1374 = vmatmul.mubr.bf16.gmra.mrb[0].mxu0 %v1219
      %v1375 = vpop.f32.mrb[0].mxu0
      %v1376 = vadd.f32 %v1159, %v1375
      %v1377 = vpop.f32.mrb[0].mxu0
      %v1378 = vpop.f32.mrb[0].mxu0
      %v1379 = vadd.f32 %v1159, %v1378
      %v1380 = vpop.f32.mrb[0].mxu0
      %1381 = vdwg.mxu0
      %1382 = vst.msk [vmem:[%s402] sm:$0xff] %vm828, %v1256
      %1383 = vst.msk [vmem:[%s402 + $0x8] sm:$0xff] %vm828, %v1259
      %1384 = vst.msk [vmem:[%s402 + $0x10] sm:$0xff] %vm828, %v1264
      %1385 = vst.msk [vmem:[%s402 + $0x18] sm:$0xff] %vm828, %v1267
      %1386 = vst.msk [vmem:[%s402 + $0x20] sm:$0xff] %vm828, %v1272
      %1387 = vst.msk [vmem:[%s402 + $0x28] sm:$0xff] %vm828, %v1275
      %1388 = vst.msk [vmem:[%s402 + $0x30] sm:$0xff] %vm828, %v1280
      %1389 = vst.msk [vmem:[%s402 + $0x38] sm:$0xff] %vm828, %v1283
      %1390 = vst.msk [vmem:[%s402 + $0x40] sm:$0xff] %vm828, %v1288
      %1391 = vst.msk [vmem:[%s402 + $0x48] sm:$0xff] %vm828, %v1291
      %1392 = vst.msk [vmem:[%s402 + $0x50] sm:$0xff] %vm828, %v1296
      %1393 = vst.msk [vmem:[%s402 + $0x58] sm:$0xff] %vm828, %v1299
      %1394 = vst.msk [vmem:[%s402 + $0x60] sm:$0xff] %vm828, %v1304
      %1395 = vst.msk [vmem:[%s402 + $0x68] sm:$0xff] %vm828, %v1307
      %1396 = vst.msk [vmem:[%s402 + $0x70] sm:$0xff] %vm828, %v1312
      %1397 = vst.msk [vmem:[%s402 + $0x78] sm:$0xff] %vm828, %v1315
      %1398 = vst.msk [vmem:[%s402 + $0x80] sm:$0xff] %vm828, %v1320
      %1399 = vst.msk [vmem:[%s402 + $0x88] sm:$0xff] %vm828, %v1323
      %1400 = vst.msk [vmem:[%s402 + $0x90] sm:$0xff] %vm828, %v1328
      %1401 = vst.msk [vmem:[%s402 + $0x98] sm:$0xff] %vm828, %v1331
      %1402 = vst.msk [vmem:[%s402 + $0xa0] sm:$0xff] %vm828, %v1336
      %1403 = vst.msk [vmem:[%s402 + $0xa8] sm:$0xff] %vm828, %v1339
      %1404 = vst.msk [vmem:[%s402 + $0xb0] sm:$0xff] %vm828, %v1344
      %1405 = vst.msk [vmem:[%s402 + $0xb8] sm:$0xff] %vm828, %v1347
      %1406 = vst.msk [vmem:[%s402 + $0xc0] sm:$0xff] %vm828, %v1352
      %1407 = vst.msk [vmem:[%s402 + $0xc8] sm:$0xff] %vm828, %v1355
      %1408 = vst.msk [vmem:[%s402 + $0xd0] sm:$0xff] %vm828, %v1360
      %1409 = vst.msk [vmem:[%s402 + $0xd8] sm:$0xff] %vm828, %v1363
      %1410 = vst.msk [vmem:[%s402 + $0xe0] sm:$0xff] %vm828, %v1368
      %1411 = vst.msk [vmem:[%s402 + $0xe8] sm:$0xff] %vm828, %v1371
      %1412 = vst.msk [vmem:[%s402 + $0xf0] sm:$0xff] %vm828, %v1376
      %1413 = vst.msk [vmem:[%s402 + $0xf8] sm:$0xff] %vm828, %v1379
      %s1414 = smul.u32 32, %s23
      %p1415 = scmp.lt.s32.totalorder %s22, 1
      %s1416 = scalar_select %p1415, %s22, 1
      %p1417 = scmp.lt.s32.totalorder %s1414, 31
      %s1418 = scalar_select %p1417, %s1414, 31
      %s1419 = smul.addr %s1416, 32
      %s1420 = sadd.s32 %s1418, %s1419
      %s1421 = smul.addr %s1420, 8
      %s1422 = scalar_lea.vmem %s7, %s1421
      // Predicated region
      $region49: #{focalnet_block_fwd.6} parent=47 // pred_check
        %p1423 = pneg %p223
      $region50: #{focalnet_block_fwd.6} parent=47 // pred_check_branch
        %1425 = sbr.rel (%p1423) target = $region52
      $region51: #{focalnet_block_fwd.6} parent=47 // pred_region
        %s1426 = smul.u32 32, %s23
      $region52: #{focalnet_block_fwd.6} parent=47 // pred_fallthru
        _
    $region48: #{focalnet_block_fwd.6} parent=5 // pred_fallthru
      _
    %p1427 = scmp.le.s32.totalorder 2, %s13
    // Predicated region
    $region53: #{focalnet_block_fwd.6} parent=5 // pred_check
      %p1428 = pneg %p1427
    $region54: #{focalnet_block_fwd.6} parent=5 // pred_check_branch
      %1430 = sbr.rel (%p1428) target = $region56
    $region55: #{focalnet_block_fwd.6} parent=5 // pred_region
      %s1431 = ssub.s32 %s13, 2
      // Predicated region
      $region57: #{focalnet_block_fwd.6} parent=55 // pred_check
        %p1432 = pneg %p229
      $region58: #{focalnet_block_fwd.6} parent=55 // pred_check_branch
        %1434 = sbr.rel (%p1432) target = $region60
      $region59: #{focalnet_block_fwd.6} parent=55 // pred_region
        %s1435 = smul.u32 32, %s25
        %p1436 = scmp.lt.s32.totalorder %s24, 1
        %s1437 = scalar_select %p1436, %s24, 1
        %p1438 = scmp.lt.s32.totalorder %s1435, 31
        %s1439 = scalar_select %p1438, %s1435, 31
        %s1440 = smul.addr %s1437, 32
        %s1441 = sadd.s32 %s1439, %s1440
        %s1442 = smul.addr %s1441, 8
        %s1443 = scalar_lea.vmem %s7, %s1442
      $region60: #{focalnet_block_fwd.6} parent=55 // pred_fallthru
        _
    $region56: #{focalnet_block_fwd.6} parent=5 // pred_fallthru
      _
  $region6: #{focalnet_block_fwd.6} parent=0 // loop_footer
    %s17 = sadd.s32 1, %s13
  $region7: #{focalnet_block_fwd.6} parent=0 // loop_footer_branch
    %12 = sbr.rel target = $region3
  $region8: #{focalnet_block_fwd.6} parent=0 // loop_exit
    _

// kernel: focalnet_block_fwd.7
$region0: #{focalnet_block_fwd.7}
  #allocation0 [shape = 'u32[]', space=smem, size = 0x4, offset = 0x4, fixed_abs, tag = 'smem constant byte address 0x4 - core index']
  #allocation1 [shape = 'u32[144,128]{1,0:T(1,128)}', space=vmem, size = 0x12000, scoped, tag = 'internal scratch']
  %s0 = inlined_call_operand.vmem [shape: f32[512,32], index: 0, kind: input, shape index: {}]
  %s1 = inlined_call_operand.vmem [shape: f32[1,32], index: 1, kind: input, shape index: {}]
  %s2 = inlined_call_operand.vmem [shape: f32[1,32], index: 2, kind: input, shape index: {}]
  %s3 = inlined_call_operand.vmem [shape: bf16[32,128], index: 3, kind: input, shape index: {}]
  %s4 = inlined_call_operand.vmem [shape: f32[1,128], index: 4, kind: input, shape index: {}]
  %s5 = inlined_call_operand.vmem [shape: bf16[128,32], index: 5, kind: input, shape index: {}]
  %s6 = inlined_call_operand.vmem [shape: f32[1,32], index: 6, kind: input, shape index: {}]
  %s7 = inlined_call_operand.vmem [shape: f32[512,32], index: 7, kind: output, shape index: {}]
  %s8 = sld [smem:[#allocation0]]
  $region61: #{focalnet_block_fwd.7} parent=0
    _
  %s10 = ssub.s32 1, %s8
  %s11 = scalar_select 0, %s10, %s8
  loop: start=0, step=1, limit=4
  $region2: #{focalnet_block_fwd.7} parent=0 // loop_pre_header
    _
  $region3: #{focalnet_block_fwd.7} parent=0 // loop_header
    %s13 = sphi 0, %s17
    %p14 = scmp.ge.s32.totalorder %s13, 4
    %s23 = sphi 0, %s25
    %s26 = sphi 0, %s23
    %s27 = sphi 0, %s26
    %s43 = sphi 0, %s27
    %s47 = sphi 0, %s47
    %s49 = sphi 0, %s47
    %s50 = sphi 0, %s49
    %s64 = sphi 0, %s50
    %s68 = sphi 0, %s68
    %s70 = sphi 0, %s68
    %s71 = sphi 0, %s70
    %s85 = sphi 0, %s71
    %s89 = sphi 0, %s89
    %s91 = sphi 0, %s89
    %s92 = sphi 0, %s91
    %s106 = sphi 0, %s92
    %s110 = sphi 0, %s110
    %s112 = sphi 0, %s110
    %s113 = sphi 0, %s112
    %s127 = sphi 0, %s113
    %s131 = sphi 0, %s131
    %s133 = sphi 0, %s131
    %s134 = sphi 0, %s133
    %s148 = sphi 0, %s134
    %s152 = sphi 0, %s152
    %s154 = sphi 0, %s152
    %s155 = sphi 0, %s154
    %s169 = sphi 0, %s155
    %s175 = sphi 0, %s177
    %s178 = sphi 0, %s175
    %s179 = sphi 0, %s178
    %s195 = sphi 0, %s179
  $region4: #{focalnet_block_fwd.7} parent=0 // loop_header_branch
    %16 = sbr.rel (%p14) target = $region8
  $region5: #{focalnet_block_fwd.7} parent=0 // loop_body
    %s18 = ssub.s32 %s13, 1
    %s19 = ssub.s32 %s13, 2
    %s20 = sadd.s32 %s13, 1
    %s21 = ssub.s32 %s13, %s20
    %p22 = scmp.eq.s32.totalorder %s21, 0
    %s24 = sadd.s32 %s23, 1
    %s25 = scalar_select %p22, %s23, %s24
    %p28 = pneg %p22
    %p29 = scmp.eq.s32.totalorder %s13, 1
    %p30 = por %p28, %p29
    %p31 = scmp.ne.s32.totalorder %s23, %s26
    %p32 = scmp.eq.s32.totalorder %s13, 0
    %p33 = por %p31, %p32
    %p34 = scmp.ne.s32.totalorder %s23, %s26
    %p35 = scmp.eq.s32.totalorder %s18, 1
    %p36 = por %p34, %p35
    %p37 = scmp.ne.s32.totalorder %s26, %s27
    %p38 = scmp.eq.s32.totalorder %s18, 0
    %p39 = por %p37, %p38
    %p40 = scmp.ne.s32.totalorder %s26, %s27
    %p41 = scmp.eq.s32.totalorder %s19, 1
    %p42 = por %p40, %p41
    %p44 = scmp.ne.s32.totalorder %s27, %s43
    %p45 = scmp.eq.s32.totalorder %s19, 0
    %p46 = por %p44, %p45
    %s48 = sadd.s32 %s47, 1
    %p51 = scmp.eq.s32.totalorder %s13, 1
    %p52 = scmp.ne.s32.totalorder %s47, %s49
    %p53 = scmp.eq.s32.totalorder %s13, 0
    %p54 = por %p52, %p53
    %p55 = scmp.ne.s32.totalorder %s47, %s49
    %p56 = scmp.eq.s32.totalorder %s18, 1
    %p57 = por %p55, %p56
    %p58 = scmp.ne.s32.totalorder %s49, %s50
    %p59 = scmp.eq.s32.totalorder %s18, 0
    %p60 = por %p58, %p59
    %p61 = scmp.ne.s32.totalorder %s49, %s50
    %p62 = scmp.eq.s32.totalorder %s19, 1
    %p63 = por %p61, %p62
    %p65 = scmp.ne.s32.totalorder %s50, %s64
    %p66 = scmp.eq.s32.totalorder %s19, 0
    %p67 = por %p65, %p66
    %s69 = sadd.s32 %s68, 1
    %p72 = scmp.eq.s32.totalorder %s13, 1
    %p73 = scmp.ne.s32.totalorder %s68, %s70
    %p74 = scmp.eq.s32.totalorder %s13, 0
    %p75 = por %p73, %p74
    %p76 = scmp.ne.s32.totalorder %s68, %s70
    %p77 = scmp.eq.s32.totalorder %s18, 1
    %p78 = por %p76, %p77
    %p79 = scmp.ne.s32.totalorder %s70, %s71
    %p80 = scmp.eq.s32.totalorder %s18, 0
    %p81 = por %p79, %p80
    %p82 = scmp.ne.s32.totalorder %s70, %s71
    %p83 = scmp.eq.s32.totalorder %s19, 1
    %p84 = por %p82, %p83
    %p86 = scmp.ne.s32.totalorder %s71, %s85
    %p87 = scmp.eq.s32.totalorder %s19, 0
    %p88 = por %p86, %p87
    %s90 = sadd.s32 %s89, 1
    %p93 = scmp.eq.s32.totalorder %s13, 1
    %p94 = scmp.ne.s32.totalorder %s89, %s91
    %p95 = scmp.eq.s32.totalorder %s13, 0
    %p96 = por %p94, %p95
    %p97 = scmp.ne.s32.totalorder %s89, %s91
    %p98 = scmp.eq.s32.totalorder %s18, 1
    %p99 = por %p97, %p98
    %p100 = scmp.ne.s32.totalorder %s91, %s92
    %p101 = scmp.eq.s32.totalorder %s18, 0
    %p102 = por %p100, %p101
    %p103 = scmp.ne.s32.totalorder %s91, %s92
    %p104 = scmp.eq.s32.totalorder %s19, 1
    %p105 = por %p103, %p104
    %p107 = scmp.ne.s32.totalorder %s92, %s106
    %p108 = scmp.eq.s32.totalorder %s19, 0
    %p109 = por %p107, %p108
    %s111 = sadd.s32 %s110, 1
    %p114 = scmp.eq.s32.totalorder %s13, 1
    %p115 = scmp.ne.s32.totalorder %s110, %s112
    %p116 = scmp.eq.s32.totalorder %s13, 0
    %p117 = por %p115, %p116
    %p118 = scmp.ne.s32.totalorder %s110, %s112
    %p119 = scmp.eq.s32.totalorder %s18, 1
    %p120 = por %p118, %p119
    %p121 = scmp.ne.s32.totalorder %s112, %s113
    %p122 = scmp.eq.s32.totalorder %s18, 0
    %p123 = por %p121, %p122
    %p124 = scmp.ne.s32.totalorder %s112, %s113
    %p125 = scmp.eq.s32.totalorder %s19, 1
    %p126 = por %p124, %p125
    %p128 = scmp.ne.s32.totalorder %s113, %s127
    %p129 = scmp.eq.s32.totalorder %s19, 0
    %p130 = por %p128, %p129
    %s132 = sadd.s32 %s131, 1
    %p135 = scmp.eq.s32.totalorder %s13, 1
    %p136 = scmp.ne.s32.totalorder %s131, %s133
    %p137 = scmp.eq.s32.totalorder %s13, 0
    %p138 = por %p136, %p137
    %p139 = scmp.ne.s32.totalorder %s131, %s133
    %p140 = scmp.eq.s32.totalorder %s18, 1
    %p141 = por %p139, %p140
    %p142 = scmp.ne.s32.totalorder %s133, %s134
    %p143 = scmp.eq.s32.totalorder %s18, 0
    %p144 = por %p142, %p143
    %p145 = scmp.ne.s32.totalorder %s133, %s134
    %p146 = scmp.eq.s32.totalorder %s19, 1
    %p147 = por %p145, %p146
    %p149 = scmp.ne.s32.totalorder %s134, %s148
    %p150 = scmp.eq.s32.totalorder %s19, 0
    %p151 = por %p149, %p150
    %s153 = sadd.s32 %s152, 1
    %p156 = scmp.eq.s32.totalorder %s13, 1
    %p157 = scmp.ne.s32.totalorder %s152, %s154
    %p158 = scmp.eq.s32.totalorder %s13, 0
    %p159 = por %p157, %p158
    %p160 = scmp.ne.s32.totalorder %s152, %s154
    %p161 = scmp.eq.s32.totalorder %s18, 1
    %p162 = por %p160, %p161
    %p163 = scmp.ne.s32.totalorder %s154, %s155
    %p164 = scmp.eq.s32.totalorder %s18, 0
    %p165 = por %p163, %p164
    %p166 = scmp.ne.s32.totalorder %s154, %s155
    %p167 = scmp.eq.s32.totalorder %s19, 1
    %p168 = por %p166, %p167
    %p170 = scmp.ne.s32.totalorder %s155, %s169
    %p171 = scmp.eq.s32.totalorder %s19, 0
    %p172 = por %p170, %p171
    %s173 = ssub.s32 %s13, %s20
    %p174 = scmp.eq.s32.totalorder %s173, 0
    %s176 = sadd.s32 %s175, 1
    %s177 = scalar_select %p174, %s175, %s176
    %p180 = pneg %p174
    %p181 = scmp.eq.s32.totalorder %s13, 1
    %p182 = por %p180, %p181
    %p183 = scmp.ne.s32.totalorder %s175, %s178
    %p184 = scmp.eq.s32.totalorder %s13, 0
    %p185 = por %p183, %p184
    %p186 = scmp.ne.s32.totalorder %s175, %s178
    %p187 = scmp.eq.s32.totalorder %s18, 1
    %p188 = por %p186, %p187
    %p189 = scmp.ne.s32.totalorder %s178, %s179
    %p190 = scmp.eq.s32.totalorder %s18, 0
    %p191 = por %p189, %p190
    %p192 = scmp.ne.s32.totalorder %s178, %s179
    %p193 = scmp.eq.s32.totalorder %s19, 1
    %p194 = por %p192, %p193
    %p196 = scmp.ne.s32.totalorder %s179, %s195
    %p197 = scmp.eq.s32.totalorder %s19, 0
    %p198 = por %p196, %p197
    %p199 = scmp.le.s32.totalorder 1, %s13
    %p200 = scmp.lt.s32.totalorder %s13, 3
    %p201 = pnand %p199, %p200
    %p202 = pneg %p201
    // Predicated region
    $region9: #{focalnet_block_fwd.7} parent=5 // pred_check
      _
    $region10: #{focalnet_block_fwd.7} parent=5 // pred_check_branch
      %204 = sbr.rel (%p201) target = $region12
    $region11: #{focalnet_block_fwd.7} parent=5 // pred_region
      %s205 = ssub.s32 %s13, 1
      // Predicated region
      $region13: #{focalnet_block_fwd.7} parent=11 // pred_check
        %p206 = pneg %p60
      $region14: #{focalnet_block_fwd.7} parent=11 // pred_check_branch
        %208 = sbr.rel (%p206) target = $region16
      $region15: #{focalnet_block_fwd.7} parent=11 // pred_region
        _
      $region16: #{focalnet_block_fwd.7} parent=11 // pred_fallthru
        _
      // Predicated region
      $region17: #{focalnet_block_fwd.7} parent=11 // pred_check
        %p209 = pneg %p81
      $region18: #{focalnet_block_fwd.7} parent=11 // pred_check_branch
        %211 = sbr.rel (%p209) target = $region20
      $region19: #{focalnet_block_fwd.7} parent=11 // pred_region
        _
      $region20: #{focalnet_block_fwd.7} parent=11 // pred_fallthru
        _
      // Predicated region
      $region21: #{focalnet_block_fwd.7} parent=11 // pred_check
        %p212 = pneg %p102
      $region22: #{focalnet_block_fwd.7} parent=11 // pred_check_branch
        %214 = sbr.rel (%p212) target = $region24
      $region23: #{focalnet_block_fwd.7} parent=11 // pred_region
        _
      $region24: #{focalnet_block_fwd.7} parent=11 // pred_fallthru
        _
      // Predicated region
      $region25: #{focalnet_block_fwd.7} parent=11 // pred_check
        %p215 = pneg %p123
      $region26: #{focalnet_block_fwd.7} parent=11 // pred_check_branch
        %217 = sbr.rel (%p215) target = $region28
      $region27: #{focalnet_block_fwd.7} parent=11 // pred_region
        _
      $region28: #{focalnet_block_fwd.7} parent=11 // pred_fallthru
        _
      // Predicated region
      $region29: #{focalnet_block_fwd.7} parent=11 // pred_check
        %p218 = pneg %p144
      $region30: #{focalnet_block_fwd.7} parent=11 // pred_check_branch
        %220 = sbr.rel (%p218) target = $region32
      $region31: #{focalnet_block_fwd.7} parent=11 // pred_region
        _
      $region32: #{focalnet_block_fwd.7} parent=11 // pred_fallthru
        _
      // Predicated region
      $region33: #{focalnet_block_fwd.7} parent=11 // pred_check
        %p221 = pneg %p165
      $region34: #{focalnet_block_fwd.7} parent=11 // pred_check_branch
        %223 = sbr.rel (%p221) target = $region36
      $region35: #{focalnet_block_fwd.7} parent=11 // pred_region
        _
      $region36: #{focalnet_block_fwd.7} parent=11 // pred_fallthru
        _
    $region12: #{focalnet_block_fwd.7} parent=5 // pred_fallthru
      _
    %p224 = scmp.lt.s32.totalorder %s13, 2
    // Predicated region
    $region37: #{focalnet_block_fwd.7} parent=5 // pred_check
      %p225 = pneg %p224
    $region38: #{focalnet_block_fwd.7} parent=5 // pred_check_branch
      %227 = sbr.rel (%p225) target = $region40
    $region39: #{focalnet_block_fwd.7} parent=5 // pred_region
      // Predicated region
      $region41: #{focalnet_block_fwd.7} parent=39 // pred_check
        %p228 = pneg %p33
      $region42: #{focalnet_block_fwd.7} parent=39 // pred_check_branch
        %230 = sbr.rel (%p228) target = $region44
      $region43: #{focalnet_block_fwd.7} parent=39 // pred_region
        %s231 = smul.u32 32, %s13
        %p232 = scmp.lt.s32.totalorder %s231, 63
        %s233 = scalar_select %p232, %s231, 63
        %s234 = smul.addr %s233, 8
        %s235 = scalar_lea.vmem %s0, %s234
        %s236 = smul.u32 32, %s13
      $region44: #{focalnet_block_fwd.7} parent=39 // pred_fallthru
        _
    $region40: #{focalnet_block_fwd.7} parent=5 // pred_fallthru
      _
    %p237 = scmp.le.s32.totalorder 1, %s13
    %p238 = scmp.lt.s32.totalorder %s13, 3
    %p239 = pnand %p237, %p238
    %p240 = pneg %p239
    // Predicated region
    $region45: #{focalnet_block_fwd.7} parent=5 // pred_check
      _
    $region46: #{focalnet_block_fwd.7} parent=5 // pred_check_branch
      %242 = sbr.rel (%p239) target = $region48
    $region47: #{focalnet_block_fwd.7} parent=5 // pred_region
      %s243 = ssub.s32 %s13, 1
      %s244 = smul.u32 32, %s18
      %p245 = scmp.lt.s32.totalorder %s244, 63
      %s246 = scalar_select %p245, %s244, 63
      %s247 = smul.addr %s246, 8
      %s248 = scalar_lea.vmem %s0, %s247
      %p249 = pneg %p39
      %p250 = pneg %p36
      %p251 = pneg %p60
      %p252 = pneg %p57
      %p253 = pneg %p81
      %p254 = pneg %p78
      %p255 = pneg %p102
      %p256 = pneg %p99
      %p257 = pneg %p123
      %p258 = pneg %p120
      %p259 = pneg %p144
      %p260 = pneg %p141
      %p261 = pneg %p165
      %p262 = pneg %p162
      %p263 = pneg %p191
      %p264 = pneg %p188
      %s265 = smul.u32 32, %s18
      %p266 = scmp.lt.s32.totalorder %s265, 63
      %s267 = scalar_select %p266, %s265, 63
      %s268 = smul.addr %s267, 8
      %s269 = scalar_lea.vmem %s7, %s268
      %s270 = smul.u32 32, %s18
      %p271 = scmp.lt.s32.totalorder %s270, 63
      %s272 = scalar_select %p271, %s270, 63
      %s273 = smul.addr %s272, 8
      %s274 = scalar_lea.vmem %s0, %s273
      %s275 = smul.u32 32, %s18
      %s276 = smul.u32 32, %s18
      %p277 = scmp.lt.s32.totalorder %s276, 63
      %s278 = scalar_select %p277, %s276, 63
      %s279 = smul.addr %s278, 8
      %s280 = scalar_lea.vmem %s7, %s279
      %s281 = smul.u32 32, %s18
      %v283 = vld [vmem:[%s274] sm:$0xff]
      %v284 = vld [vmem:[%s274 + $0x8] sm:$0xff]
      %v285 = vld [vmem:[%s274 + $0x10] sm:$0xff]
      %v286 = vld [vmem:[%s274 + $0x18] sm:$0xff]
      %v287 = vld [vmem:[%s274 + $0x20] sm:$0xff]
      %v288 = vld [vmem:[%s274 + $0x28] sm:$0xff]
      %v289 = vld [vmem:[%s274 + $0x30] sm:$0xff]
      %v290 = vld [vmem:[%s274 + $0x38] sm:$0xff]
      %v291 = vld [vmem:[%s274 + $0x40] sm:$0xff]
      %v292 = vld [vmem:[%s274 + $0x48] sm:$0xff]
      %v293 = vld [vmem:[%s274 + $0x50] sm:$0xff]
      %v294 = vld [vmem:[%s274 + $0x58] sm:$0xff]
      %v295 = vld [vmem:[%s274 + $0x60] sm:$0xff]
      %v296 = vld [vmem:[%s274 + $0x68] sm:$0xff]
      %v297 = vld [vmem:[%s274 + $0x70] sm:$0xff]
      %v298 = vld [vmem:[%s274 + $0x78] sm:$0xff]
      %v299 = vld [vmem:[%s274 + $0x80] sm:$0xff]
      %v300 = vld [vmem:[%s274 + $0x88] sm:$0xff]
      %v301 = vld [vmem:[%s274 + $0x90] sm:$0xff]
      %v302 = vld [vmem:[%s274 + $0x98] sm:$0xff]
      %v303 = vld [vmem:[%s274 + $0xa0] sm:$0xff]
      %v304 = vld [vmem:[%s274 + $0xa8] sm:$0xff]
      %v305 = vld [vmem:[%s274 + $0xb0] sm:$0xff]
      %v306 = vld [vmem:[%s274 + $0xb8] sm:$0xff]
      %v307 = vld [vmem:[%s274 + $0xc0] sm:$0xff]
      %v308 = vld [vmem:[%s274 + $0xc8] sm:$0xff]
      %v309 = vld [vmem:[%s274 + $0xd0] sm:$0xff]
      %v310 = vld [vmem:[%s274 + $0xd8] sm:$0xff]
      %v311 = vld [vmem:[%s274 + $0xe0] sm:$0xff]
      %v312 = vld [vmem:[%s274 + $0xe8] sm:$0xff]
      %v313 = vld [vmem:[%s274 + $0xf0] sm:$0xff]
      %v314 = vld [vmem:[%s274 + $0xf8] sm:$0xff]
      %vm315 = vcmask 261120
      %v316 = vsel %vm315, %v283, 0.0
      %317 = vadd.xlane.f32.xlu0 %v316
      %v318 = vpop.xlane.xlu0 %317
      %v319 = vsel %vm315, %v284, 0.0
      %320 = vadd.xlane.f32.xlu0 %v319
      %v321 = vpop.xlane.xlu0 %320
      %v322 = vsel %vm315, %v285, 0.0
      %323 = vadd.xlane.f32.xlu0 %v322
      %v324 = vpop.xlane.xlu0 %323
      %v325 = vsel %vm315, %v286, 0.0
      %326 = vadd.xlane.f32.xlu0 %v325
      %v327 = vpop.xlane.xlu0 %326
      %v328 = vsel %vm315, %v287, 0.0
      %329 = vadd.xlane.f32.xlu0 %v328
      %v330 = vpop.xlane.xlu0 %329
      %v331 = vsel %vm315, %v288, 0.0
      %332 = vadd.xlane.f32.xlu0 %v331
      %v333 = vpop.xlane.xlu0 %332
      %v334 = vsel %vm315, %v289, 0.0
      %335 = vadd.xlane.f32.xlu0 %v334
      %v336 = vpop.xlane.xlu0 %335
      %v337 = vsel %vm315, %v290, 0.0
      %338 = vadd.xlane.f32.xlu0 %v337
      %v339 = vpop.xlane.xlu0 %338
      %v340 = vsel %vm315, %v291, 0.0
      %341 = vadd.xlane.f32.xlu0 %v340
      %v342 = vpop.xlane.xlu0 %341
      %v343 = vsel %vm315, %v292, 0.0
      %344 = vadd.xlane.f32.xlu0 %v343
      %v345 = vpop.xlane.xlu0 %344
      %v346 = vsel %vm315, %v293, 0.0
      %347 = vadd.xlane.f32.xlu0 %v346
      %v348 = vpop.xlane.xlu0 %347
      %v349 = vsel %vm315, %v294, 0.0
      %350 = vadd.xlane.f32.xlu0 %v349
      %v351 = vpop.xlane.xlu0 %350
      %v352 = vsel %vm315, %v295, 0.0
      %353 = vadd.xlane.f32.xlu0 %v352
      %v354 = vpop.xlane.xlu0 %353
      %v355 = vsel %vm315, %v296, 0.0
      %356 = vadd.xlane.f32.xlu0 %v355
      %v357 = vpop.xlane.xlu0 %356
      %v358 = vsel %vm315, %v297, 0.0
      %359 = vadd.xlane.f32.xlu0 %v358
      %v360 = vpop.xlane.xlu0 %359
      %v361 = vsel %vm315, %v298, 0.0
      %362 = vadd.xlane.f32.xlu0 %v361
      %v363 = vpop.xlane.xlu0 %362
      %v364 = vsel %vm315, %v299, 0.0
      %365 = vadd.xlane.f32.xlu0 %v364
      %v366 = vpop.xlane.xlu0 %365
      %v367 = vsel %vm315, %v300, 0.0
      %368 = vadd.xlane.f32.xlu0 %v367
      %v369 = vpop.xlane.xlu0 %368
      %v370 = vsel %vm315, %v301, 0.0
      %371 = vadd.xlane.f32.xlu0 %v370
      %v372 = vpop.xlane.xlu0 %371
      %v373 = vsel %vm315, %v302, 0.0
      %374 = vadd.xlane.f32.xlu0 %v373
      %v375 = vpop.xlane.xlu0 %374
      %v376 = vsel %vm315, %v303, 0.0
      %377 = vadd.xlane.f32.xlu0 %v376
      %v378 = vpop.xlane.xlu0 %377
      %v379 = vsel %vm315, %v304, 0.0
      %380 = vadd.xlane.f32.xlu0 %v379
      %v381 = vpop.xlane.xlu0 %380
      %v382 = vsel %vm315, %v305, 0.0
      %383 = vadd.xlane.f32.xlu0 %v382
      %v384 = vpop.xlane.xlu0 %383
      %v385 = vsel %vm315, %v306, 0.0
      %386 = vadd.xlane.f32.xlu0 %v385
      %v387 = vpop.xlane.xlu0 %386
      %v388 = vsel %vm315, %v307, 0.0
      %389 = vadd.xlane.f32.xlu0 %v388
      %v390 = vpop.xlane.xlu0 %389
      %v391 = vsel %vm315, %v308, 0.0
      %392 = vadd.xlane.f32.xlu0 %v391
      %v393 = vpop.xlane.xlu0 %392
      %v394 = vsel %vm315, %v309, 0.0
      %395 = vadd.xlane.f32.xlu0 %v394
      %v396 = vpop.xlane.xlu0 %395
      %v397 = vsel %vm315, %v310, 0.0
      %398 = vadd.xlane.f32.xlu0 %v397
      %v399 = vpop.xlane.xlu0 %398
      %v400 = vsel %vm315, %v311, 0.0
      %401 = vadd.xlane.f32.xlu0 %v400
      %v402 = vpop.xlane.xlu0 %401
      %v403 = vsel %vm315, %v312, 0.0
      %404 = vadd.xlane.f32.xlu0 %v403
      %v405 = vpop.xlane.xlu0 %404
      %v406 = vsel %vm315, %v313, 0.0
      %407 = vadd.xlane.f32.xlu0 %v406
      %v408 = vpop.xlane.xlu0 %407
      %v409 = vsel %vm315, %v314, 0.0
      %410 = vadd.xlane.f32.xlu0 %v409
      %v411 = vpop.xlane.xlu0 %410
      %v412 = vrcp.pop 32.0
      %v413 = vmul.f32 %v318, %v412
      %v414 = vmul.f32 %v321, %v412
      %v415 = vmul.f32 %v324, %v412
      %v416 = vmul.f32 %v327, %v412
      %v417 = vmul.f32 %v330, %v412
      %v418 = vmul.f32 %v333, %v412
      %v419 = vmul.f32 %v336, %v412
      %v420 = vmul.f32 %v339, %v412
      %v421 = vmul.f32 %v342, %v412
      %v422 = vmul.f32 %v345, %v412
      %v423 = vmul.f32 %v348, %v412
      %v424 = vmul.f32 %v351, %v412
      %v425 = vmul.f32 %v354, %v412
      %v426 = vmul.f32 %v357, %v412
      %v427 = vmul.f32 %v360, %v412
      %v428 = vmul.f32 %v363, %v412
      %v429 = vmul.f32 %v366, %v412
      %v430 = vmul.f32 %v369, %v412
      %v431 = vmul.f32 %v372, %v412
      %v432 = vmul.f32 %v375, %v412
      %v433 = vmul.f32 %v378, %v412
      %v434 = vmul.f32 %v381, %v412
      %v435 = vmul.f32 %v384, %v412
      %v436 = vmul.f32 %v387, %v412
      %v437 = vmul.f32 %v390, %v412
      %v438 = vmul.f32 %v393, %v412
      %v439 = vmul.f32 %v396, %v412
      %v440 = vmul.f32 %v399, %v412
      %v441 = vmul.f32 %v402, %v412
      %v442 = vmul.f32 %v405, %v412
      %v443 = vmul.f32 %v408, %v412
      %v444 = vmul.f32 %v411, %v412
      %v445 = vsub.f32 %v283, %v413
      %v446 = vsub.f32 %v284, %v414
      %v447 = vsub.f32 %v285, %v415
      %v448 = vsub.f32 %v286, %v416
      %v449 = vsub.f32 %v287, %v417
      %v450 = vsub.f32 %v288, %v418
      %v451 = vsub.f32 %v289, %v419
      %v452 = vsub.f32 %v290, %v420
      %v453 = vsub.f32 %v291, %v421
      %v454 = vsub.f32 %v292, %v422
      %v455 = vsub.f32 %v293, %v423
      %v456 = vsub.f32 %v294, %v424
      %v457 = vsub.f32 %v295, %v425
      %v458 = vsub.f32 %v296, %v426
      %v459 = vsub.f32 %v297, %v427
      %v460 = vsub.f32 %v298, %v428
      %v461 = vsub.f32 %v299, %v429
      %v462 = vsub.f32 %v300, %v430
      %v463 = vsub.f32 %v301, %v431
      %v464 = vsub.f32 %v302, %v432
      %v465 = vsub.f32 %v303, %v433
      %v466 = vsub.f32 %v304, %v434
      %v467 = vsub.f32 %v305, %v435
      %v468 = vsub.f32 %v306, %v436
      %v469 = vsub.f32 %v307, %v437
      %v470 = vsub.f32 %v308, %v438
      %v471 = vsub.f32 %v309, %v439
      %v472 = vsub.f32 %v310, %v440
      %v473 = vsub.f32 %v311, %v441
      %v474 = vsub.f32 %v312, %v442
      %v475 = vsub.f32 %v313, %v443
      %v476 = vsub.f32 %v314, %v444
      %v477 = vmul.f32 %v445, %v445
      %v478 = vmul.f32 %v446, %v446
      %v479 = vmul.f32 %v447, %v447
      %v480 = vmul.f32 %v448, %v448
      %v481 = vmul.f32 %v449, %v449
      %v482 = vmul.f32 %v450, %v450
      %v483 = vmul.f32 %v451, %v451
      %v484 = vmul.f32 %v452, %v452
      %v485 = vmul.f32 %v453, %v453
      %v486 = vmul.f32 %v454, %v454
      %v487 = vmul.f32 %v455, %v455
      %v488 = vmul.f32 %v456, %v456
      %v489 = vmul.f32 %v457, %v457
      %v490 = vmul.f32 %v458, %v458
      %v491 = vmul.f32 %v459, %v459
      %v492 = vmul.f32 %v460, %v460
      %v493 = vmul.f32 %v461, %v461
      %v494 = vmul.f32 %v462, %v462
      %v495 = vmul.f32 %v463, %v463
      %v496 = vmul.f32 %v464, %v464
      %v497 = vmul.f32 %v465, %v465
      %v498 = vmul.f32 %v466, %v466
      %v499 = vmul.f32 %v467, %v467
      %v500 = vmul.f32 %v468, %v468
      %v501 = vmul.f32 %v469, %v469
      %v502 = vmul.f32 %v470, %v470
      %v503 = vmul.f32 %v471, %v471
      %v504 = vmul.f32 %v472, %v472
      %v505 = vmul.f32 %v473, %v473
      %v506 = vmul.f32 %v474, %v474
      %v507 = vmul.f32 %v475, %v475
      %v508 = vmul.f32 %v476, %v476
      %v509 = vsel %vm315, %v477, 0.0
      %510 = vadd.xlane.f32.xlu0 %v509
      %v511 = vpop.xlane.xlu0 %510
      %v512 = vsel %vm315, %v478, 0.0
      %513 = vadd.xlane.f32.xlu0 %v512
      %v514 = vpop.xlane.xlu0 %513
      %v515 = vsel %vm315, %v479, 0.0
      %516 = vadd.xlane.f32.xlu0 %v515
      %v517 = vpop.xlane.xlu0 %516
      %v518 = vsel %vm315, %v480, 0.0
      %519 = vadd.xlane.f32.xlu0 %v518
      %v520 = vpop.xlane.xlu0 %519
      %v521 = vsel %vm315, %v481, 0.0
      %522 = vadd.xlane.f32.xlu0 %v521
      %v523 = vpop.xlane.xlu0 %522
      %v524 = vsel %vm315, %v482, 0.0
      %525 = vadd.xlane.f32.xlu0 %v524
      %v526 = vpop.xlane.xlu0 %525
      %v527 = vsel %vm315, %v483, 0.0
      %528 = vadd.xlane.f32.xlu0 %v527
      %v529 = vpop.xlane.xlu0 %528
      %v530 = vsel %vm315, %v484, 0.0
      %531 = vadd.xlane.f32.xlu0 %v530
      %v532 = vpop.xlane.xlu0 %531
      %v533 = vsel %vm315, %v485, 0.0
      %534 = vadd.xlane.f32.xlu0 %v533
      %v535 = vpop.xlane.xlu0 %534
      %v536 = vsel %vm315, %v486, 0.0
      %537 = vadd.xlane.f32.xlu0 %v536
      %v538 = vpop.xlane.xlu0 %537
      %v539 = vsel %vm315, %v487, 0.0
      %540 = vadd.xlane.f32.xlu0 %v539
      %v541 = vpop.xlane.xlu0 %540
      %v542 = vsel %vm315, %v488, 0.0
      %543 = vadd.xlane.f32.xlu0 %v542
      %v544 = vpop.xlane.xlu0 %543
      %v545 = vsel %vm315, %v489, 0.0
      %546 = vadd.xlane.f32.xlu0 %v545
      %v547 = vpop.xlane.xlu0 %546
      %v548 = vsel %vm315, %v490, 0.0
      %549 = vadd.xlane.f32.xlu0 %v548
      %v550 = vpop.xlane.xlu0 %549
      %v551 = vsel %vm315, %v491, 0.0
      %552 = vadd.xlane.f32.xlu0 %v551
      %v553 = vpop.xlane.xlu0 %552
      %v554 = vsel %vm315, %v492, 0.0
      %555 = vadd.xlane.f32.xlu0 %v554
      %v556 = vpop.xlane.xlu0 %555
      %v557 = vsel %vm315, %v493, 0.0
      %558 = vadd.xlane.f32.xlu0 %v557
      %v559 = vpop.xlane.xlu0 %558
      %v560 = vsel %vm315, %v494, 0.0
      %561 = vadd.xlane.f32.xlu0 %v560
      %v562 = vpop.xlane.xlu0 %561
      %v563 = vsel %vm315, %v495, 0.0
      %564 = vadd.xlane.f32.xlu0 %v563
      %v565 = vpop.xlane.xlu0 %564
      %v566 = vsel %vm315, %v496, 0.0
      %567 = vadd.xlane.f32.xlu0 %v566
      %v568 = vpop.xlane.xlu0 %567
      %v569 = vsel %vm315, %v497, 0.0
      %570 = vadd.xlane.f32.xlu0 %v569
      %v571 = vpop.xlane.xlu0 %570
      %v572 = vsel %vm315, %v498, 0.0
      %573 = vadd.xlane.f32.xlu0 %v572
      %v574 = vpop.xlane.xlu0 %573
      %v575 = vsel %vm315, %v499, 0.0
      %576 = vadd.xlane.f32.xlu0 %v575
      %v577 = vpop.xlane.xlu0 %576
      %v578 = vsel %vm315, %v500, 0.0
      %579 = vadd.xlane.f32.xlu0 %v578
      %v580 = vpop.xlane.xlu0 %579
      %v581 = vsel %vm315, %v501, 0.0
      %582 = vadd.xlane.f32.xlu0 %v581
      %v583 = vpop.xlane.xlu0 %582
      %v584 = vsel %vm315, %v502, 0.0
      %585 = vadd.xlane.f32.xlu0 %v584
      %v586 = vpop.xlane.xlu0 %585
      %v587 = vsel %vm315, %v503, 0.0
      %588 = vadd.xlane.f32.xlu0 %v587
      %v589 = vpop.xlane.xlu0 %588
      %v590 = vsel %vm315, %v504, 0.0
      %591 = vadd.xlane.f32.xlu0 %v590
      %v592 = vpop.xlane.xlu0 %591
      %v593 = vsel %vm315, %v505, 0.0
      %594 = vadd.xlane.f32.xlu0 %v593
      %v595 = vpop.xlane.xlu0 %594
      %v596 = vsel %vm315, %v506, 0.0
      %597 = vadd.xlane.f32.xlu0 %v596
      %v598 = vpop.xlane.xlu0 %597
      %v599 = vsel %vm315, %v507, 0.0
      %600 = vadd.xlane.f32.xlu0 %v599
      %v601 = vpop.xlane.xlu0 %600
      %v602 = vsel %vm315, %v508, 0.0
      %603 = vadd.xlane.f32.xlu0 %v602
      %v604 = vpop.xlane.xlu0 %603
      %v605 = vmul.f32 %v511, %v412
      %v606 = vmul.f32 %v514, %v412
      %v607 = vmul.f32 %v517, %v412
      %v608 = vmul.f32 %v520, %v412
      %v609 = vmul.f32 %v523, %v412
      %v610 = vmul.f32 %v526, %v412
      %v611 = vmul.f32 %v529, %v412
      %v612 = vmul.f32 %v532, %v412
      %v613 = vmul.f32 %v535, %v412
      %v614 = vmul.f32 %v538, %v412
      %v615 = vmul.f32 %v541, %v412
      %v616 = vmul.f32 %v544, %v412
      %v617 = vmul.f32 %v547, %v412
      %v618 = vmul.f32 %v550, %v412
      %v619 = vmul.f32 %v553, %v412
      %v620 = vmul.f32 %v556, %v412
      %v621 = vmul.f32 %v559, %v412
      %v622 = vmul.f32 %v562, %v412
      %v623 = vmul.f32 %v565, %v412
      %v624 = vmul.f32 %v568, %v412
      %v625 = vmul.f32 %v571, %v412
      %v626 = vmul.f32 %v574, %v412
      %v627 = vmul.f32 %v577, %v412
      %v628 = vmul.f32 %v580, %v412
      %v629 = vmul.f32 %v583, %v412
      %v630 = vmul.f32 %v586, %v412
      %v631 = vmul.f32 %v589, %v412
      %v632 = vmul.f32 %v592, %v412
      %v633 = vmul.f32 %v595, %v412
      %v634 = vmul.f32 %v598, %v412
      %v635 = vmul.f32 %v601, %v412
      %v636 = vmul.f32 %v604, %v412
      %v637 = vadd.f32 %v605, 1e-05
      %v638 = vadd.f32 %v606, 1e-05
      %v639 = vadd.f32 %v607, 1e-05
      %v640 = vadd.f32 %v608, 1e-05
      %v641 = vadd.f32 %v609, 1e-05
      %v642 = vadd.f32 %v610, 1e-05
      %v643 = vadd.f32 %v611, 1e-05
      %v644 = vadd.f32 %v612, 1e-05
      %v645 = vadd.f32 %v613, 1e-05
      %v646 = vadd.f32 %v614, 1e-05
      %v647 = vadd.f32 %v615, 1e-05
      %v648 = vadd.f32 %v616, 1e-05
      %v649 = vadd.f32 %v617, 1e-05
      %v650 = vadd.f32 %v618, 1e-05
      %v651 = vadd.f32 %v619, 1e-05
      %v652 = vadd.f32 %v620, 1e-05
      %v653 = vadd.f32 %v621, 1e-05
      %v654 = vadd.f32 %v622, 1e-05
      %v655 = vadd.f32 %v623, 1e-05
      %v656 = vadd.f32 %v624, 1e-05
      %v657 = vadd.f32 %v625, 1e-05
      %v658 = vadd.f32 %v626, 1e-05
      %v659 = vadd.f32 %v627, 1e-05
      %v660 = vadd.f32 %v628, 1e-05
      %v661 = vadd.f32 %v629, 1e-05
      %v662 = vadd.f32 %v630, 1e-05
      %v663 = vadd.f32 %v631, 1e-05
      %v664 = vadd.f32 %v632, 1e-05
      %v665 = vadd.f32 %v633, 1e-05
      %v666 = vadd.f32 %v634, 1e-05
      %v667 = vadd.f32 %v635, 1e-05
      %v668 = vadd.f32 %v636, 1e-05
      %v669 = vrsqrt.pop %v637
      %v670 = vrsqrt.pop %v638
      %v671 = vrsqrt.pop %v639
      %v672 = vrsqrt.pop %v640
      %v673 = vrsqrt.pop %v641
      %v674 = vrsqrt.pop %v642
      %v675 = vrsqrt.pop %v643
      %v676 = vrsqrt.pop %v644
      %v677 = vrsqrt.pop %v645
      %v678 = vrsqrt.pop %v646
      %v679 = vrsqrt.pop %v647
      %v680 = vrsqrt.pop %v648
      %v681 = vrsqrt.pop %v649
      %v682 = vrsqrt.pop %v650
      %v683 = vrsqrt.pop %v651
      %v684 = vrsqrt.pop %v652
      %v685 = vrsqrt.pop %v653
      %v686 = vrsqrt.pop %v654
      %v687 = vrsqrt.pop %v655
      %v688 = vrsqrt.pop %v656
      %v689 = vrsqrt.pop %v657
      %v690 = vrsqrt.pop %v658
      %v691 = vrsqrt.pop %v659
      %v692 = vrsqrt.pop %v660
      %v693 = vrsqrt.pop %v661
      %v694 = vrsqrt.pop %v662
      %v695 = vrsqrt.pop %v663
      %v696 = vrsqrt.pop %v664
      %v697 = vrsqrt.pop %v665
      %v698 = vrsqrt.pop %v666
      %v699 = vrsqrt.pop %v667
      %v700 = vrsqrt.pop %v668
      %v701 = vmul.f32 %v445, %v669
      %v702 = vmul.f32 %v446, %v670
      %v703 = vmul.f32 %v447, %v671
      %v704 = vmul.f32 %v448, %v672
      %v705 = vmul.f32 %v449, %v673
      %v706 = vmul.f32 %v450, %v674
      %v707 = vmul.f32 %v451, %v675
      %v708 = vmul.f32 %v452, %v676
      %v709 = vmul.f32 %v453, %v677
      %v710 = vmul.f32 %v454, %v678
      %v711 = vmul.f32 %v455, %v679
      %v712 = vmul.f32 %v456, %v680
      %v713 = vmul.f32 %v457, %v681
      %v714 = vmul.f32 %v458, %v682
      %v715 = vmul.f32 %v459, %v683
      %v716 = vmul.f32 %v460, %v684
      %v717 = vmul.f32 %v461, %v685
      %v718 = vmul.f32 %v462, %v686
      %v719 = vmul.f32 %v463, %v687
      %v720 = vmul.f32 %v464, %v688
      %v721 = vmul.f32 %v465, %v689
      %v722 = vmul.f32 %v466, %v690
      %v723 = vmul.f32 %v467, %v691
      %v724 = vmul.f32 %v468, %v692
      %v725 = vmul.f32 %v469, %v693
      %v726 = vmul.f32 %v470, %v694
      %v727 = vmul.f32 %v471, %v695
      %v728 = vmul.f32 %v472, %v696
      %v729 = vmul.f32 %v473, %v697
      %v730 = vmul.f32 %v474, %v698
      %v731 = vmul.f32 %v475, %v699
      %v732 = vmul.f32 %v476, %v700
      %v733 = vld [vmem:[%s1] sm:$0x1]
      %v735 = vlaneseq
      %v736 = vshrl.u32 %v735, 7
      %v737 = vsub.s32 0, %v736
      %v738 = vrot.slane %v733, %v737
      %v740 = vmul.f32 %v701, %v738
      %v741 = vmul.f32 %v702, %v738
      %v742 = vmul.f32 %v703, %v738
      %v743 = vmul.f32 %v704, %v738
      %v744 = vmul.f32 %v705, %v738
      %v745 = vmul.f32 %v706, %v738
      %v746 = vmul.f32 %v707, %v738
      %v747 = vmul.f32 %v708, %v738
      %v748 = vmul.f32 %v709, %v738
      %v749 = vmul.f32 %v710, %v738
      %v750 = vmul.f32 %v711, %v738
      %v751 = vmul.f32 %v712, %v738
      %v752 = vmul.f32 %v713, %v738
      %v753 = vmul.f32 %v714, %v738
      %v754 = vmul.f32 %v715, %v738
      %v755 = vmul.f32 %v716, %v738
      %v756 = vmul.f32 %v717, %v738
      %v757 = vmul.f32 %v718, %v738
      %v758 = vmul.f32 %v719, %v738
      %v759 = vmul.f32 %v720, %v738
      %v760 = vmul.f32 %v721, %v738
      %v761 = vmul.f32 %v722, %v738
      %v762 = vmul.f32 %v723, %v738
      %v763 = vmul.f32 %v724, %v738
      %v764 = vmul.f32 %v725, %v738
      %v765 = vmul.f32 %v726, %v738
      %v766 = vmul.f32 %v727, %v738
      %v767 = vmul.f32 %v728, %v738
      %v768 = vmul.f32 %v729, %v738
      %v769 = vmul.f32 %v730, %v738
      %v770 = vmul.f32 %v731, %v738
      %v771 = vmul.f32 %v732, %v738
      %v772 = vld [vmem:[%s2] sm:$0x1]
      %v774 = vlaneseq
      %v775 = vshrl.u32 %v774, 7
      %v776 = vsub.s32 0, %v775
      %v777 = vrot.slane %v772, %v776
      %v779 = vadd.f32 %v740, %v777
      %v780 = vadd.f32 %v741, %v777
      %v781 = vadd.f32 %v742, %v777
      %v782 = vadd.f32 %v743, %v777
      %v783 = vadd.f32 %v744, %v777
      %v784 = vadd.f32 %v745, %v777
      %v785 = vadd.f32 %v746, %v777
      %v786 = vadd.f32 %v747, %v777
      %v787 = vadd.f32 %v748, %v777
      %v788 = vadd.f32 %v749, %v777
      %v789 = vadd.f32 %v750, %v777
      %v790 = vadd.f32 %v751, %v777
      %v791 = vadd.f32 %v752, %v777
      %v792 = vadd.f32 %v753, %v777
      %v793 = vadd.f32 %v754, %v777
      %v794 = vadd.f32 %v755, %v777
      %v795 = vadd.f32 %v756, %v777
      %v796 = vadd.f32 %v757, %v777
      %v797 = vadd.f32 %v758, %v777
      %v798 = vadd.f32 %v759, %v777
      %v799 = vadd.f32 %v760, %v777
      %v800 = vadd.f32 %v761, %v777
      %v801 = vadd.f32 %v762, %v777
      %v802 = vadd.f32 %v763, %v777
      %v803 = vadd.f32 %v764, %v777
      %v804 = vadd.f32 %v765, %v777
      %v805 = vadd.f32 %v766, %v777
      %v806 = vadd.f32 %v767, %v777
      %v807 = vadd.f32 %v768, %v777
      %v808 = vadd.f32 %v769, %v777
      %v809 = vadd.f32 %v770, %v777
      %v810 = vadd.f32 %v771, %v777
      %v811 = vpack.c.bf16 %v780, %v779
      %v812 = vpack.c.bf16 %v782, %v781
      %v813 = vpack.c.bf16 %v784, %v783
      %v814 = vpack.c.bf16 %v786, %v785
      %v815 = vpack.c.bf16 %v788, %v787
      %v816 = vpack.c.bf16 %v790, %v789
      %v817 = vpack.c.bf16 %v792, %v791
      %v818 = vpack.c.bf16 %v794, %v793
      %v819 = vpack.c.bf16 %v796, %v795
      %v820 = vpack.c.bf16 %v798, %v797
      %v821 = vpack.c.bf16 %v800, %v799
      %v822 = vpack.c.bf16 %v802, %v801
      %v823 = vpack.c.bf16 %v804, %v803
      %v824 = vpack.c.bf16 %v806, %v805
      %v825 = vpack.c.bf16 %v808, %v807
      %v826 = vpack.c.bf16 %v810, %v809
      %v827 = vld [vmem:[%s3] sm:$0xf]
      %v828 = vld [vmem:[%s3 + $0x4] sm:$0xf]
      %v829 = vld [vmem:[%s3 + $0x8] sm:$0xf]
      %v830 = vld [vmem:[%s3 + $0xc] sm:$0xf]
      %v831 = vld [vmem:[%s4] sm:$0x1]
      %v833 = vlaneseq
      %v834 = vshrl.u32 %v833, 7
      %v835 = vsub.s32 0, %v834
      %v836 = vrot.slane %v831, %v835
      %v842 = vunpack.c.l.b16 %v827
      %v843 = vunpack.c.l.b16 %v828
      %v844 = vunpack.c.l.b16 %v829
      %v845 = vunpack.c.l.b16 %v830
      %v846 = vpack.c.b16 %v843, %v842
      %v847 = vpack.c.b16 %v845, %v844
      %v851 = vsel %vm315, %v811, 0
      %v854 = vsel %vm315, %v812, 0
      %v857 = vsel %vm315, %v813, 0
      %v860 = vsel %vm315, %v814, 0
      %v863 = vsel %vm315, %v815, 0
      %v866 = vsel %vm315, %v816, 0
      %v869 = vsel %vm315, %v817, 0
      %v872 = vsel %vm315, %v818, 0
      %v875 = vsel %vm315, %v819, 0
      %v878 = vsel %vm315, %v820, 0
      %v881 = vsel %vm315, %v821, 0
      %v884 = vsel %vm315, %v822, 0
      %v887 = vsel %vm315, %v823, 0
      %v890 = vsel %vm315, %v824, 0
      %v893 = vsel %vm315, %v825, 0
      %v896 = vsel %vm315, %v826, 0
      %898 = vmatprep.subr.bf16.mxu0 0
      %899 = vmatpush1.bf16.msra.mxu0 %v846
      %900 = vmatprep.subr.bf16.mxu0 0
      %901 = vmatpush1.bf16.msra.mxu0 %v847
      %902 = vmatprep.subr.bf16.mxu0 0
      %903 = vmatpush1.bf16.msra.mxu0 0
      %904 = vmatprep.subr.bf16.mxu0 0
      %905 = vmatpush1.bf16.msra.mxu0 0
      %906 = vmatprep.subr.bf16.mxu0 0
      %907 = vmatpush1.bf16.msra.mxu0 0
      %908 = vmatprep.subr.bf16.mxu0 0
      %909 = vmatpush1.bf16.msra.mxu0 0
      %910 = vmatprep.subr.bf16.mxu0 0
      %911 = vmatpush1.bf16.msra.mxu0 0
      %912 = vmatprep.subr.bf16.mxu0 0
      %913 = vmatpush1.bf16.msra.mxu0 0
      %914 = vmatprep.subr.bf16.mxu0 0
      %915 = vmatpush1.bf16.msra.mxu0 0
      %916 = vmatprep.subr.bf16.mxu0 0
      %917 = vmatpush1.bf16.msra.mxu0 0
      %918 = vmatprep.subr.bf16.mxu0 0
      %919 = vmatpush1.bf16.msra.mxu0 0
      %920 = vmatprep.subr.bf16.mxu0 0
      %921 = vmatpush1.bf16.msra.mxu0 0
      %922 = vmatprep.subr.bf16.mxu0 0
      %923 = vmatpush1.bf16.msra.mxu0 0
      %924 = vmatprep.subr.bf16.mxu0 0
      %925 = vmatpush1.bf16.msra.mxu0 0
      %926 = vmatprep.subr.bf16.mxu0 0
      %927 = vmatpush1.bf16.msra.mxu0 0
      %928 = vmatprep.subr.bf16.mxu0 0
      %929 = vmatpush1.bf16.msra.mxu0 0
      %930 = vmatprep.mubr.bf16.mxu0 0
      %931 = vmatmul.mubr.bf16.gmra.mrb[0].mxu0 %v851
      %v932 = vpop.f32.mrb[0].mxu0
      %v933 = vadd.f32 %v836, %v932
      %v934 = vpop.f32.mrb[0].mxu0
      %v935 = vpop.f32.mrb[0].mxu0
      %v936 = vadd.f32 %v836, %v935
      %v937 = vpop.f32.mrb[0].mxu0
      %938 = vmatprep.mubr.bf16.mxu0 0
      %939 = vmatmul.mubr.bf16.gmra.mrb[0].mxu0 %v854
      %v940 = vpop.f32.mrb[0].mxu0
      %v941 = vadd.f32 %v836, %v940
      %v942 = vpop.f32.mrb[0].mxu0
      %v943 = vpop.f32.mrb[0].mxu0
      %v944 = vadd.f32 %v836, %v943
      %v945 = vpop.f32.mrb[0].mxu0
      %946 = vmatprep.mubr.bf16.mxu0 0
      %947 = vmatmul.mubr.bf16.gmra.mrb[0].mxu0 %v857
      %v948 = vpop.f32.mrb[0].mxu0
      %v949 = vadd.f32 %v836, %v948
      %v950 = vpop.f32.mrb[0].mxu0
      %v951 = vpop.f32.mrb[0].mxu0
      %v952 = vadd.f32 %v836, %v951
      %v953 = vpop.f32.mrb[0].mxu0
      %954 = vmatprep.mubr.bf16.mxu0 0
      %955 = vmatmul.mubr.bf16.gmra.mrb[0].mxu0 %v860
      %v956 = vpop.f32.mrb[0].mxu0
      %v957 = vadd.f32 %v836, %v956
      %v958 = vpop.f32.mrb[0].mxu0
      %v959 = vpop.f32.mrb[0].mxu0
      %v960 = vadd.f32 %v836, %v959
      %v961 = vpop.f32.mrb[0].mxu0
      %962 = vmatprep.mubr.bf16.mxu0 0
      %963 = vmatmul.mubr.bf16.gmra.mrb[0].mxu0 %v863
      %v964 = vpop.f32.mrb[0].mxu0
      %v965 = vadd.f32 %v836, %v964
      %v966 = vpop.f32.mrb[0].mxu0
      %v967 = vpop.f32.mrb[0].mxu0
      %v968 = vadd.f32 %v836, %v967
      %v969 = vpop.f32.mrb[0].mxu0
      %970 = vmatprep.mubr.bf16.mxu0 0
      %971 = vmatmul.mubr.bf16.gmra.mrb[0].mxu0 %v866
      %v972 = vpop.f32.mrb[0].mxu0
      %v973 = vadd.f32 %v836, %v972
      %v974 = vpop.f32.mrb[0].mxu0
      %v975 = vpop.f32.mrb[0].mxu0
      %v976 = vadd.f32 %v836, %v975
      %v977 = vpop.f32.mrb[0].mxu0
      %978 = vmatprep.mubr.bf16.mxu0 0
      %979 = vmatmul.mubr.bf16.gmra.mrb[0].mxu0 %v869
      %v980 = vpop.f32.mrb[0].mxu0
      %v981 = vadd.f32 %v836, %v980
      %v982 = vpop.f32.mrb[0].mxu0
      %v983 = vpop.f32.mrb[0].mxu0
      %v984 = vadd.f32 %v836, %v983
      %v985 = vpop.f32.mrb[0].mxu0
      %986 = vmatprep.mubr.bf16.mxu0 0
      %987 = vmatmul.mubr.bf16.gmra.mrb[0].mxu0 %v872
      %v988 = vpop.f32.mrb[0].mxu0
      %v989 = vadd.f32 %v836, %v988
      %v990 = vpop.f32.mrb[0].mxu0
      %v991 = vpop.f32.mrb[0].mxu0
      %v992 = vadd.f32 %v836, %v991
      %v993 = vpop.f32.mrb[0].mxu0
      %994 = vmatprep.mubr.bf16.mxu0 0
      %995 = vmatmul.mubr.bf16.gmra.mrb[0].mxu0 %v875
      %v996 = vpop.f32.mrb[0].mxu0
      %v997 = vadd.f32 %v836, %v996
      %v998 = vpop.f32.mrb[0].mxu0
      %v999 = vpop.f32.mrb[0].mxu0
      %v1000 = vadd.f32 %v836, %v999
      %v1001 = vpop.f32.mrb[0].mxu0
      %1002 = vmatprep.mubr.bf16.mxu0 0
      %1003 = vmatmul.mubr.bf16.gmra.mrb[0].mxu0 %v878
      %v1004 = vpop.f32.mrb[0].mxu0
      %v1005 = vadd.f32 %v836, %v1004
      %v1006 = vpop.f32.mrb[0].mxu0
      %v1007 = vpop.f32.mrb[0].mxu0
      %v1008 = vadd.f32 %v836, %v1007
      %v1009 = vpop.f32.mrb[0].mxu0
      %1010 = vmatprep.mubr.bf16.mxu0 0
      %1011 = vmatmul.mubr.bf16.gmra.mrb[0].mxu0 %v881
      %v1012 = vpop.f32.mrb[0].mxu0
      %v1013 = vadd.f32 %v836, %v1012
      %v1014 = vpop.f32.mrb[0].mxu0
      %v1015 = vpop.f32.mrb[0].mxu0
      %v1016 = vadd.f32 %v836, %v1015
      %v1017 = vpop.f32.mrb[0].mxu0
      %1018 = vmatprep.mubr.bf16.mxu0 0
      %1019 = vmatmul.mubr.bf16.gmra.mrb[0].mxu0 %v884
      %v1020 = vpop.f32.mrb[0].mxu0
      %v1021 = vadd.f32 %v836, %v1020
      %v1022 = vpop.f32.mrb[0].mxu0
      %v1023 = vpop.f32.mrb[0].mxu0
      %v1024 = vadd.f32 %v836, %v1023
      %v1025 = vpop.f32.mrb[0].mxu0
      %1026 = vmatprep.mubr.bf16.mxu0 0
      %1027 = vmatmul.mubr.bf16.gmra.mrb[0].mxu0 %v887
      %v1028 = vpop.f32.mrb[0].mxu0
      %v1029 = vadd.f32 %v836, %v1028
      %v1030 = vpop.f32.mrb[0].mxu0
      %v1031 = vpop.f32.mrb[0].mxu0
      %v1032 = vadd.f32 %v836, %v1031
      %v1033 = vpop.f32.mrb[0].mxu0
      %1034 = vmatprep.mubr.bf16.mxu0 0
      %1035 = vmatmul.mubr.bf16.gmra.mrb[0].mxu0 %v890
      %v1036 = vpop.f32.mrb[0].mxu0
      %v1037 = vadd.f32 %v836, %v1036
      %v1038 = vpop.f32.mrb[0].mxu0
      %v1039 = vpop.f32.mrb[0].mxu0
      %v1040 = vadd.f32 %v836, %v1039
      %v1041 = vpop.f32.mrb[0].mxu0
      %1042 = vmatprep.mubr.bf16.mxu0 0
      %1043 = vmatmul.mubr.bf16.gmra.mrb[0].mxu0 %v893
      %v1044 = vpop.f32.mrb[0].mxu0
      %v1045 = vadd.f32 %v836, %v1044
      %v1046 = vpop.f32.mrb[0].mxu0
      %v1047 = vpop.f32.mrb[0].mxu0
      %v1048 = vadd.f32 %v836, %v1047
      %v1049 = vpop.f32.mrb[0].mxu0
      %1050 = vmatprep.mubr.bf16.mxu0 0
      %1051 = vmatmul.mubr.bf16.gmra.mrb[0].mxu0 %v896
      %v1052 = vpop.f32.mrb[0].mxu0
      %v1053 = vadd.f32 %v836, %v1052
      %v1054 = vpop.f32.mrb[0].mxu0
      %v1055 = vpop.f32.mrb[0].mxu0
      %v1056 = vadd.f32 %v836, %v1055
      %v1057 = vpop.f32.mrb[0].mxu0
      %1058 = vdwg.mxu0
      %v1059 = vmul.f32 %v933, 0.5
      %v1060 = vmul.f32 %v936, 0.5
      %v1061 = vmul.f32 %v941, 0.5
      %v1062 = vmul.f32 %v944, 0.5
      %v1063 = vmul.f32 %v949, 0.5
      %v1064 = vmul.f32 %v952, 0.5
      %v1065 = vmul.f32 %v957, 0.5
      %v1066 = vmul.f32 %v960, 0.5
      %v1067 = vmul.f32 %v965, 0.5
      %v1068 = vmul.f32 %v968, 0.5
      %v1069 = vmul.f32 %v973, 0.5
      %v1070 = vmul.f32 %v976, 0.5
      %v1071 = vmul.f32 %v981, 0.5
      %v1072 = vmul.f32 %v984, 0.5
      %v1073 = vmul.f32 %v989, 0.5
      %v1074 = vmul.f32 %v992, 0.5
      %v1075 = vmul.f32 %v997, 0.5
      %v1076 = vmul.f32 %v1000, 0.5
      %v1077 = vmul.f32 %v1005, 0.5
      %v1078 = vmul.f32 %v1008, 0.5
      %v1079 = vmul.f32 %v1013, 0.5
      %v1080 = vmul.f32 %v1016, 0.5
      %v1081 = vmul.f32 %v1021, 0.5
      %v1082 = vmul.f32 %v1024, 0.5
      %v1083 = vmul.f32 %v1029, 0.5
      %v1084 = vmul.f32 %v1032, 0.5
      %v1085 = vmul.f32 %v1037, 0.5
      %v1086 = vmul.f32 %v1040, 0.5
      %v1087 = vmul.f32 %v1045, 0.5
      %v1088 = vmul.f32 %v1048, 0.5
      %v1089 = vmul.f32 %v1053, 0.5
      %v1090 = vmul.f32 %v1056, 0.5
      %v1091 = vmul.f32 %v933, 0.044715
      %v1092 = vmul.f32 %v936, 0.044715
      %v1093 = vmul.f32 %v941, 0.044715
      %v1094 = vmul.f32 %v944, 0.044715
      %v1095 = vmul.f32 %v949, 0.044715
      %v1096 = vmul.f32 %v952, 0.044715
      %v1097 = vmul.f32 %v957, 0.044715
      %v1098 = vmul.f32 %v960, 0.044715
      %v1099 = vmul.f32 %v965, 0.044715
      %v1100 = vmul.f32 %v968, 0.044715
      %v1101 = vmul.f32 %v973, 0.044715
      %v1102 = vmul.f32 %v976, 0.044715
      %v1103 = vmul.f32 %v981, 0.044715
      %v1104 = vmul.f32 %v984, 0.044715
      %v1105 = vmul.f32 %v989, 0.044715
      %v1106 = vmul.f32 %v992, 0.044715
      %v1107 = vmul.f32 %v997, 0.044715
      %v1108 = vmul.f32 %v1000, 0.044715
      %v1109 = vmul.f32 %v1005, 0.044715
      %v1110 = vmul.f32 %v1008, 0.044715
      %v1111 = vmul.f32 %v1013, 0.044715
      %v1112 = vmul.f32 %v1016, 0.044715
      %v1113 = vmul.f32 %v1021, 0.044715
      %v1114 = vmul.f32 %v1024, 0.044715
      %v1115 = vmul.f32 %v1029, 0.044715
      %v1116 = vmul.f32 %v1032, 0.044715
      %v1117 = vmul.f32 %v1037, 0.044715
      %v1118 = vmul.f32 %v1040, 0.044715
      %v1119 = vmul.f32 %v1045, 0.044715
      %v1120 = vmul.f32 %v1048, 0.044715
      %v1121 = vmul.f32 %v1053, 0.044715
      %v1122 = vmul.f32 %v1056, 0.044715
      %v1123 = vmul.f32 %v1091, %v933
      %v1124 = vmul.f32 %v1092, %v936
      %v1125 = vmul.f32 %v1093, %v941
      %v1126 = vmul.f32 %v1094, %v944
      %v1127 = vmul.f32 %v1095, %v949
      %v1128 = vmul.f32 %v1096, %v952
      %v1129 = vmul.f32 %v1097, %v957
      %v1130 = vmul.f32 %v1098, %v960
      %v1131 = vmul.f32 %v1099, %v965
      %v1132 = vmul.f32 %v1100, %v968
      %v1133 = vmul.f32 %v1101, %v973
      %v1134 = vmul.f32 %v1102, %v976
      %v1135 = vmul.f32 %v1103, %v981
      %v1136 = vmul.f32 %v1104, %v984
      %v1137 = vmul.f32 %v1105, %v989
      %v1138 = vmul.f32 %v1106, %v992
      %v1139 = vmul.f32 %v1107, %v997
      %v1140 = vmul.f32 %v1108, %v1000
      %v1141 = vmul.f32 %v1109, %v1005
      %v1142 = vmul.f32 %v1110, %v1008
      %v1143 = vmul.f32 %v1111, %v1013
      %v1144 = vmul.f32 %v1112, %v1016
      %v1145 = vmul.f32 %v1113, %v1021
      %v1146 = vmul.f32 %v1114, %v1024
      %v1147 = vmul.f32 %v1115, %v1029
      %v1148 = vmul.f32 %v1116, %v1032
      %v1149 = vmul.f32 %v1117, %v1037
      %v1150 = vmul.f32 %v1118, %v1040
      %v1151 = vmul.f32 %v1119, %v1045
      %v1152 = vmul.f32 %v1120, %v1048
      %v1153 = vmul.f32 %v1121, %v1053
      %v1154 = vmul.f32 %v1122, %v1056
      %v1155 = vmul.f32 %v1123, %v933
      %v1156 = vmul.f32 %v1124, %v936
      %v1157 = vmul.f32 %v1125, %v941
      %v1158 = vmul.f32 %v1126, %v944
      %v1159 = vmul.f32 %v1127, %v949
      %v1160 = vmul.f32 %v1128, %v952
      %v1161 = vmul.f32 %v1129, %v957
      %v1162 = vmul.f32 %v1130, %v960
      %v1163 = vmul.f32 %v1131, %v965
      %v1164 = vmul.f32 %v1132, %v968
      %v1165 = vmul.f32 %v1133, %v973
      %v1166 = vmul.f32 %v1134, %v976
      %v1167 = vmul.f32 %v1135, %v981
      %v1168 = vmul.f32 %v1136, %v984
      %v1169 = vmul.f32 %v1137, %v989
      %v1170 = vmul.f32 %v1138, %v992
      %v1171 = vmul.f32 %v1139, %v997
      %v1172 = vmul.f32 %v1140, %v1000
      %v1173 = vmul.f32 %v1141, %v1005
      %v1174 = vmul.f32 %v1142, %v1008
      %v1175 = vmul.f32 %v1143, %v1013
      %v1176 = vmul.f32 %v1144, %v1016
      %v1177 = vmul.f32 %v1145, %v1021
      %v1178 = vmul.f32 %v1146, %v1024
      %v1179 = vmul.f32 %v1147, %v1029
      %v1180 = vmul.f32 %v1148, %v1032
      %v1181 = vmul.f32 %v1149, %v1037
      %v1182 = vmul.f32 %v1150, %v1040
      %v1183 = vmul.f32 %v1151, %v1045
      %v1184 = vmul.f32 %v1152, %v1048
      %v1185 = vmul.f32 %v1153, %v1053
      %v1186 = vmul.f32 %v1154, %v1056
      %v1187 = vadd.f32 %v933, %v1155
      %v1188 = vadd.f32 %v936, %v1156
      %v1189 = vadd.f32 %v941, %v1157
      %v1190 = vadd.f32 %v944, %v1158
      %v1191 = vadd.f32 %v949, %v1159
      %v1192 = vadd.f32 %v952, %v1160
      %v1193 = vadd.f32 %v957, %v1161
      %v1194 = vadd.f32 %v960, %v1162
      %v1195 = vadd.f32 %v965, %v1163
      %v1196 = vadd.f32 %v968, %v1164
      %v1197 = vadd.f32 %v973, %v1165
      %v1198 = vadd.f32 %v976, %v1166
      %v1199 = vadd.f32 %v981, %v1167
      %v1200 = vadd.f32 %v984, %v1168
      %v1201 = vadd.f32 %v989, %v1169
      %v1202 = vadd.f32 %v992, %v1170
      %v1203 = vadd.f32 %v997, %v1171
      %v1204 = vadd.f32 %v1000, %v1172
      %v1205 = vadd.f32 %v1005, %v1173
      %v1206 = vadd.f32 %v1008, %v1174
      %v1207 = vadd.f32 %v1013, %v1175
      %v1208 = vadd.f32 %v1016, %v1176
      %v1209 = vadd.f32 %v1021, %v1177
      %v1210 = vadd.f32 %v1024, %v1178
      %v1211 = vadd.f32 %v1029, %v1179
      %v1212 = vadd.f32 %v1032, %v1180
      %v1213 = vadd.f32 %v1037, %v1181
      %v1214 = vadd.f32 %v1040, %v1182
      %v1215 = vadd.f32 %v1045, %v1183
      %v1216 = vadd.f32 %v1048, %v1184
      %v1217 = vadd.f32 %v1053, %v1185
      %v1218 = vadd.f32 %v1056, %v1186
      %v1219 = vmul.f32 %v1187, 0.7978846
      %v1220 = vmul.f32 %v1188, 0.7978846
      %v1221 = vmul.f32 %v1189, 0.7978846
      %v1222 = vmul.f32 %v1190, 0.7978846
      %v1223 = vmul.f32 %v1191, 0.7978846
      %v1224 = vmul.f32 %v1192, 0.7978846
      %v1225 = vmul.f32 %v1193, 0.7978846
      %v1226 = vmul.f32 %v1194, 0.7978846
      %v1227 = vmul.f32 %v1195, 0.7978846
      %v1228 = vmul.f32 %v1196, 0.7978846
      %v1229 = vmul.f32 %v1197, 0.7978846
      %v1230 = vmul.f32 %v1198, 0.7978846
      %v1231 = vmul.f32 %v1199, 0.7978846
      %v1232 = vmul.f32 %v1200, 0.7978846
      %v1233 = vmul.f32 %v1201, 0.7978846
      %v1234 = vmul.f32 %v1202, 0.7978846
      %v1235 = vmul.f32 %v1203, 0.7978846
      %v1236 = vmul.f32 %v1204, 0.7978846
      %v1237 = vmul.f32 %v1205, 0.7978846
      %v1238 = vmul.f32 %v1206, 0.7978846
      %v1239 = vmul.f32 %v1207, 0.7978846
      %v1240 = vmul.f32 %v1208, 0.7978846
      %v1241 = vmul.f32 %v1209, 0.7978846
      %v1242 = vmul.f32 %v1210, 0.7978846
      %v1243 = vmul.f32 %v1211, 0.7978846
      %v1244 = vmul.f32 %v1212, 0.7978846
      %v1245 = vmul.f32 %v1213, 0.7978846
      %v1246 = vmul.f32 %v1214, 0.7978846
      %v1247 = vmul.f32 %v1215, 0.7978846
      %v1248 = vmul.f32 %v1216, 0.7978846
      %v1249 = vmul.f32 %v1217, 0.7978846
      %v1250 = vmul.f32 %v1218, 0.7978846
      %v1251 = vtanh.pop %v1219
      %v1252 = vtanh.pop %v1220
      %v1253 = vtanh.pop %v1221
      %v1254 = vtanh.pop %v1222
      %v1255 = vtanh.pop %v1223
      %v1256 = vtanh.pop %v1224
      %v1257 = vtanh.pop %v1225
      %v1258 = vtanh.pop %v1226
      %v1259 = vtanh.pop %v1227
      %v1260 = vtanh.pop %v1228
      %v1261 = vtanh.pop %v1229
      %v1262 = vtanh.pop %v1230
      %v1263 = vtanh.pop %v1231
      %v1264 = vtanh.pop %v1232
      %v1265 = vtanh.pop %v1233
      %v1266 = vtanh.pop %v1234
      %v1267 = vtanh.pop %v1235
      %v1268 = vtanh.pop %v1236
      %v1269 = vtanh.pop %v1237
      %v1270 = vtanh.pop %v1238
      %v1271 = vtanh.pop %v1239
      %v1272 = vtanh.pop %v1240
      %v1273 = vtanh.pop %v1241
      %v1274 = vtanh.pop %v1242
      %v1275 = vtanh.pop %v1243
      %v1276 = vtanh.pop %v1244
      %v1277 = vtanh.pop %v1245
      %v1278 = vtanh.pop %v1246
      %v1279 = vtanh.pop %v1247
      %v1280 = vtanh.pop %v1248
      %v1281 = vtanh.pop %v1249
      %v1282 = vtanh.pop %v1250
      %v1283 = vadd.f32 %v1251, 1.0
      %v1284 = vadd.f32 %v1252, 1.0
      %v1285 = vadd.f32 %v1253, 1.0
      %v1286 = vadd.f32 %v1254, 1.0
      %v1287 = vadd.f32 %v1255, 1.0
      %v1288 = vadd.f32 %v1256, 1.0
      %v1289 = vadd.f32 %v1257, 1.0
      %v1290 = vadd.f32 %v1258, 1.0
      %v1291 = vadd.f32 %v1259, 1.0
      %v1292 = vadd.f32 %v1260, 1.0
      %v1293 = vadd.f32 %v1261, 1.0
      %v1294 = vadd.f32 %v1262, 1.0
      %v1295 = vadd.f32 %v1263, 1.0
      %v1296 = vadd.f32 %v1264, 1.0
      %v1297 = vadd.f32 %v1265, 1.0
      %v1298 = vadd.f32 %v1266, 1.0
      %v1299 = vadd.f32 %v1267, 1.0
      %v1300 = vadd.f32 %v1268, 1.0
      %v1301 = vadd.f32 %v1269, 1.0
      %v1302 = vadd.f32 %v1270, 1.0
      %v1303 = vadd.f32 %v1271, 1.0
      %v1304 = vadd.f32 %v1272, 1.0
      %v1305 = vadd.f32 %v1273, 1.0
      %v1306 = vadd.f32 %v1274, 1.0
      %v1307 = vadd.f32 %v1275, 1.0
      %v1308 = vadd.f32 %v1276, 1.0
      %v1309 = vadd.f32 %v1277, 1.0
      %v1310 = vadd.f32 %v1278, 1.0
      %v1311 = vadd.f32 %v1279, 1.0
      %v1312 = vadd.f32 %v1280, 1.0
      %v1313 = vadd.f32 %v1281, 1.0
      %v1314 = vadd.f32 %v1282, 1.0
      %v1315 = vmul.f32 %v1059, %v1283
      %v1316 = vmul.f32 %v1060, %v1284
      %v1317 = vmul.f32 %v1061, %v1285
      %v1318 = vmul.f32 %v1062, %v1286
      %v1319 = vmul.f32 %v1063, %v1287
      %v1320 = vmul.f32 %v1064, %v1288
      %v1321 = vmul.f32 %v1065, %v1289
      %v1322 = vmul.f32 %v1066, %v1290
      %v1323 = vmul.f32 %v1067, %v1291
      %v1324 = vmul.f32 %v1068, %v1292
      %v1325 = vmul.f32 %v1069, %v1293
      %v1326 = vmul.f32 %v1070, %v1294
      %v1327 = vmul.f32 %v1071, %v1295
      %v1328 = vmul.f32 %v1072, %v1296
      %v1329 = vmul.f32 %v1073, %v1297
      %v1330 = vmul.f32 %v1074, %v1298
      %v1331 = vmul.f32 %v1075, %v1299
      %v1332 = vmul.f32 %v1076, %v1300
      %v1333 = vmul.f32 %v1077, %v1301
      %v1334 = vmul.f32 %v1078, %v1302
      %v1335 = vmul.f32 %v1079, %v1303
      %v1336 = vmul.f32 %v1080, %v1304
      %v1337 = vmul.f32 %v1081, %v1305
      %v1338 = vmul.f32 %v1082, %v1306
      %v1339 = vmul.f32 %v1083, %v1307
      %v1340 = vmul.f32 %v1084, %v1308
      %v1341 = vmul.f32 %v1085, %v1309
      %v1342 = vmul.f32 %v1086, %v1310
      %v1343 = vmul.f32 %v1087, %v1311
      %v1344 = vmul.f32 %v1088, %v1312
      %v1345 = vmul.f32 %v1089, %v1313
      %v1346 = vmul.f32 %v1090, %v1314
      %v1347 = vpack.c.bf16 %v1316, %v1315
      %v1348 = vpack.c.bf16 %v1318, %v1317
      %v1349 = vpack.c.bf16 %v1320, %v1319
      %v1350 = vpack.c.bf16 %v1322, %v1321
      %v1351 = vpack.c.bf16 %v1324, %v1323
      %v1352 = vpack.c.bf16 %v1326, %v1325
      %v1353 = vpack.c.bf16 %v1328, %v1327
      %v1354 = vpack.c.bf16 %v1330, %v1329
      %v1355 = vpack.c.bf16 %v1332, %v1331
      %v1356 = vpack.c.bf16 %v1334, %v1333
      %v1357 = vpack.c.bf16 %v1336, %v1335
      %v1358 = vpack.c.bf16 %v1338, %v1337
      %v1359 = vpack.c.bf16 %v1340, %v1339
      %v1360 = vpack.c.bf16 %v1342, %v1341
      %v1361 = vpack.c.bf16 %v1344, %v1343
      %v1362 = vpack.c.bf16 %v1346, %v1345
      %v1363 = vld [vmem:[%s5] sm:$0xf]
      %v1364 = vld [vmem:[%s5 + $0x4] sm:$0xf]
      %v1365 = vld [vmem:[%s5 + $0x8] sm:$0xf]
      %v1366 = vld [vmem:[%s5 + $0xc] sm:$0xf]
      %v1367 = vld [vmem:[%s5 + $0x10] sm:$0xf]
      %v1368 = vld [vmem:[%s5 + $0x14] sm:$0xf]
      %v1369 = vld [vmem:[%s5 + $0x18] sm:$0xf]
      %v1370 = vld [vmem:[%s5 + $0x1c] sm:$0xf]
      %v1371 = vld [vmem:[%s5 + $0x20] sm:$0xf]
      %v1372 = vld [vmem:[%s5 + $0x24] sm:$0xf]
      %v1373 = vld [vmem:[%s5 + $0x28] sm:$0xf]
      %v1374 = vld [vmem:[%s5 + $0x2c] sm:$0xf]
      %v1375 = vld [vmem:[%s5 + $0x30] sm:$0xf]
      %v1376 = vld [vmem:[%s5 + $0x34] sm:$0xf]
      %v1377 = vld [vmem:[%s5 + $0x38] sm:$0xf]
      %v1378 = vld [vmem:[%s5 + $0x3c] sm:$0xf]
      %v1379 = vld [vmem:[%s6] sm:$0x1]
      %v1381 = vlaneseq
      %v1382 = vshrl.u32 %v1381, 7
      %v1383 = vsub.s32 0, %v1382
      %v1384 = vrot.slane %v1379, %v1383
      %v1402 = vunpack.c.l.b16 %v1363
      %v1403 = vunpack.c.l.b16 %v1364
      %v1404 = vunpack.c.l.b16 %v1365
      %v1405 = vunpack.c.l.b16 %v1366
      %v1406 = vunpack.c.l.b16 %v1367
      %v1407 = vunpack.c.l.b16 %v1368
      %v1408 = vunpack.c.l.b16 %v1369
      %v1409 = vunpack.c.l.b16 %v1370
      %v1410 = vunpack.c.l.b16 %v1371
      %v1411 = vunpack.c.l.b16 %v1372
      %v1412 = vunpack.c.l.b16 %v1373
      %v1413 = vunpack.c.l.b16 %v1374
      %v1414 = vunpack.c.l.b16 %v1375
      %v1415 = vunpack.c.l.b16 %v1376
      %v1416 = vunpack.c.l.b16 %v1377
      %v1417 = vunpack.c.l.b16 %v1378
      %v1418 = vpack.c.b16 %v1403, %v1402
      %v1419 = vpack.c.b16 %v1405, %v1404
      %v1420 = vpack.c.b16 %v1407, %v1406
      %v1421 = vpack.c.b16 %v1409, %v1408
      %v1422 = vpack.c.b16 %v1411, %v1410
      %v1423 = vpack.c.b16 %v1413, %v1412
      %v1424 = vpack.c.b16 %v1415, %v1414
      %v1425 = vpack.c.b16 %v1417, %v1416
      %1434 = vmatprep.subr.bf16.mxu0 0
      %1435 = vmatpush1.bf16.msra.mxu0 %v1418
      %1436 = vmatprep.subr.bf16.mxu0 0
      %1437 = vmatpush1.bf16.msra.mxu0 %v1419
      %1438 = vmatprep.subr.bf16.mxu0 0
      %1439 = vmatpush1.bf16.msra.mxu0 %v1420
      %1440 = vmatprep.subr.bf16.mxu0 0
      %1441 = vmatpush1.bf16.msra.mxu0 %v1421
      %1442 = vmatprep.subr.bf16.mxu0 0
      %1443 = vmatpush1.bf16.msra.mxu0 %v1422
      %1444 = vmatprep.subr.bf16.mxu0 0
      %1445 = vmatpush1.bf16.msra.mxu0 %v1423
      %1446 = vmatprep.subr.bf16.mxu0 0
      %1447 = vmatpush1.bf16.msra.mxu0 %v1424
      %1448 = vmatprep.subr.bf16.mxu0 0
      %1449 = vmatpush1.bf16.msra.mxu0 %v1425
      %1450 = vmatprep.subr.bf16.mxu0 0
      %1451 = vmatpush1.bf16.msra.mxu0 0
      %1452 = vmatprep.subr.bf16.mxu0 0
      %1453 = vmatpush1.bf16.msra.mxu0 0
      %1454 = vmatprep.subr.bf16.mxu0 0
      %1455 = vmatpush1.bf16.msra.mxu0 0
      %1456 = vmatprep.subr.bf16.mxu0 0
      %1457 = vmatpush1.bf16.msra.mxu0 0
      %1458 = vmatprep.subr.bf16.mxu0 0
      %1459 = vmatpush1.bf16.msra.mxu0 0
      %1460 = vmatprep.subr.bf16.mxu0 0
      %1461 = vmatpush1.bf16.msra.mxu0 0
      %1462 = vmatprep.subr.bf16.mxu0 0
      %1463 = vmatpush1.bf16.msra.mxu0 0
      %1464 = vmatprep.subr.bf16.mxu0 0
      %1465 = vmatpush1.bf16.msra.mxu0 0
      %1466 = vmatprep.mubr.bf16.mxu0 0
      %1467 = vmatmul.mubr.bf16.gmra.mrb[0].mxu0 %v1347
      %v1468 = vpop.f32.mrb[0].mxu0
      %v1469 = vadd.f32 %v1384, %v1468
      %v1470 = vpop.f32.mrb[0].mxu0
      %v1471 = vpop.f32.mrb[0].mxu0
      %v1472 = vadd.f32 %v1384, %v1471
      %v1473 = vpop.f32.mrb[0].mxu0
      %1474 = vmatprep.mubr.bf16.mxu0 0
      %1475 = vmatmul.mubr.bf16.gmra.mrb[0].mxu0 %v1348
      %v1476 = vpop.f32.mrb[0].mxu0
      %v1477 = vadd.f32 %v1384, %v1476
      %v1478 = vpop.f32.mrb[0].mxu0
      %v1479 = vpop.f32.mrb[0].mxu0
      %v1480 = vadd.f32 %v1384, %v1479
      %v1481 = vpop.f32.mrb[0].mxu0
      %1482 = vmatprep.mubr.bf16.mxu0 0
      %1483 = vmatmul.mubr.bf16.gmra.mrb[0].mxu0 %v1349
      %v1484 = vpop.f32.mrb[0].mxu0
      %v1485 = vadd.f32 %v1384, %v1484
      %v1486 = vpop.f32.mrb[0].mxu0
      %v1487 = vpop.f32.mrb[0].mxu0
      %v1488 = vadd.f32 %v1384, %v1487
      %v1489 = vpop.f32.mrb[0].mxu0
      %1490 = vmatprep.mubr.bf16.mxu0 0
      %1491 = vmatmul.mubr.bf16.gmra.mrb[0].mxu0 %v1350
      %v1492 = vpop.f32.mrb[0].mxu0
      %v1493 = vadd.f32 %v1384, %v1492
      %v1494 = vpop.f32.mrb[0].mxu0
      %v1495 = vpop.f32.mrb[0].mxu0
      %v1496 = vadd.f32 %v1384, %v1495
      %v1497 = vpop.f32.mrb[0].mxu0
      %1498 = vmatprep.mubr.bf16.mxu0 0
      %1499 = vmatmul.mubr.bf16.gmra.mrb[0].mxu0 %v1351
      %v1500 = vpop.f32.mrb[0].mxu0
      %v1501 = vadd.f32 %v1384, %v1500
      %v1502 = vpop.f32.mrb[0].mxu0
      %v1503 = vpop.f32.mrb[0].mxu0
      %v1504 = vadd.f32 %v1384, %v1503
      %v1505 = vpop.f32.mrb[0].mxu0
      %1506 = vmatprep.mubr.bf16.mxu0 0
      %1507 = vmatmul.mubr.bf16.gmra.mrb[0].mxu0 %v1352
      %v1508 = vpop.f32.mrb[0].mxu0
      %v1509 = vadd.f32 %v1384, %v1508
      %v1510 = vpop.f32.mrb[0].mxu0
      %v1511 = vpop.f32.mrb[0].mxu0
      %v1512 = vadd.f32 %v1384, %v1511
      %v1513 = vpop.f32.mrb[0].mxu0
      %1514 = vmatprep.mubr.bf16.mxu0 0
      %1515 = vmatmul.mubr.bf16.gmra.mrb[0].mxu0 %v1353
      %v1516 = vpop.f32.mrb[0].mxu0
      %v1517 = vadd.f32 %v1384, %v1516
      %v1518 = vpop.f32.mrb[0].mxu0
      %v1519 = vpop.f32.mrb[0].mxu0
      %v1520 = vadd.f32 %v1384, %v1519
      %v1521 = vpop.f32.mrb[0].mxu0
      %1522 = vmatprep.mubr.bf16.mxu0 0
      %1523 = vmatmul.mubr.bf16.gmra.mrb[0].mxu0 %v1354
      %v1524 = vpop.f32.mrb[0].mxu0
      %v1525 = vadd.f32 %v1384, %v1524
      %v1526 = vpop.f32.mrb[0].mxu0
      %v1527 = vpop.f32.mrb[0].mxu0
      %v1528 = vadd.f32 %v1384, %v1527
      %v1529 = vpop.f32.mrb[0].mxu0
      %1530 = vmatprep.mubr.bf16.mxu0 0
      %1531 = vmatmul.mubr.bf16.gmra.mrb[0].mxu0 %v1355
      %v1532 = vpop.f32.mrb[0].mxu0
      %v1533 = vadd.f32 %v1384, %v1532
      %v1534 = vpop.f32.mrb[0].mxu0
      %v1535 = vpop.f32.mrb[0].mxu0
      %v1536 = vadd.f32 %v1384, %v1535
      %v1537 = vpop.f32.mrb[0].mxu0
      %1538 = vmatprep.mubr.bf16.mxu0 0
      %1539 = vmatmul.mubr.bf16.gmra.mrb[0].mxu0 %v1356
      %v1540 = vpop.f32.mrb[0].mxu0
      %v1541 = vadd.f32 %v1384, %v1540
      %v1542 = vpop.f32.mrb[0].mxu0
      %v1543 = vpop.f32.mrb[0].mxu0
      %v1544 = vadd.f32 %v1384, %v1543
      %v1545 = vpop.f32.mrb[0].mxu0
      %1546 = vmatprep.mubr.bf16.mxu0 0
      %1547 = vmatmul.mubr.bf16.gmra.mrb[0].mxu0 %v1357
      %v1548 = vpop.f32.mrb[0].mxu0
      %v1549 = vadd.f32 %v1384, %v1548
      %v1550 = vpop.f32.mrb[0].mxu0
      %v1551 = vpop.f32.mrb[0].mxu0
      %v1552 = vadd.f32 %v1384, %v1551
      %v1553 = vpop.f32.mrb[0].mxu0
      %1554 = vmatprep.mubr.bf16.mxu0 0
      %1555 = vmatmul.mubr.bf16.gmra.mrb[0].mxu0 %v1358
      %v1556 = vpop.f32.mrb[0].mxu0
      %v1557 = vadd.f32 %v1384, %v1556
      %v1558 = vpop.f32.mrb[0].mxu0
      %v1559 = vpop.f32.mrb[0].mxu0
      %v1560 = vadd.f32 %v1384, %v1559
      %v1561 = vpop.f32.mrb[0].mxu0
      %1562 = vmatprep.mubr.bf16.mxu0 0
      %1563 = vmatmul.mubr.bf16.gmra.mrb[0].mxu0 %v1359
      %v1564 = vpop.f32.mrb[0].mxu0
      %v1565 = vadd.f32 %v1384, %v1564
      %v1566 = vpop.f32.mrb[0].mxu0
      %v1567 = vpop.f32.mrb[0].mxu0
      %v1568 = vadd.f32 %v1384, %v1567
      %v1569 = vpop.f32.mrb[0].mxu0
      %1570 = vmatprep.mubr.bf16.mxu0 0
      %1571 = vmatmul.mubr.bf16.gmra.mrb[0].mxu0 %v1360
      %v1572 = vpop.f32.mrb[0].mxu0
      %v1573 = vadd.f32 %v1384, %v1572
      %v1574 = vpop.f32.mrb[0].mxu0
      %v1575 = vpop.f32.mrb[0].mxu0
      %v1576 = vadd.f32 %v1384, %v1575
      %v1577 = vpop.f32.mrb[0].mxu0
      %1578 = vmatprep.mubr.bf16.mxu0 0
      %1579 = vmatmul.mubr.bf16.gmra.mrb[0].mxu0 %v1361
      %v1580 = vpop.f32.mrb[0].mxu0
      %v1581 = vadd.f32 %v1384, %v1580
      %v1582 = vpop.f32.mrb[0].mxu0
      %v1583 = vpop.f32.mrb[0].mxu0
      %v1584 = vadd.f32 %v1384, %v1583
      %v1585 = vpop.f32.mrb[0].mxu0
      %1586 = vmatprep.mubr.bf16.mxu0 0
      %1587 = vmatmul.mubr.bf16.gmra.mrb[0].mxu0 %v1362
      %v1588 = vpop.f32.mrb[0].mxu0
      %v1589 = vadd.f32 %v1384, %v1588
      %v1590 = vpop.f32.mrb[0].mxu0
      %v1591 = vpop.f32.mrb[0].mxu0
      %v1592 = vadd.f32 %v1384, %v1591
      %v1593 = vpop.f32.mrb[0].mxu0
      %1594 = vdwg.mxu0
      %v1595 = vadd.f32 %v283, %v1469
      %v1596 = vadd.f32 %v284, %v1472
      %v1597 = vadd.f32 %v285, %v1477
      %v1598 = vadd.f32 %v286, %v1480
      %v1599 = vadd.f32 %v287, %v1485
      %v1600 = vadd.f32 %v288, %v1488
      %v1601 = vadd.f32 %v289, %v1493
      %v1602 = vadd.f32 %v290, %v1496
      %v1603 = vadd.f32 %v291, %v1501
      %v1604 = vadd.f32 %v292, %v1504
      %v1605 = vadd.f32 %v293, %v1509
      %v1606 = vadd.f32 %v294, %v1512
      %v1607 = vadd.f32 %v295, %v1517
      %v1608 = vadd.f32 %v296, %v1520
      %v1609 = vadd.f32 %v297, %v1525
      %v1610 = vadd.f32 %v298, %v1528
      %v1611 = vadd.f32 %v299, %v1533
      %v1612 = vadd.f32 %v300, %v1536
      %v1613 = vadd.f32 %v301, %v1541
      %v1614 = vadd.f32 %v302, %v1544
      %v1615 = vadd.f32 %v303, %v1549
      %v1616 = vadd.f32 %v304, %v1552
      %v1617 = vadd.f32 %v305, %v1557
      %v1618 = vadd.f32 %v306, %v1560
      %v1619 = vadd.f32 %v307, %v1565
      %v1620 = vadd.f32 %v308, %v1568
      %v1621 = vadd.f32 %v309, %v1573
      %v1622 = vadd.f32 %v310, %v1576
      %v1623 = vadd.f32 %v311, %v1581
      %v1624 = vadd.f32 %v312, %v1584
      %v1625 = vadd.f32 %v313, %v1589
      %v1626 = vadd.f32 %v314, %v1592
      %1627 = vst.msk [vmem:[%s280] sm:$0xff] %vm315, %v1595
      %1628 = vst.msk [vmem:[%s280 + $0x8] sm:$0xff] %vm315, %v1596
      %1629 = vst.msk [vmem:[%s280 + $0x10] sm:$0xff] %vm315, %v1597
      %1630 = vst.msk [vmem:[%s280 + $0x18] sm:$0xff] %vm315, %v1598
      %1631 = vst.msk [vmem:[%s280 + $0x20] sm:$0xff] %vm315, %v1599
      %1632 = vst.msk [vmem:[%s280 + $0x28] sm:$0xff] %vm315, %v1600
      %1633 = vst.msk [vmem:[%s280 + $0x30] sm:$0xff] %vm315, %v1601
      %1634 = vst.msk [vmem:[%s280 + $0x38] sm:$0xff] %vm315, %v1602
      %1635 = vst.msk [vmem:[%s280 + $0x40] sm:$0xff] %vm315, %v1603
      %1636 = vst.msk [vmem:[%s280 + $0x48] sm:$0xff] %vm315, %v1604
      %1637 = vst.msk [vmem:[%s280 + $0x50] sm:$0xff] %vm315, %v1605
      %1638 = vst.msk [vmem:[%s280 + $0x58] sm:$0xff] %vm315, %v1606
      %1639 = vst.msk [vmem:[%s280 + $0x60] sm:$0xff] %vm315, %v1607
      %1640 = vst.msk [vmem:[%s280 + $0x68] sm:$0xff] %vm315, %v1608
      %1641 = vst.msk [vmem:[%s280 + $0x70] sm:$0xff] %vm315, %v1609
      %1642 = vst.msk [vmem:[%s280 + $0x78] sm:$0xff] %vm315, %v1610
      %1643 = vst.msk [vmem:[%s280 + $0x80] sm:$0xff] %vm315, %v1611
      %1644 = vst.msk [vmem:[%s280 + $0x88] sm:$0xff] %vm315, %v1612
      %1645 = vst.msk [vmem:[%s280 + $0x90] sm:$0xff] %vm315, %v1613
      %1646 = vst.msk [vmem:[%s280 + $0x98] sm:$0xff] %vm315, %v1614
      %1647 = vst.msk [vmem:[%s280 + $0xa0] sm:$0xff] %vm315, %v1615
      %1648 = vst.msk [vmem:[%s280 + $0xa8] sm:$0xff] %vm315, %v1616
      %1649 = vst.msk [vmem:[%s280 + $0xb0] sm:$0xff] %vm315, %v1617
      %1650 = vst.msk [vmem:[%s280 + $0xb8] sm:$0xff] %vm315, %v1618
      %1651 = vst.msk [vmem:[%s280 + $0xc0] sm:$0xff] %vm315, %v1619
      %1652 = vst.msk [vmem:[%s280 + $0xc8] sm:$0xff] %vm315, %v1620
      %1653 = vst.msk [vmem:[%s280 + $0xd0] sm:$0xff] %vm315, %v1621
      %1654 = vst.msk [vmem:[%s280 + $0xd8] sm:$0xff] %vm315, %v1622
      %1655 = vst.msk [vmem:[%s280 + $0xe0] sm:$0xff] %vm315, %v1623
      %1656 = vst.msk [vmem:[%s280 + $0xe8] sm:$0xff] %vm315, %v1624
      %1657 = vst.msk [vmem:[%s280 + $0xf0] sm:$0xff] %vm315, %v1625
      %1658 = vst.msk [vmem:[%s280 + $0xf8] sm:$0xff] %vm315, %v1626
      %s1659 = smul.u32 32, %s18
      %p1660 = scmp.lt.s32.totalorder %s1659, 63
      %s1661 = scalar_select %p1660, %s1659, 63
      %s1662 = smul.addr %s1661, 8
      %s1663 = scalar_lea.vmem %s7, %s1662
      // Predicated region
      $region49: #{focalnet_block_fwd.7} parent=47 // pred_check
        %p1664 = pneg %p188
      $region50: #{focalnet_block_fwd.7} parent=47 // pred_check_branch
        %1666 = sbr.rel (%p1664) target = $region52
      $region51: #{focalnet_block_fwd.7} parent=47 // pred_region
        %s1667 = smul.u32 32, %s18
      $region52: #{focalnet_block_fwd.7} parent=47 // pred_fallthru
        _
    $region48: #{focalnet_block_fwd.7} parent=5 // pred_fallthru
      _
    %p1668 = scmp.le.s32.totalorder 2, %s13
    // Predicated region
    $region53: #{focalnet_block_fwd.7} parent=5 // pred_check
      %p1669 = pneg %p1668
    $region54: #{focalnet_block_fwd.7} parent=5 // pred_check_branch
      %1671 = sbr.rel (%p1669) target = $region56
    $region55: #{focalnet_block_fwd.7} parent=5 // pred_region
      %s1672 = ssub.s32 %s13, 2
      // Predicated region
      $region57: #{focalnet_block_fwd.7} parent=55 // pred_check
        %p1673 = pneg %p194
      $region58: #{focalnet_block_fwd.7} parent=55 // pred_check_branch
        %1675 = sbr.rel (%p1673) target = $region60
      $region59: #{focalnet_block_fwd.7} parent=55 // pred_region
        %s1676 = smul.u32 32, %s19
        %p1677 = scmp.lt.s32.totalorder %s1676, 63
        %s1678 = scalar_select %p1677, %s1676, 63
        %s1679 = smul.addr %s1678, 8
        %s1680 = scalar_lea.vmem %s7, %s1679
      $region60: #{focalnet_block_fwd.7} parent=55 // pred_fallthru
        _
    $region56: #{focalnet_block_fwd.7} parent=5 // pred_fallthru
      _
  $region6: #{focalnet_block_fwd.7} parent=0 // loop_footer
    %s17 = sadd.s32 1, %s13
  $region7: #{focalnet_block_fwd.7} parent=0 // loop_footer_branch
    %12 = sbr.rel target = $region3
  $region8: #{focalnet_block_fwd.7} parent=0 // loop_exit
    _

// kernel: focalnet_block_fwd.5
$region0: #{focalnet_block_fwd.5}
  #allocation0 [shape = 'u32[]', space=smem, size = 0x4, offset = 0x4, fixed_abs, tag = 'smem constant byte address 0x4 - core index']
  #allocation1 [shape = 'u32[144,128]{1,0:T(1,128)}', space=vmem, size = 0x12000, scoped, tag = 'internal scratch']
  #allocation2 [shape = 'f32[20,26,32]{2,1,0:T(8,128)}', space=vmem, size = 0x50000, scoped, tag = 'scratch operand']
  %s0 = inlined_call_operand.vmem [shape: bf16[2,16,16,32], index: 0, kind: input, shape index: {}]
  %s1 = inlined_call_operand.vmem [shape: bf16[2,16,16,3], index: 1, kind: input, shape index: {}]
  %s2 = inlined_call_operand.vmem [shape: f32[3,3,32], index: 2, kind: input, shape index: {}]
  %s3 = inlined_call_operand.vmem [shape: f32[5,5,32], index: 3, kind: input, shape index: {}]
  %s4 = inlined_call_operand.vmem [shape: bf16[2,16,16,32], index: 4, kind: output, shape index: {0}]
  %s5 = inlined_call_operand.vmem [shape: f32[2,1,32], index: 5, kind: output, shape index: {1}]
  %6 = xla_tuple %s4, %s5
  %s7 = sld [smem:[#allocation0]]
  $region57: #{focalnet_block_fwd.5} parent=0
    _
  %s9 = ssub.s32 1, %s7
  %s10 = scalar_select 0, %s9, %s7
  loop: start=0, step=1, limit=4
  $region2: #{focalnet_block_fwd.5} parent=0 // loop_pre_header
    _
  $region3: #{focalnet_block_fwd.5} parent=0 // loop_header
    %s12 = sphi 0, %s16
    %p13 = scmp.ge.s32.totalorder %s12, 4
    %s19 = sphi 0, %s31
    %s20 = sphi 0, %s27
    %s21 = sphi 0, %s19
    %s22 = sphi 0, %s20
    %s23 = sphi 0, %s21
    %s24 = sphi 0, %s22
    %s36 = sphi 0, %s38
    %s39 = sphi 0, %s36
    %s40 = sphi 0, %s39
    %s56 = sphi 0, %s40
    %s62 = sphi 0, %s64
    %s65 = sphi 0, %s62
    %s66 = sphi 0, %s65
    %s82 = sphi 0, %s66
    %s88 = sphi 0, %s90
    %s91 = sphi 0, %s88
    %s92 = sphi 0, %s91
    %s108 = sphi 0, %s92
    %s114 = sphi 0, %s116
    %s117 = sphi 0, %s114
    %s118 = sphi 0, %s117
    %s134 = sphi 0, %s118
    %s142 = sphi 0, %s144
    %s145 = sphi 0, %s142
    %s146 = sphi 0, %s145
    %s162 = sphi 0, %s146
    %s170 = sphi 0, %s172
    %s173 = sphi 0, %s170
    %s174 = sphi 0, %s173
    %s190 = sphi 0, %s174
  $region4: #{focalnet_block_fwd.5} parent=0 // loop_header_branch
    %15 = sbr.rel (%p13) target = $region8
  $region5: #{focalnet_block_fwd.5} parent=0 // loop_body
    %s17 = ssub.s32 %s12, 1
    %s18 = ssub.s32 %s12, 2
    %s25 = sadd.s32 1, %s20
    %p26 = scmp.ge.s32.totalorder %s25, 1
    %s27 = scalar_select %p26, 0, %s25
    %s28 = sadd.s32 1, %s19
    %s29 = scalar_select %p26, %s28, %s19
    %p30 = scmp.ge.s32.totalorder %s29, 2
    %s31 = scalar_select %p30, 0, %s29
    %s32 = ssub.s32 %s19, %s31
    %s33 = ssub.s32 %s20, %s27
    %s34 = sor.u32 %s32, %s33
    %p35 = scmp.eq.s32.totalorder %s34, 0
    %s37 = sadd.s32 %s36, 1
    %s38 = scalar_select %p35, %s36, %s37
    %p41 = pneg %p35
    %p42 = scmp.eq.s32.totalorder %s12, 1
    %p43 = por %p41, %p42
    %p44 = scmp.ne.s32.totalorder %s36, %s39
    %p45 = scmp.eq.s32.totalorder %s12, 0
    %p46 = por %p44, %p45
    %p47 = scmp.ne.s32.totalorder %s36, %s39
    %p48 = scmp.eq.s32.totalorder %s17, 1
    %p49 = por %p47, %p48
    %p50 = scmp.ne.s32.totalorder %s39, %s40
    %p51 = scmp.eq.s32.totalorder %s17, 0
    %p52 = por %p50, %p51
    %p53 = scmp.ne.s32.totalorder %s39, %s40
    %p54 = scmp.eq.s32.totalorder %s18, 1
    %p55 = por %p53, %p54
    %p57 = scmp.ne.s32.totalorder %s40, %s56
    %p58 = scmp.eq.s32.totalorder %s18, 0
    %p59 = por %p57, %p58
    %s60 = ssub.s32 %s19, %s31
    %p61 = scmp.eq.s32.totalorder %s60, 0
    %s63 = sadd.s32 %s62, 1
    %s64 = scalar_select %p61, %s62, %s63
    %p67 = pneg %p61
    %p68 = scmp.eq.s32.totalorder %s12, 1
    %p69 = por %p67, %p68
    %p70 = scmp.ne.s32.totalorder %s62, %s65
    %p71 = scmp.eq.s32.totalorder %s12, 0
    %p72 = por %p70, %p71
    %p73 = scmp.ne.s32.totalorder %s62, %s65
    %p74 = scmp.eq.s32.totalorder %s17, 1
    %p75 = por %p73, %p74
    %p76 = scmp.ne.s32.totalorder %s65, %s66
    %p77 = scmp.eq.s32.totalorder %s17, 0
    %p78 = por %p76, %p77
    %p79 = scmp.ne.s32.totalorder %s65, %s66
    %p80 = scmp.eq.s32.totalorder %s18, 1
    %p81 = por %p79, %p80
    %p83 = scmp.ne.s32.totalorder %s66, %s82
    %p84 = scmp.eq.s32.totalorder %s18, 0
    %p85 = por %p83, %p84
    %s86 = ssub.s32 %s20, %s27
    %p87 = scmp.eq.s32.totalorder %s86, 0
    %s89 = sadd.s32 %s88, 1
    %s90 = scalar_select %p87, %s88, %s89
    %p93 = pneg %p87
    %p94 = scmp.eq.s32.totalorder %s12, 1
    %p95 = por %p93, %p94
    %p96 = scmp.ne.s32.totalorder %s88, %s91
    %p97 = scmp.eq.s32.totalorder %s12, 0
    %p98 = por %p96, %p97
    %p99 = scmp.ne.s32.totalorder %s88, %s91
    %p100 = scmp.eq.s32.totalorder %s17, 1
    %p101 = por %p99, %p100
    %p102 = scmp.ne.s32.totalorder %s91, %s92
    %p103 = scmp.eq.s32.totalorder %s17, 0
    %p104 = por %p102, %p103
    %p105 = scmp.ne.s32.totalorder %s91, %s92
    %p106 = scmp.eq.s32.totalorder %s18, 1
    %p107 = por %p105, %p106
    %p109 = scmp.ne.s32.totalorder %s92, %s108
    %p110 = scmp.eq.s32.totalorder %s18, 0
    %p111 = por %p109, %p110
    %s112 = ssub.s32 %s20, %s27
    %p113 = scmp.eq.s32.totalorder %s112, 0
    %s115 = sadd.s32 %s114, 1
    %s116 = scalar_select %p113, %s114, %s115
    %p119 = pneg %p113
    %p120 = scmp.eq.s32.totalorder %s12, 1
    %p121 = por %p119, %p120
    %p122 = scmp.ne.s32.totalorder %s114, %s117
    %p123 = scmp.eq.s32.totalorder %s12, 0
    %p124 = por %p122, %p123
    %p125 = scmp.ne.s32.totalorder %s114, %s117
    %p126 = scmp.eq.s32.totalorder %s17, 1
    %p127 = por %p125, %p126
    %p128 = scmp.ne.s32.totalorder %s117, %s118
    %p129 = scmp.eq.s32.totalorder %s17, 0
    %p130 = por %p128, %p129
    %p131 = scmp.ne.s32.totalorder %s117, %s118
    %p132 = scmp.eq.s32.totalorder %s18, 1
    %p133 = por %p131, %p132
    %p135 = scmp.ne.s32.totalorder %s118, %s134
    %p136 = scmp.eq.s32.totalorder %s18, 0
    %p137 = por %p135, %p136
    %s138 = ssub.s32 %s19, %s31
    %s139 = ssub.s32 %s20, %s27
    %s140 = sor.u32 %s138, %s139
    %p141 = scmp.eq.s32.totalorder %s140, 0
    %s143 = sadd.s32 %s142, 1
    %s144 = scalar_select %p141, %s142, %s143
    %p147 = pneg %p141
    %p148 = scmp.eq.s32.totalorder %s12, 1
    %p149 = por %p147, %p148
    %p150 = scmp.ne.s32.totalorder %s142, %s145
    %p151 = scmp.eq.s32.totalorder %s12, 0
    %p152 = por %p150, %p151
    %p153 = scmp.ne.s32.totalorder %s142, %s145
    %p154 = scmp.eq.s32.totalorder %s17, 1
    %p155 = por %p153, %p154
    %p156 = scmp.ne.s32.totalorder %s145, %s146
    %p157 = scmp.eq.s32.totalorder %s17, 0
    %p158 = por %p156, %p157
    %p159 = scmp.ne.s32.totalorder %s145, %s146
    %p160 = scmp.eq.s32.totalorder %s18, 1
    %p161 = por %p159, %p160
    %p163 = scmp.ne.s32.totalorder %s146, %s162
    %p164 = scmp.eq.s32.totalorder %s18, 0
    %p165 = por %p163, %p164
    %s166 = ssub.s32 %s19, %s31
    %s167 = ssub.s32 %s20, %s27
    %s168 = sor.u32 %s166, %s167
    %p169 = scmp.eq.s32.totalorder %s168, 0
    %s171 = sadd.s32 %s170, 1
    %s172 = scalar_select %p169, %s170, %s171
    %p175 = pneg %p169
    %p176 = scmp.eq.s32.totalorder %s12, 1
    %p177 = por %p175, %p176
    %p178 = scmp.ne.s32.totalorder %s170, %s173
    %p179 = scmp.eq.s32.totalorder %s12, 0
    %p180 = por %p178, %p179
    %p181 = scmp.ne.s32.totalorder %s170, %s173
    %p182 = scmp.eq.s32.totalorder %s17, 1
    %p183 = por %p181, %p182
    %p184 = scmp.ne.s32.totalorder %s173, %s174
    %p185 = scmp.eq.s32.totalorder %s17, 0
    %p186 = por %p184, %p185
    %p187 = scmp.ne.s32.totalorder %s173, %s174
    %p188 = scmp.eq.s32.totalorder %s18, 1
    %p189 = por %p187, %p188
    %p191 = scmp.ne.s32.totalorder %s174, %s190
    %p192 = scmp.eq.s32.totalorder %s18, 0
    %p193 = por %p191, %p192
    %p194 = scmp.le.s32.totalorder 1, %s12
    %p195 = scmp.lt.s32.totalorder %s12, 3
    %p196 = pnand %p194, %p195
    %p197 = pneg %p196
    // Predicated region
    $region9: #{focalnet_block_fwd.5} parent=5 // pred_check
      _
    $region10: #{focalnet_block_fwd.5} parent=5 // pred_check_branch
      %199 = sbr.rel (%p196) target = $region12
    $region11: #{focalnet_block_fwd.5} parent=5 // pred_region
      %s200 = ssub.s32 %s12, 1
      // Predicated region
      $region13: #{focalnet_block_fwd.5} parent=11 // pred_check
        %p201 = pneg %p104
      $region14: #{focalnet_block_fwd.5} parent=11 // pred_check_branch
        %203 = sbr.rel (%p201) target = $region16
      $region15: #{focalnet_block_fwd.5} parent=11 // pred_region
        %p204 = scmp.lt.s32.totalorder %s22, 0
        %s205 = scalar_select %p204, %s22, 0
        %s206 = smul.addr %s205, 4
        %s207 = scalar_lea.vmem %s2, %s206
      $region16: #{focalnet_block_fwd.5} parent=11 // pred_fallthru
        _
      // Predicated region
      $region17: #{focalnet_block_fwd.5} parent=11 // pred_check
        %p208 = pneg %p130
      $region18: #{focalnet_block_fwd.5} parent=11 // pred_check_branch
        %210 = sbr.rel (%p208) target = $region20
      $region19: #{focalnet_block_fwd.5} parent=11 // pred_region
        %p211 = scmp.lt.s32.totalorder %s22, 0
        %s212 = scalar_select %p211, %s22, 0
        %s213 = smul.addr %s212, 8
        %s214 = scalar_lea.vmem %s3, %s213
      $region20: #{focalnet_block_fwd.5} parent=11 // pred_fallthru
        _
    $region12: #{focalnet_block_fwd.5} parent=5 // pred_fallthru
      _
    %p215 = scmp.lt.s32.totalorder %s12, 2
    // Predicated region
    $region21: #{focalnet_block_fwd.5} parent=5 // pred_check
      %p216 = pneg %p215
    $region22: #{focalnet_block_fwd.5} parent=5 // pred_check_branch
      %218 = sbr.rel (%p216) target = $region24
    $region23: #{focalnet_block_fwd.5} parent=5 // pred_region
      // Predicated region
      $region25: #{focalnet_block_fwd.5} parent=23 // pred_check
        %p219 = pneg %p46
      $region26: #{focalnet_block_fwd.5} parent=23 // pred_check_branch
        %221 = sbr.rel (%p219) target = $region28
      $region27: #{focalnet_block_fwd.5} parent=23 // pred_region
        %p222 = scmp.lt.s32.totalorder %s19, 1
        %s223 = scalar_select %p222, %s19, 1
        %p224 = scmp.lt.s32.totalorder %s20, 0
        %s225 = scalar_select %p224, %s20, 0
        %s226 = smul.addr %s223, 32
        %s227 = sadd.s32 %s225, %s226
        %s228 = smul.addr %s227, 4
        %s229 = scalar_lea.vmem %s0, %s228
      $region28: #{focalnet_block_fwd.5} parent=23 // pred_fallthru
        _
      // Predicated region
      $region29: #{focalnet_block_fwd.5} parent=23 // pred_check
        %p230 = pneg %p72
      $region30: #{focalnet_block_fwd.5} parent=23 // pred_check_branch
        %232 = sbr.rel (%p230) target = $region32
      $region31: #{focalnet_block_fwd.5} parent=23 // pred_region
        %p233 = scmp.lt.s32.totalorder %s19, 1
        %s234 = scalar_select %p233, %s19, 1
        %s235 = smul.addr %s234, 32
        %s236 = smul.addr %s235, 4
        %s237 = scalar_lea.vmem %s1, %s236
      $region32: #{focalnet_block_fwd.5} parent=23 // pred_fallthru
        _
    $region24: #{focalnet_block_fwd.5} parent=5 // pred_fallthru
      _
    %p238 = scmp.le.s32.totalorder 1, %s12
    %p239 = scmp.lt.s32.totalorder %s12, 3
    %p240 = pnand %p238, %p239
    %p241 = pneg %p240
    // Predicated region
    $region33: #{focalnet_block_fwd.5} parent=5 // pred_check
      _
    $region34: #{focalnet_block_fwd.5} parent=5 // pred_check_branch
      %243 = sbr.rel (%p240) target = $region36
    $region35: #{focalnet_block_fwd.5} parent=5 // pred_region
      %s244 = ssub.s32 %s12, 1
      %p245 = scmp.lt.s32.totalorder %s21, 1
      %s246 = scalar_select %p245, %s21, 1
      %p247 = scmp.lt.s32.totalorder %s22, 0
      %s248 = scalar_select %p247, %s22, 0
      %s249 = smul.addr %s246, 32
      %s250 = sadd.s32 %s248, %s249
      %s251 = smul.addr %s250, 4
      %s252 = scalar_lea.vmem %s0, %s251
      %p253 = pneg %p52
      %p254 = pneg %p49
      %p255 = scmp.lt.s32.totalorder %s21, 1
      %s256 = scalar_select %p255, %s21, 1
      %s257 = smul.addr %s256, 32
      %s258 = smul.addr %s257, 4
      %s259 = scalar_lea.vmem %s1, %s258
      %p260 = pneg %p78
      %p261 = pneg %p75
      %p262 = scmp.lt.s32.totalorder %s22, 0
      %s263 = scalar_select %p262, %s22, 0
      %s264 = smul.addr %s263, 4
      %s265 = scalar_lea.vmem %s2, %s264
      %p266 = pneg %p104
      %p267 = pneg %p101
      %p268 = scmp.lt.s32.totalorder %s22, 0
      %s269 = scalar_select %p268, %s22, 0
      %s270 = smul.addr %s269, 8
      %s271 = scalar_lea.vmem %s3, %s270
      %p272 = pneg %p130
      %p273 = pneg %p127
      %p274 = pneg %p158
      %p275 = pneg %p155
      %p276 = scmp.lt.s32.totalorder %s21, 1
      %s277 = scalar_select %p276, %s21, 1
      %p278 = scmp.lt.s32.totalorder %s22, 0
      %s279 = scalar_select %p278, %s22, 0
      %s280 = smul.addr %s277, 32
      %s281 = sadd.s32 %s279, %s280
      %s282 = smul.addr %s281, 4
      %s283 = scalar_lea.vmem %s4, %s282
      %p284 = pneg %p186
      %p285 = pneg %p183
      %p286 = scmp.lt.s32.totalorder %s21, 1
      %s287 = scalar_select %p286, %s21, 1
      %p288 = scmp.lt.s32.totalorder %s22, 0
      %s289 = scalar_select %p288, %s22, 0
      %s290 = sadd.s32 %s289, %s287
      %s291 = scalar_lea.vmem %s5, %s290
      %p292 = scmp.lt.s32.totalorder %s21, 1
      %s293 = scalar_select %p292, %s21, 1
      %p294 = scmp.lt.s32.totalorder %s22, 0
      %s295 = scalar_select %p294, %s22, 0
      %s296 = smul.addr %s293, 32
      %s297 = sadd.s32 %s295, %s296
      %s298 = smul.addr %s297, 4
      %s299 = scalar_lea.vmem %s0, %s298
      %p300 = scmp.lt.s32.totalorder %s21, 1
      %s301 = scalar_select %p300, %s21, 1
      %s302 = smul.addr %s301, 32
      %s303 = smul.addr %s302, 4
      %s304 = scalar_lea.vmem %s1, %s303
      %p305 = scmp.lt.s32.totalorder %s22, 0
      %s306 = scalar_select %p305, %s22, 0
      %s307 = smul.addr %s306, 4
      %s308 = scalar_lea.vmem %s2, %s307
      %p309 = scmp.lt.s32.totalorder %s22, 0
      %s310 = scalar_select %p309, %s22, 0
      %s311 = smul.addr %s310, 8
      %s312 = scalar_lea.vmem %s3, %s311
      %p313 = scmp.lt.s32.totalorder %s21, 1
      %s314 = scalar_select %p313, %s21, 1
      %p315 = scmp.lt.s32.totalorder %s22, 0
      %s316 = scalar_select %p315, %s22, 0
      %s317 = smul.addr %s314, 32
      %s318 = sadd.s32 %s316, %s317
      %s319 = smul.addr %s318, 4
      %s320 = scalar_lea.vmem %s4, %s319
      %p321 = scmp.lt.s32.totalorder %s21, 1
      %s322 = scalar_select %p321, %s21, 1
      %p323 = scmp.lt.s32.totalorder %s22, 0
      %s324 = scalar_select %p323, %s22, 0
      %s325 = sadd.s32 %s324, %s322
      %s326 = scalar_lea.vmem %s5, %s325
      %vm327 = vcmask 261120
      %328 = vst.msk [vmem:[#allocation2] sm:$0xff] %vm327, 0.0
      %329 = vst.msk [vmem:[#allocation2 + $0x8] sm:$0xff] %vm327, 0.0
      %330 = vst.msk [vmem:[#allocation2 + $0x10] sm:$0xff] %vm327, 0.0
      %vm331 = vcmask 254976
      %332 = vst.msk [vmem:[#allocation2 + $0x18] sm:$0x3] %vm331, 0.0
      %333 = vst.msk [vmem:[#allocation2 + $0x20] sm:$0xff] %vm327, 0.0
      %334 = vst.msk [vmem:[#allocation2 + $0x28] sm:$0xff] %vm327, 0.0
      %335 = vst.msk [vmem:[#allocation2 + $0x30] sm:$0xff] %vm327, 0.0
      %336 = vst.msk [vmem:[#allocation2 + $0x38] sm:$0x3] %vm331, 0.0
      %337 = vst.msk [vmem:[#allocation2 + $0x40] sm:$0xff] %vm327, 0.0
      %338 = vst.msk [vmem:[#allocation2 + $0x48] sm:$0xff] %vm327, 0.0
      %339 = vst.msk [vmem:[#allocation2 + $0x50] sm:$0xff] %vm327, 0.0
      %340 = vst.msk [vmem:[#allocation2 + $0x58] sm:$0x3] %vm331, 0.0
      %341 = vst.msk [vmem:[#allocation2 + $0x60] sm:$0xff] %vm327, 0.0
      %342 = vst.msk [vmem:[#allocation2 + $0x68] sm:$0xff] %vm327, 0.0
      %343 = vst.msk [vmem:[#allocation2 + $0x70] sm:$0xff] %vm327, 0.0
      %344 = vst.msk [vmem:[#allocation2 + $0x78] sm:$0x3] %vm331, 0.0
      %345 = vst.msk [vmem:[#allocation2 + $0x80] sm:$0xff] %vm327, 0.0
      %346 = vst.msk [vmem:[#allocation2 + $0x88] sm:$0xff] %vm327, 0.0
      %347 = vst.msk [vmem:[#allocation2 + $0x90] sm:$0xff] %vm327, 0.0
      %348 = vst.msk [vmem:[#allocation2 + $0x98] sm:$0x3] %vm331, 0.0
      %349 = vst.msk [vmem:[#allocation2 + $0xa0] sm:$0xff] %vm327, 0.0
      %350 = vst.msk [vmem:[#allocation2 + $0xa8] sm:$0xff] %vm327, 0.0
      %351 = vst.msk [vmem:[#allocation2 + $0xb0] sm:$0xff] %vm327, 0.0
      %352 = vst.msk [vmem:[#allocation2 + $0xb8] sm:$0x3] %vm331, 0.0
      %353 = vst.msk [vmem:[#allocation2 + $0xc0] sm:$0xff] %vm327, 0.0
      %354 = vst.msk [vmem:[#allocation2 + $0xc8] sm:$0xff] %vm327, 0.0
      %355 = vst.msk [vmem:[#allocation2 + $0xd0] sm:$0xff] %vm327, 0.0
      %356 = vst.msk [vmem:[#allocation2 + $0xd8] sm:$0x3] %vm331, 0.0
      %357 = vst.msk [vmem:[#allocation2 + $0xe0] sm:$0xff] %vm327, 0.0
      %358 = vst.msk [vmem:[#allocation2 + $0xe8] sm:$0xff] %vm327, 0.0
      %359 = vst.msk [vmem:[#allocation2 + $0xf0] sm:$0xff] %vm327, 0.0
      %360 = vst.msk [vmem:[#allocation2 + $0xf8] sm:$0x3] %vm331, 0.0
      %361 = vst.msk [vmem:[#allocation2 + $0x100] sm:$0xff] %vm327, 0.0
      %362 = vst.msk [vmem:[#allocation2 + $0x108] sm:$0xff] %vm327, 0.0
      %363 = vst.msk [vmem:[#allocation2 + $0x110] sm:$0xff] %vm327, 0.0
      %364 = vst.msk [vmem:[#allocation2 + $0x118] sm:$0x3] %vm331, 0.0
      %365 = vst.msk [vmem:[#allocation2 + $0x120] sm:$0xff] %vm327, 0.0
      %366 = vst.msk [vmem:[#allocation2 + $0x128] sm:$0xff] %vm327, 0.0
      %367 = vst.msk [vmem:[#allocation2 + $0x130] sm:$0xff] %vm327, 0.0
      %368 = vst.msk [vmem:[#allocation2 + $0x138] sm:$0x3] %vm331, 0.0
      %369 = vst.msk [vmem:[#allocation2 + $0x140] sm:$0xff] %vm327, 0.0
      %370 = vst.msk [vmem:[#allocation2 + $0x148] sm:$0xff] %vm327, 0.0
      %371 = vst.msk [vmem:[#allocation2 + $0x150] sm:$0xff] %vm327, 0.0
      %372 = vst.msk [vmem:[#allocation2 + $0x158] sm:$0x3] %vm331, 0.0
      %373 = vst.msk [vmem:[#allocation2 + $0x160] sm:$0xff] %vm327, 0.0
      %374 = vst.msk [vmem:[#allocation2 + $0x168] sm:$0xff] %vm327, 0.0
      %375 = vst.msk [vmem:[#allocation2 + $0x170] sm:$0xff] %vm327, 0.0
      %376 = vst.msk [vmem:[#allocation2 + $0x178] sm:$0x3] %vm331, 0.0
      %377 = vst.msk [vmem:[#allocation2 + $0x180] sm:$0xff] %vm327, 0.0
      %378 = vst.msk [vmem:[#allocation2 + $0x188] sm:$0xff] %vm327, 0.0
      %379 = vst.msk [vmem:[#allocation2 + $0x190] sm:$0xff] %vm327, 0.0
      %380 = vst.msk [vmem:[#allocation2 + $0x198] sm:$0x3] %vm331, 0.0
      %381 = vst.msk [vmem:[#allocation2 + $0x1a0] sm:$0xff] %vm327, 0.0
      %382 = vst.msk [vmem:[#allocation2 + $0x1a8] sm:$0xff] %vm327, 0.0
      %383 = vst.msk [vmem:[#allocation2 + $0x1b0] sm:$0xff] %vm327, 0.0
      %384 = vst.msk [vmem:[#allocation2 + $0x1b8] sm:$0x3] %vm331, 0.0
      %385 = vst.msk [vmem:[#allocation2 + $0x1c0] sm:$0xff] %vm327, 0.0
      %386 = vst.msk [vmem:[#allocation2 + $0x1c8] sm:$0xff] %vm327, 0.0
      %387 = vst.msk [vmem:[#allocation2 + $0x1d0] sm:$0xff] %vm327, 0.0
      %388 = vst.msk [vmem:[#allocation2 + $0x1d8] sm:$0x3] %vm331, 0.0
      %389 = vst.msk [vmem:[#allocation2 + $0x1e0] sm:$0xff] %vm327, 0.0
      %390 = vst.msk [vmem:[#allocation2 + $0x1e8] sm:$0xff] %vm327, 0.0
      %391 = vst.msk [vmem:[#allocation2 + $0x1f0] sm:$0xff] %vm327, 0.0
      %392 = vst.msk [vmem:[#allocation2 + $0x1f8] sm:$0x3] %vm331, 0.0
      %393 = vst.msk [vmem:[#allocation2 + $0x200] sm:$0xff] %vm327, 0.0
      %394 = vst.msk [vmem:[#allocation2 + $0x208] sm:$0xff] %vm327, 0.0
      %395 = vst.msk [vmem:[#allocation2 + $0x210] sm:$0xff] %vm327, 0.0
      %396 = vst.msk [vmem:[#allocation2 + $0x218] sm:$0x3] %vm331, 0.0
      %397 = vst.msk [vmem:[#allocation2 + $0x220] sm:$0xff] %vm327, 0.0
      %398 = vst.msk [vmem:[#allocation2 + $0x228] sm:$0xff] %vm327, 0.0
      %399 = vst.msk [vmem:[#allocation2 + $0x230] sm:$0xff] %vm327, 0.0
      %400 = vst.msk [vmem:[#allocation2 + $0x238] sm:$0x3] %vm331, 0.0
      %401 = vst.msk [vmem:[#allocation2 + $0x240] sm:$0xff] %vm327, 0.0
      %402 = vst.msk [vmem:[#allocation2 + $0x248] sm:$0xff] %vm327, 0.0
      %403 = vst.msk [vmem:[#allocation2 + $0x250] sm:$0xff] %vm327, 0.0
      %404 = vst.msk [vmem:[#allocation2 + $0x258] sm:$0x3] %vm331, 0.0
      %405 = vst.msk [vmem:[#allocation2 + $0x260] sm:$0xff] %vm327, 0.0
      %406 = vst.msk [vmem:[#allocation2 + $0x268] sm:$0xff] %vm327, 0.0
      %407 = vst.msk [vmem:[#allocation2 + $0x270] sm:$0xff] %vm327, 0.0
      %408 = vst.msk [vmem:[#allocation2 + $0x278] sm:$0x3] %vm331, 0.0
      %v409 = vld [vmem:[%s299] sm:$0xf]
      %v410 = vld [vmem:[%s299 + $0x4] sm:$0xf]
      %v411 = vld [vmem:[%s299 + $0x8] sm:$0xf]
      %v412 = vld [vmem:[%s299 + $0xc] sm:$0xf]
      %v413 = vld [vmem:[%s299 + $0x10] sm:$0xf]
      %v414 = vld [vmem:[%s299 + $0x14] sm:$0xf]
      %v415 = vld [vmem:[%s299 + $0x18] sm:$0xf]
      %v416 = vld [vmem:[%s299 + $0x1c] sm:$0xf]
      %v417 = vld [vmem:[%s299 + $0x20] sm:$0xf]
      %v418 = vld [vmem:[%s299 + $0x24] sm:$0xf]
      %v419 = vld [vmem:[%s299 + $0x28] sm:$0xf]
      %v420 = vld [vmem:[%s299 + $0x2c] sm:$0xf]
      %v421 = vld [vmem:[%s299 + $0x30] sm:$0xf]
      %v422 = vld [vmem:[%s299 + $0x34] sm:$0xf]
      %v423 = vld [vmem:[%s299 + $0x38] sm:$0xf]
      %v424 = vld [vmem:[%s299 + $0x3c] sm:$0xf]
      %v425 = vld [vmem:[%s299 + $0x40] sm:$0xf]
      %v426 = vld [vmem:[%s299 + $0x44] sm:$0xf]
      %v427 = vld [vmem:[%s299 + $0x48] sm:$0xf]
      %v428 = vld [vmem:[%s299 + $0x4c] sm:$0xf]
      %v429 = vld [vmem:[%s299 + $0x50] sm:$0xf]
      %v430 = vld [vmem:[%s299 + $0x54] sm:$0xf]
      %v431 = vld [vmem:[%s299 + $0x58] sm:$0xf]
      %v432 = vld [vmem:[%s299 + $0x5c] sm:$0xf]
      %v433 = vld [vmem:[%s299 + $0x60] sm:$0xf]
      %v434 = vld [vmem:[%s299 + $0x64] sm:$0xf]
      %v435 = vld [vmem:[%s299 + $0x68] sm:$0xf]
      %v436 = vld [vmem:[%s299 + $0x6c] sm:$0xf]
      %v437 = vld [vmem:[%s299 + $0x70] sm:$0xf]
      %v438 = vld [vmem:[%s299 + $0x74] sm:$0xf]
      %v439 = vld [vmem:[%s299 + $0x78] sm:$0xf]
      %v440 = vld [vmem:[%s299 + $0x7c] sm:$0xf]
      %v441 = vunpack.c.l.bf16 %v409
      %v442 = vunpack.c.l.bf16 %v410
      %v443 = vunpack.c.l.bf16 %v411
      %v444 = vunpack.c.l.bf16 %v412
      %v445 = vunpack.c.l.bf16 %v413
      %v446 = vunpack.c.l.bf16 %v414
      %v447 = vunpack.c.l.bf16 %v415
      %v448 = vunpack.c.l.bf16 %v416
      %v449 = vunpack.c.l.bf16 %v417
      %v450 = vunpack.c.l.bf16 %v418
      %v451 = vunpack.c.l.bf16 %v419
      %v452 = vunpack.c.l.bf16 %v420
      %v453 = vunpack.c.l.bf16 %v421
      %v454 = vunpack.c.l.bf16 %v422
      %v455 = vunpack.c.l.bf16 %v423
      %v456 = vunpack.c.l.bf16 %v424
      %v457 = vunpack.c.l.bf16 %v425
      %v458 = vunpack.c.l.bf16 %v426
      %v459 = vunpack.c.l.bf16 %v427
      %v460 = vunpack.c.l.bf16 %v428
      %v461 = vunpack.c.l.bf16 %v429
      %v462 = vunpack.c.l.bf16 %v430
      %v463 = vunpack.c.l.bf16 %v431
      %v464 = vunpack.c.l.bf16 %v432
      %v465 = vunpack.c.l.bf16 %v433
      %v466 = vunpack.c.l.bf16 %v434
      %v467 = vunpack.c.l.bf16 %v435
      %v468 = vunpack.c.l.bf16 %v436
      %v469 = vunpack.c.l.bf16 %v437
      %v470 = vunpack.c.l.bf16 %v438
      %v471 = vunpack.c.l.bf16 %v439
      %v472 = vunpack.c.l.bf16 %v440
      %v473 = vld [vmem:[%s304] sm:$0xf]
      %v474 = vld [vmem:[%s304 + $0x4] sm:$0xf]
      %v475 = vld [vmem:[%s304 + $0x8] sm:$0xf]
      %v476 = vld [vmem:[%s304 + $0xc] sm:$0xf]
      %v477 = vld [vmem:[%s304 + $0x10] sm:$0xf]
      %v478 = vld [vmem:[%s304 + $0x14] sm:$0xf]
      %v479 = vld [vmem:[%s304 + $0x18] sm:$0xf]
      %v480 = vld [vmem:[%s304 + $0x1c] sm:$0xf]
      %v481 = vld [vmem:[%s304 + $0x20] sm:$0xf]
      %v482 = vld [vmem:[%s304 + $0x24] sm:$0xf]
      %v483 = vld [vmem:[%s304 + $0x28] sm:$0xf]
      %v484 = vld [vmem:[%s304 + $0x2c] sm:$0xf]
      %v485 = vld [vmem:[%s304 + $0x30] sm:$0xf]
      %v486 = vld [vmem:[%s304 + $0x34] sm:$0xf]
      %v487 = vld [vmem:[%s304 + $0x38] sm:$0xf]
      %v488 = vld [vmem:[%s304 + $0x3c] sm:$0xf]
      %v489 = vld [vmem:[%s304 + $0x40] sm:$0xf]
      %v490 = vld [vmem:[%s304 + $0x44] sm:$0xf]
      %v491 = vld [vmem:[%s304 + $0x48] sm:$0xf]
      %v492 = vld [vmem:[%s304 + $0x4c] sm:$0xf]
      %v493 = vld [vmem:[%s304 + $0x50] sm:$0xf]
      %v494 = vld [vmem:[%s304 + $0x54] sm:$0xf]
      %v495 = vld [vmem:[%s304 + $0x58] sm:$0xf]
      %v496 = vld [vmem:[%s304 + $0x5c] sm:$0xf]
      %v497 = vld [vmem:[%s304 + $0x60] sm:$0xf]
      %v498 = vld [vmem:[%s304 + $0x64] sm:$0xf]
      %v499 = vld [vmem:[%s304 + $0x68] sm:$0xf]
      %v500 = vld [vmem:[%s304 + $0x6c] sm:$0xf]
      %v501 = vld [vmem:[%s304 + $0x70] sm:$0xf]
      %v502 = vld [vmem:[%s304 + $0x74] sm:$0xf]
      %v503 = vld [vmem:[%s304 + $0x78] sm:$0xf]
      %v504 = vld [vmem:[%s304 + $0x7c] sm:$0xf]
      %v505 = vunpack.c.l.bf16 %v473
      %v506 = vunpack.c.l.bf16 %v474
      %v507 = vunpack.c.l.bf16 %v475
      %v508 = vunpack.c.l.bf16 %v476
      %v509 = vunpack.c.l.bf16 %v477
      %v510 = vunpack.c.l.bf16 %v478
      %v511 = vunpack.c.l.bf16 %v479
      %v512 = vunpack.c.l.bf16 %v480
      %v513 = vunpack.c.l.bf16 %v481
      %v514 = vunpack.c.l.bf16 %v482
      %v515 = vunpack.c.l.bf16 %v483
      %v516 = vunpack.c.l.bf16 %v484
      %v517 = vunpack.c.l.bf16 %v485
      %v518 = vunpack.c.l.bf16 %v486
      %v519 = vunpack.c.l.bf16 %v487
      %v520 = vunpack.c.l.bf16 %v488
      %v521 = vunpack.c.l.bf16 %v489
      %v522 = vunpack.c.l.bf16 %v490
      %v523 = vunpack.c.l.bf16 %v491
      %v524 = vunpack.c.l.bf16 %v492
      %v525 = vunpack.c.l.bf16 %v493
      %v526 = vunpack.c.l.bf16 %v494
      %v527 = vunpack.c.l.bf16 %v495
      %v528 = vunpack.c.l.bf16 %v496
      %v529 = vunpack.c.l.bf16 %v497
      %v530 = vunpack.c.l.bf16 %v498
      %v531 = vunpack.c.l.bf16 %v499
      %v532 = vunpack.c.l.bf16 %v500
      %v533 = vunpack.c.l.bf16 %v501
      %v534 = vunpack.c.l.bf16 %v502
      %v535 = vunpack.c.l.bf16 %v503
      %v536 = vunpack.c.l.bf16 %v504
      %s537 = scalar_lea.vmem [#allocation2], 64
      %538 = vst.msk [vmem:[%s537 + $0x8] sm:$0xff] %vm327, %v441
      %539 = vst.msk [vmem:[%s537 + $0x10] sm:$0xff] %vm327, %v442
      %540 = vst.msk [vmem:[%s537 + $0x28] sm:$0xff] %vm327, %v443
      %541 = vst.msk [vmem:[%s537 + $0x30] sm:$0xff] %vm327, %v444
      %542 = vst.msk [vmem:[%s537 + $0x48] sm:$0xff] %vm327, %v445
      %543 = vst.msk [vmem:[%s537 + $0x50] sm:$0xff] %vm327, %v446
      %544 = vst.msk [vmem:[%s537 + $0x68] sm:$0xff] %vm327, %v447
      %545 = vst.msk [vmem:[%s537 + $0x70] sm:$0xff] %vm327, %v448
      %546 = vst.msk [vmem:[%s537 + $0x88] sm:$0xff] %vm327, %v449
      %547 = vst.msk [vmem:[%s537 + $0x90] sm:$0xff] %vm327, %v450
      %548 = vst.msk [vmem:[%s537 + $0xa8] sm:$0xff] %vm327, %v451
      %549 = vst.msk [vmem:[%s537 + $0xb0] sm:$0xff] %vm327, %v452
      %550 = vst.msk [vmem:[%s537 + $0xc8] sm:$0xff] %vm327, %v453
      %551 = vst.msk [vmem:[%s537 + $0xd0] sm:$0xff] %vm327, %v454
      %552 = vst.msk [vmem:[%s537 + $0xe8] sm:$0xff] %vm327, %v455
      %553 = vst.msk [vmem:[%s537 + $0xf0] sm:$0xff] %vm327, %v456
      %554 = vst.msk [vmem:[%s537 + $0x108] sm:$0xff] %vm327, %v457
      %555 = vst.msk [vmem:[%s537 + $0x110] sm:$0xff] %vm327, %v458
      %556 = vst.msk [vmem:[%s537 + $0x128] sm:$0xff] %vm327, %v459
      %557 = vst.msk [vmem:[%s537 + $0x130] sm:$0xff] %vm327, %v460
      %558 = vst.msk [vmem:[%s537 + $0x148] sm:$0xff] %vm327, %v461
      %559 = vst.msk [vmem:[%s537 + $0x150] sm:$0xff] %vm327, %v462
      %560 = vst.msk [vmem:[%s537 + $0x168] sm:$0xff] %vm327, %v463
      %561 = vst.msk [vmem:[%s537 + $0x170] sm:$0xff] %vm327, %v464
      %562 = vst.msk [vmem:[%s537 + $0x188] sm:$0xff] %vm327, %v465
      %563 = vst.msk [vmem:[%s537 + $0x190] sm:$0xff] %vm327, %v466
      %564 = vst.msk [vmem:[%s537 + $0x1a8] sm:$0xff] %vm327, %v467
      %565 = vst.msk [vmem:[%s537 + $0x1b0] sm:$0xff] %vm327, %v468
      %566 = vst.msk [vmem:[%s537 + $0x1c8] sm:$0xff] %vm327, %v469
      %567 = vst.msk [vmem:[%s537 + $0x1d0] sm:$0xff] %vm327, %v470
      %568 = vst.msk [vmem:[%s537 + $0x1e8] sm:$0xff] %vm327, %v471
      %569 = vst.msk [vmem:[%s537 + $0x1f0] sm:$0xff] %vm327, %v472
      %v570 = vld [vmem:[%s308] sm:$0x7]
      %v571 = vld [vmem:[%s308 + $0x4] sm:$0x7]
      %v572 = vld [vmem:[%s308 + $0x8] sm:$0x7]
      %v573 = vld [vmem:[#allocation2 + $0x27] sm:$0xff]
      %v574 = vld [vmem:[#allocation2 + $0x2f] sm:$0xff]
      %v575 = vld [vmem:[#allocation2 + $0x47] sm:$0xff]
      %v576 = vld [vmem:[#allocation2 + $0x4f] sm:$0xff]
      %v577 = vld [vmem:[#allocation2 + $0x67] sm:$0xff]
      %v578 = vld [vmem:[#allocation2 + $0x6f] sm:$0xff]
      %v579 = vld [vmem:[#allocation2 + $0x87] sm:$0xff]
      %v580 = vld [vmem:[#allocation2 + $0x8f] sm:$0xff]
      %v581 = vld [vmem:[#allocation2 + $0xa7] sm:$0xff]
      %v582 = vld [vmem:[#allocation2 + $0xaf] sm:$0xff]
      %v583 = vld [vmem:[#allocation2 + $0xc7] sm:$0xff]
      %v584 = vld [vmem:[#allocation2 + $0xcf] sm:$0xff]
      %v585 = vld [vmem:[#allocation2 + $0xe7] sm:$0xff]
      %v586 = vld [vmem:[#allocation2 + $0xef] sm:$0xff]
      %v587 = vld [vmem:[#allocation2 + $0x107] sm:$0xff]
      %v588 = vld [vmem:[#allocation2 + $0x10f] sm:$0xff]
      %v589 = vld [vmem:[#allocation2 + $0x127] sm:$0xff]
      %v590 = vld [vmem:[#allocation2 + $0x12f] sm:$0xff]
      %v591 = vld [vmem:[#allocation2 + $0x147] sm:$0xff]
      %v592 = vld [vmem:[#allocation2 + $0x14f] sm:$0xff]
      %v593 = vld [vmem:[#allocation2 + $0x167] sm:$0xff]
      %v594 = vld [vmem:[#allocation2 + $0x16f] sm:$0xff]
      %v595 = vld [vmem:[#allocation2 + $0x187] sm:$0xff]
      %v596 = vld [vmem:[#allocation2 + $0x18f] sm:$0xff]
      %v597 = vld [vmem:[#allocation2 + $0x1a7] sm:$0xff]
      %v598 = vld [vmem:[#allocation2 + $0x1af] sm:$0xff]
      %v599 = vld [vmem:[#allocation2 + $0x1c7] sm:$0xff]
      %v600 = vld [vmem:[#allocation2 + $0x1cf] sm:$0xff]
      %v601 = vld [vmem:[#allocation2 + $0x1e7] sm:$0xff]
      %v602 = vld [vmem:[#allocation2 + $0x1ef] sm:$0xff]
      %v603 = vld [vmem:[#allocation2 + $0x207] sm:$0xff]
      %v604 = vld [vmem:[#allocation2 + $0x20f] sm:$0xff]
      %v605 = vld [vmem:[#allocation2 + $0x227] sm:$0xff]
      %v606 = vld [vmem:[#allocation2 + $0x22f] sm:$0xff]
      %v607 = vld [vmem:[#allocation2 + $0x247] sm:$0xff]
      %v608 = vld [vmem:[#allocation2 + $0x24f] sm:$0xff]
      %v609 = vlaneseq
      %v610 = vshrl.u32 %v609, 7
      %v611 = vsub.s32 0, %v610
      %v612 = vrot.slane %v570, %v611
      %v613 = vmul.f32 %v573, %v612
      %v614 = vmul.f32 %v574, %v612
      %v615 = vmul.f32 %v575, %v612
      %v616 = vmul.f32 %v576, %v612
      %v617 = vmul.f32 %v577, %v612
      %v618 = vmul.f32 %v578, %v612
      %v619 = vmul.f32 %v579, %v612
      %v620 = vmul.f32 %v580, %v612
      %v621 = vmul.f32 %v581, %v612
      %v622 = vmul.f32 %v582, %v612
      %v623 = vmul.f32 %v583, %v612
      %v624 = vmul.f32 %v584, %v612
      %v625 = vmul.f32 %v585, %v612
      %v626 = vmul.f32 %v586, %v612
      %v627 = vmul.f32 %v587, %v612
      %v628 = vmul.f32 %v588, %v612
      %v629 = vmul.f32 %v589, %v612
      %v630 = vmul.f32 %v590, %v612
      %v631 = vmul.f32 %v591, %v612
      %v632 = vmul.f32 %v592, %v612
      %v633 = vmul.f32 %v593, %v612
      %v634 = vmul.f32 %v594, %v612
      %v635 = vmul.f32 %v595, %v612
      %v636 = vmul.f32 %v596, %v612
      %v637 = vmul.f32 %v597, %v612
      %v638 = vmul.f32 %v598, %v612
      %v639 = vmul.f32 %v599, %v612
      %v640 = vmul.f32 %v600, %v612
      %v641 = vmul.f32 %v601, %v612
      %v642 = vmul.f32 %v602, %v612
      %v643 = vmul.f32 %v603, %v612
      %v644 = vmul.f32 %v604, %v612
      %v645 = vadd.f32 %v613, 0.0
      %v646 = vadd.f32 %v614, 0.0
      %v647 = vadd.f32 %v615, 0.0
      %v648 = vadd.f32 %v616, 0.0
      %v649 = vadd.f32 %v617, 0.0
      %v650 = vadd.f32 %v618, 0.0
      %v651 = vadd.f32 %v619, 0.0
      %v652 = vadd.f32 %v620, 0.0
      %v653 = vadd.f32 %v621, 0.0
      %v654 = vadd.f32 %v622, 0.0
      %v655 = vadd.f32 %v623, 0.0
      %v656 = vadd.f32 %v624, 0.0
      %v657 = vadd.f32 %v625, 0.0
      %v658 = vadd.f32 %v626, 0.0
      %v659 = vadd.f32 %v627, 0.0
      %v660 = vadd.f32 %v628, 0.0
      %v661 = vadd.f32 %v629, 0.0
      %v662 = vadd.f32 %v630, 0.0
      %v663 = vadd.f32 %v631, 0.0
      %v664 = vadd.f32 %v632, 0.0
      %v665 = vadd.f32 %v633, 0.0
      %v666 = vadd.f32 %v634, 0.0
      %v667 = vadd.f32 %v635, 0.0
      %v668 = vadd.f32 %v636, 0.0
      %v669 = vadd.f32 %v637, 0.0
      %v670 = vadd.f32 %v638, 0.0
      %v671 = vadd.f32 %v639, 0.0
      %v672 = vadd.f32 %v640, 0.0
      %v673 = vadd.f32 %v641, 0.0
      %v674 = vadd.f32 %v642, 0.0
      %v675 = vadd.f32 %v643, 0.0
      %v676 = vadd.f32 %v644, 0.0
      %v677 = vlaneseq
      %v678 = vshrl.u32 %v677, 7
      %v679 = vsub.s32 0, %v678
      %v680 = vrot.slane %v571, %v679
      %v681 = vmul.f32 %v575, %v680
      %v682 = vmul.f32 %v576, %v680
      %v683 = vmul.f32 %v577, %v680
      %v684 = vmul.f32 %v578, %v680
      %v685 = vmul.f32 %v579, %v680
      %v686 = vmul.f32 %v580, %v680
      %v687 = vmul.f32 %v581, %v680
      %v688 = vmul.f32 %v582, %v680
      %v689 = vmul.f32 %v583, %v680
      %v690 = vmul.f32 %v584, %v680
      %v691 = vmul.f32 %v585, %v680
      %v692 = vmul.f32 %v586, %v680
      %v693 = vmul.f32 %v587, %v680
      %v694 = vmul.f32 %v588, %v680
      %v695 = vmul.f32 %v589, %v680
      %v696 = vmul.f32 %v590, %v680
      %v697 = vmul.f32 %v591, %v680
      %v698 = vmul.f32 %v592, %v680
      %v699 = vmul.f32 %v593, %v680
      %v700 = vmul.f32 %v594, %v680
      %v701 = vmul.f32 %v595, %v680
      %v702 = vmul.f32 %v596, %v680
      %v703 = vmul.f32 %v597, %v680
      %v704 = vmul.f32 %v598, %v680
      %v705 = vmul.f32 %v599, %v680
      %v706 = vmul.f32 %v600, %v680
      %v707 = vmul.f32 %v601, %v680
      %v708 = vmul.f32 %v602, %v680
      %v709 = vmul.f32 %v603, %v680
      %v710 = vmul.f32 %v604, %v680
      %v711 = vmul.f32 %v605, %v680
      %v712 = vmul.f32 %v606, %v680
      %v713 = vadd.f32 %v645, %v681
      %v714 = vadd.f32 %v646, %v682
      %v715 = vadd.f32 %v647, %v683
      %v716 = vadd.f32 %v648, %v684
      %v717 = vadd.f32 %v649, %v685
      %v718 = vadd.f32 %v650, %v686
      %v719 = vadd.f32 %v651, %v687
      %v720 = vadd.f32 %v652, %v688
      %v721 = vadd.f32 %v653, %v689
      %v722 = vadd.f32 %v654, %v690
      %v723 = vadd.f32 %v655, %v691
      %v724 = vadd.f32 %v656, %v692
      %v725 = vadd.f32 %v657, %v693
      %v726 = vadd.f32 %v658, %v694
      %v727 = vadd.f32 %v659, %v695
      %v728 = vadd.f32 %v660, %v696
      %v729 = vadd.f32 %v661, %v697
      %v730 = vadd.f32 %v662, %v698
      %v731 = vadd.f32 %v663, %v699
      %v732 = vadd.f32 %v664, %v700
      %v733 = vadd.f32 %v665, %v701
      %v734 = vadd.f32 %v666, %v702
      %v735 = vadd.f32 %v667, %v703
      %v736 = vadd.f32 %v668, %v704
      %v737 = vadd.f32 %v669, %v705
      %v738 = vadd.f32 %v670, %v706
      %v739 = vadd.f32 %v671, %v707
      %v740 = vadd.f32 %v672, %v708
      %v741 = vadd.f32 %v673, %v709
      %v742 = vadd.f32 %v674, %v710
      %v743 = vadd.f32 %v675, %v711
      %v744 = vadd.f32 %v676, %v712
      %v745 = vlaneseq
      %v746 = vshrl.u32 %v745, 7
      %v747 = vsub.s32 0, %v746
      %v748 = vrot.slane %v572, %v747
      %v749 = vmul.f32 %v577, %v748
      %v750 = vmul.f32 %v578, %v748
      %v751 = vmul.f32 %v579, %v748
      %v752 = vmul.f32 %v580, %v748
      %v753 = vmul.f32 %v581, %v748
      %v754 = vmul.f32 %v582, %v748
      %v755 = vmul.f32 %v583, %v748
      %v756 = vmul.f32 %v584, %v748
      %v757 = vmul.f32 %v585, %v748
      %v758 = vmul.f32 %v586, %v748
      %v759 = vmul.f32 %v587, %v748
      %v760 = vmul.f32 %v588, %v748
      %v761 = vmul.f32 %v589, %v748
      %v762 = vmul.f32 %v590, %v748
      %v763 = vmul.f32 %v591, %v748
      %v764 = vmul.f32 %v592, %v748
      %v765 = vmul.f32 %v593, %v748
      %v766 = vmul.f32 %v594, %v748
      %v767 = vmul.f32 %v595, %v748
      %v768 = vmul.f32 %v596, %v748
      %v769 = vmul.f32 %v597, %v748
      %v770 = vmul.f32 %v598, %v748
      %v771 = vmul.f32 %v599, %v748
      %v772 = vmul.f32 %v600, %v748
      %v773 = vmul.f32 %v601, %v748
      %v774 = vmul.f32 %v602, %v748
      %v775 = vmul.f32 %v603, %v748
      %v776 = vmul.f32 %v604, %v748
      %v777 = vmul.f32 %v605, %v748
      %v778 = vmul.f32 %v606, %v748
      %v779 = vmul.f32 %v607, %v748
      %v780 = vmul.f32 %v608, %v748
      %v781 = vadd.f32 %v713, %v749
      %v782 = vadd.f32 %v714, %v750
      %v783 = vadd.f32 %v715, %v751
      %v784 = vadd.f32 %v716, %v752
      %v785 = vadd.f32 %v717, %v753
      %v786 = vadd.f32 %v718, %v754
      %v787 = vadd.f32 %v719, %v755
      %v788 = vadd.f32 %v720, %v756
      %v789 = vadd.f32 %v721, %v757
      %v790 = vadd.f32 %v722, %v758
      %v791 = vadd.f32 %v723, %v759
      %v792 = vadd.f32 %v724, %v760
      %v793 = vadd.f32 %v725, %v761
      %v794 = vadd.f32 %v726, %v762
      %v795 = vadd.f32 %v727, %v763
      %v796 = vadd.f32 %v728, %v764
      %v797 = vadd.f32 %v729, %v765
      %v798 = vadd.f32 %v730, %v766
      %v799 = vadd.f32 %v731, %v767
      %v800 = vadd.f32 %v732, %v768
      %v801 = vadd.f32 %v733, %v769
      %v802 = vadd.f32 %v734, %v770
      %v803 = vadd.f32 %v735, %v771
      %v804 = vadd.f32 %v736, %v772
      %v805 = vadd.f32 %v737, %v773
      %v806 = vadd.f32 %v738, %v774
      %v807 = vadd.f32 %v739, %v775
      %v808 = vadd.f32 %v740, %v776
      %v809 = vadd.f32 %v741, %v777
      %v810 = vadd.f32 %v742, %v778
      %v811 = vadd.f32 %v743, %v779
      %v812 = vadd.f32 %v744, %v780
      %v813 = vld [vmem:[#allocation2 + $0x28] sm:$0xff]
      %v814 = vld [vmem:[#allocation2 + $0x30] sm:$0xff]
      %v815 = vld [vmem:[#allocation2 + $0x48] sm:$0xff]
      %v816 = vld [vmem:[#allocation2 + $0x50] sm:$0xff]
      %v817 = vld [vmem:[#allocation2 + $0x68] sm:$0xff]
      %v818 = vld [vmem:[#allocation2 + $0x70] sm:$0xff]
      %v819 = vld [vmem:[#allocation2 + $0x88] sm:$0xff]
      %v820 = vld [vmem:[#allocation2 + $0x90] sm:$0xff]
      %v821 = vld [vmem:[#allocation2 + $0xa8] sm:$0xff]
      %v822 = vld [vmem:[#allocation2 + $0xb0] sm:$0xff]
      %v823 = vld [vmem:[#allocation2 + $0xc8] sm:$0xff]
      %v824 = vld [vmem:[#allocation2 + $0xd0] sm:$0xff]
      %v825 = vld [vmem:[#allocation2 + $0xe8] sm:$0xff]
      %v826 = vld [vmem:[#allocation2 + $0xf0] sm:$0xff]
      %v827 = vld [vmem:[#allocation2 + $0x108] sm:$0xff]
      %v828 = vld [vmem:[#allocation2 + $0x110] sm:$0xff]
      %v829 = vld [vmem:[#allocation2 + $0x128] sm:$0xff]
      %v830 = vld [vmem:[#allocation2 + $0x130] sm:$0xff]
      %v831 = vld [vmem:[#allocation2 + $0x148] sm:$0xff]
      %v832 = vld [vmem:[#allocation2 + $0x150] sm:$0xff]
      %v833 = vld [vmem:[#allocation2 + $0x168] sm:$0xff]
      %v834 = vld [vmem:[#allocation2 + $0x170] sm:$0xff]
      %v835 = vld [vmem:[#allocation2 + $0x188] sm:$0xff]
      %v836 = vld [vmem:[#allocation2 + $0x190] sm:$0xff]
      %v837 = vld [vmem:[#allocation2 + $0x1a8] sm:$0xff]
      %v838 = vld [vmem:[#allocation2 + $0x1b0] sm:$0xff]
      %v839 = vld [vmem:[#allocation2 + $0x1c8] sm:$0xff]
      %v840 = vld [vmem:[#allocation2 + $0x1d0] sm:$0xff]
      %v841 = vld [vmem:[#allocation2 + $0x1e8] sm:$0xff]
      %v842 = vld [vmem:[#allocation2 + $0x1f0] sm:$0xff]
      %v843 = vld [vmem:[#allocation2 + $0x208] sm:$0xff]
      %v844 = vld [vmem:[#allocation2 + $0x210] sm:$0xff]
      %v845 = vld [vmem:[#allocation2 + $0x228] sm:$0xff]
      %v846 = vld [vmem:[#allocation2 + $0x230] sm:$0xff]
      %v847 = vld [vmem:[#allocation2 + $0x248] sm:$0xff]
      %v848 = vld [vmem:[#allocation2 + $0x250] sm:$0xff]
      %v849 = vlaneseq
      %v850 = vshrl.u32 %v849, 7
      %v851 = vsub.s32 1, %v850
      %v852 = vrot.slane %v570, %v851
      %v853 = vmul.f32 %v813, %v852
      %v854 = vmul.f32 %v814, %v852
      %v855 = vmul.f32 %v815, %v852
      %v856 = vmul.f32 %v816, %v852
      %v857 = vmul.f32 %v817, %v852
      %v858 = vmul.f32 %v818, %v852
      %v859 = vmul.f32 %v819, %v852
      %v860 = vmul.f32 %v820, %v852
      %v861 = vmul.f32 %v821, %v852
      %v862 = vmul.f32 %v822, %v852
      %v863 = vmul.f32 %v823, %v852
      %v864 = vmul.f32 %v824, %v852
      %v865 = vmul.f32 %v825, %v852
      %v866 = vmul.f32 %v826, %v852
      %v867 = vmul.f32 %v827, %v852
      %v868 = vmul.f32 %v828, %v852
      %v869 = vmul.f32 %v829, %v852
      %v870 = vmul.f32 %v830, %v852
      %v871 = vmul.f32 %v831, %v852
      %v872 = vmul.f32 %v832, %v852
      %v873 = vmul.f32 %v833, %v852
      %v874 = vmul.f32 %v834, %v852
      %v875 = vmul.f32 %v835, %v852
      %v876 = vmul.f32 %v836, %v852
      %v877 = vmul.f32 %v837, %v852
      %v878 = vmul.f32 %v838, %v852
      %v879 = vmul.f32 %v839, %v852
      %v880 = vmul.f32 %v840, %v852
      %v881 = vmul.f32 %v841, %v852
      %v882 = vmul.f32 %v842, %v852
      %v883 = vmul.f32 %v843, %v852
      %v884 = vmul.f32 %v844, %v852
      %v885 = vadd.f32 %v781, %v853
      %v886 = vadd.f32 %v782, %v854
      %v887 = vadd.f32 %v783, %v855
      %v888 = vadd.f32 %v784, %v856
      %v889 = vadd.f32 %v785, %v857
      %v890 = vadd.f32 %v786, %v858
      %v891 = vadd.f32 %v787, %v859
      %v892 = vadd.f32 %v788, %v860
      %v893 = vadd.f32 %v789, %v861
      %v894 = vadd.f32 %v790, %v862
      %v895 = vadd.f32 %v791, %v863
      %v896 = vadd.f32 %v792, %v864
      %v897 = vadd.f32 %v793, %v865
      %v898 = vadd.f32 %v794, %v866
      %v899 = vadd.f32 %v795, %v867
      %v900 = vadd.f32 %v796, %v868
      %v901 = vadd.f32 %v797, %v869
      %v902 = vadd.f32 %v798, %v870
      %v903 = vadd.f32 %v799, %v871
      %v904 = vadd.f32 %v800, %v872
      %v905 = vadd.f32 %v801, %v873
      %v906 = vadd.f32 %v802, %v874
      %v907 = vadd.f32 %v803, %v875
      %v908 = vadd.f32 %v804, %v876
      %v909 = vadd.f32 %v805, %v877
      %v910 = vadd.f32 %v806, %v878
      %v911 = vadd.f32 %v807, %v879
      %v912 = vadd.f32 %v808, %v880
      %v913 = vadd.f32 %v809, %v881
      %v914 = vadd.f32 %v810, %v882
      %v915 = vadd.f32 %v811, %v883
      %v916 = vadd.f32 %v812, %v884
      %v917 = vlaneseq
      %v918 = vshrl.u32 %v917, 7
      %v919 = vsub.s32 1, %v918
      %v920 = vrot.slane %v571, %v919
      %v921 = vmul.f32 %v815, %v920
      %v922 = vmul.f32 %v816, %v920
      %v923 = vmul.f32 %v817, %v920
      %v924 = vmul.f32 %v818, %v920
      %v925 = vmul.f32 %v819, %v920
      %v926 = vmul.f32 %v820, %v920
      %v927 = vmul.f32 %v821, %v920
      %v928 = vmul.f32 %v822, %v920
      %v929 = vmul.f32 %v823, %v920
      %v930 = vmul.f32 %v824, %v920
      %v931 = vmul.f32 %v825, %v920
      %v932 = vmul.f32 %v826, %v920
      %v933 = vmul.f32 %v827, %v920
      %v934 = vmul.f32 %v828, %v920
      %v935 = vmul.f32 %v829, %v920
      %v936 = vmul.f32 %v830, %v920
      %v937 = vmul.f32 %v831, %v920
      %v938 = vmul.f32 %v832, %v920
      %v939 = vmul.f32 %v833, %v920
      %v940 = vmul.f32 %v834, %v920
      %v941 = vmul.f32 %v835, %v920
      %v942 = vmul.f32 %v836, %v920
      %v943 = vmul.f32 %v837, %v920
      %v944 = vmul.f32 %v838, %v920
      %v945 = vmul.f32 %v839, %v920
      %v946 = vmul.f32 %v840, %v920
      %v947 = vmul.f32 %v841, %v920
      %v948 = vmul.f32 %v842, %v920
      %v949 = vmul.f32 %v843, %v920
      %v950 = vmul.f32 %v844, %v920
      %v951 = vmul.f32 %v845, %v920
      %v952 = vmul.f32 %v846, %v920
      %v953 = vadd.f32 %v885, %v921
      %v954 = vadd.f32 %v886, %v922
      %v955 = vadd.f32 %v887, %v923
      %v956 = vadd.f32 %v888, %v924
      %v957 = vadd.f32 %v889, %v925
      %v958 = vadd.f32 %v890, %v926
      %v959 = vadd.f32 %v891, %v927
      %v960 = vadd.f32 %v892, %v928
      %v961 = vadd.f32 %v893, %v929
      %v962 = vadd.f32 %v894, %v930
      %v963 = vadd.f32 %v895, %v931
      %v964 = vadd.f32 %v896, %v932
      %v965 = vadd.f32 %v897, %v933
      %v966 = vadd.f32 %v898, %v934
      %v967 = vadd.f32 %v899, %v935
      %v968 = vadd.f32 %v900, %v936
      %v969 = vadd.f32 %v901, %v937
      %v970 = vadd.f32 %v902, %v938
      %v971 = vadd.f32 %v903, %v939
      %v972 = vadd.f32 %v904, %v940
      %v973 = vadd.f32 %v905, %v941
      %v974 = vadd.f32 %v906, %v942
      %v975 = vadd.f32 %v907, %v943
      %v976 = vadd.f32 %v908, %v944
      %v977 = vadd.f32 %v909, %v945
      %v978 = vadd.f32 %v910, %v946
      %v979 = vadd.f32 %v911, %v947
      %v980 = vadd.f32 %v912, %v948
      %v981 = vadd.f32 %v913, %v949
      %v982 = vadd.f32 %v914, %v950
      %v983 = vadd.f32 %v915, %v951
      %v984 = vadd.f32 %v916, %v952
      %v985 = vlaneseq
      %v986 = vshrl.u32 %v985, 7
      %v987 = vsub.s32 1, %v986
      %v988 = vrot.slane %v572, %v987
      %v989 = vmul.f32 %v817, %v988
      %v990 = vmul.f32 %v818, %v988
      %v991 = vmul.f32 %v819, %v988
      %v992 = vmul.f32 %v820, %v988
      %v993 = vmul.f32 %v821, %v988
      %v994 = vmul.f32 %v822, %v988
      %v995 = vmul.f32 %v823, %v988
      %v996 = vmul.f32 %v824, %v988
      %v997 = vmul.f32 %v825, %v988
      %v998 = vmul.f32 %v826, %v988
      %v999 = vmul.f32 %v827, %v988
      %v1000 = vmul.f32 %v828, %v988
      %v1001 = vmul.f32 %v829, %v988
      %v1002 = vmul.f32 %v830, %v988
      %v1003 = vmul.f32 %v831, %v988
      %v1004 = vmul.f32 %v832, %v988
      %v1005 = vmul.f32 %v833, %v988
      %v1006 = vmul.f32 %v834, %v988
      %v1007 = vmul.f32 %v835, %v988
      %v1008 = vmul.f32 %v836, %v988
      %v1009 = vmul.f32 %v837, %v988
      %v1010 = vmul.f32 %v838, %v988
      %v1011 = vmul.f32 %v839, %v988
      %v1012 = vmul.f32 %v840, %v988
      %v1013 = vmul.f32 %v841, %v988
      %v1014 = vmul.f32 %v842, %v988
      %v1015 = vmul.f32 %v843, %v988
      %v1016 = vmul.f32 %v844, %v988
      %v1017 = vmul.f32 %v845, %v988
      %v1018 = vmul.f32 %v846, %v988
      %v1019 = vmul.f32 %v847, %v988
      %v1020 = vmul.f32 %v848, %v988
      %v1021 = vadd.f32 %v953, %v989
      %v1022 = vadd.f32 %v954, %v990
      %v1023 = vadd.f32 %v955, %v991
      %v1024 = vadd.f32 %v956, %v992
      %v1025 = vadd.f32 %v957, %v993
      %v1026 = vadd.f32 %v958, %v994
      %v1027 = vadd.f32 %v959, %v995
      %v1028 = vadd.f32 %v960, %v996
      %v1029 = vadd.f32 %v961, %v997
      %v1030 = vadd.f32 %v962, %v998
      %v1031 = vadd.f32 %v963, %v999
      %v1032 = vadd.f32 %v964, %v1000
      %v1033 = vadd.f32 %v965, %v1001
      %v1034 = vadd.f32 %v966, %v1002
      %v1035 = vadd.f32 %v967, %v1003
      %v1036 = vadd.f32 %v968, %v1004
      %v1037 = vadd.f32 %v969, %v1005
      %v1038 = vadd.f32 %v970, %v1006
      %v1039 = vadd.f32 %v971, %v1007
      %v1040 = vadd.f32 %v972, %v1008
      %v1041 = vadd.f32 %v973, %v1009
      %v1042 = vadd.f32 %v974, %v1010
      %v1043 = vadd.f32 %v975, %v1011
      %v1044 = vadd.f32 %v976, %v1012
      %v1045 = vadd.f32 %v977, %v1013
      %v1046 = vadd.f32 %v978, %v1014
      %v1047 = vadd.f32 %v979, %v1015
      %v1048 = vadd.f32 %v980, %v1016
      %v1049 = vadd.f32 %v981, %v1017
      %v1050 = vadd.f32 %v982, %v1018
      %v1051 = vadd.f32 %v983, %v1019
      %v1052 = vadd.f32 %v984, %v1020
      %v1053 = vld [vmem:[#allocation2 + $0x29] sm:$0xff]
      %v1054 = vld [vmem:[#allocation2 + $0x31] sm:$0xff]
      %v1055 = vld [vmem:[#allocation2 + $0x49] sm:$0xff]
      %v1056 = vld [vmem:[#allocation2 + $0x51] sm:$0xff]
      %v1057 = vld [vmem:[#allocation2 + $0x69] sm:$0xff]
      %v1058 = vld [vmem:[#allocation2 + $0x71] sm:$0xff]
      %v1059 = vld [vmem:[#allocation2 + $0x89] sm:$0xff]
      %v1060 = vld [vmem:[#allocation2 + $0x91] sm:$0xff]
      %v1061 = vld [vmem:[#allocation2 + $0xa9] sm:$0xff]
      %v1062 = vld [vmem:[#allocation2 + $0xb1] sm:$0xff]
      %v1063 = vld [vmem:[#allocation2 + $0xc9] sm:$0xff]
      %v1064 = vld [vmem:[#allocation2 + $0xd1] sm:$0xff]
      %v1065 = vld [vmem:[#allocation2 + $0xe9] sm:$0xff]
      %v1066 = vld [vmem:[#allocation2 + $0xf1] sm:$0xff]
      %v1067 = vld [vmem:[#allocation2 + $0x109] sm:$0xff]
      %v1068 = vld [vmem:[#allocation2 + $0x111] sm:$0xff]
      %v1069 = vld [vmem:[#allocation2 + $0x129] sm:$0xff]
      %v1070 = vld [vmem:[#allocation2 + $0x131] sm:$0xff]
      %v1071 = vld [vmem:[#allocation2 + $0x149] sm:$0xff]
      %v1072 = vld [vmem:[#allocation2 + $0x151] sm:$0xff]
      %v1073 = vld [vmem:[#allocation2 + $0x169] sm:$0xff]
      %v1074 = vld [vmem:[#allocation2 + $0x171] sm:$0xff]
      %v1075 = vld [vmem:[#allocation2 + $0x189] sm:$0xff]
      %v1076 = vld [vmem:[#allocation2 + $0x191] sm:$0xff]
      %v1077 = vld [vmem:[#allocation2 + $0x1a9] sm:$0xff]
      %v1078 = vld [vmem:[#allocation2 + $0x1b1] sm:$0xff]
      %v1079 = vld [vmem:[#allocation2 + $0x1c9] sm:$0xff]
      %v1080 = vld [vmem:[#allocation2 + $0x1d1] sm:$0xff]
      %v1081 = vld [vmem:[#allocation2 + $0x1e9] sm:$0xff]
      %v1082 = vld [vmem:[#allocation2 + $0x1f1] sm:$0xff]
      %v1083 = vld [vmem:[#allocation2 + $0x209] sm:$0xff]
      %v1084 = vld [vmem:[#allocation2 + $0x211] sm:$0xff]
      %v1085 = vld [vmem:[#allocation2 + $0x229] sm:$0xff]
      %v1086 = vld [vmem:[#allocation2 + $0x231] sm:$0xff]
      %v1087 = vld [vmem:[#allocation2 + $0x249] sm:$0xff]
      %v1088 = vld [vmem:[#allocation2 + $0x251] sm:$0xff]
      %v1089 = vlaneseq
      %v1090 = vshrl.u32 %v1089, 7
      %v1091 = vsub.s32 2, %v1090
      %v1092 = vrot.slane %v570, %v1091
      %v1093 = vmul.f32 %v1053, %v1092
      %v1094 = vmul.f32 %v1054, %v1092
      %v1095 = vmul.f32 %v1055, %v1092
      %v1096 = vmul.f32 %v1056, %v1092
      %v1097 = vmul.f32 %v1057, %v1092
      %v1098 = vmul.f32 %v1058, %v1092
      %v1099 = vmul.f32 %v1059, %v1092
      %v1100 = vmul.f32 %v1060, %v1092
      %v1101 = vmul.f32 %v1061, %v1092
      %v1102 = vmul.f32 %v1062, %v1092
      %v1103 = vmul.f32 %v1063, %v1092
      %v1104 = vmul.f32 %v1064, %v1092
      %v1105 = vmul.f32 %v1065, %v1092
      %v1106 = vmul.f32 %v1066, %v1092
      %v1107 = vmul.f32 %v1067, %v1092
      %v1108 = vmul.f32 %v1068, %v1092
      %v1109 = vmul.f32 %v1069, %v1092
      %v1110 = vmul.f32 %v1070, %v1092
      %v1111 = vmul.f32 %v1071, %v1092
      %v1112 = vmul.f32 %v1072, %v1092
      %v1113 = vmul.f32 %v1073, %v1092
      %v1114 = vmul.f32 %v1074, %v1092
      %v1115 = vmul.f32 %v1075, %v1092
      %v1116 = vmul.f32 %v1076, %v1092
      %v1117 = vmul.f32 %v1077, %v1092
      %v1118 = vmul.f32 %v1078, %v1092
      %v1119 = vmul.f32 %v1079, %v1092
      %v1120 = vmul.f32 %v1080, %v1092
      %v1121 = vmul.f32 %v1081, %v1092
      %v1122 = vmul.f32 %v1082, %v1092
      %v1123 = vmul.f32 %v1083, %v1092
      %v1124 = vmul.f32 %v1084, %v1092
      %v1125 = vadd.f32 %v1021, %v1093
      %v1126 = vadd.f32 %v1022, %v1094
      %v1127 = vadd.f32 %v1023, %v1095
      %v1128 = vadd.f32 %v1024, %v1096
      %v1129 = vadd.f32 %v1025, %v1097
      %v1130 = vadd.f32 %v1026, %v1098
      %v1131 = vadd.f32 %v1027, %v1099
      %v1132 = vadd.f32 %v1028, %v1100
      %v1133 = vadd.f32 %v1029, %v1101
      %v1134 = vadd.f32 %v1030, %v1102
      %v1135 = vadd.f32 %v1031, %v1103
      %v1136 = vadd.f32 %v1032, %v1104
      %v1137 = vadd.f32 %v1033, %v1105
      %v1138 = vadd.f32 %v1034, %v1106
      %v1139 = vadd.f32 %v1035, %v1107
      %v1140 = vadd.f32 %v1036, %v1108
      %v1141 = vadd.f32 %v1037, %v1109
      %v1142 = vadd.f32 %v1038, %v1110
      %v1143 = vadd.f32 %v1039, %v1111
      %v1144 = vadd.f32 %v1040, %v1112
      %v1145 = vadd.f32 %v1041, %v1113
      %v1146 = vadd.f32 %v1042, %v1114
      %v1147 = vadd.f32 %v1043, %v1115
      %v1148 = vadd.f32 %v1044, %v1116
      %v1149 = vadd.f32 %v1045, %v1117
      %v1150 = vadd.f32 %v1046, %v1118
      %v1151 = vadd.f32 %v1047, %v1119
      %v1152 = vadd.f32 %v1048, %v1120
      %v1153 = vadd.f32 %v1049, %v1121
      %v1154 = vadd.f32 %v1050, %v1122
      %v1155 = vadd.f32 %v1051, %v1123
      %v1156 = vadd.f32 %v1052, %v1124
      %v1157 = vlaneseq
      %v1158 = vshrl.u32 %v1157, 7
      %v1159 = vsub.s32 2, %v1158
      %v1160 = vrot.slane %v571, %v1159
      %v1161 = vmul.f32 %v1055, %v1160
      %v1162 = vmul.f32 %v1056, %v1160
      %v1163 = vmul.f32 %v1057, %v1160
      %v1164 = vmul.f32 %v1058, %v1160
      %v1165 = vmul.f32 %v1059, %v1160
      %v1166 = vmul.f32 %v1060, %v1160
      %v1167 = vmul.f32 %v1061, %v1160
      %v1168 = vmul.f32 %v1062, %v1160
      %v1169 = vmul.f32 %v1063, %v1160
      %v1170 = vmul.f32 %v1064, %v1160
      %v1171 = vmul.f32 %v1065, %v1160
      %v1172 = vmul.f32 %v1066, %v1160
      %v1173 = vmul.f32 %v1067, %v1160
      %v1174 = vmul.f32 %v1068, %v1160
      %v1175 = vmul.f32 %v1069, %v1160
      %v1176 = vmul.f32 %v1070, %v1160
      %v1177 = vmul.f32 %v1071, %v1160
      %v1178 = vmul.f32 %v1072, %v1160
      %v1179 = vmul.f32 %v1073, %v1160
      %v1180 = vmul.f32 %v1074, %v1160
      %v1181 = vmul.f32 %v1075, %v1160
      %v1182 = vmul.f32 %v1076, %v1160
      %v1183 = vmul.f32 %v1077, %v1160
      %v1184 = vmul.f32 %v1078, %v1160
      %v1185 = vmul.f32 %v1079, %v1160
      %v1186 = vmul.f32 %v1080, %v1160
      %v1187 = vmul.f32 %v1081, %v1160
      %v1188 = vmul.f32 %v1082, %v1160
      %v1189 = vmul.f32 %v1083, %v1160
      %v1190 = vmul.f32 %v1084, %v1160
      %v1191 = vmul.f32 %v1085, %v1160
      %v1192 = vmul.f32 %v1086, %v1160
      %v1193 = vadd.f32 %v1125, %v1161
      %v1194 = vadd.f32 %v1126, %v1162
      %v1195 = vadd.f32 %v1127, %v1163
      %v1196 = vadd.f32 %v1128, %v1164
      %v1197 = vadd.f32 %v1129, %v1165
      %v1198 = vadd.f32 %v1130, %v1166
      %v1199 = vadd.f32 %v1131, %v1167
      %v1200 = vadd.f32 %v1132, %v1168
      %v1201 = vadd.f32 %v1133, %v1169
      %v1202 = vadd.f32 %v1134, %v1170
      %v1203 = vadd.f32 %v1135, %v1171
      %v1204 = vadd.f32 %v1136, %v1172
      %v1205 = vadd.f32 %v1137, %v1173
      %v1206 = vadd.f32 %v1138, %v1174
      %v1207 = vadd.f32 %v1139, %v1175
      %v1208 = vadd.f32 %v1140, %v1176
      %v1209 = vadd.f32 %v1141, %v1177
      %v1210 = vadd.f32 %v1142, %v1178
      %v1211 = vadd.f32 %v1143, %v1179
      %v1212 = vadd.f32 %v1144, %v1180
      %v1213 = vadd.f32 %v1145, %v1181
      %v1214 = vadd.f32 %v1146, %v1182
      %v1215 = vadd.f32 %v1147, %v1183
      %v1216 = vadd.f32 %v1148, %v1184
      %v1217 = vadd.f32 %v1149, %v1185
      %v1218 = vadd.f32 %v1150, %v1186
      %v1219 = vadd.f32 %v1151, %v1187
      %v1220 = vadd.f32 %v1152, %v1188
      %v1221 = vadd.f32 %v1153, %v1189
      %v1222 = vadd.f32 %v1154, %v1190
      %v1223 = vadd.f32 %v1155, %v1191
      %v1224 = vadd.f32 %v1156, %v1192
      %v1225 = vlaneseq
      %v1226 = vshrl.u32 %v1225, 7
      %v1227 = vsub.s32 2, %v1226
      %v1228 = vrot.slane %v572, %v1227
      %v1229 = vmul.f32 %v1057, %v1228
      %v1230 = vmul.f32 %v1058, %v1228
      %v1231 = vmul.f32 %v1059, %v1228
      %v1232 = vmul.f32 %v1060, %v1228
      %v1233 = vmul.f32 %v1061, %v1228
      %v1234 = vmul.f32 %v1062, %v1228
      %v1235 = vmul.f32 %v1063, %v1228
      %v1236 = vmul.f32 %v1064, %v1228
      %v1237 = vmul.f32 %v1065, %v1228
      %v1238 = vmul.f32 %v1066, %v1228
      %v1239 = vmul.f32 %v1067, %v1228
      %v1240 = vmul.f32 %v1068, %v1228
      %v1241 = vmul.f32 %v1069, %v1228
      %v1242 = vmul.f32 %v1070, %v1228
      %v1243 = vmul.f32 %v1071, %v1228
      %v1244 = vmul.f32 %v1072, %v1228
      %v1245 = vmul.f32 %v1073, %v1228
      %v1246 = vmul.f32 %v1074, %v1228
      %v1247 = vmul.f32 %v1075, %v1228
      %v1248 = vmul.f32 %v1076, %v1228
      %v1249 = vmul.f32 %v1077, %v1228
      %v1250 = vmul.f32 %v1078, %v1228
      %v1251 = vmul.f32 %v1079, %v1228
      %v1252 = vmul.f32 %v1080, %v1228
      %v1253 = vmul.f32 %v1081, %v1228
      %v1254 = vmul.f32 %v1082, %v1228
      %v1255 = vmul.f32 %v1083, %v1228
      %v1256 = vmul.f32 %v1084, %v1228
      %v1257 = vmul.f32 %v1085, %v1228
      %v1258 = vmul.f32 %v1086, %v1228
      %v1259 = vmul.f32 %v1087, %v1228
      %v1260 = vmul.f32 %v1088, %v1228
      %v1261 = vadd.f32 %v1193, %v1229
      %v1262 = vadd.f32 %v1194, %v1230
      %v1263 = vadd.f32 %v1195, %v1231
      %v1264 = vadd.f32 %v1196, %v1232
      %v1265 = vadd.f32 %v1197, %v1233
      %v1266 = vadd.f32 %v1198, %v1234
      %v1267 = vadd.f32 %v1199, %v1235
      %v1268 = vadd.f32 %v1200, %v1236
      %v1269 = vadd.f32 %v1201, %v1237
      %v1270 = vadd.f32 %v1202, %v1238
      %v1271 = vadd.f32 %v1203, %v1239
      %v1272 = vadd.f32 %v1204, %v1240
      %v1273 = vadd.f32 %v1205, %v1241
      %v1274 = vadd.f32 %v1206, %v1242
      %v1275 = vadd.f32 %v1207, %v1243
      %v1276 = vadd.f32 %v1208, %v1244
      %v1277 = vadd.f32 %v1209, %v1245
      %v1278 = vadd.f32 %v1210, %v1246
      %v1279 = vadd.f32 %v1211, %v1247
      %v1280 = vadd.f32 %v1212, %v1248
      %v1281 = vadd.f32 %v1213, %v1249
      %v1282 = vadd.f32 %v1214, %v1250
      %v1283 = vadd.f32 %v1215, %v1251
      %v1284 = vadd.f32 %v1216, %v1252
      %v1285 = vadd.f32 %v1217, %v1253
      %v1286 = vadd.f32 %v1218, %v1254
      %v1287 = vadd.f32 %v1219, %v1255
      %v1288 = vadd.f32 %v1220, %v1256
      %v1289 = vadd.f32 %v1221, %v1257
      %v1290 = vadd.f32 %v1222, %v1258
      %v1291 = vadd.f32 %v1223, %v1259
      %v1292 = vadd.f32 %v1224, %v1260
      %v1293 = vmul.f32 %v1261, 0.5
      %v1294 = vmul.f32 %v1262, 0.5
      %v1295 = vmul.f32 %v1263, 0.5
      %v1296 = vmul.f32 %v1264, 0.5
      %v1297 = vmul.f32 %v1265, 0.5
      %v1298 = vmul.f32 %v1266, 0.5
      %v1299 = vmul.f32 %v1267, 0.5
      %v1300 = vmul.f32 %v1268, 0.5
      %v1301 = vmul.f32 %v1269, 0.5
      %v1302 = vmul.f32 %v1270, 0.5
      %v1303 = vmul.f32 %v1271, 0.5
      %v1304 = vmul.f32 %v1272, 0.5
      %v1305 = vmul.f32 %v1273, 0.5
      %v1306 = vmul.f32 %v1274, 0.5
      %v1307 = vmul.f32 %v1275, 0.5
      %v1308 = vmul.f32 %v1276, 0.5
      %v1309 = vmul.f32 %v1277, 0.5
      %v1310 = vmul.f32 %v1278, 0.5
      %v1311 = vmul.f32 %v1279, 0.5
      %v1312 = vmul.f32 %v1280, 0.5
      %v1313 = vmul.f32 %v1281, 0.5
      %v1314 = vmul.f32 %v1282, 0.5
      %v1315 = vmul.f32 %v1283, 0.5
      %v1316 = vmul.f32 %v1284, 0.5
      %v1317 = vmul.f32 %v1285, 0.5
      %v1318 = vmul.f32 %v1286, 0.5
      %v1319 = vmul.f32 %v1287, 0.5
      %v1320 = vmul.f32 %v1288, 0.5
      %v1321 = vmul.f32 %v1289, 0.5
      %v1322 = vmul.f32 %v1290, 0.5
      %v1323 = vmul.f32 %v1291, 0.5
      %v1324 = vmul.f32 %v1292, 0.5
      %v1325 = vmul.f32 %v1261, 0.044715
      %v1326 = vmul.f32 %v1262, 0.044715
      %v1327 = vmul.f32 %v1263, 0.044715
      %v1328 = vmul.f32 %v1264, 0.044715
      %v1329 = vmul.f32 %v1265, 0.044715
      %v1330 = vmul.f32 %v1266, 0.044715
      %v1331 = vmul.f32 %v1267, 0.044715
      %v1332 = vmul.f32 %v1268, 0.044715
      %v1333 = vmul.f32 %v1269, 0.044715
      %v1334 = vmul.f32 %v1270, 0.044715
      %v1335 = vmul.f32 %v1271, 0.044715
      %v1336 = vmul.f32 %v1272, 0.044715
      %v1337 = vmul.f32 %v1273, 0.044715
      %v1338 = vmul.f32 %v1274, 0.044715
      %v1339 = vmul.f32 %v1275, 0.044715
      %v1340 = vmul.f32 %v1276, 0.044715
      %v1341 = vmul.f32 %v1277, 0.044715
      %v1342 = vmul.f32 %v1278, 0.044715
      %v1343 = vmul.f32 %v1279, 0.044715
      %v1344 = vmul.f32 %v1280, 0.044715
      %v1345 = vmul.f32 %v1281, 0.044715
      %v1346 = vmul.f32 %v1282, 0.044715
      %v1347 = vmul.f32 %v1283, 0.044715
      %v1348 = vmul.f32 %v1284, 0.044715
      %v1349 = vmul.f32 %v1285, 0.044715
      %v1350 = vmul.f32 %v1286, 0.044715
      %v1351 = vmul.f32 %v1287, 0.044715
      %v1352 = vmul.f32 %v1288, 0.044715
      %v1353 = vmul.f32 %v1289, 0.044715
      %v1354 = vmul.f32 %v1290, 0.044715
      %v1355 = vmul.f32 %v1291, 0.044715
      %v1356 = vmul.f32 %v1292, 0.044715
      %v1357 = vmul.f32 %v1325, %v1261
      %v1358 = vmul.f32 %v1326, %v1262
      %v1359 = vmul.f32 %v1327, %v1263
      %v1360 = vmul.f32 %v1328, %v1264
      %v1361 = vmul.f32 %v1329, %v1265
      %v1362 = vmul.f32 %v1330, %v1266
      %v1363 = vmul.f32 %v1331, %v1267
      %v1364 = vmul.f32 %v1332, %v1268
      %v1365 = vmul.f32 %v1333, %v1269
      %v1366 = vmul.f32 %v1334, %v1270
      %v1367 = vmul.f32 %v1335, %v1271
      %v1368 = vmul.f32 %v1336, %v1272
      %v1369 = vmul.f32 %v1337, %v1273
      %v1370 = vmul.f32 %v1338, %v1274
      %v1371 = vmul.f32 %v1339, %v1275
      %v1372 = vmul.f32 %v1340, %v1276
      %v1373 = vmul.f32 %v1341, %v1277
      %v1374 = vmul.f32 %v1342, %v1278
      %v1375 = vmul.f32 %v1343, %v1279
      %v1376 = vmul.f32 %v1344, %v1280
      %v1377 = vmul.f32 %v1345, %v1281
      %v1378 = vmul.f32 %v1346, %v1282
      %v1379 = vmul.f32 %v1347, %v1283
      %v1380 = vmul.f32 %v1348, %v1284
      %v1381 = vmul.f32 %v1349, %v1285
      %v1382 = vmul.f32 %v1350, %v1286
      %v1383 = vmul.f32 %v1351, %v1287
      %v1384 = vmul.f32 %v1352, %v1288
      %v1385 = vmul.f32 %v1353, %v1289
      %v1386 = vmul.f32 %v1354, %v1290
      %v1387 = vmul.f32 %v1355, %v1291
      %v1388 = vmul.f32 %v1356, %v1292
      %v1389 = vmul.f32 %v1357, %v1261
      %v1390 = vmul.f32 %v1358, %v1262
      %v1391 = vmul.f32 %v1359, %v1263
      %v1392 = vmul.f32 %v1360, %v1264
      %v1393 = vmul.f32 %v1361, %v1265
      %v1394 = vmul.f32 %v1362, %v1266
      %v1395 = vmul.f32 %v1363, %v1267
      %v1396 = vmul.f32 %v1364, %v1268
      %v1397 = vmul.f32 %v1365, %v1269
      %v1398 = vmul.f32 %v1366, %v1270
      %v1399 = vmul.f32 %v1367, %v1271
      %v1400 = vmul.f32 %v1368, %v1272
      %v1401 = vmul.f32 %v1369, %v1273
      %v1402 = vmul.f32 %v1370, %v1274
      %v1403 = vmul.f32 %v1371, %v1275
      %v1404 = vmul.f32 %v1372, %v1276
      %v1405 = vmul.f32 %v1373, %v1277
      %v1406 = vmul.f32 %v1374, %v1278
      %v1407 = vmul.f32 %v1375, %v1279
      %v1408 = vmul.f32 %v1376, %v1280
      %v1409 = vmul.f32 %v1377, %v1281
      %v1410 = vmul.f32 %v1378, %v1282
      %v1411 = vmul.f32 %v1379, %v1283
      %v1412 = vmul.f32 %v1380, %v1284
      %v1413 = vmul.f32 %v1381, %v1285
      %v1414 = vmul.f32 %v1382, %v1286
      %v1415 = vmul.f32 %v1383, %v1287
      %v1416 = vmul.f32 %v1384, %v1288
      %v1417 = vmul.f32 %v1385, %v1289
      %v1418 = vmul.f32 %v1386, %v1290
      %v1419 = vmul.f32 %v1387, %v1291
      %v1420 = vmul.f32 %v1388, %v1292
      %v1421 = vadd.f32 %v1261, %v1389
      %v1422 = vadd.f32 %v1262, %v1390
      %v1423 = vadd.f32 %v1263, %v1391
      %v1424 = vadd.f32 %v1264, %v1392
      %v1425 = vadd.f32 %v1265, %v1393
      %v1426 = vadd.f32 %v1266, %v1394
      %v1427 = vadd.f32 %v1267, %v1395
      %v1428 = vadd.f32 %v1268, %v1396
      %v1429 = vadd.f32 %v1269, %v1397
      %v1430 = vadd.f32 %v1270, %v1398
      %v1431 = vadd.f32 %v1271, %v1399
      %v1432 = vadd.f32 %v1272, %v1400
      %v1433 = vadd.f32 %v1273, %v1401
      %v1434 = vadd.f32 %v1274, %v1402
      %v1435 = vadd.f32 %v1275, %v1403
      %v1436 = vadd.f32 %v1276, %v1404
      %v1437 = vadd.f32 %v1277, %v1405
      %v1438 = vadd.f32 %v1278, %v1406
      %v1439 = vadd.f32 %v1279, %v1407
      %v1440 = vadd.f32 %v1280, %v1408
      %v1441 = vadd.f32 %v1281, %v1409
      %v1442 = vadd.f32 %v1282, %v1410
      %v1443 = vadd.f32 %v1283, %v1411
      %v1444 = vadd.f32 %v1284, %v1412
      %v1445 = vadd.f32 %v1285, %v1413
      %v1446 = vadd.f32 %v1286, %v1414
      %v1447 = vadd.f32 %v1287, %v1415
      %v1448 = vadd.f32 %v1288, %v1416
      %v1449 = vadd.f32 %v1289, %v1417
      %v1450 = vadd.f32 %v1290, %v1418
      %v1451 = vadd.f32 %v1291, %v1419
      %v1452 = vadd.f32 %v1292, %v1420
      %v1453 = vmul.f32 %v1421, 0.7978846
      %v1454 = vmul.f32 %v1422, 0.7978846
      %v1455 = vmul.f32 %v1423, 0.7978846
      %v1456 = vmul.f32 %v1424, 0.7978846
      %v1457 = vmul.f32 %v1425, 0.7978846
      %v1458 = vmul.f32 %v1426, 0.7978846
      %v1459 = vmul.f32 %v1427, 0.7978846
      %v1460 = vmul.f32 %v1428, 0.7978846
      %v1461 = vmul.f32 %v1429, 0.7978846
      %v1462 = vmul.f32 %v1430, 0.7978846
      %v1463 = vmul.f32 %v1431, 0.7978846
      %v1464 = vmul.f32 %v1432, 0.7978846
      %v1465 = vmul.f32 %v1433, 0.7978846
      %v1466 = vmul.f32 %v1434, 0.7978846
      %v1467 = vmul.f32 %v1435, 0.7978846
      %v1468 = vmul.f32 %v1436, 0.7978846
      %v1469 = vmul.f32 %v1437, 0.7978846
      %v1470 = vmul.f32 %v1438, 0.7978846
      %v1471 = vmul.f32 %v1439, 0.7978846
      %v1472 = vmul.f32 %v1440, 0.7978846
      %v1473 = vmul.f32 %v1441, 0.7978846
      %v1474 = vmul.f32 %v1442, 0.7978846
      %v1475 = vmul.f32 %v1443, 0.7978846
      %v1476 = vmul.f32 %v1444, 0.7978846
      %v1477 = vmul.f32 %v1445, 0.7978846
      %v1478 = vmul.f32 %v1446, 0.7978846
      %v1479 = vmul.f32 %v1447, 0.7978846
      %v1480 = vmul.f32 %v1448, 0.7978846
      %v1481 = vmul.f32 %v1449, 0.7978846
      %v1482 = vmul.f32 %v1450, 0.7978846
      %v1483 = vmul.f32 %v1451, 0.7978846
      %v1484 = vmul.f32 %v1452, 0.7978846
      %v1485 = vtanh.pop %v1453
      %v1486 = vtanh.pop %v1454
      %v1487 = vtanh.pop %v1455
      %v1488 = vtanh.pop %v1456
      %v1489 = vtanh.pop %v1457
      %v1490 = vtanh.pop %v1458
      %v1491 = vtanh.pop %v1459
      %v1492 = vtanh.pop %v1460
      %v1493 = vtanh.pop %v1461
      %v1494 = vtanh.pop %v1462
      %v1495 = vtanh.pop %v1463
      %v1496 = vtanh.pop %v1464
      %v1497 = vtanh.pop %v1465
      %v1498 = vtanh.pop %v1466
      %v1499 = vtanh.pop %v1467
      %v1500 = vtanh.pop %v1468
      %v1501 = vtanh.pop %v1469
      %v1502 = vtanh.pop %v1470
      %v1503 = vtanh.pop %v1471
      %v1504 = vtanh.pop %v1472
      %v1505 = vtanh.pop %v1473
      %v1506 = vtanh.pop %v1474
      %v1507 = vtanh.pop %v1475
      %v1508 = vtanh.pop %v1476
      %v1509 = vtanh.pop %v1477
      %v1510 = vtanh.pop %v1478
      %v1511 = vtanh.pop %v1479
      %v1512 = vtanh.pop %v1480
      %v1513 = vtanh.pop %v1481
      %v1514 = vtanh.pop %v1482
      %v1515 = vtanh.pop %v1483
      %v1516 = vtanh.pop %v1484
      %v1517 = vadd.f32 %v1485, 1.0
      %v1518 = vadd.f32 %v1486, 1.0
      %v1519 = vadd.f32 %v1487, 1.0
      %v1520 = vadd.f32 %v1488, 1.0
      %v1521 = vadd.f32 %v1489, 1.0
      %v1522 = vadd.f32 %v1490, 1.0
      %v1523 = vadd.f32 %v1491, 1.0
      %v1524 = vadd.f32 %v1492, 1.0
      %v1525 = vadd.f32 %v1493, 1.0
      %v1526 = vadd.f32 %v1494, 1.0
      %v1527 = vadd.f32 %v1495, 1.0
      %v1528 = vadd.f32 %v1496, 1.0
      %v1529 = vadd.f32 %v1497, 1.0
      %v1530 = vadd.f32 %v1498, 1.0
      %v1531 = vadd.f32 %v1499, 1.0
      %v1532 = vadd.f32 %v1500, 1.0
      %v1533 = vadd.f32 %v1501, 1.0
      %v1534 = vadd.f32 %v1502, 1.0
      %v1535 = vadd.f32 %v1503, 1.0
      %v1536 = vadd.f32 %v1504, 1.0
      %v1537 = vadd.f32 %v1505, 1.0
      %v1538 = vadd.f32 %v1506, 1.0
      %v1539 = vadd.f32 %v1507, 1.0
      %v1540 = vadd.f32 %v1508, 1.0
      %v1541 = vadd.f32 %v1509, 1.0
      %v1542 = vadd.f32 %v1510, 1.0
      %v1543 = vadd.f32 %v1511, 1.0
      %v1544 = vadd.f32 %v1512, 1.0
      %v1545 = vadd.f32 %v1513, 1.0
      %v1546 = vadd.f32 %v1514, 1.0
      %v1547 = vadd.f32 %v1515, 1.0
      %v1548 = vadd.f32 %v1516, 1.0
      %v1549 = vmul.f32 %v1293, %v1517
      %v1550 = vmul.f32 %v1294, %v1518
      %v1551 = vmul.f32 %v1295, %v1519
      %v1552 = vmul.f32 %v1296, %v1520
      %v1553 = vmul.f32 %v1297, %v1521
      %v1554 = vmul.f32 %v1298, %v1522
      %v1555 = vmul.f32 %v1299, %v1523
      %v1556 = vmul.f32 %v1300, %v1524
      %v1557 = vmul.f32 %v1301, %v1525
      %v1558 = vmul.f32 %v1302, %v1526
      %v1559 = vmul.f32 %v1303, %v1527
      %v1560 = vmul.f32 %v1304, %v1528
      %v1561 = vmul.f32 %v1305, %v1529
      %v1562 = vmul.f32 %v1306, %v1530
      %v1563 = vmul.f32 %v1307, %v1531
      %v1564 = vmul.f32 %v1308, %v1532
      %v1565 = vmul.f32 %v1309, %v1533
      %v1566 = vmul.f32 %v1310, %v1534
      %v1567 = vmul.f32 %v1311, %v1535
      %v1568 = vmul.f32 %v1312, %v1536
      %v1569 = vmul.f32 %v1313, %v1537
      %v1570 = vmul.f32 %v1314, %v1538
      %v1571 = vmul.f32 %v1315, %v1539
      %v1572 = vmul.f32 %v1316, %v1540
      %v1573 = vmul.f32 %v1317, %v1541
      %v1574 = vmul.f32 %v1318, %v1542
      %v1575 = vmul.f32 %v1319, %v1543
      %v1576 = vmul.f32 %v1320, %v1544
      %v1577 = vmul.f32 %v1321, %v1545
      %v1578 = vmul.f32 %v1322, %v1546
      %v1579 = vmul.f32 %v1323, %v1547
      %v1580 = vmul.f32 %v1324, %v1548
      %1582 = vset.pattern.permute.xlu0 0
      %1583 = vperm.xlu0 %1582, %v505
      %v1584 = vpop.permute.xlu0 %1583
      %1587 = vset.pattern.permute.xlu0 0
      %1588 = vperm.xlu0 %1587, %v506
      %v1589 = vpop.permute.xlu0 %1588
      %1592 = vset.pattern.permute.xlu0 0
      %1593 = vperm.xlu0 %1592, %v507
      %v1594 = vpop.permute.xlu0 %1593
      %1597 = vset.pattern.permute.xlu0 0
      %1598 = vperm.xlu0 %1597, %v508
      %v1599 = vpop.permute.xlu0 %1598
      %1602 = vset.pattern.permute.xlu0 0
      %1603 = vperm.xlu0 %1602, %v509
      %v1604 = vpop.permute.xlu0 %1603
      %1607 = vset.pattern.permute.xlu0 0
      %1608 = vperm.xlu0 %1607, %v510
      %v1609 = vpop.permute.xlu0 %1608
      %1612 = vset.pattern.permute.xlu0 0
      %1613 = vperm.xlu0 %1612, %v511
      %v1614 = vpop.permute.xlu0 %1613
      %1617 = vset.pattern.permute.xlu0 0
      %1618 = vperm.xlu0 %1617, %v512
      %v1619 = vpop.permute.xlu0 %1618
      %1622 = vset.pattern.permute.xlu0 0
      %1623 = vperm.xlu0 %1622, %v513
      %v1624 = vpop.permute.xlu0 %1623
      %1627 = vset.pattern.permute.xlu0 0
      %1628 = vperm.xlu0 %1627, %v514
      %v1629 = vpop.permute.xlu0 %1628
      %1632 = vset.pattern.permute.xlu0 0
      %1633 = vperm.xlu0 %1632, %v515
      %v1634 = vpop.permute.xlu0 %1633
      %1637 = vset.pattern.permute.xlu0 0
      %1638 = vperm.xlu0 %1637, %v516
      %v1639 = vpop.permute.xlu0 %1638
      %1642 = vset.pattern.permute.xlu0 0
      %1643 = vperm.xlu0 %1642, %v517
      %v1644 = vpop.permute.xlu0 %1643
      %1647 = vset.pattern.permute.xlu0 0
      %1648 = vperm.xlu0 %1647, %v518
      %v1649 = vpop.permute.xlu0 %1648
      %1652 = vset.pattern.permute.xlu0 0
      %1653 = vperm.xlu0 %1652, %v519
      %v1654 = vpop.permute.xlu0 %1653
      %1657 = vset.pattern.permute.xlu0 0
      %1658 = vperm.xlu0 %1657, %v520
      %v1659 = vpop.permute.xlu0 %1658
      %1662 = vset.pattern.permute.xlu0 0
      %1663 = vperm.xlu0 %1662, %v521
      %v1664 = vpop.permute.xlu0 %1663
      %1667 = vset.pattern.permute.xlu0 0
      %1668 = vperm.xlu0 %1667, %v522
      %v1669 = vpop.permute.xlu0 %1668
      %1672 = vset.pattern.permute.xlu0 0
      %1673 = vperm.xlu0 %1672, %v523
      %v1674 = vpop.permute.xlu0 %1673
      %1677 = vset.pattern.permute.xlu0 0
      %1678 = vperm.xlu0 %1677, %v524
      %v1679 = vpop.permute.xlu0 %1678
      %1682 = vset.pattern.permute.xlu0 0
      %1683 = vperm.xlu0 %1682, %v525
      %v1684 = vpop.permute.xlu0 %1683
      %1687 = vset.pattern.permute.xlu0 0
      %1688 = vperm.xlu0 %1687, %v526
      %v1689 = vpop.permute.xlu0 %1688
      %1692 = vset.pattern.permute.xlu0 0
      %1693 = vperm.xlu0 %1692, %v527
      %v1694 = vpop.permute.xlu0 %1693
      %1697 = vset.pattern.permute.xlu0 0
      %1698 = vperm.xlu0 %1697, %v528
      %v1699 = vpop.permute.xlu0 %1698
      %1702 = vset.pattern.permute.xlu0 0
      %1703 = vperm.xlu0 %1702, %v529
      %v1704 = vpop.permute.xlu0 %1703
      %1707 = vset.pattern.permute.xlu0 0
      %1708 = vperm.xlu0 %1707, %v530
      %v1709 = vpop.permute.xlu0 %1708
      %1712 = vset.pattern.permute.xlu0 0
      %1713 = vperm.xlu0 %1712, %v531
      %v1714 = vpop.permute.xlu0 %1713
      %1717 = vset.pattern.permute.xlu0 0
      %1718 = vperm.xlu0 %1717, %v532
      %v1719 = vpop.permute.xlu0 %1718
      %1722 = vset.pattern.permute.xlu0 0
      %1723 = vperm.xlu0 %1722, %v533
      %v1724 = vpop.permute.xlu0 %1723
      %1727 = vset.pattern.permute.xlu0 0
      %1728 = vperm.xlu0 %1727, %v534
      %v1729 = vpop.permute.xlu0 %1728
      %1732 = vset.pattern.permute.xlu0 0
      %1733 = vperm.xlu0 %1732, %v535
      %v1734 = vpop.permute.xlu0 %1733
      %1737 = vset.pattern.permute.xlu0 0
      %1738 = vperm.xlu0 %1737, %v536
      %v1739 = vpop.permute.xlu0 %1738
      %v1741 = vmul.f32 %v1549, %v1584
      %v1742 = vmul.f32 %v1550, %v1589
      %v1743 = vmul.f32 %v1551, %v1594
      %v1744 = vmul.f32 %v1552, %v1599
      %v1745 = vmul.f32 %v1553, %v1604
      %v1746 = vmul.f32 %v1554, %v1609
      %v1747 = vmul.f32 %v1555, %v1614
      %v1748 = vmul.f32 %v1556, %v1619
      %v1749 = vmul.f32 %v1557, %v1624
      %v1750 = vmul.f32 %v1558, %v1629
      %v1751 = vmul.f32 %v1559, %v1634
      %v1752 = vmul.f32 %v1560, %v1639
      %v1753 = vmul.f32 %v1561, %v1644
      %v1754 = vmul.f32 %v1562, %v1649
      %v1755 = vmul.f32 %v1563, %v1654
      %v1756 = vmul.f32 %v1564, %v1659
      %v1757 = vmul.f32 %v1565, %v1664
      %v1758 = vmul.f32 %v1566, %v1669
      %v1759 = vmul.f32 %v1567, %v1674
      %v1760 = vmul.f32 %v1568, %v1679
      %v1761 = vmul.f32 %v1569, %v1684
      %v1762 = vmul.f32 %v1570, %v1689
      %v1763 = vmul.f32 %v1571, %v1694
      %v1764 = vmul.f32 %v1572, %v1699
      %v1765 = vmul.f32 %v1573, %v1704
      %v1766 = vmul.f32 %v1574, %v1709
      %v1767 = vmul.f32 %v1575, %v1714
      %v1768 = vmul.f32 %v1576, %v1719
      %v1769 = vmul.f32 %v1577, %v1724
      %v1770 = vmul.f32 %v1578, %v1729
      %v1771 = vmul.f32 %v1579, %v1734
      %v1772 = vmul.f32 %v1580, %v1739
      %v1773 = vadd.f32 %v1741, 0.0
      %v1774 = vadd.f32 %v1742, 0.0
      %v1775 = vadd.f32 %v1743, 0.0
      %v1776 = vadd.f32 %v1744, 0.0
      %v1777 = vadd.f32 %v1745, 0.0
      %v1778 = vadd.f32 %v1746, 0.0
      %v1779 = vadd.f32 %v1747, 0.0
      %v1780 = vadd.f32 %v1748, 0.0
      %v1781 = vadd.f32 %v1749, 0.0
      %v1782 = vadd.f32 %v1750, 0.0
      %v1783 = vadd.f32 %v1751, 0.0
      %v1784 = vadd.f32 %v1752, 0.0
      %v1785 = vadd.f32 %v1753, 0.0
      %v1786 = vadd.f32 %v1754, 0.0
      %v1787 = vadd.f32 %v1755, 0.0
      %v1788 = vadd.f32 %v1756, 0.0
      %v1789 = vadd.f32 %v1757, 0.0
      %v1790 = vadd.f32 %v1758, 0.0
      %v1791 = vadd.f32 %v1759, 0.0
      %v1792 = vadd.f32 %v1760, 0.0
      %v1793 = vadd.f32 %v1761, 0.0
      %v1794 = vadd.f32 %v1762, 0.0
      %v1795 = vadd.f32 %v1763, 0.0
      %v1796 = vadd.f32 %v1764, 0.0
      %v1797 = vadd.f32 %v1765, 0.0
      %v1798 = vadd.f32 %v1766, 0.0
      %v1799 = vadd.f32 %v1767, 0.0
      %v1800 = vadd.f32 %v1768, 0.0
      %v1801 = vadd.f32 %v1769, 0.0
      %v1802 = vadd.f32 %v1770, 0.0
      %v1803 = vadd.f32 %v1771, 0.0
      %v1804 = vadd.f32 %v1772, 0.0
      %1805 = vst.msk [vmem:[%s537 + $0x8] sm:$0xff] %vm327, %v1549
      %1806 = vst.msk [vmem:[%s537 + $0x10] sm:$0xff] %vm327, %v1550
      %1807 = vst.msk [vmem:[%s537 + $0x28] sm:$0xff] %vm327, %v1551
      %1808 = vst.msk [vmem:[%s537 + $0x30] sm:$0xff] %vm327, %v1552
      %1809 = vst.msk [vmem:[%s537 + $0x48] sm:$0xff] %vm327, %v1553
      %1810 = vst.msk [vmem:[%s537 + $0x50] sm:$0xff] %vm327, %v1554
      %1811 = vst.msk [vmem:[%s537 + $0x68] sm:$0xff] %vm327, %v1555
      %1812 = vst.msk [vmem:[%s537 + $0x70] sm:$0xff] %vm327, %v1556
      %1813 = vst.msk [vmem:[%s537 + $0x88] sm:$0xff] %vm327, %v1557
      %1814 = vst.msk [vmem:[%s537 + $0x90] sm:$0xff] %vm327, %v1558
      %1815 = vst.msk [vmem:[%s537 + $0xa8] sm:$0xff] %vm327, %v1559
      %1816 = vst.msk [vmem:[%s537 + $0xb0] sm:$0xff] %vm327, %v1560
      %1817 = vst.msk [vmem:[%s537 + $0xc8] sm:$0xff] %vm327, %v1561
      %1818 = vst.msk [vmem:[%s537 + $0xd0] sm:$0xff] %vm327, %v1562
      %1819 = vst.msk [vmem:[%s537 + $0xe8] sm:$0xff] %vm327, %v1563
      %1820 = vst.msk [vmem:[%s537 + $0xf0] sm:$0xff] %vm327, %v1564
      %1821 = vst.msk [vmem:[%s537 + $0x108] sm:$0xff] %vm327, %v1565
      %1822 = vst.msk [vmem:[%s537 + $0x110] sm:$0xff] %vm327, %v1566
      %1823 = vst.msk [vmem:[%s537 + $0x128] sm:$0xff] %vm327, %v1567
      %1824 = vst.msk [vmem:[%s537 + $0x130] sm:$0xff] %vm327, %v1568
      %1825 = vst.msk [vmem:[%s537 + $0x148] sm:$0xff] %vm327, %v1569
      %1826 = vst.msk [vmem:[%s537 + $0x150] sm:$0xff] %vm327, %v1570
      %1827 = vst.msk [vmem:[%s537 + $0x168] sm:$0xff] %vm327, %v1571
      %1828 = vst.msk [vmem:[%s537 + $0x170] sm:$0xff] %vm327, %v1572
      %1829 = vst.msk [vmem:[%s537 + $0x188] sm:$0xff] %vm327, %v1573
      %1830 = vst.msk [vmem:[%s537 + $0x190] sm:$0xff] %vm327, %v1574
      %1831 = vst.msk [vmem:[%s537 + $0x1a8] sm:$0xff] %vm327, %v1575
      %1832 = vst.msk [vmem:[%s537 + $0x1b0] sm:$0xff] %vm327, %v1576
      %1833 = vst.msk [vmem:[%s537 + $0x1c8] sm:$0xff] %vm327, %v1577
      %1834 = vst.msk [vmem:[%s537 + $0x1d0] sm:$0xff] %vm327, %v1578
      %1835 = vst.msk [vmem:[%s537 + $0x1e8] sm:$0xff] %vm327, %v1579
      %1836 = vst.msk [vmem:[%s537 + $0x1f0] sm:$0xff] %vm327, %v1580
      %v1837 = vld [vmem:[%s312] sm:$0x1f]
      %v1838 = vld [vmem:[%s312 + $0x8] sm:$0x1f]
      %v1839 = vld [vmem:[%s312 + $0x10] sm:$0x1f]
      %v1840 = vld [vmem:[%s312 + $0x18] sm:$0x1f]
      %v1841 = vld [vmem:[%s312 + $0x20] sm:$0x1f]
      %v1842 = vld [vmem:[#allocation2 + $0x6] sm:$0xff]
      %v1843 = vld [vmem:[#allocation2 + $0xe] sm:$0xff]
      %v1844 = vld [vmem:[#allocation2 + $0x26] sm:$0xff]
      %v1845 = vld [vmem:[#allocation2 + $0x2e] sm:$0xff]
      %v1846 = vld [vmem:[#allocation2 + $0x46] sm:$0xff]
      %v1847 = vld [vmem:[#allocation2 + $0x4e] sm:$0xff]
      %v1848 = vld [vmem:[#allocation2 + $0x66] sm:$0xff]
      %v1849 = vld [vmem:[#allocation2 + $0x6e] sm:$0xff]
      %v1850 = vld [vmem:[#allocation2 + $0x86] sm:$0xff]
      %v1851 = vld [vmem:[#allocation2 + $0x8e] sm:$0xff]
      %v1852 = vld [vmem:[#allocation2 + $0xa6] sm:$0xff]
      %v1853 = vld [vmem:[#allocation2 + $0xae] sm:$0xff]
      %v1854 = vld [vmem:[#allocation2 + $0xc6] sm:$0xff]
      %v1855 = vld [vmem:[#allocation2 + $0xce] sm:$0xff]
      %v1856 = vld [vmem:[#allocation2 + $0xe6] sm:$0xff]
      %v1857 = vld [vmem:[#allocation2 + $0xee] sm:$0xff]
      %v1858 = vld [vmem:[#allocation2 + $0x106] sm:$0xff]
      %v1859 = vld [vmem:[#allocation2 + $0x10e] sm:$0xff]
      %v1860 = vld [vmem:[#allocation2 + $0x126] sm:$0xff]
      %v1861 = vld [vmem:[#allocation2 + $0x12e] sm:$0xff]
      %v1862 = vld [vmem:[#allocation2 + $0x146] sm:$0xff]
      %v1863 = vld [vmem:[#allocation2 + $0x14e] sm:$0xff]
      %v1864 = vld [vmem:[#allocation2 + $0x166] sm:$0xff]
      %v1865 = vld [vmem:[#allocation2 + $0x16e] sm:$0xff]
      %v1866 = vld [vmem:[#allocation2 + $0x186] sm:$0xff]
      %v1867 = vld [vmem:[#allocation2 + $0x18e] sm:$0xff]
      %v1868 = vld [vmem:[#allocation2 + $0x1a6] sm:$0xff]
      %v1869 = vld [vmem:[#allocation2 + $0x1ae] sm:$0xff]
      %v1870 = vld [vmem:[#allocation2 + $0x1c6] sm:$0xff]
      %v1871 = vld [vmem:[#allocation2 + $0x1ce] sm:$0xff]
      %v1872 = vld [vmem:[#allocation2 + $0x1e6] sm:$0xff]
      %v1873 = vld [vmem:[#allocation2 + $0x1ee] sm:$0xff]
      %v1874 = vld [vmem:[#allocation2 + $0x206] sm:$0xff]
      %v1875 = vld [vmem:[#allocation2 + $0x20e] sm:$0xff]
      %v1876 = vld [vmem:[#allocation2 + $0x226] sm:$0xff]
      %v1877 = vld [vmem:[#allocation2 + $0x22e] sm:$0xff]
      %v1878 = vld [vmem:[#allocation2 + $0x246] sm:$0xff]
      %v1879 = vld [vmem:[#allocation2 + $0x24e] sm:$0xff]
      %v1880 = vld [vmem:[#allocation2 + $0x266] sm:$0xff]
      %v1881 = vld [vmem:[#allocation2 + $0x26e] sm:$0xff]
      %v1882 = vlaneseq
      %v1883 = vshrl.u32 %v1882, 7
      %v1884 = vsub.s32 0, %v1883
      %v1885 = vrot.slane %v1837, %v1884
      %v1886 = vmul.f32 %v1842, %v1885
      %v1887 = vmul.f32 %v1843, %v1885
      %v1888 = vmul.f32 %v1844, %v1885
      %v1889 = vmul.f32 %v1845, %v1885
      %v1890 = vmul.f32 %v1846, %v1885
      %v1891 = vmul.f32 %v1847, %v1885
      %v1892 = vmul.f32 %v1848, %v1885
      %v1893 = vmul.f32 %v1849, %v1885
      %v1894 = vmul.f32 %v1850, %v1885
      %v1895 = vmul.f32 %v1851, %v1885
      %v1896 = vmul.f32 %v1852, %v1885
      %v1897 = vmul.f32 %v1853, %v1885
      %v1898 = vmul.f32 %v1854, %v1885
      %v1899 = vmul.f32 %v1855, %v1885
      %v1900 = vmul.f32 %v1856, %v1885
      %v1901 = vmul.f32 %v1857, %v1885
      %v1902 = vmul.f32 %v1858, %v1885
      %v1903 = vmul.f32 %v1859, %v1885
      %v1904 = vmul.f32 %v1860, %v1885
      %v1905 = vmul.f32 %v1861, %v1885
      %v1906 = vmul.f32 %v1862, %v1885
      %v1907 = vmul.f32 %v1863, %v1885
      %v1908 = vmul.f32 %v1864, %v1885
      %v1909 = vmul.f32 %v1865, %v1885
      %v1910 = vmul.f32 %v1866, %v1885
      %v1911 = vmul.f32 %v1867, %v1885
      %v1912 = vmul.f32 %v1868, %v1885
      %v1913 = vmul.f32 %v1869, %v1885
      %v1914 = vmul.f32 %v1870, %v1885
      %v1915 = vmul.f32 %v1871, %v1885
      %v1916 = vmul.f32 %v1872, %v1885
      %v1917 = vmul.f32 %v1873, %v1885
      %v1918 = vadd.f32 %v1886, 0.0
      %v1919 = vadd.f32 %v1887, 0.0
      %v1920 = vadd.f32 %v1888, 0.0
      %v1921 = vadd.f32 %v1889, 0.0
      %v1922 = vadd.f32 %v1890, 0.0
      %v1923 = vadd.f32 %v1891, 0.0
      %v1924 = vadd.f32 %v1892, 0.0
      %v1925 = vadd.f32 %v1893, 0.0
      %v1926 = vadd.f32 %v1894, 0.0
      %v1927 = vadd.f32 %v1895, 0.0
      %v1928 = vadd.f32 %v1896, 0.0
      %v1929 = vadd.f32 %v1897, 0.0
      %v1930 = vadd.f32 %v1898, 0.0
      %v1931 = vadd.f32 %v1899, 0.0
      %v1932 = vadd.f32 %v1900, 0.0
      %v1933 = vadd.f32 %v1901, 0.0
      %v1934 = vadd.f32 %v1902, 0.0
      %v1935 = vadd.f32 %v1903, 0.0
      %v1936 = vadd.f32 %v1904, 0.0
      %v1937 = vadd.f32 %v1905, 0.0
      %v1938 = vadd.f32 %v1906, 0.0
      %v1939 = vadd.f32 %v1907, 0.0
      %v1940 = vadd.f32 %v1908, 0.0
      %v1941 = vadd.f32 %v1909, 0.0
      %v1942 = vadd.f32 %v1910, 0.0
      %v1943 = vadd.f32 %v1911, 0.0
      %v1944 = vadd.f32 %v1912, 0.0
      %v1945 = vadd.f32 %v1913, 0.0
      %v1946 = vadd.f32 %v1914, 0.0
      %v1947 = vadd.f32 %v1915, 0.0
      %v1948 = vadd.f32 %v1916, 0.0
      %v1949 = vadd.f32 %v1917, 0.0
      %v1950 = vlaneseq
      %v1951 = vshrl.u32 %v1950, 7
      %v1952 = vsub.s32 0, %v1951
      %v1953 = vrot.slane %v1838, %v1952
      %v1954 = vmul.f32 %v1844, %v1953
      %v1955 = vmul.f32 %v1845, %v1953
      %v1956 = vmul.f32 %v1846, %v1953
      %v1957 = vmul.f32 %v1847, %v1953
      %v1958 = vmul.f32 %v1848, %v1953
      %v1959 = vmul.f32 %v1849, %v1953
      %v1960 = vmul.f32 %v1850, %v1953
      %v1961 = vmul.f32 %v1851, %v1953
      %v1962 = vmul.f32 %v1852, %v1953
      %v1963 = vmul.f32 %v1853, %v1953
      %v1964 = vmul.f32 %v1854, %v1953
      %v1965 = vmul.f32 %v1855, %v1953
      %v1966 = vmul.f32 %v1856, %v1953
      %v1967 = vmul.f32 %v1857, %v1953
      %v1968 = vmul.f32 %v1858, %v1953
      %v1969 = vmul.f32 %v1859, %v1953
      %v1970 = vmul.f32 %v1860, %v1953
      %v1971 = vmul.f32 %v1861, %v1953
      %v1972 = vmul.f32 %v1862, %v1953
      %v1973 = vmul.f32 %v1863, %v1953
      %v1974 = vmul.f32 %v1864, %v1953
      %v1975 = vmul.f32 %v1865, %v1953
      %v1976 = vmul.f32 %v1866, %v1953
      %v1977 = vmul.f32 %v1867, %v1953
      %v1978 = vmul.f32 %v1868, %v1953
      %v1979 = vmul.f32 %v1869, %v1953
      %v1980 = vmul.f32 %v1870, %v1953
      %v1981 = vmul.f32 %v1871, %v1953
      %v1982 = vmul.f32 %v1872, %v1953
      %v1983 = vmul.f32 %v1873, %v1953
      %v1984 = vmul.f32 %v1874, %v1953
      %v1985 = vmul.f32 %v1875, %v1953
      %v1986 = vadd.f32 %v1918, %v1954
      %v1987 = vadd.f32 %v1919, %v1955
      %v1988 = vadd.f32 %v1920, %v1956
      %v1989 = vadd.f32 %v1921, %v1957
      %v1990 = vadd.f32 %v1922, %v1958
      %v1991 = vadd.f32 %v1923, %v1959
      %v1992 = vadd.f32 %v1924, %v1960
      %v1993 = vadd.f32 %v1925, %v1961
      %v1994 = vadd.f32 %v1926, %v1962
      %v1995 = vadd.f32 %v1927, %v1963
      %v1996 = vadd.f32 %v1928, %v1964
      %v1997 = vadd.f32 %v1929, %v1965
      %v1998 = vadd.f32 %v1930, %v1966
      %v1999 = vadd.f32 %v1931, %v1967
      %v2000 = vadd.f32 %v1932, %v1968
      %v2001 = vadd.f32 %v1933, %v1969
      %v2002 = vadd.f32 %v1934, %v1970
      %v2003 = vadd.f32 %v1935, %v1971
      %v2004 = vadd.f32 %v1936, %v1972
      %v2005 = vadd.f32 %v1937, %v1973
      %v2006 = vadd.f32 %v1938, %v1974
      %v2007 = vadd.f32 %v1939, %v1975
      %v2008 = vadd.f32 %v1940, %v1976
      %v2009 = vadd.f32 %v1941, %v1977
      %v2010 = vadd.f32 %v1942, %v1978
      %v2011 = vadd.f32 %v1943, %v1979
      %v2012 = vadd.f32 %v1944, %v1980
      %v2013 = vadd.f32 %v1945, %v1981
      %v2014 = vadd.f32 %v1946, %v1982
      %v2015 = vadd.f32 %v1947, %v1983
      %v2016 = vadd.f32 %v1948, %v1984
      %v2017 = vadd.f32 %v1949, %v1985
      %v2018 = vlaneseq
      %v2019 = vshrl.u32 %v2018, 7
      %v2020 = vsub.s32 0, %v2019
      %v2021 = vrot.slane %v1839, %v2020
      %v2022 = vmul.f32 %v1846, %v2021
      %v2023 = vmul.f32 %v1847, %v2021
      %v2024 = vmul.f32 %v1848, %v2021
      %v2025 = vmul.f32 %v1849, %v2021
      %v2026 = vmul.f32 %v1850, %v2021
      %v2027 = vmul.f32 %v1851, %v2021
      %v2028 = vmul.f32 %v1852, %v2021
      %v2029 = vmul.f32 %v1853, %v2021
      %v2030 = vmul.f32 %v1854, %v2021
      %v2031 = vmul.f32 %v1855, %v2021
      %v2032 = vmul.f32 %v1856, %v2021
      %v2033 = vmul.f32 %v1857, %v2021
      %v2034 = vmul.f32 %v1858, %v2021
      %v2035 = vmul.f32 %v1859, %v2021
      %v2036 = vmul.f32 %v1860, %v2021
      %v2037 = vmul.f32 %v1861, %v2021
      %v2038 = vmul.f32 %v1862, %v2021
      %v2039 = vmul.f32 %v1863, %v2021
      %v2040 = vmul.f32 %v1864, %v2021
      %v2041 = vmul.f32 %v1865, %v2021
      %v2042 = vmul.f32 %v1866, %v2021
      %v2043 = vmul.f32 %v1867, %v2021
      %v2044 = vmul.f32 %v1868, %v2021
      %v2045 = vmul.f32 %v1869, %v2021
      %v2046 = vmul.f32 %v1870, %v2021
      %v2047 = vmul.f32 %v1871, %v2021
      %v2048 = vmul.f32 %v1872, %v2021
      %v2049 = vmul.f32 %v1873, %v2021
      %v2050 = vmul.f32 %v1874, %v2021
      %v2051 = vmul.f32 %v1875, %v2021
      %v2052 = vmul.f32 %v1876, %v2021
      %v2053 = vmul.f32 %v1877, %v2021
      %v2054 = vadd.f32 %v1986, %v2022
      %v2055 = vadd.f32 %v1987, %v2023
      %v2056 = vadd.f32 %v1988, %v2024
      %v2057 = vadd.f32 %v1989, %v2025
      %v2058 = vadd.f32 %v1990, %v2026
      %v2059 = vadd.f32 %v1991, %v2027
      %v2060 = vadd.f32 %v1992, %v2028
      %v2061 = vadd.f32 %v1993, %v2029
      %v2062 = vadd.f32 %v1994, %v2030
      %v2063 = vadd.f32 %v1995, %v2031
      %v2064 = vadd.f32 %v1996, %v2032
      %v2065 = vadd.f32 %v1997, %v2033
      %v2066 = vadd.f32 %v1998, %v2034
      %v2067 = vadd.f32 %v1999, %v2035
      %v2068 = vadd.f32 %v2000, %v2036
      %v2069 = vadd.f32 %v2001, %v2037
      %v2070 = vadd.f32 %v2002, %v2038
      %v2071 = vadd.f32 %v2003, %v2039
      %v2072 = vadd.f32 %v2004, %v2040
      %v2073 = vadd.f32 %v2005, %v2041
      %v2074 = vadd.f32 %v2006, %v2042
      %v2075 = vadd.f32 %v2007, %v2043
      %v2076 = vadd.f32 %v2008, %v2044
      %v2077 = vadd.f32 %v2009, %v2045
      %v2078 = vadd.f32 %v2010, %v2046
      %v2079 = vadd.f32 %v2011, %v2047
      %v2080 = vadd.f32 %v2012, %v2048
      %v2081 = vadd.f32 %v2013, %v2049
      %v2082 = vadd.f32 %v2014, %v2050
      %v2083 = vadd.f32 %v2015, %v2051
      %v2084 = vadd.f32 %v2016, %v2052
      %v2085 = vadd.f32 %v2017, %v2053
      %v2086 = vlaneseq
      %v2087 = vshrl.u32 %v2086, 7
      %v2088 = vsub.s32 0, %v2087
      %v2089 = vrot.slane %v1840, %v2088
      %v2090 = vmul.f32 %v1848, %v2089
      %v2091 = vmul.f32 %v1849, %v2089
      %v2092 = vmul.f32 %v1850, %v2089
      %v2093 = vmul.f32 %v1851, %v2089
      %v2094 = vmul.f32 %v1852, %v2089
      %v2095 = vmul.f32 %v1853, %v2089
      %v2096 = vmul.f32 %v1854, %v2089
      %v2097 = vmul.f32 %v1855, %v2089
      %v2098 = vmul.f32 %v1856, %v2089
      %v2099 = vmul.f32 %v1857, %v2089
      %v2100 = vmul.f32 %v1858, %v2089
      %v2101 = vmul.f32 %v1859, %v2089
      %v2102 = vmul.f32 %v1860, %v2089
      %v2103 = vmul.f32 %v1861, %v2089
      %v2104 = vmul.f32 %v1862, %v2089
      %v2105 = vmul.f32 %v1863, %v2089
      %v2106 = vmul.f32 %v1864, %v2089
      %v2107 = vmul.f32 %v1865, %v2089
      %v2108 = vmul.f32 %v1866, %v2089
      %v2109 = vmul.f32 %v1867, %v2089
      %v2110 = vmul.f32 %v1868, %v2089
      %v2111 = vmul.f32 %v1869, %v2089
      %v2112 = vmul.f32 %v1870, %v2089
      %v2113 = vmul.f32 %v1871, %v2089
      %v2114 = vmul.f32 %v1872, %v2089
      %v2115 = vmul.f32 %v1873, %v2089
      %v2116 = vmul.f32 %v1874, %v2089
      %v2117 = vmul.f32 %v1875, %v2089
      %v2118 = vmul.f32 %v1876, %v2089
      %v2119 = vmul.f32 %v1877, %v2089
      %v2120 = vmul.f32 %v1878, %v2089
      %v2121 = vmul.f32 %v1879, %v2089
      %v2122 = vadd.f32 %v2054, %v2090
      %v2123 = vadd.f32 %v2055, %v2091
      %v2124 = vadd.f32 %v2056, %v2092
      %v2125 = vadd.f32 %v2057, %v2093
      %v2126 = vadd.f32 %v2058, %v2094
      %v2127 = vadd.f32 %v2059, %v2095
      %v2128 = vadd.f32 %v2060, %v2096
      %v2129 = vadd.f32 %v2061, %v2097
      %v2130 = vadd.f32 %v2062, %v2098
      %v2131 = vadd.f32 %v2063, %v2099
      %v2132 = vadd.f32 %v2064, %v2100
      %v2133 = vadd.f32 %v2065, %v2101
      %v2134 = vadd.f32 %v2066, %v2102
      %v2135 = vadd.f32 %v2067, %v2103
      %v2136 = vadd.f32 %v2068, %v2104
      %v2137 = vadd.f32 %v2069, %v2105
      %v2138 = vadd.f32 %v2070, %v2106
      %v2139 = vadd.f32 %v2071, %v2107
      %v2140 = vadd.f32 %v2072, %v2108
      %v2141 = vadd.f32 %v2073, %v2109
      %v2142 = vadd.f32 %v2074, %v2110
      %v2143 = vadd.f32 %v2075, %v2111
      %v2144 = vadd.f32 %v2076, %v2112
      %v2145 = vadd.f32 %v2077, %v2113
      %v2146 = vadd.f32 %v2078, %v2114
      %v2147 = vadd.f32 %v2079, %v2115
      %v2148 = vadd.f32 %v2080, %v2116
      %v2149 = vadd.f32 %v2081, %v2117
      %v2150 = vadd.f32 %v2082, %v2118
      %v2151 = vadd.f32 %v2083, %v2119
      %v2152 = vadd.f32 %v2084, %v2120
      %v2153 = vadd.f32 %v2085, %v2121
      %v2154 = vlaneseq
      %v2155 = vshrl.u32 %v2154, 7
      %v2156 = vsub.s32 0, %v2155
      %v2157 = vrot.slane %v1841, %v2156
      %v2158 = vmul.f32 %v1850, %v2157
      %v2159 = vmul.f32 %v1851, %v2157
      %v2160 = vmul.f32 %v1852, %v2157
      %v2161 = vmul.f32 %v1853, %v2157
      %v2162 = vmul.f32 %v1854, %v2157
      %v2163 = vmul.f32 %v1855, %v2157
      %v2164 = vmul.f32 %v1856, %v2157
      %v2165 = vmul.f32 %v1857, %v2157
      %v2166 = vmul.f32 %v1858, %v2157
      %v2167 = vmul.f32 %v1859, %v2157
      %v2168 = vmul.f32 %v1860, %v2157
      %v2169 = vmul.f32 %v1861, %v2157
      %v2170 = vmul.f32 %v1862, %v2157
      %v2171 = vmul.f32 %v1863, %v2157
      %v2172 = vmul.f32 %v1864, %v2157
      %v2173 = vmul.f32 %v1865, %v2157
      %v2174 = vmul.f32 %v1866, %v2157
      %v2175 = vmul.f32 %v1867, %v2157
      %v2176 = vmul.f32 %v1868, %v2157
      %v2177 = vmul.f32 %v1869, %v2157
      %v2178 = vmul.f32 %v1870, %v2157
      %v2179 = vmul.f32 %v1871, %v2157
      %v2180 = vmul.f32 %v1872, %v2157
      %v2181 = vmul.f32 %v1873, %v2157
      %v2182 = vmul.f32 %v1874, %v2157
      %v2183 = vmul.f32 %v1875, %v2157
      %v2184 = vmul.f32 %v1876, %v2157
      %v2185 = vmul.f32 %v1877, %v2157
      %v2186 = vmul.f32 %v1878, %v2157
      %v2187 = vmul.f32 %v1879, %v2157
      %v2188 = vmul.f32 %v1880, %v2157
      %v2189 = vmul.f32 %v1881, %v2157
      %v2190 = vadd.f32 %v2122, %v2158
      %v2191 = vadd.f32 %v2123, %v2159
      %v2192 = vadd.f32 %v2124, %v2160
      %v2193 = vadd.f32 %v2125, %v2161
      %v2194 = vadd.f32 %v2126, %v2162
      %v2195 = vadd.f32 %v2127, %v2163
      %v2196 = vadd.f32 %v2128, %v2164
      %v2197 = vadd.f32 %v2129, %v2165
      %v2198 = vadd.f32 %v2130, %v2166
      %v2199 = vadd.f32 %v2131, %v2167
      %v2200 = vadd.f32 %v2132, %v2168
      %v2201 = vadd.f32 %v2133, %v2169
      %v2202 = vadd.f32 %v2134, %v2170
      %v2203 = vadd.f32 %v2135, %v2171
      %v2204 = vadd.f32 %v2136, %v2172
      %v2205 = vadd.f32 %v2137, %v2173
      %v2206 = vadd.f32 %v2138, %v2174
      %v2207 = vadd.f32 %v2139, %v2175
      %v2208 = vadd.f32 %v2140, %v2176
      %v2209 = vadd.f32 %v2141, %v2177
      %v2210 = vadd.f32 %v2142, %v2178
      %v2211 = vadd.f32 %v2143, %v2179
      %v2212 = vadd.f32 %v2144, %v2180
      %v2213 = vadd.f32 %v2145, %v2181
      %v2214 = vadd.f32 %v2146, %v2182
      %v2215 = vadd.f32 %v2147, %v2183
      %v2216 = vadd.f32 %v2148, %v2184
      %v2217 = vadd.f32 %v2149, %v2185
      %v2218 = vadd.f32 %v2150, %v2186
      %v2219 = vadd.f32 %v2151, %v2187
      %v2220 = vadd.f32 %v2152, %v2188
      %v2221 = vadd.f32 %v2153, %v2189
      %v2222 = vld [vmem:[#allocation2 + $0x7] sm:$0xff]
      %v2223 = vld [vmem:[#allocation2 + $0xf] sm:$0xff]
      %v2224 = vld [vmem:[#allocation2 + $0x27] sm:$0xff]
      %v2225 = vld [vmem:[#allocation2 + $0x2f] sm:$0xff]
      %v2226 = vld [vmem:[#allocation2 + $0x47] sm:$0xff]
      %v2227 = vld [vmem:[#allocation2 + $0x4f] sm:$0xff]
      %v2228 = vld [vmem:[#allocation2 + $0x67] sm:$0xff]
      %v2229 = vld [vmem:[#allocation2 + $0x6f] sm:$0xff]
      %v2230 = vld [vmem:[#allocation2 + $0x87] sm:$0xff]
      %v2231 = vld [vmem:[#allocation2 + $0x8f] sm:$0xff]
      %v2232 = vld [vmem:[#allocation2 + $0xa7] sm:$0xff]
      %v2233 = vld [vmem:[#allocation2 + $0xaf] sm:$0xff]
      %v2234 = vld [vmem:[#allocation2 + $0xc7] sm:$0xff]
      %v2235 = vld [vmem:[#allocation2 + $0xcf] sm:$0xff]
      %v2236 = vld [vmem:[#allocation2 + $0xe7] sm:$0xff]
      %v2237 = vld [vmem:[#allocation2 + $0xef] sm:$0xff]
      %v2238 = vld [vmem:[#allocation2 + $0x107] sm:$0xff]
      %v2239 = vld [vmem:[#allocation2 + $0x10f] sm:$0xff]
      %v2240 = vld [vmem:[#allocation2 + $0x127] sm:$0xff]
      %v2241 = vld [vmem:[#allocation2 + $0x12f] sm:$0xff]
      %v2242 = vld [vmem:[#allocation2 + $0x147] sm:$0xff]
      %v2243 = vld [vmem:[#allocation2 + $0x14f] sm:$0xff]
      %v2244 = vld [vmem:[#allocation2 + $0x167] sm:$0xff]
      %v2245 = vld [vmem:[#allocation2 + $0x16f] sm:$0xff]
      %v2246 = vld [vmem:[#allocation2 + $0x187] sm:$0xff]
      %v2247 = vld [vmem:[#allocation2 + $0x18f] sm:$0xff]
      %v2248 = vld [vmem:[#allocation2 + $0x1a7] sm:$0xff]
      %v2249 = vld [vmem:[#allocation2 + $0x1af] sm:$0xff]
      %v2250 = vld [vmem:[#allocation2 + $0x1c7] sm:$0xff]
      %v2251 = vld [vmem:[#allocation2 + $0x1cf] sm:$0xff]
      %v2252 = vld [vmem:[#allocation2 + $0x1e7] sm:$0xff]
      %v2253 = vld [vmem:[#allocation2 + $0x1ef] sm:$0xff]
      %v2254 = vld [vmem:[#allocation2 + $0x207] sm:$0xff]
      %v2255 = vld [vmem:[#allocation2 + $0x20f] sm:$0xff]
      %v2256 = vld [vmem:[#allocation2 + $0x227] sm:$0xff]
      %v2257 = vld [vmem:[#allocation2 + $0x22f] sm:$0xff]
      %v2258 = vld [vmem:[#allocation2 + $0x247] sm:$0xff]
      %v2259 = vld [vmem:[#allocation2 + $0x24f] sm:$0xff]
      %v2260 = vld [vmem:[#allocation2 + $0x267] sm:$0xff]
      %v2261 = vld [vmem:[#allocation2 + $0x26f] sm:$0xff]
      %v2262 = vlaneseq
      %v2263 = vshrl.u32 %v2262, 7
      %v2264 = vsub.s32 1, %v2263
      %v2265 = vrot.slane %v1837, %v2264
      %v2266 = vmul.f32 %v2222, %v2265
      %v2267 = vmul.f32 %v2223, %v2265
      %v2268 = vmul.f32 %v2224, %v2265
      %v2269 = vmul.f32 %v2225, %v2265
      %v2270 = vmul.f32 %v2226, %v2265
      %v2271 = vmul.f32 %v2227, %v2265
      %v2272 = vmul.f32 %v2228, %v2265
      %v2273 = vmul.f32 %v2229, %v2265
      %v2274 = vmul.f32 %v2230, %v2265
      %v2275 = vmul.f32 %v2231, %v2265
      %v2276 = vmul.f32 %v2232, %v2265
      %v2277 = vmul.f32 %v2233, %v2265
      %v2278 = vmul.f32 %v2234, %v2265
      %v2279 = vmul.f32 %v2235, %v2265
      %v2280 = vmul.f32 %v2236, %v2265
      %v2281 = vmul.f32 %v2237, %v2265
      %v2282 = vmul.f32 %v2238, %v2265
      %v2283 = vmul.f32 %v2239, %v2265
      %v2284 = vmul.f32 %v2240, %v2265
      %v2285 = vmul.f32 %v2241, %v2265
      %v2286 = vmul.f32 %v2242, %v2265
      %v2287 = vmul.f32 %v2243, %v2265
      %v2288 = vmul.f32 %v2244, %v2265
      %v2289 = vmul.f32 %v2245, %v2265
      %v2290 = vmul.f32 %v2246, %v2265
      %v2291 = vmul.f32 %v2247, %v2265
      %v2292 = vmul.f32 %v2248, %v2265
      %v2293 = vmul.f32 %v2249, %v2265
      %v2294 = vmul.f32 %v2250, %v2265
      %v2295 = vmul.f32 %v2251, %v2265
      %v2296 = vmul.f32 %v2252, %v2265
      %v2297 = vmul.f32 %v2253, %v2265
      %v2298 = vadd.f32 %v2190, %v2266
      %v2299 = vadd.f32 %v2191, %v2267
      %v2300 = vadd.f32 %v2192, %v2268
      %v2301 = vadd.f32 %v2193, %v2269
      %v2302 = vadd.f32 %v2194, %v2270
      %v2303 = vadd.f32 %v2195, %v2271
      %v2304 = vadd.f32 %v2196, %v2272
      %v2305 = vadd.f32 %v2197, %v2273
      %v2306 = vadd.f32 %v2198, %v2274
      %v2307 = vadd.f32 %v2199, %v2275
      %v2308 = vadd.f32 %v2200, %v2276
      %v2309 = vadd.f32 %v2201, %v2277
      %v2310 = vadd.f32 %v2202, %v2278
      %v2311 = vadd.f32 %v2203, %v2279
      %v2312 = vadd.f32 %v2204, %v2280
      %v2313 = vadd.f32 %v2205, %v2281
      %v2314 = vadd.f32 %v2206, %v2282
      %v2315 = vadd.f32 %v2207, %v2283
      %v2316 = vadd.f32 %v2208, %v2284
      %v2317 = vadd.f32 %v2209, %v2285
      %v2318 = vadd.f32 %v2210, %v2286
      %v2319 = vadd.f32 %v2211, %v2287
      %v2320 = vadd.f32 %v2212, %v2288
      %v2321 = vadd.f32 %v2213, %v2289
      %v2322 = vadd.f32 %v2214, %v2290
      %v2323 = vadd.f32 %v2215, %v2291
      %v2324 = vadd.f32 %v2216, %v2292
      %v2325 = vadd.f32 %v2217, %v2293
      %v2326 = vadd.f32 %v2218, %v2294
      %v2327 = vadd.f32 %v2219, %v2295
      %v2328 = vadd.f32 %v2220, %v2296
      %v2329 = vadd.f32 %v2221, %v2297
      %v2330 = vlaneseq
      %v2331 = vshrl.u32 %v2330, 7
      %v2332 = vsub.s32 1, %v2331
      %v2333 = vrot.slane %v1838, %v2332
      %v2334 = vmul.f32 %v2224, %v2333
      %v2335 = vmul.f32 %v2225, %v2333
      %v2336 = vmul.f32 %v2226, %v2333
      %v2337 = vmul.f32 %v2227, %v2333
      %v2338 = vmul.f32 %v2228, %v2333
      %v2339 = vmul.f32 %v2229, %v2333
      %v2340 = vmul.f32 %v2230, %v2333
      %v2341 = vmul.f32 %v2231, %v2333
      %v2342 = vmul.f32 %v2232, %v2333
      %v2343 = vmul.f32 %v2233, %v2333
      %v2344 = vmul.f32 %v2234, %v2333
      %v2345 = vmul.f32 %v2235, %v2333
      %v2346 = vmul.f32 %v2236, %v2333
      %v2347 = vmul.f32 %v2237, %v2333
      %v2348 = vmul.f32 %v2238, %v2333
      %v2349 = vmul.f32 %v2239, %v2333
      %v2350 = vmul.f32 %v2240, %v2333
      %v2351 = vmul.f32 %v2241, %v2333
      %v2352 = vmul.f32 %v2242, %v2333
      %v2353 = vmul.f32 %v2243, %v2333
      %v2354 = vmul.f32 %v2244, %v2333
      %v2355 = vmul.f32 %v2245, %v2333
      %v2356 = vmul.f32 %v2246, %v2333
      %v2357 = vmul.f32 %v2247, %v2333
      %v2358 = vmul.f32 %v2248, %v2333
      %v2359 = vmul.f32 %v2249, %v2333
      %v2360 = vmul.f32 %v2250, %v2333
      %v2361 = vmul.f32 %v2251, %v2333
      %v2362 = vmul.f32 %v2252, %v2333
      %v2363 = vmul.f32 %v2253, %v2333
      %v2364 = vmul.f32 %v2254, %v2333
      %v2365 = vmul.f32 %v2255, %v2333
      %v2366 = vadd.f32 %v2298, %v2334
      %v2367 = vadd.f32 %v2299, %v2335
      %v2368 = vadd.f32 %v2300, %v2336
      %v2369 = vadd.f32 %v2301, %v2337
      %v2370 = vadd.f32 %v2302, %v2338
      %v2371 = vadd.f32 %v2303, %v2339
      %v2372 = vadd.f32 %v2304, %v2340
      %v2373 = vadd.f32 %v2305, %v2341
      %v2374 = vadd.f32 %v2306, %v2342
      %v2375 = vadd.f32 %v2307, %v2343
      %v2376 = vadd.f32 %v2308, %v2344
      %v2377 = vadd.f32 %v2309, %v2345
      %v2378 = vadd.f32 %v2310, %v2346
      %v2379 = vadd.f32 %v2311, %v2347
      %v2380 = vadd.f32 %v2312, %v2348
      %v2381 = vadd.f32 %v2313, %v2349
      %v2382 = vadd.f32 %v2314, %v2350
      %v2383 = vadd.f32 %v2315, %v2351
      %v2384 = vadd.f32 %v2316, %v2352
      %v2385 = vadd.f32 %v2317, %v2353
      %v2386 = vadd.f32 %v2318, %v2354
      %v2387 = vadd.f32 %v2319, %v2355
      %v2388 = vadd.f32 %v2320, %v2356
      %v2389 = vadd.f32 %v2321, %v2357
      %v2390 = vadd.f32 %v2322, %v2358
      %v2391 = vadd.f32 %v2323, %v2359
      %v2392 = vadd.f32 %v2324, %v2360
      %v2393 = vadd.f32 %v2325, %v2361
      %v2394 = vadd.f32 %v2326, %v2362
      %v2395 = vadd.f32 %v2327, %v2363
      %v2396 = vadd.f32 %v2328, %v2364
      %v2397 = vadd.f32 %v2329, %v2365
      %v2398 = vlaneseq
      %v2399 = vshrl.u32 %v2398, 7
      %v2400 = vsub.s32 1, %v2399
      %v2401 = vrot.slane %v1839, %v2400
      %v2402 = vmul.f32 %v2226, %v2401
      %v2403 = vmul.f32 %v2227, %v2401
      %v2404 = vmul.f32 %v2228, %v2401
      %v2405 = vmul.f32 %v2229, %v2401
      %v2406 = vmul.f32 %v2230, %v2401
      %v2407 = vmul.f32 %v2231, %v2401
      %v2408 = vmul.f32 %v2232, %v2401
      %v2409 = vmul.f32 %v2233, %v2401
      %v2410 = vmul.f32 %v2234, %v2401
      %v2411 = vmul.f32 %v2235, %v2401
      %v2412 = vmul.f32 %v2236, %v2401
      %v2413 = vmul.f32 %v2237, %v2401
      %v2414 = vmul.f32 %v2238, %v2401
      %v2415 = vmul.f32 %v2239, %v2401
      %v2416 = vmul.f32 %v2240, %v2401
      %v2417 = vmul.f32 %v2241, %v2401
      %v2418 = vmul.f32 %v2242, %v2401
      %v2419 = vmul.f32 %v2243, %v2401
      %v2420 = vmul.f32 %v2244, %v2401
      %v2421 = vmul.f32 %v2245, %v2401
      %v2422 = vmul.f32 %v2246, %v2401
      %v2423 = vmul.f32 %v2247, %v2401
      %v2424 = vmul.f32 %v2248, %v2401
      %v2425 = vmul.f32 %v2249, %v2401
      %v2426 = vmul.f32 %v2250, %v2401
      %v2427 = vmul.f32 %v2251, %v2401
      %v2428 = vmul.f32 %v2252, %v2401
      %v2429 = vmul.f32 %v2253, %v2401
      %v2430 = vmul.f32 %v2254, %v2401
      %v2431 = vmul.f32 %v2255, %v2401
      %v2432 = vmul.f32 %v2256, %v2401
      %v2433 = vmul.f32 %v2257, %v2401
      %v2434 = vadd.f32 %v2366, %v2402
      %v2435 = vadd.f32 %v2367, %v2403
      %v2436 = vadd.f32 %v2368, %v2404
      %v2437 = vadd.f32 %v2369, %v2405
      %v2438 = vadd.f32 %v2370, %v2406
      %v2439 = vadd.f32 %v2371, %v2407
      %v2440 = vadd.f32 %v2372, %v2408
      %v2441 = vadd.f32 %v2373, %v2409
      %v2442 = vadd.f32 %v2374, %v2410
      %v2443 = vadd.f32 %v2375, %v2411
      %v2444 = vadd.f32 %v2376, %v2412
      %v2445 = vadd.f32 %v2377, %v2413
      %v2446 = vadd.f32 %v2378, %v2414
      %v2447 = vadd.f32 %v2379, %v2415
      %v2448 = vadd.f32 %v2380, %v2416
      %v2449 = vadd.f32 %v2381, %v2417
      %v2450 = vadd.f32 %v2382, %v2418
      %v2451 = vadd.f32 %v2383, %v2419
      %v2452 = vadd.f32 %v2384, %v2420
      %v2453 = vadd.f32 %v2385, %v2421
      %v2454 = vadd.f32 %v2386, %v2422
      %v2455 = vadd.f32 %v2387, %v2423
      %v2456 = vadd.f32 %v2388, %v2424
      %v2457 = vadd.f32 %v2389, %v2425
      %v2458 = vadd.f32 %v2390, %v2426
      %v2459 = vadd.f32 %v2391, %v2427
      %v2460 = vadd.f32 %v2392, %v2428
      %v2461 = vadd.f32 %v2393, %v2429
      %v2462 = vadd.f32 %v2394, %v2430
      %v2463 = vadd.f32 %v2395, %v2431
      %v2464 = vadd.f32 %v2396, %v2432
      %v2465 = vadd.f32 %v2397, %v2433
      %v2466 = vlaneseq
      %v2467 = vshrl.u32 %v2466, 7
      %v2468 = vsub.s32 1, %v2467
      %v2469 = vrot.slane %v1840, %v2468
      %v2470 = vmul.f32 %v2228, %v2469
      %v2471 = vmul.f32 %v2229, %v2469
      %v2472 = vmul.f32 %v2230, %v2469
      %v2473 = vmul.f32 %v2231, %v2469
      %v2474 = vmul.f32 %v2232, %v2469
      %v2475 = vmul.f32 %v2233, %v2469
      %v2476 = vmul.f32 %v2234, %v2469
      %v2477 = vmul.f32 %v2235, %v2469
      %v2478 = vmul.f32 %v2236, %v2469
      %v2479 = vmul.f32 %v2237, %v2469
      %v2480 = vmul.f32 %v2238, %v2469
      %v2481 = vmul.f32 %v2239, %v2469
      %v2482 = vmul.f32 %v2240, %v2469
      %v2483 = vmul.f32 %v2241, %v2469
      %v2484 = vmul.f32 %v2242, %v2469
      %v2485 = vmul.f32 %v2243, %v2469
      %v2486 = vmul.f32 %v2244, %v2469
      %v2487 = vmul.f32 %v2245, %v2469
      %v2488 = vmul.f32 %v2246, %v2469
      %v2489 = vmul.f32 %v2247, %v2469
      %v2490 = vmul.f32 %v2248, %v2469
      %v2491 = vmul.f32 %v2249, %v2469
      %v2492 = vmul.f32 %v2250, %v2469
      %v2493 = vmul.f32 %v2251, %v2469
      %v2494 = vmul.f32 %v2252, %v2469
      %v2495 = vmul.f32 %v2253, %v2469
      %v2496 = vmul.f32 %v2254, %v2469
      %v2497 = vmul.f32 %v2255, %v2469
      %v2498 = vmul.f32 %v2256, %v2469
      %v2499 = vmul.f32 %v2257, %v2469
      %v2500 = vmul.f32 %v2258, %v2469
      %v2501 = vmul.f32 %v2259, %v2469
      %v2502 = vadd.f32 %v2434, %v2470
      %v2503 = vadd.f32 %v2435, %v2471
      %v2504 = vadd.f32 %v2436, %v2472
      %v2505 = vadd.f32 %v2437, %v2473
      %v2506 = vadd.f32 %v2438, %v2474
      %v2507 = vadd.f32 %v2439, %v2475
      %v2508 = vadd.f32 %v2440, %v2476
      %v2509 = vadd.f32 %v2441, %v2477
      %v2510 = vadd.f32 %v2442, %v2478
      %v2511 = vadd.f32 %v2443, %v2479
      %v2512 = vadd.f32 %v2444, %v2480
      %v2513 = vadd.f32 %v2445, %v2481
      %v2514 = vadd.f32 %v2446, %v2482
      %v2515 = vadd.f32 %v2447, %v2483
      %v2516 = vadd.f32 %v2448, %v2484
      %v2517 = vadd.f32 %v2449, %v2485
      %v2518 = vadd.f32 %v2450, %v2486
      %v2519 = vadd.f32 %v2451, %v2487
      %v2520 = vadd.f32 %v2452, %v2488
      %v2521 = vadd.f32 %v2453, %v2489
      %v2522 = vadd.f32 %v2454, %v2490
      %v2523 = vadd.f32 %v2455, %v2491
      %v2524 = vadd.f32 %v2456, %v2492
      %v2525 = vadd.f32 %v2457, %v2493
      %v2526 = vadd.f32 %v2458, %v2494
      %v2527 = vadd.f32 %v2459, %v2495
      %v2528 = vadd.f32 %v2460, %v2496
      %v2529 = vadd.f32 %v2461, %v2497
      %v2530 = vadd.f32 %v2462, %v2498
      %v2531 = vadd.f32 %v2463, %v2499
      %v2532 = vadd.f32 %v2464, %v2500
      %v2533 = vadd.f32 %v2465, %v2501
      %v2534 = vlaneseq
      %v2535 = vshrl.u32 %v2534, 7
      %v2536 = vsub.s32 1, %v2535
      %v2537 = vrot.slane %v1841, %v2536
      %v2538 = vmul.f32 %v2230, %v2537
      %v2539 = vmul.f32 %v2231, %v2537
      %v2540 = vmul.f32 %v2232, %v2537
      %v2541 = vmul.f32 %v2233, %v2537
      %v2542 = vmul.f32 %v2234, %v2537
      %v2543 = vmul.f32 %v2235, %v2537
      %v2544 = vmul.f32 %v2236, %v2537
      %v2545 = vmul.f32 %v2237, %v2537
      %v2546 = vmul.f32 %v2238, %v2537
      %v2547 = vmul.f32 %v2239, %v2537
      %v2548 = vmul.f32 %v2240, %v2537
      %v2549 = vmul.f32 %v2241, %v2537
      %v2550 = vmul.f32 %v2242, %v2537
      %v2551 = vmul.f32 %v2243, %v2537
      %v2552 = vmul.f32 %v2244, %v2537
      %v2553 = vmul.f32 %v2245, %v2537
      %v2554 = vmul.f32 %v2246, %v2537
      %v2555 = vmul.f32 %v2247, %v2537
      %v2556 = vmul.f32 %v2248, %v2537
      %v2557 = vmul.f32 %v2249, %v2537
      %v2558 = vmul.f32 %v2250, %v2537
      %v2559 = vmul.f32 %v2251, %v2537
      %v2560 = vmul.f32 %v2252, %v2537
      %v2561 = vmul.f32 %v2253, %v2537
      %v2562 = vmul.f32 %v2254, %v2537
      %v2563 = vmul.f32 %v2255, %v2537
      %v2564 = vmul.f32 %v2256, %v2537
      %v2565 = vmul.f32 %v2257, %v2537
      %v2566 = vmul.f32 %v2258, %v2537
      %v2567 = vmul.f32 %v2259, %v2537
      %v2568 = vmul.f32 %v2260, %v2537
      %v2569 = vmul.f32 %v2261, %v2537
      %v2570 = vadd.f32 %v2502, %v2538
      %v2571 = vadd.f32 %v2503, %v2539
      %v2572 = vadd.f32 %v2504, %v2540
      %v2573 = vadd.f32 %v2505, %v2541
      %v2574 = vadd.f32 %v2506, %v2542
      %v2575 = vadd.f32 %v2507, %v2543
      %v2576 = vadd.f32 %v2508, %v2544
      %v2577 = vadd.f32 %v2509, %v2545
      %v2578 = vadd.f32 %v2510, %v2546
      %v2579 = vadd.f32 %v2511, %v2547
      %v2580 = vadd.f32 %v2512, %v2548
      %v2581 = vadd.f32 %v2513, %v2549
      %v2582 = vadd.f32 %v2514, %v2550
      %v2583 = vadd.f32 %v2515, %v2551
      %v2584 = vadd.f32 %v2516, %v2552
      %v2585 = vadd.f32 %v2517, %v2553
      %v2586 = vadd.f32 %v2518, %v2554
      %v2587 = vadd.f32 %v2519, %v2555
      %v2588 = vadd.f32 %v2520, %v2556
      %v2589 = vadd.f32 %v2521, %v2557
      %v2590 = vadd.f32 %v2522, %v2558
      %v2591 = vadd.f32 %v2523, %v2559
      %v2592 = vadd.f32 %v2524, %v2560
      %v2593 = vadd.f32 %v2525, %v2561
      %v2594 = vadd.f32 %v2526, %v2562
      %v2595 = vadd.f32 %v2527, %v2563
      %v2596 = vadd.f32 %v2528, %v2564
      %v2597 = vadd.f32 %v2529, %v2565
      %v2598 = vadd.f32 %v2530, %v2566
      %v2599 = vadd.f32 %v2531, %v2567
      %v2600 = vadd.f32 %v2532, %v2568
      %v2601 = vadd.f32 %v2533, %v2569
      %v2602 = vld [vmem:[#allocation2 + $0x8] sm:$0xff]
      %v2603 = vld [vmem:[#allocation2 + $0x10] sm:$0xff]
      %v2604 = vld [vmem:[#allocation2 + $0x28] sm:$0xff]
      %v2605 = vld [vmem:[#allocation2 + $0x30] sm:$0xff]
      %v2606 = vld [vmem:[#allocation2 + $0x48] sm:$0xff]
      %v2607 = vld [vmem:[#allocation2 + $0x50] sm:$0xff]
      %v2608 = vld [vmem:[#allocation2 + $0x68] sm:$0xff]
      %v2609 = vld [vmem:[#allocation2 + $0x70] sm:$0xff]
      %v2610 = vld [vmem:[#allocation2 + $0x88] sm:$0xff]
      %v2611 = vld [vmem:[#allocation2 + $0x90] sm:$0xff]
      %v2612 = vld [vmem:[#allocation2 + $0xa8] sm:$0xff]
      %v2613 = vld [vmem:[#allocation2 + $0xb0] sm:$0xff]
      %v2614 = vld [vmem:[#allocation2 + $0xc8] sm:$0xff]
      %v2615 = vld [vmem:[#allocation2 + $0xd0] sm:$0xff]
      %v2616 = vld [vmem:[#allocation2 + $0xe8] sm:$0xff]
      %v2617 = vld [vmem:[#allocation2 + $0xf0] sm:$0xff]
      %v2618 = vld [vmem:[#allocation2 + $0x108] sm:$0xff]
      %v2619 = vld [vmem:[#allocation2 + $0x110] sm:$0xff]
      %v2620 = vld [vmem:[#allocation2 + $0x128] sm:$0xff]
      %v2621 = vld [vmem:[#allocation2 + $0x130] sm:$0xff]
      %v2622 = vld [vmem:[#allocation2 + $0x148] sm:$0xff]
      %v2623 = vld [vmem:[#allocation2 + $0x150] sm:$0xff]
      %v2624 = vld [vmem:[#allocation2 + $0x168] sm:$0xff]
      %v2625 = vld [vmem:[#allocation2 + $0x170] sm:$0xff]
      %v2626 = vld [vmem:[#allocation2 + $0x188] sm:$0xff]
      %v2627 = vld [vmem:[#allocation2 + $0x190] sm:$0xff]
      %v2628 = vld [vmem:[#allocation2 + $0x1a8] sm:$0xff]
      %v2629 = vld [vmem:[#allocation2 + $0x1b0] sm:$0xff]
      %v2630 = vld [vmem:[#allocation2 + $0x1c8] sm:$0xff]
      %v2631 = vld [vmem:[#allocation2 + $0x1d0] sm:$0xff]
      %v2632 = vld [vmem:[#allocation2 + $0x1e8] sm:$0xff]
      %v2633 = vld [vmem:[#allocation2 + $0x1f0] sm:$0xff]
      %v2634 = vld [vmem:[#allocation2 + $0x208] sm:$0xff]
      %v2635 = vld [vmem:[#allocation2 + $0x210] sm:$0xff]
      %v2636 = vld [vmem:[#allocation2 + $0x228] sm:$0xff]
      %v2637 = vld [vmem:[#allocation2 + $0x230] sm:$0xff]
      %v2638 = vld [vmem:[#allocation2 + $0x248] sm:$0xff]
      %v2639 = vld [vmem:[#allocation2 + $0x250] sm:$0xff]
      %v2640 = vld [vmem:[#allocation2 + $0x268] sm:$0xff]
      %v2641 = vld [vmem:[#allocation2 + $0x270] sm:$0xff]
      %v2642 = vlaneseq
      %v2643 = vshrl.u32 %v2642, 7
      %v2644 = vsub.s32 2, %v2643
      %v2645 = vrot.slane %v1837, %v2644
      %v2646 = vmul.f32 %v2602, %v2645
      %v2647 = vmul.f32 %v2603, %v2645
      %v2648 = vmul.f32 %v2604, %v2645
      %v2649 = vmul.f32 %v2605, %v2645
      %v2650 = vmul.f32 %v2606, %v2645
      %v2651 = vmul.f32 %v2607, %v2645
      %v2652 = vmul.f32 %v2608, %v2645
      %v2653 = vmul.f32 %v2609, %v2645
      %v2654 = vmul.f32 %v2610, %v2645
      %v2655 = vmul.f32 %v2611, %v2645
      %v2656 = vmul.f32 %v2612, %v2645
      %v2657 = vmul.f32 %v2613, %v2645
      %v2658 = vmul.f32 %v2614, %v2645
      %v2659 = vmul.f32 %v2615, %v2645
      %v2660 = vmul.f32 %v2616, %v2645
      %v2661 = vmul.f32 %v2617, %v2645
      %v2662 = vmul.f32 %v2618, %v2645
      %v2663 = vmul.f32 %v2619, %v2645
      %v2664 = vmul.f32 %v2620, %v2645
      %v2665 = vmul.f32 %v2621, %v2645
      %v2666 = vmul.f32 %v2622, %v2645
      %v2667 = vmul.f32 %v2623, %v2645
      %v2668 = vmul.f32 %v2624, %v2645
      %v2669 = vmul.f32 %v2625, %v2645
      %v2670 = vmul.f32 %v2626, %v2645
      %v2671 = vmul.f32 %v2627, %v2645
      %v2672 = vmul.f32 %v2628, %v2645
      %v2673 = vmul.f32 %v2629, %v2645
      %v2674 = vmul.f32 %v2630, %v2645
      %v2675 = vmul.f32 %v2631, %v2645
      %v2676 = vmul.f32 %v2632, %v2645
      %v2677 = vmul.f32 %v2633, %v2645
      %v2678 = vadd.f32 %v2570, %v2646
      %v2679 = vadd.f32 %v2571, %v2647
      %v2680 = vadd.f32 %v2572, %v2648
      %v2681 = vadd.f32 %v2573, %v2649
      %v2682 = vadd.f32 %v2574, %v2650
      %v2683 = vadd.f32 %v2575, %v2651
      %v2684 = vadd.f32 %v2576, %v2652
      %v2685 = vadd.f32 %v2577, %v2653
      %v2686 = vadd.f32 %v2578, %v2654
      %v2687 = vadd.f32 %v2579, %v2655
      %v2688 = vadd.f32 %v2580, %v2656
      %v2689 = vadd.f32 %v2581, %v2657
      %v2690 = vadd.f32 %v2582, %v2658
      %v2691 = vadd.f32 %v2583, %v2659
      %v2692 = vadd.f32 %v2584, %v2660
      %v2693 = vadd.f32 %v2585, %v2661
      %v2694 = vadd.f32 %v2586, %v2662
      %v2695 = vadd.f32 %v2587, %v2663
      %v2696 = vadd.f32 %v2588, %v2664
      %v2697 = vadd.f32 %v2589, %v2665
      %v2698 = vadd.f32 %v2590, %v2666
      %v2699 = vadd.f32 %v2591, %v2667
      %v2700 = vadd.f32 %v2592, %v2668
      %v2701 = vadd.f32 %v2593, %v2669
      %v2702 = vadd.f32 %v2594, %v2670
      %v2703 = vadd.f32 %v2595, %v2671
      %v2704 = vadd.f32 %v2596, %v2672
      %v2705 = vadd.f32 %v2597, %v2673
      %v2706 = vadd.f32 %v2598, %v2674
      %v2707 = vadd.f32 %v2599, %v2675
      %v2708 = vadd.f32 %v2600, %v2676
      %v2709 = vadd.f32 %v2601, %v2677
      %v2710 = vlaneseq
      %v2711 = vshrl.u32 %v2710, 7
      %v2712 = vsub.s32 2, %v2711
      %v2713 = vrot.slane %v1838, %v2712
      %v2714 = vmul.f32 %v2604, %v2713
      %v2715 = vmul.f32 %v2605, %v2713
      %v2716 = vmul.f32 %v2606, %v2713
      %v2717 = vmul.f32 %v2607, %v2713
      %v2718 = vmul.f32 %v2608, %v2713
      %v2719 = vmul.f32 %v2609, %v2713
      %v2720 = vmul.f32 %v2610, %v2713
      %v2721 = vmul.f32 %v2611, %v2713
      %v2722 = vmul.f32 %v2612, %v2713
      %v2723 = vmul.f32 %v2613, %v2713
      %v2724 = vmul.f32 %v2614, %v2713
      %v2725 = vmul.f32 %v2615, %v2713
      %v2726 = vmul.f32 %v2616, %v2713
      %v2727 = vmul.f32 %v2617, %v2713
      %v2728 = vmul.f32 %v2618, %v2713
      %v2729 = vmul.f32 %v2619, %v2713
      %v2730 = vmul.f32 %v2620, %v2713
      %v2731 = vmul.f32 %v2621, %v2713
      %v2732 = vmul.f32 %v2622, %v2713
      %v2733 = vmul.f32 %v2623, %v2713
      %v2734 = vmul.f32 %v2624, %v2713
      %v2735 = vmul.f32 %v2625, %v2713
      %v2736 = vmul.f32 %v2626, %v2713
      %v2737 = vmul.f32 %v2627, %v2713
      %v2738 = vmul.f32 %v2628, %v2713
      %v2739 = vmul.f32 %v2629, %v2713
      %v2740 = vmul.f32 %v2630, %v2713
      %v2741 = vmul.f32 %v2631, %v2713
      %v2742 = vmul.f32 %v2632, %v2713
      %v2743 = vmul.f32 %v2633, %v2713
      %v2744 = vmul.f32 %v2634, %v2713
      %v2745 = vmul.f32 %v2635, %v2713
      %v2746 = vadd.f32 %v2678, %v2714
      %v2747 = vadd.f32 %v2679, %v2715
      %v2748 = vadd.f32 %v2680, %v2716
      %v2749 = vadd.f32 %v2681, %v2717
      %v2750 = vadd.f32 %v2682, %v2718
      %v2751 = vadd.f32 %v2683, %v2719
      %v2752 = vadd.f32 %v2684, %v2720
      %v2753 = vadd.f32 %v2685, %v2721
      %v2754 = vadd.f32 %v2686, %v2722
      %v2755 = vadd.f32 %v2687, %v2723
      %v2756 = vadd.f32 %v2688, %v2724
      %v2757 = vadd.f32 %v2689, %v2725
      %v2758 = vadd.f32 %v2690, %v2726
      %v2759 = vadd.f32 %v2691, %v2727
      %v2760 = vadd.f32 %v2692, %v2728
      %v2761 = vadd.f32 %v2693, %v2729
      %v2762 = vadd.f32 %v2694, %v2730
      %v2763 = vadd.f32 %v2695, %v2731
      %v2764 = vadd.f32 %v2696, %v2732
      %v2765 = vadd.f32 %v2697, %v2733
      %v2766 = vadd.f32 %v2698, %v2734
      %v2767 = vadd.f32 %v2699, %v2735
      %v2768 = vadd.f32 %v2700, %v2736
      %v2769 = vadd.f32 %v2701, %v2737
      %v2770 = vadd.f32 %v2702, %v2738
      %v2771 = vadd.f32 %v2703, %v2739
      %v2772 = vadd.f32 %v2704, %v2740
      %v2773 = vadd.f32 %v2705, %v2741
      %v2774 = vadd.f32 %v2706, %v2742
      %v2775 = vadd.f32 %v2707, %v2743
      %v2776 = vadd.f32 %v2708, %v2744
      %v2777 = vadd.f32 %v2709, %v2745
      %v2778 = vlaneseq
      %v2779 = vshrl.u32 %v2778, 7
      %v2780 = vsub.s32 2, %v2779
      %v2781 = vrot.slane %v1839, %v2780
      %v2782 = vmul.f32 %v2606, %v2781
      %v2783 = vmul.f32 %v2607, %v2781
      %v2784 = vmul.f32 %v2608, %v2781
      %v2785 = vmul.f32 %v2609, %v2781
      %v2786 = vmul.f32 %v2610, %v2781
      %v2787 = vmul.f32 %v2611, %v2781
      %v2788 = vmul.f32 %v2612, %v2781
      %v2789 = vmul.f32 %v2613, %v2781
      %v2790 = vmul.f32 %v2614, %v2781
      %v2791 = vmul.f32 %v2615, %v2781
      %v2792 = vmul.f32 %v2616, %v2781
      %v2793 = vmul.f32 %v2617, %v2781
      %v2794 = vmul.f32 %v2618, %v2781
      %v2795 = vmul.f32 %v2619, %v2781
      %v2796 = vmul.f32 %v2620, %v2781
      %v2797 = vmul.f32 %v2621, %v2781
      %v2798 = vmul.f32 %v2622, %v2781
      %v2799 = vmul.f32 %v2623, %v2781
      %v2800 = vmul.f32 %v2624, %v2781
      %v2801 = vmul.f32 %v2625, %v2781
      %v2802 = vmul.f32 %v2626, %v2781
      %v2803 = vmul.f32 %v2627, %v2781
      %v2804 = vmul.f32 %v2628, %v2781
      %v2805 = vmul.f32 %v2629, %v2781
      %v2806 = vmul.f32 %v2630, %v2781
      %v2807 = vmul.f32 %v2631, %v2781
      %v2808 = vmul.f32 %v2632, %v2781
      %v2809 = vmul.f32 %v2633, %v2781
      %v2810 = vmul.f32 %v2634, %v2781
      %v2811 = vmul.f32 %v2635, %v2781
      %v2812 = vmul.f32 %v2636, %v2781
      %v2813 = vmul.f32 %v2637, %v2781
      %v2814 = vadd.f32 %v2746, %v2782
      %v2815 = vadd.f32 %v2747, %v2783
      %v2816 = vadd.f32 %v2748, %v2784
      %v2817 = vadd.f32 %v2749, %v2785
      %v2818 = vadd.f32 %v2750, %v2786
      %v2819 = vadd.f32 %v2751, %v2787
      %v2820 = vadd.f32 %v2752, %v2788
      %v2821 = vadd.f32 %v2753, %v2789
      %v2822 = vadd.f32 %v2754, %v2790
      %v2823 = vadd.f32 %v2755, %v2791
      %v2824 = vadd.f32 %v2756, %v2792
      %v2825 = vadd.f32 %v2757, %v2793
      %v2826 = vadd.f32 %v2758, %v2794
      %v2827 = vadd.f32 %v2759, %v2795
      %v2828 = vadd.f32 %v2760, %v2796
      %v2829 = vadd.f32 %v2761, %v2797
      %v2830 = vadd.f32 %v2762, %v2798
      %v2831 = vadd.f32 %v2763, %v2799
      %v2832 = vadd.f32 %v2764, %v2800
      %v2833 = vadd.f32 %v2765, %v2801
      %v2834 = vadd.f32 %v2766, %v2802
      %v2835 = vadd.f32 %v2767, %v2803
      %v2836 = vadd.f32 %v2768, %v2804
      %v2837 = vadd.f32 %v2769, %v2805
      %v2838 = vadd.f32 %v2770, %v2806
      %v2839 = vadd.f32 %v2771, %v2807
      %v2840 = vadd.f32 %v2772, %v2808
      %v2841 = vadd.f32 %v2773, %v2809
      %v2842 = vadd.f32 %v2774, %v2810
      %v2843 = vadd.f32 %v2775, %v2811
      %v2844 = vadd.f32 %v2776, %v2812
      %v2845 = vadd.f32 %v2777, %v2813
      %v2846 = vlaneseq
      %v2847 = vshrl.u32 %v2846, 7
      %v2848 = vsub.s32 2, %v2847
      %v2849 = vrot.slane %v1840, %v2848
      %v2850 = vmul.f32 %v2608, %v2849
      %v2851 = vmul.f32 %v2609, %v2849
      %v2852 = vmul.f32 %v2610, %v2849
      %v2853 = vmul.f32 %v2611, %v2849
      %v2854 = vmul.f32 %v2612, %v2849
      %v2855 = vmul.f32 %v2613, %v2849
      %v2856 = vmul.f32 %v2614, %v2849
      %v2857 = vmul.f32 %v2615, %v2849
      %v2858 = vmul.f32 %v2616, %v2849
      %v2859 = vmul.f32 %v2617, %v2849
      %v2860 = vmul.f32 %v2618, %v2849
      %v2861 = vmul.f32 %v2619, %v2849
      %v2862 = vmul.f32 %v2620, %v2849
      %v2863 = vmul.f32 %v2621, %v2849
      %v2864 = vmul.f32 %v2622, %v2849
      %v2865 = vmul.f32 %v2623, %v2849
      %v2866 = vmul.f32 %v2624, %v2849
      %v2867 = vmul.f32 %v2625, %v2849
      %v2868 = vmul.f32 %v2626, %v2849
      %v2869 = vmul.f32 %v2627, %v2849
      %v2870 = vmul.f32 %v2628, %v2849
      %v2871 = vmul.f32 %v2629, %v2849
      %v2872 = vmul.f32 %v2630, %v2849
      %v2873 = vmul.f32 %v2631, %v2849
      %v2874 = vmul.f32 %v2632, %v2849
      %v2875 = vmul.f32 %v2633, %v2849
      %v2876 = vmul.f32 %v2634, %v2849
      %v2877 = vmul.f32 %v2635, %v2849
      %v2878 = vmul.f32 %v2636, %v2849
      %v2879 = vmul.f32 %v2637, %v2849
      %v2880 = vmul.f32 %v2638, %v2849
      %v2881 = vmul.f32 %v2639, %v2849
      %v2882 = vadd.f32 %v2814, %v2850
      %v2883 = vadd.f32 %v2815, %v2851
      %v2884 = vadd.f32 %v2816, %v2852
      %v2885 = vadd.f32 %v2817, %v2853
      %v2886 = vadd.f32 %v2818, %v2854
      %v2887 = vadd.f32 %v2819, %v2855
      %v2888 = vadd.f32 %v2820, %v2856
      %v2889 = vadd.f32 %v2821, %v2857
      %v2890 = vadd.f32 %v2822, %v2858
      %v2891 = vadd.f32 %v2823, %v2859
      %v2892 = vadd.f32 %v2824, %v2860
      %v2893 = vadd.f32 %v2825, %v2861
      %v2894 = vadd.f32 %v2826, %v2862
      %v2895 = vadd.f32 %v2827, %v2863
      %v2896 = vadd.f32 %v2828, %v2864
      %v2897 = vadd.f32 %v2829, %v2865
      %v2898 = vadd.f32 %v2830, %v2866
      %v2899 = vadd.f32 %v2831, %v2867
      %v2900 = vadd.f32 %v2832, %v2868
      %v2901 = vadd.f32 %v2833, %v2869
      %v2902 = vadd.f32 %v2834, %v2870
      %v2903 = vadd.f32 %v2835, %v2871
      %v2904 = vadd.f32 %v2836, %v2872
      %v2905 = vadd.f32 %v2837, %v2873
      %v2906 = vadd.f32 %v2838, %v2874
      %v2907 = vadd.f32 %v2839, %v2875
      %v2908 = vadd.f32 %v2840, %v2876
      %v2909 = vadd.f32 %v2841, %v2877
      %v2910 = vadd.f32 %v2842, %v2878
      %v2911 = vadd.f32 %v2843, %v2879
      %v2912 = vadd.f32 %v2844, %v2880
      %v2913 = vadd.f32 %v2845, %v2881
      %v2914 = vlaneseq
      %v2915 = vshrl.u32 %v2914, 7
      %v2916 = vsub.s32 2, %v2915
      %v2917 = vrot.slane %v1841, %v2916
      %v2918 = vmul.f32 %v2610, %v2917
      %v2919 = vmul.f32 %v2611, %v2917
      %v2920 = vmul.f32 %v2612, %v2917
      %v2921 = vmul.f32 %v2613, %v2917
      %v2922 = vmul.f32 %v2614, %v2917
      %v2923 = vmul.f32 %v2615, %v2917
      %v2924 = vmul.f32 %v2616, %v2917
      %v2925 = vmul.f32 %v2617, %v2917
      %v2926 = vmul.f32 %v2618, %v2917
      %v2927 = vmul.f32 %v2619, %v2917
      %v2928 = vmul.f32 %v2620, %v2917
      %v2929 = vmul.f32 %v2621, %v2917
      %v2930 = vmul.f32 %v2622, %v2917
      %v2931 = vmul.f32 %v2623, %v2917
      %v2932 = vmul.f32 %v2624, %v2917
      %v2933 = vmul.f32 %v2625, %v2917
      %v2934 = vmul.f32 %v2626, %v2917
      %v2935 = vmul.f32 %v2627, %v2917
      %v2936 = vmul.f32 %v2628, %v2917
      %v2937 = vmul.f32 %v2629, %v2917
      %v2938 = vmul.f32 %v2630, %v2917
      %v2939 = vmul.f32 %v2631, %v2917
      %v2940 = vmul.f32 %v2632, %v2917
      %v2941 = vmul.f32 %v2633, %v2917
      %v2942 = vmul.f32 %v2634, %v2917
      %v2943 = vmul.f32 %v2635, %v2917
      %v2944 = vmul.f32 %v2636, %v2917
      %v2945 = vmul.f32 %v2637, %v2917
      %v2946 = vmul.f32 %v2638, %v2917
      %v2947 = vmul.f32 %v2639, %v2917
      %v2948 = vmul.f32 %v2640, %v2917
      %v2949 = vmul.f32 %v2641, %v2917
      %v2950 = vadd.f32 %v2882, %v2918
      %v2951 = vadd.f32 %v2883, %v2919
      %v2952 = vadd.f32 %v2884, %v2920
      %v2953 = vadd.f32 %v2885, %v2921
      %v2954 = vadd.f32 %v2886, %v2922
      %v2955 = vadd.f32 %v2887, %v2923
      %v2956 = vadd.f32 %v2888, %v2924
      %v2957 = vadd.f32 %v2889, %v2925
      %v2958 = vadd.f32 %v2890, %v2926
      %v2959 = vadd.f32 %v2891, %v2927
      %v2960 = vadd.f32 %v2892, %v2928
      %v2961 = vadd.f32 %v2893, %v2929
      %v2962 = vadd.f32 %v2894, %v2930
      %v2963 = vadd.f32 %v2895, %v2931
      %v2964 = vadd.f32 %v2896, %v2932
      %v2965 = vadd.f32 %v2897, %v2933
      %v2966 = vadd.f32 %v2898, %v2934
      %v2967 = vadd.f32 %v2899, %v2935
      %v2968 = vadd.f32 %v2900, %v2936
      %v2969 = vadd.f32 %v2901, %v2937
      %v2970 = vadd.f32 %v2902, %v2938
      %v2971 = vadd.f32 %v2903, %v2939
      %v2972 = vadd.f32 %v2904, %v2940
      %v2973 = vadd.f32 %v2905, %v2941
      %v2974 = vadd.f32 %v2906, %v2942
      %v2975 = vadd.f32 %v2907, %v2943
      %v2976 = vadd.f32 %v2908, %v2944
      %v2977 = vadd.f32 %v2909, %v2945
      %v2978 = vadd.f32 %v2910, %v2946
      %v2979 = vadd.f32 %v2911, %v2947
      %v2980 = vadd.f32 %v2912, %v2948
      %v2981 = vadd.f32 %v2913, %v2949
      %v2982 = vld [vmem:[#allocation2 + $0x9] sm:$0xff]
      %v2983 = vld [vmem:[#allocation2 + $0x11] sm:$0xff]
      %v2984 = vld [vmem:[#allocation2 + $0x29] sm:$0xff]
      %v2985 = vld [vmem:[#allocation2 + $0x31] sm:$0xff]
      %v2986 = vld [vmem:[#allocation2 + $0x49] sm:$0xff]
      %v2987 = vld [vmem:[#allocation2 + $0x51] sm:$0xff]
      %v2988 = vld [vmem:[#allocation2 + $0x69] sm:$0xff]
      %v2989 = vld [vmem:[#allocation2 + $0x71] sm:$0xff]
      %v2990 = vld [vmem:[#allocation2 + $0x89] sm:$0xff]
      %v2991 = vld [vmem:[#allocation2 + $0x91] sm:$0xff]
      %v2992 = vld [vmem:[#allocation2 + $0xa9] sm:$0xff]
      %v2993 = vld [vmem:[#allocation2 + $0xb1] sm:$0xff]
      %v2994 = vld [vmem:[#allocation2 + $0xc9] sm:$0xff]
      %v2995 = vld [vmem:[#allocation2 + $0xd1] sm:$0xff]
      %v2996 = vld [vmem:[#allocation2 + $0xe9] sm:$0xff]
      %v2997 = vld [vmem:[#allocation2 + $0xf1] sm:$0xff]
      %v2998 = vld [vmem:[#allocation2 + $0x109] sm:$0xff]
      %v2999 = vld [vmem:[#allocation2 + $0x111] sm:$0xff]
      %v3000 = vld [vmem:[#allocation2 + $0x129] sm:$0xff]
      %v3001 = vld [vmem:[#allocation2 + $0x131] sm:$0xff]
      %v3002 = vld [vmem:[#allocation2 + $0x149] sm:$0xff]
      %v3003 = vld [vmem:[#allocation2 + $0x151] sm:$0xff]
      %v3004 = vld [vmem:[#allocation2 + $0x169] sm:$0xff]
      %v3005 = vld [vmem:[#allocation2 + $0x171] sm:$0xff]
      %v3006 = vld [vmem:[#allocation2 + $0x189] sm:$0xff]
      %v3007 = vld [vmem:[#allocation2 + $0x191] sm:$0xff]
      %v3008 = vld [vmem:[#allocation2 + $0x1a9] sm:$0xff]
      %v3009 = vld [vmem:[#allocation2 + $0x1b1] sm:$0xff]
      %v3010 = vld [vmem:[#allocation2 + $0x1c9] sm:$0xff]
      %v3011 = vld [vmem:[#allocation2 + $0x1d1] sm:$0xff]
      %v3012 = vld [vmem:[#allocation2 + $0x1e9] sm:$0xff]
      %v3013 = vld [vmem:[#allocation2 + $0x1f1] sm:$0xff]
      %v3014 = vld [vmem:[#allocation2 + $0x209] sm:$0xff]
      %v3015 = vld [vmem:[#allocation2 + $0x211] sm:$0xff]
      %v3016 = vld [vmem:[#allocation2 + $0x229] sm:$0xff]
      %v3017 = vld [vmem:[#allocation2 + $0x231] sm:$0xff]
      %v3018 = vld [vmem:[#allocation2 + $0x249] sm:$0xff]
      %v3019 = vld [vmem:[#allocation2 + $0x251] sm:$0xff]
      %v3020 = vld [vmem:[#allocation2 + $0x269] sm:$0xff]
      %v3021 = vld [vmem:[#allocation2 + $0x271] sm:$0xff]
      %v3022 = vlaneseq
      %v3023 = vshrl.u32 %v3022, 7
      %v3024 = vsub.s32 3, %v3023
      %v3025 = vrot.slane %v1837, %v3024
      %v3026 = vmul.f32 %v2982, %v3025
      %v3027 = vmul.f32 %v2983, %v3025
      %v3028 = vmul.f32 %v2984, %v3025
      %v3029 = vmul.f32 %v2985, %v3025
      %v3030 = vmul.f32 %v2986, %v3025
      %v3031 = vmul.f32 %v2987, %v3025
      %v3032 = vmul.f32 %v2988, %v3025
      %v3033 = vmul.f32 %v2989, %v3025
      %v3034 = vmul.f32 %v2990, %v3025
      %v3035 = vmul.f32 %v2991, %v3025
      %v3036 = vmul.f32 %v2992, %v3025
      %v3037 = vmul.f32 %v2993, %v3025
      %v3038 = vmul.f32 %v2994, %v3025
      %v3039 = vmul.f32 %v2995, %v3025
      %v3040 = vmul.f32 %v2996, %v3025
      %v3041 = vmul.f32 %v2997, %v3025
      %v3042 = vmul.f32 %v2998, %v3025
      %v3043 = vmul.f32 %v2999, %v3025
      %v3044 = vmul.f32 %v3000, %v3025
      %v3045 = vmul.f32 %v3001, %v3025
      %v3046 = vmul.f32 %v3002, %v3025
      %v3047 = vmul.f32 %v3003, %v3025
      %v3048 = vmul.f32 %v3004, %v3025
      %v3049 = vmul.f32 %v3005, %v3025
      %v3050 = vmul.f32 %v3006, %v3025
      %v3051 = vmul.f32 %v3007, %v3025
      %v3052 = vmul.f32 %v3008, %v3025
      %v3053 = vmul.f32 %v3009, %v3025
      %v3054 = vmul.f32 %v3010, %v3025
      %v3055 = vmul.f32 %v3011, %v3025
      %v3056 = vmul.f32 %v3012, %v3025
      %v3057 = vmul.f32 %v3013, %v3025
      %v3058 = vadd.f32 %v2950, %v3026
      %v3059 = vadd.f32 %v2951, %v3027
      %v3060 = vadd.f32 %v2952, %v3028
      %v3061 = vadd.f32 %v2953, %v3029
      %v3062 = vadd.f32 %v2954, %v3030
      %v3063 = vadd.f32 %v2955, %v3031
      %v3064 = vadd.f32 %v2956, %v3032
      %v3065 = vadd.f32 %v2957, %v3033
      %v3066 = vadd.f32 %v2958, %v3034
      %v3067 = vadd.f32 %v2959, %v3035
      %v3068 = vadd.f32 %v2960, %v3036
      %v3069 = vadd.f32 %v2961, %v3037
      %v3070 = vadd.f32 %v2962, %v3038
      %v3071 = vadd.f32 %v2963, %v3039
      %v3072 = vadd.f32 %v2964, %v3040
      %v3073 = vadd.f32 %v2965, %v3041
      %v3074 = vadd.f32 %v2966, %v3042
      %v3075 = vadd.f32 %v2967, %v3043
      %v3076 = vadd.f32 %v2968, %v3044
      %v3077 = vadd.f32 %v2969, %v3045
      %v3078 = vadd.f32 %v2970, %v3046
      %v3079 = vadd.f32 %v2971, %v3047
      %v3080 = vadd.f32 %v2972, %v3048
      %v3081 = vadd.f32 %v2973, %v3049
      %v3082 = vadd.f32 %v2974, %v3050
      %v3083 = vadd.f32 %v2975, %v3051
      %v3084 = vadd.f32 %v2976, %v3052
      %v3085 = vadd.f32 %v2977, %v3053
      %v3086 = vadd.f32 %v2978, %v3054
      %v3087 = vadd.f32 %v2979, %v3055
      %v3088 = vadd.f32 %v2980, %v3056
      %v3089 = vadd.f32 %v2981, %v3057
      %v3090 = vlaneseq
      %v3091 = vshrl.u32 %v3090, 7
      %v3092 = vsub.s32 3, %v3091
      %v3093 = vrot.slane %v1838, %v3092
      %v3094 = vmul.f32 %v2984, %v3093
      %v3095 = vmul.f32 %v2985, %v3093
      %v3096 = vmul.f32 %v2986, %v3093
      %v3097 = vmul.f32 %v2987, %v3093
      %v3098 = vmul.f32 %v2988, %v3093
      %v3099 = vmul.f32 %v2989, %v3093
      %v3100 = vmul.f32 %v2990, %v3093
      %v3101 = vmul.f32 %v2991, %v3093
      %v3102 = vmul.f32 %v2992, %v3093
      %v3103 = vmul.f32 %v2993, %v3093
      %v3104 = vmul.f32 %v2994, %v3093
      %v3105 = vmul.f32 %v2995, %v3093
      %v3106 = vmul.f32 %v2996, %v3093
      %v3107 = vmul.f32 %v2997, %v3093
      %v3108 = vmul.f32 %v2998, %v3093
      %v3109 = vmul.f32 %v2999, %v3093
      %v3110 = vmul.f32 %v3000, %v3093
      %v3111 = vmul.f32 %v3001, %v3093
      %v3112 = vmul.f32 %v3002, %v3093
      %v3113 = vmul.f32 %v3003, %v3093
      %v3114 = vmul.f32 %v3004, %v3093
      %v3115 = vmul.f32 %v3005, %v3093
      %v3116 = vmul.f32 %v3006, %v3093
      %v3117 = vmul.f32 %v3007, %v3093
      %v3118 = vmul.f32 %v3008, %v3093
      %v3119 = vmul.f32 %v3009, %v3093
      %v3120 = vmul.f32 %v3010, %v3093
      %v3121 = vmul.f32 %v3011, %v3093
      %v3122 = vmul.f32 %v3012, %v3093
      %v3123 = vmul.f32 %v3013, %v3093
      %v3124 = vmul.f32 %v3014, %v3093
      %v3125 = vmul.f32 %v3015, %v3093
      %v3126 = vadd.f32 %v3058, %v3094
      %v3127 = vadd.f32 %v3059, %v3095
      %v3128 = vadd.f32 %v3060, %v3096
      %v3129 = vadd.f32 %v3061, %v3097
      %v3130 = vadd.f32 %v3062, %v3098
      %v3131 = vadd.f32 %v3063, %v3099
      %v3132 = vadd.f32 %v3064, %v3100
      %v3133 = vadd.f32 %v3065, %v3101
      %v3134 = vadd.f32 %v3066, %v3102
      %v3135 = vadd.f32 %v3067, %v3103
      %v3136 = vadd.f32 %v3068, %v3104
      %v3137 = vadd.f32 %v3069, %v3105
      %v3138 = vadd.f32 %v3070, %v3106
      %v3139 = vadd.f32 %v3071, %v3107
      %v3140 = vadd.f32 %v3072, %v3108
      %v3141 = vadd.f32 %v3073, %v3109
      %v3142 = vadd.f32 %v3074, %v3110
      %v3143 = vadd.f32 %v3075, %v3111
      %v3144 = vadd.f32 %v3076, %v3112
      %v3145 = vadd.f32 %v3077, %v3113
      %v3146 = vadd.f32 %v3078, %v3114
      %v3147 = vadd.f32 %v3079, %v3115
      %v3148 = vadd.f32 %v3080, %v3116
      %v3149 = vadd.f32 %v3081, %v3117
      %v3150 = vadd.f32 %v3082, %v3118
      %v3151 = vadd.f32 %v3083, %v3119
      %v3152 = vadd.f32 %v3084, %v3120
      %v3153 = vadd.f32 %v3085, %v3121
      %v3154 = vadd.f32 %v3086, %v3122
      %v3155 = vadd.f32 %v3087, %v3123
      %v3156 = vadd.f32 %v3088, %v3124
      %v3157 = vadd.f32 %v3089, %v3125
      %v3158 = vlaneseq
      %v3159 = vshrl.u32 %v3158, 7
      %v3160 = vsub.s32 3, %v3159
      %v3161 = vrot.slane %v1839, %v3160
      %v3162 = vmul.f32 %v2986, %v3161
      %v3163 = vmul.f32 %v2987, %v3161
      %v3164 = vmul.f32 %v2988, %v3161
      %v3165 = vmul.f32 %v2989, %v3161
      %v3166 = vmul.f32 %v2990, %v3161
      %v3167 = vmul.f32 %v2991, %v3161
      %v3168 = vmul.f32 %v2992, %v3161
      %v3169 = vmul.f32 %v2993, %v3161
      %v3170 = vmul.f32 %v2994, %v3161
      %v3171 = vmul.f32 %v2995, %v3161
      %v3172 = vmul.f32 %v2996, %v3161
      %v3173 = vmul.f32 %v2997, %v3161
      %v3174 = vmul.f32 %v2998, %v3161
      %v3175 = vmul.f32 %v2999, %v3161
      %v3176 = vmul.f32 %v3000, %v3161
      %v3177 = vmul.f32 %v3001, %v3161
      %v3178 = vmul.f32 %v3002, %v3161
      %v3179 = vmul.f32 %v3003, %v3161
      %v3180 = vmul.f32 %v3004, %v3161
      %v3181 = vmul.f32 %v3005, %v3161
      %v3182 = vmul.f32 %v3006, %v3161
      %v3183 = vmul.f32 %v3007, %v3161
      %v3184 = vmul.f32 %v3008, %v3161
      %v3185 = vmul.f32 %v3009, %v3161
      %v3186 = vmul.f32 %v3010, %v3161
      %v3187 = vmul.f32 %v3011, %v3161
      %v3188 = vmul.f32 %v3012, %v3161
      %v3189 = vmul.f32 %v3013, %v3161
      %v3190 = vmul.f32 %v3014, %v3161
      %v3191 = vmul.f32 %v3015, %v3161
      %v3192 = vmul.f32 %v3016, %v3161
      %v3193 = vmul.f32 %v3017, %v3161
      %v3194 = vadd.f32 %v3126, %v3162
      %v3195 = vadd.f32 %v3127, %v3163
      %v3196 = vadd.f32 %v3128, %v3164
      %v3197 = vadd.f32 %v3129, %v3165
      %v3198 = vadd.f32 %v3130, %v3166
      %v3199 = vadd.f32 %v3131, %v3167
      %v3200 = vadd.f32 %v3132, %v3168
      %v3201 = vadd.f32 %v3133, %v3169
      %v3202 = vadd.f32 %v3134, %v3170
      %v3203 = vadd.f32 %v3135, %v3171
      %v3204 = vadd.f32 %v3136, %v3172
      %v3205 = vadd.f32 %v3137, %v3173
      %v3206 = vadd.f32 %v3138, %v3174
      %v3207 = vadd.f32 %v3139, %v3175
      %v3208 = vadd.f32 %v3140, %v3176
      %v3209 = vadd.f32 %v3141, %v3177
      %v3210 = vadd.f32 %v3142, %v3178
      %v3211 = vadd.f32 %v3143, %v3179
      %v3212 = vadd.f32 %v3144, %v3180
      %v3213 = vadd.f32 %v3145, %v3181
      %v3214 = vadd.f32 %v3146, %v3182
      %v3215 = vadd.f32 %v3147, %v3183
      %v3216 = vadd.f32 %v3148, %v3184
      %v3217 = vadd.f32 %v3149, %v3185
      %v3218 = vadd.f32 %v3150, %v3186
      %v3219 = vadd.f32 %v3151, %v3187
      %v3220 = vadd.f32 %v3152, %v3188
      %v3221 = vadd.f32 %v3153, %v3189
      %v3222 = vadd.f32 %v3154, %v3190
      %v3223 = vadd.f32 %v3155, %v3191
      %v3224 = vadd.f32 %v3156, %v3192
      %v3225 = vadd.f32 %v3157, %v3193
      %v3226 = vlaneseq
      %v3227 = vshrl.u32 %v3226, 7
      %v3228 = vsub.s32 3, %v3227
      %v3229 = vrot.slane %v1840, %v3228
      %v3230 = vmul.f32 %v2988, %v3229
      %v3231 = vmul.f32 %v2989, %v3229
      %v3232 = vmul.f32 %v2990, %v3229
      %v3233 = vmul.f32 %v2991, %v3229
      %v3234 = vmul.f32 %v2992, %v3229
      %v3235 = vmul.f32 %v2993, %v3229
      %v3236 = vmul.f32 %v2994, %v3229
      %v3237 = vmul.f32 %v2995, %v3229
      %v3238 = vmul.f32 %v2996, %v3229
      %v3239 = vmul.f32 %v2997, %v3229
      %v3240 = vmul.f32 %v2998, %v3229
      %v3241 = vmul.f32 %v2999, %v3229
      %v3242 = vmul.f32 %v3000, %v3229
      %v3243 = vmul.f32 %v3001, %v3229
      %v3244 = vmul.f32 %v3002, %v3229
      %v3245 = vmul.f32 %v3003, %v3229
      %v3246 = vmul.f32 %v3004, %v3229
      %v3247 = vmul.f32 %v3005, %v3229
      %v3248 = vmul.f32 %v3006, %v3229
      %v3249 = vmul.f32 %v3007, %v3229
      %v3250 = vmul.f32 %v3008, %v3229
      %v3251 = vmul.f32 %v3009, %v3229
      %v3252 = vmul.f32 %v3010, %v3229
      %v3253 = vmul.f32 %v3011, %v3229
      %v3254 = vmul.f32 %v3012, %v3229
      %v3255 = vmul.f32 %v3013, %v3229
      %v3256 = vmul.f32 %v3014, %v3229
      %v3257 = vmul.f32 %v3015, %v3229
      %v3258 = vmul.f32 %v3016, %v3229
      %v3259 = vmul.f32 %v3017, %v3229
      %v3260 = vmul.f32 %v3018, %v3229
      %v3261 = vmul.f32 %v3019, %v3229
      %v3262 = vadd.f32 %v3194, %v3230
      %v3263 = vadd.f32 %v3195, %v3231
      %v3264 = vadd.f32 %v3196, %v3232
      %v3265 = vadd.f32 %v3197, %v3233
      %v3266 = vadd.f32 %v3198, %v3234
      %v3267 = vadd.f32 %v3199, %v3235
      %v3268 = vadd.f32 %v3200, %v3236
      %v3269 = vadd.f32 %v3201, %v3237
      %v3270 = vadd.f32 %v3202, %v3238
      %v3271 = vadd.f32 %v3203, %v3239
      %v3272 = vadd.f32 %v3204, %v3240
      %v3273 = vadd.f32 %v3205, %v3241
      %v3274 = vadd.f32 %v3206, %v3242
      %v3275 = vadd.f32 %v3207, %v3243
      %v3276 = vadd.f32 %v3208, %v3244
      %v3277 = vadd.f32 %v3209, %v3245
      %v3278 = vadd.f32 %v3210, %v3246
      %v3279 = vadd.f32 %v3211, %v3247
      %v3280 = vadd.f32 %v3212, %v3248
      %v3281 = vadd.f32 %v3213, %v3249
      %v3282 = vadd.f32 %v3214, %v3250
      %v3283 = vadd.f32 %v3215, %v3251
      %v3284 = vadd.f32 %v3216, %v3252
      %v3285 = vadd.f32 %v3217, %v3253
      %v3286 = vadd.f32 %v3218, %v3254
      %v3287 = vadd.f32 %v3219, %v3255
      %v3288 = vadd.f32 %v3220, %v3256
      %v3289 = vadd.f32 %v3221, %v3257
      %v3290 = vadd.f32 %v3222, %v3258
      %v3291 = vadd.f32 %v3223, %v3259
      %v3292 = vadd.f32 %v3224, %v3260
      %v3293 = vadd.f32 %v3225, %v3261
      %v3294 = vlaneseq
      %v3295 = vshrl.u32 %v3294, 7
      %v3296 = vsub.s32 3, %v3295
      %v3297 = vrot.slane %v1841, %v3296
      %v3298 = vmul.f32 %v2990, %v3297
      %v3299 = vmul.f32 %v2991, %v3297
      %v3300 = vmul.f32 %v2992, %v3297
      %v3301 = vmul.f32 %v2993, %v3297
      %v3302 = vmul.f32 %v2994, %v3297
      %v3303 = vmul.f32 %v2995, %v3297
      %v3304 = vmul.f32 %v2996, %v3297
      %v3305 = vmul.f32 %v2997, %v3297
      %v3306 = vmul.f32 %v2998, %v3297
      %v3307 = vmul.f32 %v2999, %v3297
      %v3308 = vmul.f32 %v3000, %v3297
      %v3309 = vmul.f32 %v3001, %v3297
      %v3310 = vmul.f32 %v3002, %v3297
      %v3311 = vmul.f32 %v3003, %v3297
      %v3312 = vmul.f32 %v3004, %v3297
      %v3313 = vmul.f32 %v3005, %v3297
      %v3314 = vmul.f32 %v3006, %v3297
      %v3315 = vmul.f32 %v3007, %v3297
      %v3316 = vmul.f32 %v3008, %v3297
      %v3317 = vmul.f32 %v3009, %v3297
      %v3318 = vmul.f32 %v3010, %v3297
      %v3319 = vmul.f32 %v3011, %v3297
      %v3320 = vmul.f32 %v3012, %v3297
      %v3321 = vmul.f32 %v3013, %v3297
      %v3322 = vmul.f32 %v3014, %v3297
      %v3323 = vmul.f32 %v3015, %v3297
      %v3324 = vmul.f32 %v3016, %v3297
      %v3325 = vmul.f32 %v3017, %v3297
      %v3326 = vmul.f32 %v3018, %v3297
      %v3327 = vmul.f32 %v3019, %v3297
      %v3328 = vmul.f32 %v3020, %v3297
      %v3329 = vmul.f32 %v3021, %v3297
      %v3330 = vadd.f32 %v3262, %v3298
      %v3331 = vadd.f32 %v3263, %v3299
      %v3332 = vadd.f32 %v3264, %v3300
      %v3333 = vadd.f32 %v3265, %v3301
      %v3334 = vadd.f32 %v3266, %v3302
      %v3335 = vadd.f32 %v3267, %v3303
      %v3336 = vadd.f32 %v3268, %v3304
      %v3337 = vadd.f32 %v3269, %v3305
      %v3338 = vadd.f32 %v3270, %v3306
      %v3339 = vadd.f32 %v3271, %v3307
      %v3340 = vadd.f32 %v3272, %v3308
      %v3341 = vadd.f32 %v3273, %v3309
      %v3342 = vadd.f32 %v3274, %v3310
      %v3343 = vadd.f32 %v3275, %v3311
      %v3344 = vadd.f32 %v3276, %v3312
      %v3345 = vadd.f32 %v3277, %v3313
      %v3346 = vadd.f32 %v3278, %v3314
      %v3347 = vadd.f32 %v3279, %v3315
      %v3348 = vadd.f32 %v3280, %v3316
      %v3349 = vadd.f32 %v3281, %v3317
      %v3350 = vadd.f32 %v3282, %v3318
      %v3351 = vadd.f32 %v3283, %v3319
      %v3352 = vadd.f32 %v3284, %v3320
      %v3353 = vadd.f32 %v3285, %v3321
      %v3354 = vadd.f32 %v3286, %v3322
      %v3355 = vadd.f32 %v3287, %v3323
      %v3356 = vadd.f32 %v3288, %v3324
      %v3357 = vadd.f32 %v3289, %v3325
      %v3358 = vadd.f32 %v3290, %v3326
      %v3359 = vadd.f32 %v3291, %v3327
      %v3360 = vadd.f32 %v3292, %v3328
      %v3361 = vadd.f32 %v3293, %v3329
      %v3362 = vld [vmem:[#allocation2 + $0xa] sm:$0xff]
      %v3363 = vld [vmem:[#allocation2 + $0x12] sm:$0xff]
      %v3364 = vld [vmem:[#allocation2 + $0x2a] sm:$0xff]
      %v3365 = vld [vmem:[#allocation2 + $0x32] sm:$0xff]
      %v3366 = vld [vmem:[#allocation2 + $0x4a] sm:$0xff]
      %v3367 = vld [vmem:[#allocation2 + $0x52] sm:$0xff]
      %v3368 = vld [vmem:[#allocation2 + $0x6a] sm:$0xff]
      %v3369 = vld [vmem:[#allocation2 + $0x72] sm:$0xff]
      %v3370 = vld [vmem:[#allocation2 + $0x8a] sm:$0xff]
      %v3371 = vld [vmem:[#allocation2 + $0x92] sm:$0xff]
      %v3372 = vld [vmem:[#allocation2 + $0xaa] sm:$0xff]
      %v3373 = vld [vmem:[#allocation2 + $0xb2] sm:$0xff]
      %v3374 = vld [vmem:[#allocation2 + $0xca] sm:$0xff]
      %v3375 = vld [vmem:[#allocation2 + $0xd2] sm:$0xff]
      %v3376 = vld [vmem:[#allocation2 + $0xea] sm:$0xff]
      %v3377 = vld [vmem:[#allocation2 + $0xf2] sm:$0xff]
      %v3378 = vld [vmem:[#allocation2 + $0x10a] sm:$0xff]
      %v3379 = vld [vmem:[#allocation2 + $0x112] sm:$0xff]
      %v3380 = vld [vmem:[#allocation2 + $0x12a] sm:$0xff]
      %v3381 = vld [vmem:[#allocation2 + $0x132] sm:$0xff]
      %v3382 = vld [vmem:[#allocation2 + $0x14a] sm:$0xff]
      %v3383 = vld [vmem:[#allocation2 + $0x152] sm:$0xff]
      %v3384 = vld [vmem:[#allocation2 + $0x16a] sm:$0xff]
      %v3385 = vld [vmem:[#allocation2 + $0x172] sm:$0xff]
      %v3386 = vld [vmem:[#allocation2 + $0x18a] sm:$0xff]
      %v3387 = vld [vmem:[#allocation2 + $0x192] sm:$0xff]
      %v3388 = vld [vmem:[#allocation2 + $0x1aa] sm:$0xff]
      %v3389 = vld [vmem:[#allocation2 + $0x1b2] sm:$0xff]
      %v3390 = vld [vmem:[#allocation2 + $0x1ca] sm:$0xff]
      %v3391 = vld [vmem:[#allocation2 + $0x1d2] sm:$0xff]
      %v3392 = vld [vmem:[#allocation2 + $0x1ea] sm:$0xff]
      %v3393 = vld [vmem:[#allocation2 + $0x1f2] sm:$0xff]
      %v3394 = vld [vmem:[#allocation2 + $0x20a] sm:$0xff]
      %v3395 = vld [vmem:[#allocation2 + $0x212] sm:$0xff]
      %v3396 = vld [vmem:[#allocation2 + $0x22a] sm:$0xff]
      %v3397 = vld [vmem:[#allocation2 + $0x232] sm:$0xff]
      %v3398 = vld [vmem:[#allocation2 + $0x24a] sm:$0xff]
      %v3399 = vld [vmem:[#allocation2 + $0x252] sm:$0xff]
      %v3400 = vld [vmem:[#allocation2 + $0x26a] sm:$0xff]
      %v3401 = vld [vmem:[#allocation2 + $0x272] sm:$0xff]
      %v3402 = vlaneseq
      %v3403 = vshrl.u32 %v3402, 7
      %v3404 = vsub.s32 4, %v3403
      %v3405 = vrot.slane %v1837, %v3404
      %v3406 = vmul.f32 %v3362, %v3405
      %v3407 = vmul.f32 %v3363, %v3405
      %v3408 = vmul.f32 %v3364, %v3405
      %v3409 = vmul.f32 %v3365, %v3405
      %v3410 = vmul.f32 %v3366, %v3405
      %v3411 = vmul.f32 %v3367, %v3405
      %v3412 = vmul.f32 %v3368, %v3405
      %v3413 = vmul.f32 %v3369, %v3405
      %v3414 = vmul.f32 %v3370, %v3405
      %v3415 = vmul.f32 %v3371, %v3405
      %v3416 = vmul.f32 %v3372, %v3405
      %v3417 = vmul.f32 %v3373, %v3405
      %v3418 = vmul.f32 %v3374, %v3405
      %v3419 = vmul.f32 %v3375, %v3405
      %v3420 = vmul.f32 %v3376, %v3405
      %v3421 = vmul.f32 %v3377, %v3405
      %v3422 = vmul.f32 %v3378, %v3405
      %v3423 = vmul.f32 %v3379, %v3405
      %v3424 = vmul.f32 %v3380, %v3405
      %v3425 = vmul.f32 %v3381, %v3405
      %v3426 = vmul.f32 %v3382, %v3405
      %v3427 = vmul.f32 %v3383, %v3405
      %v3428 = vmul.f32 %v3384, %v3405
      %v3429 = vmul.f32 %v3385, %v3405
      %v3430 = vmul.f32 %v3386, %v3405
      %v3431 = vmul.f32 %v3387, %v3405
      %v3432 = vmul.f32 %v3388, %v3405
      %v3433 = vmul.f32 %v3389, %v3405
      %v3434 = vmul.f32 %v3390, %v3405
      %v3435 = vmul.f32 %v3391, %v3405
      %v3436 = vmul.f32 %v3392, %v3405
      %v3437 = vmul.f32 %v3393, %v3405
      %v3438 = vadd.f32 %v3330, %v3406
      %v3439 = vadd.f32 %v3331, %v3407
      %v3440 = vadd.f32 %v3332, %v3408
      %v3441 = vadd.f32 %v3333, %v3409
      %v3442 = vadd.f32 %v3334, %v3410
      %v3443 = vadd.f32 %v3335, %v3411
      %v3444 = vadd.f32 %v3336, %v3412
      %v3445 = vadd.f32 %v3337, %v3413
      %v3446 = vadd.f32 %v3338, %v3414
      %v3447 = vadd.f32 %v3339, %v3415
      %v3448 = vadd.f32 %v3340, %v3416
      %v3449 = vadd.f32 %v3341, %v3417
      %v3450 = vadd.f32 %v3342, %v3418
      %v3451 = vadd.f32 %v3343, %v3419
      %v3452 = vadd.f32 %v3344, %v3420
      %v3453 = vadd.f32 %v3345, %v3421
      %v3454 = vadd.f32 %v3346, %v3422
      %v3455 = vadd.f32 %v3347, %v3423
      %v3456 = vadd.f32 %v3348, %v3424
      %v3457 = vadd.f32 %v3349, %v3425
      %v3458 = vadd.f32 %v3350, %v3426
      %v3459 = vadd.f32 %v3351, %v3427
      %v3460 = vadd.f32 %v3352, %v3428
      %v3461 = vadd.f32 %v3353, %v3429
      %v3462 = vadd.f32 %v3354, %v3430
      %v3463 = vadd.f32 %v3355, %v3431
      %v3464 = vadd.f32 %v3356, %v3432
      %v3465 = vadd.f32 %v3357, %v3433
      %v3466 = vadd.f32 %v3358, %v3434
      %v3467 = vadd.f32 %v3359, %v3435
      %v3468 = vadd.f32 %v3360, %v3436
      %v3469 = vadd.f32 %v3361, %v3437
      %v3470 = vlaneseq
      %v3471 = vshrl.u32 %v3470, 7
      %v3472 = vsub.s32 4, %v3471
      %v3473 = vrot.slane %v1838, %v3472
      %v3474 = vmul.f32 %v3364, %v3473
      %v3475 = vmul.f32 %v3365, %v3473
      %v3476 = vmul.f32 %v3366, %v3473
      %v3477 = vmul.f32 %v3367, %v3473
      %v3478 = vmul.f32 %v3368, %v3473
      %v3479 = vmul.f32 %v3369, %v3473
      %v3480 = vmul.f32 %v3370, %v3473
      %v3481 = vmul.f32 %v3371, %v3473
      %v3482 = vmul.f32 %v3372, %v3473
      %v3483 = vmul.f32 %v3373, %v3473
      %v3484 = vmul.f32 %v3374, %v3473
      %v3485 = vmul.f32 %v3375, %v3473
      %v3486 = vmul.f32 %v3376, %v3473
      %v3487 = vmul.f32 %v3377, %v3473
      %v3488 = vmul.f32 %v3378, %v3473
      %v3489 = vmul.f32 %v3379, %v3473
      %v3490 = vmul.f32 %v3380, %v3473
      %v3491 = vmul.f32 %v3381, %v3473
      %v3492 = vmul.f32 %v3382, %v3473
      %v3493 = vmul.f32 %v3383, %v3473
      %v3494 = vmul.f32 %v3384, %v3473
      %v3495 = vmul.f32 %v3385, %v3473
      %v3496 = vmul.f32 %v3386, %v3473
      %v3497 = vmul.f32 %v3387, %v3473
      %v3498 = vmul.f32 %v3388, %v3473
      %v3499 = vmul.f32 %v3389, %v3473
      %v3500 = vmul.f32 %v3390, %v3473
      %v3501 = vmul.f32 %v3391, %v3473
      %v3502 = vmul.f32 %v3392, %v3473
      %v3503 = vmul.f32 %v3393, %v3473
      %v3504 = vmul.f32 %v3394, %v3473
      %v3505 = vmul.f32 %v3395, %v3473
      %v3506 = vadd.f32 %v3438, %v3474
      %v3507 = vadd.f32 %v3439, %v3475
      %v3508 = vadd.f32 %v3440, %v3476
      %v3509 = vadd.f32 %v3441, %v3477
      %v3510 = vadd.f32 %v3442, %v3478
      %v3511 = vadd.f32 %v3443, %v3479
      %v3512 = vadd.f32 %v3444, %v3480
      %v3513 = vadd.f32 %v3445, %v3481
      %v3514 = vadd.f32 %v3446, %v3482
      %v3515 = vadd.f32 %v3447, %v3483
      %v3516 = vadd.f32 %v3448, %v3484
      %v3517 = vadd.f32 %v3449, %v3485
      %v3518 = vadd.f32 %v3450, %v3486
      %v3519 = vadd.f32 %v3451, %v3487
      %v3520 = vadd.f32 %v3452, %v3488
      %v3521 = vadd.f32 %v3453, %v3489
      %v3522 = vadd.f32 %v3454, %v3490
      %v3523 = vadd.f32 %v3455, %v3491
      %v3524 = vadd.f32 %v3456, %v3492
      %v3525 = vadd.f32 %v3457, %v3493
      %v3526 = vadd.f32 %v3458, %v3494
      %v3527 = vadd.f32 %v3459, %v3495
      %v3528 = vadd.f32 %v3460, %v3496
      %v3529 = vadd.f32 %v3461, %v3497
      %v3530 = vadd.f32 %v3462, %v3498
      %v3531 = vadd.f32 %v3463, %v3499
      %v3532 = vadd.f32 %v3464, %v3500
      %v3533 = vadd.f32 %v3465, %v3501
      %v3534 = vadd.f32 %v3466, %v3502
      %v3535 = vadd.f32 %v3467, %v3503
      %v3536 = vadd.f32 %v3468, %v3504
      %v3537 = vadd.f32 %v3469, %v3505
      %v3538 = vlaneseq
      %v3539 = vshrl.u32 %v3538, 7
      %v3540 = vsub.s32 4, %v3539
      %v3541 = vrot.slane %v1839, %v3540
      %v3542 = vmul.f32 %v3366, %v3541
      %v3543 = vmul.f32 %v3367, %v3541
      %v3544 = vmul.f32 %v3368, %v3541
      %v3545 = vmul.f32 %v3369, %v3541
      %v3546 = vmul.f32 %v3370, %v3541
      %v3547 = vmul.f32 %v3371, %v3541
      %v3548 = vmul.f32 %v3372, %v3541
      %v3549 = vmul.f32 %v3373, %v3541
      %v3550 = vmul.f32 %v3374, %v3541
      %v3551 = vmul.f32 %v3375, %v3541
      %v3552 = vmul.f32 %v3376, %v3541
      %v3553 = vmul.f32 %v3377, %v3541
      %v3554 = vmul.f32 %v3378, %v3541
      %v3555 = vmul.f32 %v3379, %v3541
      %v3556 = vmul.f32 %v3380, %v3541
      %v3557 = vmul.f32 %v3381, %v3541
      %v3558 = vmul.f32 %v3382, %v3541
      %v3559 = vmul.f32 %v3383, %v3541
      %v3560 = vmul.f32 %v3384, %v3541
      %v3561 = vmul.f32 %v3385, %v3541
      %v3562 = vmul.f32 %v3386, %v3541
      %v3563 = vmul.f32 %v3387, %v3541
      %v3564 = vmul.f32 %v3388, %v3541
      %v3565 = vmul.f32 %v3389, %v3541
      %v3566 = vmul.f32 %v3390, %v3541
      %v3567 = vmul.f32 %v3391, %v3541
      %v3568 = vmul.f32 %v3392, %v3541
      %v3569 = vmul.f32 %v3393, %v3541
      %v3570 = vmul.f32 %v3394, %v3541
      %v3571 = vmul.f32 %v3395, %v3541
      %v3572 = vmul.f32 %v3396, %v3541
      %v3573 = vmul.f32 %v3397, %v3541
      %v3574 = vadd.f32 %v3506, %v3542
      %v3575 = vadd.f32 %v3507, %v3543
      %v3576 = vadd.f32 %v3508, %v3544
      %v3577 = vadd.f32 %v3509, %v3545
      %v3578 = vadd.f32 %v3510, %v3546
      %v3579 = vadd.f32 %v3511, %v3547
      %v3580 = vadd.f32 %v3512, %v3548
      %v3581 = vadd.f32 %v3513, %v3549
      %v3582 = vadd.f32 %v3514, %v3550
      %v3583 = vadd.f32 %v3515, %v3551
      %v3584 = vadd.f32 %v3516, %v3552
      %v3585 = vadd.f32 %v3517, %v3553
      %v3586 = vadd.f32 %v3518, %v3554
      %v3587 = vadd.f32 %v3519, %v3555
      %v3588 = vadd.f32 %v3520, %v3556
      %v3589 = vadd.f32 %v3521, %v3557
      %v3590 = vadd.f32 %v3522, %v3558
      %v3591 = vadd.f32 %v3523, %v3559
      %v3592 = vadd.f32 %v3524, %v3560
      %v3593 = vadd.f32 %v3525, %v3561
      %v3594 = vadd.f32 %v3526, %v3562
      %v3595 = vadd.f32 %v3527, %v3563
      %v3596 = vadd.f32 %v3528, %v3564
      %v3597 = vadd.f32 %v3529, %v3565
      %v3598 = vadd.f32 %v3530, %v3566
      %v3599 = vadd.f32 %v3531, %v3567
      %v3600 = vadd.f32 %v3532, %v3568
      %v3601 = vadd.f32 %v3533, %v3569
      %v3602 = vadd.f32 %v3534, %v3570
      %v3603 = vadd.f32 %v3535, %v3571
      %v3604 = vadd.f32 %v3536, %v3572
      %v3605 = vadd.f32 %v3537, %v3573
      %v3606 = vlaneseq
      %v3607 = vshrl.u32 %v3606, 7
      %v3608 = vsub.s32 4, %v3607
      %v3609 = vrot.slane %v1840, %v3608
      %v3610 = vmul.f32 %v3368, %v3609
      %v3611 = vmul.f32 %v3369, %v3609
      %v3612 = vmul.f32 %v3370, %v3609
      %v3613 = vmul.f32 %v3371, %v3609
      %v3614 = vmul.f32 %v3372, %v3609
      %v3615 = vmul.f32 %v3373, %v3609
      %v3616 = vmul.f32 %v3374, %v3609
      %v3617 = vmul.f32 %v3375, %v3609
      %v3618 = vmul.f32 %v3376, %v3609
      %v3619 = vmul.f32 %v3377, %v3609
      %v3620 = vmul.f32 %v3378, %v3609
      %v3621 = vmul.f32 %v3379, %v3609
      %v3622 = vmul.f32 %v3380, %v3609
      %v3623 = vmul.f32 %v3381, %v3609
      %v3624 = vmul.f32 %v3382, %v3609
      %v3625 = vmul.f32 %v3383, %v3609
      %v3626 = vmul.f32 %v3384, %v3609
      %v3627 = vmul.f32 %v3385, %v3609
      %v3628 = vmul.f32 %v3386, %v3609
      %v3629 = vmul.f32 %v3387, %v3609
      %v3630 = vmul.f32 %v3388, %v3609
      %v3631 = vmul.f32 %v3389, %v3609
      %v3632 = vmul.f32 %v3390, %v3609
      %v3633 = vmul.f32 %v3391, %v3609
      %v3634 = vmul.f32 %v3392, %v3609
      %v3635 = vmul.f32 %v3393, %v3609
      %v3636 = vmul.f32 %v3394, %v3609
      %v3637 = vmul.f32 %v3395, %v3609
      %v3638 = vmul.f32 %v3396, %v3609
      %v3639 = vmul.f32 %v3397, %v3609
      %v3640 = vmul.f32 %v3398, %v3609
      %v3641 = vmul.f32 %v3399, %v3609
      %v3642 = vadd.f32 %v3574, %v3610
      %v3643 = vadd.f32 %v3575, %v3611
      %v3644 = vadd.f32 %v3576, %v3612
      %v3645 = vadd.f32 %v3577, %v3613
      %v3646 = vadd.f32 %v3578, %v3614
      %v3647 = vadd.f32 %v3579, %v3615
      %v3648 = vadd.f32 %v3580, %v3616
      %v3649 = vadd.f32 %v3581, %v3617
      %v3650 = vadd.f32 %v3582, %v3618
      %v3651 = vadd.f32 %v3583, %v3619
      %v3652 = vadd.f32 %v3584, %v3620
      %v3653 = vadd.f32 %v3585, %v3621
      %v3654 = vadd.f32 %v3586, %v3622
      %v3655 = vadd.f32 %v3587, %v3623
      %v3656 = vadd.f32 %v3588, %v3624
      %v3657 = vadd.f32 %v3589, %v3625
      %v3658 = vadd.f32 %v3590, %v3626
      %v3659 = vadd.f32 %v3591, %v3627
      %v3660 = vadd.f32 %v3592, %v3628
      %v3661 = vadd.f32 %v3593, %v3629
      %v3662 = vadd.f32 %v3594, %v3630
      %v3663 = vadd.f32 %v3595, %v3631
      %v3664 = vadd.f32 %v3596, %v3632
      %v3665 = vadd.f32 %v3597, %v3633
      %v3666 = vadd.f32 %v3598, %v3634
      %v3667 = vadd.f32 %v3599, %v3635
      %v3668 = vadd.f32 %v3600, %v3636
      %v3669 = vadd.f32 %v3601, %v3637
      %v3670 = vadd.f32 %v3602, %v3638
      %v3671 = vadd.f32 %v3603, %v3639
      %v3672 = vadd.f32 %v3604, %v3640
      %v3673 = vadd.f32 %v3605, %v3641
      %v3674 = vlaneseq
      %v3675 = vshrl.u32 %v3674, 7
      %v3676 = vsub.s32 4, %v3675
      %v3677 = vrot.slane %v1841, %v3676
      %v3678 = vmul.f32 %v3370, %v3677
      %v3679 = vmul.f32 %v3371, %v3677
      %v3680 = vmul.f32 %v3372, %v3677
      %v3681 = vmul.f32 %v3373, %v3677
      %v3682 = vmul.f32 %v3374, %v3677
      %v3683 = vmul.f32 %v3375, %v3677
      %v3684 = vmul.f32 %v3376, %v3677
      %v3685 = vmul.f32 %v3377, %v3677
      %v3686 = vmul.f32 %v3378, %v3677
      %v3687 = vmul.f32 %v3379, %v3677
      %v3688 = vmul.f32 %v3380, %v3677
      %v3689 = vmul.f32 %v3381, %v3677
      %v3690 = vmul.f32 %v3382, %v3677
      %v3691 = vmul.f32 %v3383, %v3677
      %v3692 = vmul.f32 %v3384, %v3677
      %v3693 = vmul.f32 %v3385, %v3677
      %v3694 = vmul.f32 %v3386, %v3677
      %v3695 = vmul.f32 %v3387, %v3677
      %v3696 = vmul.f32 %v3388, %v3677
      %v3697 = vmul.f32 %v3389, %v3677
      %v3698 = vmul.f32 %v3390, %v3677
      %v3699 = vmul.f32 %v3391, %v3677
      %v3700 = vmul.f32 %v3392, %v3677
      %v3701 = vmul.f32 %v3393, %v3677
      %v3702 = vmul.f32 %v3394, %v3677
      %v3703 = vmul.f32 %v3395, %v3677
      %v3704 = vmul.f32 %v3396, %v3677
      %v3705 = vmul.f32 %v3397, %v3677
      %v3706 = vmul.f32 %v3398, %v3677
      %v3707 = vmul.f32 %v3399, %v3677
      %v3708 = vmul.f32 %v3400, %v3677
      %v3709 = vmul.f32 %v3401, %v3677
      %v3710 = vadd.f32 %v3642, %v3678
      %v3711 = vadd.f32 %v3643, %v3679
      %v3712 = vadd.f32 %v3644, %v3680
      %v3713 = vadd.f32 %v3645, %v3681
      %v3714 = vadd.f32 %v3646, %v3682
      %v3715 = vadd.f32 %v3647, %v3683
      %v3716 = vadd.f32 %v3648, %v3684
      %v3717 = vadd.f32 %v3649, %v3685
      %v3718 = vadd.f32 %v3650, %v3686
      %v3719 = vadd.f32 %v3651, %v3687
      %v3720 = vadd.f32 %v3652, %v3688
      %v3721 = vadd.f32 %v3653, %v3689
      %v3722 = vadd.f32 %v3654, %v3690
      %v3723 = vadd.f32 %v3655, %v3691
      %v3724 = vadd.f32 %v3656, %v3692
      %v3725 = vadd.f32 %v3657, %v3693
      %v3726 = vadd.f32 %v3658, %v3694
      %v3727 = vadd.f32 %v3659, %v3695
      %v3728 = vadd.f32 %v3660, %v3696
      %v3729 = vadd.f32 %v3661, %v3697
      %v3730 = vadd.f32 %v3662, %v3698
      %v3731 = vadd.f32 %v3663, %v3699
      %v3732 = vadd.f32 %v3664, %v3700
      %v3733 = vadd.f32 %v3665, %v3701
      %v3734 = vadd.f32 %v3666, %v3702
      %v3735 = vadd.f32 %v3667, %v3703
      %v3736 = vadd.f32 %v3668, %v3704
      %v3737 = vadd.f32 %v3669, %v3705
      %v3738 = vadd.f32 %v3670, %v3706
      %v3739 = vadd.f32 %v3671, %v3707
      %v3740 = vadd.f32 %v3672, %v3708
      %v3741 = vadd.f32 %v3673, %v3709
      %v3742 = vmul.f32 %v3710, 0.5
      %v3743 = vmul.f32 %v3711, 0.5
      %v3744 = vmul.f32 %v3712, 0.5
      %v3745 = vmul.f32 %v3713, 0.5
      %v3746 = vmul.f32 %v3714, 0.5
      %v3747 = vmul.f32 %v3715, 0.5
      %v3748 = vmul.f32 %v3716, 0.5
      %v3749 = vmul.f32 %v3717, 0.5
      %v3750 = vmul.f32 %v3718, 0.5
      %v3751 = vmul.f32 %v3719, 0.5
      %v3752 = vmul.f32 %v3720, 0.5
      %v3753 = vmul.f32 %v3721, 0.5
      %v3754 = vmul.f32 %v3722, 0.5
      %v3755 = vmul.f32 %v3723, 0.5
      %v3756 = vmul.f32 %v3724, 0.5
      %v3757 = vmul.f32 %v3725, 0.5
      %v3758 = vmul.f32 %v3726, 0.5
      %v3759 = vmul.f32 %v3727, 0.5
      %v3760 = vmul.f32 %v3728, 0.5
      %v3761 = vmul.f32 %v3729, 0.5
      %v3762 = vmul.f32 %v3730, 0.5
      %v3763 = vmul.f32 %v3731, 0.5
      %v3764 = vmul.f32 %v3732, 0.5
      %v3765 = vmul.f32 %v3733, 0.5
      %v3766 = vmul.f32 %v3734, 0.5
      %v3767 = vmul.f32 %v3735, 0.5
      %v3768 = vmul.f32 %v3736, 0.5
      %v3769 = vmul.f32 %v3737, 0.5
      %v3770 = vmul.f32 %v3738, 0.5
      %v3771 = vmul.f32 %v3739, 0.5
      %v3772 = vmul.f32 %v3740, 0.5
      %v3773 = vmul.f32 %v3741, 0.5
      %v3774 = vmul.f32 %v3710, 0.044715
      %v3775 = vmul.f32 %v3711, 0.044715
      %v3776 = vmul.f32 %v3712, 0.044715
      %v3777 = vmul.f32 %v3713, 0.044715
      %v3778 = vmul.f32 %v3714, 0.044715
      %v3779 = vmul.f32 %v3715, 0.044715
      %v3780 = vmul.f32 %v3716, 0.044715
      %v3781 = vmul.f32 %v3717, 0.044715
      %v3782 = vmul.f32 %v3718, 0.044715
      %v3783 = vmul.f32 %v3719, 0.044715
      %v3784 = vmul.f32 %v3720, 0.044715
      %v3785 = vmul.f32 %v3721, 0.044715
      %v3786 = vmul.f32 %v3722, 0.044715
      %v3787 = vmul.f32 %v3723, 0.044715
      %v3788 = vmul.f32 %v3724, 0.044715
      %v3789 = vmul.f32 %v3725, 0.044715
      %v3790 = vmul.f32 %v3726, 0.044715
      %v3791 = vmul.f32 %v3727, 0.044715
      %v3792 = vmul.f32 %v3728, 0.044715
      %v3793 = vmul.f32 %v3729, 0.044715
      %v3794 = vmul.f32 %v3730, 0.044715
      %v3795 = vmul.f32 %v3731, 0.044715
      %v3796 = vmul.f32 %v3732, 0.044715
      %v3797 = vmul.f32 %v3733, 0.044715
      %v3798 = vmul.f32 %v3734, 0.044715
      %v3799 = vmul.f32 %v3735, 0.044715
      %v3800 = vmul.f32 %v3736, 0.044715
      %v3801 = vmul.f32 %v3737, 0.044715
      %v3802 = vmul.f32 %v3738, 0.044715
      %v3803 = vmul.f32 %v3739, 0.044715
      %v3804 = vmul.f32 %v3740, 0.044715
      %v3805 = vmul.f32 %v3741, 0.044715
      %v3806 = vmul.f32 %v3774, %v3710
      %v3807 = vmul.f32 %v3775, %v3711
      %v3808 = vmul.f32 %v3776, %v3712
      %v3809 = vmul.f32 %v3777, %v3713
      %v3810 = vmul.f32 %v3778, %v3714
      %v3811 = vmul.f32 %v3779, %v3715
      %v3812 = vmul.f32 %v3780, %v3716
      %v3813 = vmul.f32 %v3781, %v3717
      %v3814 = vmul.f32 %v3782, %v3718
      %v3815 = vmul.f32 %v3783, %v3719
      %v3816 = vmul.f32 %v3784, %v3720
      %v3817 = vmul.f32 %v3785, %v3721
      %v3818 = vmul.f32 %v3786, %v3722
      %v3819 = vmul.f32 %v3787, %v3723
      %v3820 = vmul.f32 %v3788, %v3724
      %v3821 = vmul.f32 %v3789, %v3725
      %v3822 = vmul.f32 %v3790, %v3726
      %v3823 = vmul.f32 %v3791, %v3727
      %v3824 = vmul.f32 %v3792, %v3728
      %v3825 = vmul.f32 %v3793, %v3729
      %v3826 = vmul.f32 %v3794, %v3730
      %v3827 = vmul.f32 %v3795, %v3731
      %v3828 = vmul.f32 %v3796, %v3732
      %v3829 = vmul.f32 %v3797, %v3733
      %v3830 = vmul.f32 %v3798, %v3734
      %v3831 = vmul.f32 %v3799, %v3735
      %v3832 = vmul.f32 %v3800, %v3736
      %v3833 = vmul.f32 %v3801, %v3737
      %v3834 = vmul.f32 %v3802, %v3738
      %v3835 = vmul.f32 %v3803, %v3739
      %v3836 = vmul.f32 %v3804, %v3740
      %v3837 = vmul.f32 %v3805, %v3741
      %v3838 = vmul.f32 %v3806, %v3710
      %v3839 = vmul.f32 %v3807, %v3711
      %v3840 = vmul.f32 %v3808, %v3712
      %v3841 = vmul.f32 %v3809, %v3713
      %v3842 = vmul.f32 %v3810, %v3714
      %v3843 = vmul.f32 %v3811, %v3715
      %v3844 = vmul.f32 %v3812, %v3716
      %v3845 = vmul.f32 %v3813, %v3717
      %v3846 = vmul.f32 %v3814, %v3718
      %v3847 = vmul.f32 %v3815, %v3719
      %v3848 = vmul.f32 %v3816, %v3720
      %v3849 = vmul.f32 %v3817, %v3721
      %v3850 = vmul.f32 %v3818, %v3722
      %v3851 = vmul.f32 %v3819, %v3723
      %v3852 = vmul.f32 %v3820, %v3724
      %v3853 = vmul.f32 %v3821, %v3725
      %v3854 = vmul.f32 %v3822, %v3726
      %v3855 = vmul.f32 %v3823, %v3727
      %v3856 = vmul.f32 %v3824, %v3728
      %v3857 = vmul.f32 %v3825, %v3729
      %v3858 = vmul.f32 %v3826, %v3730
      %v3859 = vmul.f32 %v3827, %v3731
      %v3860 = vmul.f32 %v3828, %v3732
      %v3861 = vmul.f32 %v3829, %v3733
      %v3862 = vmul.f32 %v3830, %v3734
      %v3863 = vmul.f32 %v3831, %v3735
      %v3864 = vmul.f32 %v3832, %v3736
      %v3865 = vmul.f32 %v3833, %v3737
      %v3866 = vmul.f32 %v3834, %v3738
      %v3867 = vmul.f32 %v3835, %v3739
      %v3868 = vmul.f32 %v3836, %v3740
      %v3869 = vmul.f32 %v3837, %v3741
      %v3870 = vadd.f32 %v3710, %v3838
      %v3871 = vadd.f32 %v3711, %v3839
      %v3872 = vadd.f32 %v3712, %v3840
      %v3873 = vadd.f32 %v3713, %v3841
      %v3874 = vadd.f32 %v3714, %v3842
      %v3875 = vadd.f32 %v3715, %v3843
      %v3876 = vadd.f32 %v3716, %v3844
      %v3877 = vadd.f32 %v3717, %v3845
      %v3878 = vadd.f32 %v3718, %v3846
      %v3879 = vadd.f32 %v3719, %v3847
      %v3880 = vadd.f32 %v3720, %v3848
      %v3881 = vadd.f32 %v3721, %v3849
      %v3882 = vadd.f32 %v3722, %v3850
      %v3883 = vadd.f32 %v3723, %v3851
      %v3884 = vadd.f32 %v3724, %v3852
      %v3885 = vadd.f32 %v3725, %v3853
      %v3886 = vadd.f32 %v3726, %v3854
      %v3887 = vadd.f32 %v3727, %v3855
      %v3888 = vadd.f32 %v3728, %v3856
      %v3889 = vadd.f32 %v3729, %v3857
      %v3890 = vadd.f32 %v3730, %v3858
      %v3891 = vadd.f32 %v3731, %v3859
      %v3892 = vadd.f32 %v3732, %v3860
      %v3893 = vadd.f32 %v3733, %v3861
      %v3894 = vadd.f32 %v3734, %v3862
      %v3895 = vadd.f32 %v3735, %v3863
      %v3896 = vadd.f32 %v3736, %v3864
      %v3897 = vadd.f32 %v3737, %v3865
      %v3898 = vadd.f32 %v3738, %v3866
      %v3899 = vadd.f32 %v3739, %v3867
      %v3900 = vadd.f32 %v3740, %v3868
      %v3901 = vadd.f32 %v3741, %v3869
      %v3902 = vmul.f32 %v3870, 0.7978846
      %v3903 = vmul.f32 %v3871, 0.7978846
      %v3904 = vmul.f32 %v3872, 0.7978846
      %v3905 = vmul.f32 %v3873, 0.7978846
      %v3906 = vmul.f32 %v3874, 0.7978846
      %v3907 = vmul.f32 %v3875, 0.7978846
      %v3908 = vmul.f32 %v3876, 0.7978846
      %v3909 = vmul.f32 %v3877, 0.7978846
      %v3910 = vmul.f32 %v3878, 0.7978846
      %v3911 = vmul.f32 %v3879, 0.7978846
      %v3912 = vmul.f32 %v3880, 0.7978846
      %v3913 = vmul.f32 %v3881, 0.7978846
      %v3914 = vmul.f32 %v3882, 0.7978846
      %v3915 = vmul.f32 %v3883, 0.7978846
      %v3916 = vmul.f32 %v3884, 0.7978846
      %v3917 = vmul.f32 %v3885, 0.7978846
      %v3918 = vmul.f32 %v3886, 0.7978846
      %v3919 = vmul.f32 %v3887, 0.7978846
      %v3920 = vmul.f32 %v3888, 0.7978846
      %v3921 = vmul.f32 %v3889, 0.7978846
      %v3922 = vmul.f32 %v3890, 0.7978846
      %v3923 = vmul.f32 %v3891, 0.7978846
      %v3924 = vmul.f32 %v3892, 0.7978846
      %v3925 = vmul.f32 %v3893, 0.7978846
      %v3926 = vmul.f32 %v3894, 0.7978846
      %v3927 = vmul.f32 %v3895, 0.7978846
      %v3928 = vmul.f32 %v3896, 0.7978846
      %v3929 = vmul.f32 %v3897, 0.7978846
      %v3930 = vmul.f32 %v3898, 0.7978846
      %v3931 = vmul.f32 %v3899, 0.7978846
      %v3932 = vmul.f32 %v3900, 0.7978846
      %v3933 = vmul.f32 %v3901, 0.7978846
      %v3934 = vtanh.pop %v3902
      %v3935 = vtanh.pop %v3903
      %v3936 = vtanh.pop %v3904
      %v3937 = vtanh.pop %v3905
      %v3938 = vtanh.pop %v3906
      %v3939 = vtanh.pop %v3907
      %v3940 = vtanh.pop %v3908
      %v3941 = vtanh.pop %v3909
      %v3942 = vtanh.pop %v3910
      %v3943 = vtanh.pop %v3911
      %v3944 = vtanh.pop %v3912
      %v3945 = vtanh.pop %v3913
      %v3946 = vtanh.pop %v3914
      %v3947 = vtanh.pop %v3915
      %v3948 = vtanh.pop %v3916
      %v3949 = vtanh.pop %v3917
      %v3950 = vtanh.pop %v3918
      %v3951 = vtanh.pop %v3919
      %v3952 = vtanh.pop %v3920
      %v3953 = vtanh.pop %v3921
      %v3954 = vtanh.pop %v3922
      %v3955 = vtanh.pop %v3923
      %v3956 = vtanh.pop %v3924
      %v3957 = vtanh.pop %v3925
      %v3958 = vtanh.pop %v3926
      %v3959 = vtanh.pop %v3927
      %v3960 = vtanh.pop %v3928
      %v3961 = vtanh.pop %v3929
      %v3962 = vtanh.pop %v3930
      %v3963 = vtanh.pop %v3931
      %v3964 = vtanh.pop %v3932
      %v3965 = vtanh.pop %v3933
      %v3966 = vadd.f32 %v3934, 1.0
      %v3967 = vadd.f32 %v3935, 1.0
      %v3968 = vadd.f32 %v3936, 1.0
      %v3969 = vadd.f32 %v3937, 1.0
      %v3970 = vadd.f32 %v3938, 1.0
      %v3971 = vadd.f32 %v3939, 1.0
      %v3972 = vadd.f32 %v3940, 1.0
      %v3973 = vadd.f32 %v3941, 1.0
      %v3974 = vadd.f32 %v3942, 1.0
      %v3975 = vadd.f32 %v3943, 1.0
      %v3976 = vadd.f32 %v3944, 1.0
      %v3977 = vadd.f32 %v3945, 1.0
      %v3978 = vadd.f32 %v3946, 1.0
      %v3979 = vadd.f32 %v3947, 1.0
      %v3980 = vadd.f32 %v3948, 1.0
      %v3981 = vadd.f32 %v3949, 1.0
      %v3982 = vadd.f32 %v3950, 1.0
      %v3983 = vadd.f32 %v3951, 1.0
      %v3984 = vadd.f32 %v3952, 1.0
      %v3985 = vadd.f32 %v3953, 1.0
      %v3986 = vadd.f32 %v3954, 1.0
      %v3987 = vadd.f32 %v3955, 1.0
      %v3988 = vadd.f32 %v3956, 1.0
      %v3989 = vadd.f32 %v3957, 1.0
      %v3990 = vadd.f32 %v3958, 1.0
      %v3991 = vadd.f32 %v3959, 1.0
      %v3992 = vadd.f32 %v3960, 1.0
      %v3993 = vadd.f32 %v3961, 1.0
      %v3994 = vadd.f32 %v3962, 1.0
      %v3995 = vadd.f32 %v3963, 1.0
      %v3996 = vadd.f32 %v3964, 1.0
      %v3997 = vadd.f32 %v3965, 1.0
      %v3998 = vmul.f32 %v3742, %v3966
      %v3999 = vmul.f32 %v3743, %v3967
      %v4000 = vmul.f32 %v3744, %v3968
      %v4001 = vmul.f32 %v3745, %v3969
      %v4002 = vmul.f32 %v3746, %v3970
      %v4003 = vmul.f32 %v3747, %v3971
      %v4004 = vmul.f32 %v3748, %v3972
      %v4005 = vmul.f32 %v3749, %v3973
      %v4006 = vmul.f32 %v3750, %v3974
      %v4007 = vmul.f32 %v3751, %v3975
      %v4008 = vmul.f32 %v3752, %v3976
      %v4009 = vmul.f32 %v3753, %v3977
      %v4010 = vmul.f32 %v3754, %v3978
      %v4011 = vmul.f32 %v3755, %v3979
      %v4012 = vmul.f32 %v3756, %v3980
      %v4013 = vmul.f32 %v3757, %v3981
      %v4014 = vmul.f32 %v3758, %v3982
      %v4015 = vmul.f32 %v3759, %v3983
      %v4016 = vmul.f32 %v3760, %v3984
      %v4017 = vmul.f32 %v3761, %v3985
      %v4018 = vmul.f32 %v3762, %v3986
      %v4019 = vmul.f32 %v3763, %v3987
      %v4020 = vmul.f32 %v3764, %v3988
      %v4021 = vmul.f32 %v3765, %v3989
      %v4022 = vmul.f32 %v3766, %v3990
      %v4023 = vmul.f32 %v3767, %v3991
      %v4024 = vmul.f32 %v3768, %v3992
      %v4025 = vmul.f32 %v3769, %v3993
      %v4026 = vmul.f32 %v3770, %v3994
      %v4027 = vmul.f32 %v3771, %v3995
      %v4028 = vmul.f32 %v3772, %v3996
      %v4029 = vmul.f32 %v3773, %v3997
      %4030 = vset.pattern.permute.xlu0 1
      %4031 = vperm.xlu0 %4030, %v505
      %v4032 = vpop.permute.xlu0 %4031
      %4034 = vset.pattern.permute.xlu0 1
      %4035 = vperm.xlu0 %4034, %v506
      %v4036 = vpop.permute.xlu0 %4035
      %4038 = vset.pattern.permute.xlu0 1
      %4039 = vperm.xlu0 %4038, %v507
      %v4040 = vpop.permute.xlu0 %4039
      %4042 = vset.pattern.permute.xlu0 1
      %4043 = vperm.xlu0 %4042, %v508
      %v4044 = vpop.permute.xlu0 %4043
      %4046 = vset.pattern.permute.xlu0 1
      %4047 = vperm.xlu0 %4046, %v509
      %v4048 = vpop.permute.xlu0 %4047
      %4050 = vset.pattern.permute.xlu0 1
      %4051 = vperm.xlu0 %4050, %v510
      %v4052 = vpop.permute.xlu0 %4051
      %4054 = vset.pattern.permute.xlu0 1
      %4055 = vperm.xlu0 %4054, %v511
      %v4056 = vpop.permute.xlu0 %4055
      %4058 = vset.pattern.permute.xlu0 1
      %4059 = vperm.xlu0 %4058, %v512
      %v4060 = vpop.permute.xlu0 %4059
      %4062 = vset.pattern.permute.xlu0 1
      %4063 = vperm.xlu0 %4062, %v513
      %v4064 = vpop.permute.xlu0 %4063
      %4066 = vset.pattern.permute.xlu0 1
      %4067 = vperm.xlu0 %4066, %v514
      %v4068 = vpop.permute.xlu0 %4067
      %4070 = vset.pattern.permute.xlu0 1
      %4071 = vperm.xlu0 %4070, %v515
      %v4072 = vpop.permute.xlu0 %4071
      %4074 = vset.pattern.permute.xlu0 1
      %4075 = vperm.xlu0 %4074, %v516
      %v4076 = vpop.permute.xlu0 %4075
      %4078 = vset.pattern.permute.xlu0 1
      %4079 = vperm.xlu0 %4078, %v517
      %v4080 = vpop.permute.xlu0 %4079
      %4082 = vset.pattern.permute.xlu0 1
      %4083 = vperm.xlu0 %4082, %v518
      %v4084 = vpop.permute.xlu0 %4083
      %4086 = vset.pattern.permute.xlu0 1
      %4087 = vperm.xlu0 %4086, %v519
      %v4088 = vpop.permute.xlu0 %4087
      %4090 = vset.pattern.permute.xlu0 1
      %4091 = vperm.xlu0 %4090, %v520
      %v4092 = vpop.permute.xlu0 %4091
      %4094 = vset.pattern.permute.xlu0 1
      %4095 = vperm.xlu0 %4094, %v521
      %v4096 = vpop.permute.xlu0 %4095
      %4098 = vset.pattern.permute.xlu0 1
      %4099 = vperm.xlu0 %4098, %v522
      %v4100 = vpop.permute.xlu0 %4099
      %4102 = vset.pattern.permute.xlu0 1
      %4103 = vperm.xlu0 %4102, %v523
      %v4104 = vpop.permute.xlu0 %4103
      %4106 = vset.pattern.permute.xlu0 1
      %4107 = vperm.xlu0 %4106, %v524
      %v4108 = vpop.permute.xlu0 %4107
      %4110 = vset.pattern.permute.xlu0 1
      %4111 = vperm.xlu0 %4110, %v525
      %v4112 = vpop.permute.xlu0 %4111
      %4114 = vset.pattern.permute.xlu0 1
      %4115 = vperm.xlu0 %4114, %v526
      %v4116 = vpop.permute.xlu0 %4115
      %4118 = vset.pattern.permute.xlu0 1
      %4119 = vperm.xlu0 %4118, %v527
      %v4120 = vpop.permute.xlu0 %4119
      %4122 = vset.pattern.permute.xlu0 1
      %4123 = vperm.xlu0 %4122, %v528
      %v4124 = vpop.permute.xlu0 %4123
      %4126 = vset.pattern.permute.xlu0 1
      %4127 = vperm.xlu0 %4126, %v529
      %v4128 = vpop.permute.xlu0 %4127
      %4130 = vset.pattern.permute.xlu0 1
      %4131 = vperm.xlu0 %4130, %v530
      %v4132 = vpop.permute.xlu0 %4131
      %4134 = vset.pattern.permute.xlu0 1
      %4135 = vperm.xlu0 %4134, %v531
      %v4136 = vpop.permute.xlu0 %4135
      %4138 = vset.pattern.permute.xlu0 1
      %4139 = vperm.xlu0 %4138, %v532
      %v4140 = vpop.permute.xlu0 %4139
      %4142 = vset.pattern.permute.xlu0 1
      %4143 = vperm.xlu0 %4142, %v533
      %v4144 = vpop.permute.xlu0 %4143
      %4146 = vset.pattern.permute.xlu0 1
      %4147 = vperm.xlu0 %4146, %v534
      %v4148 = vpop.permute.xlu0 %4147
      %4150 = vset.pattern.permute.xlu0 1
      %4151 = vperm.xlu0 %4150, %v535
      %v4152 = vpop.permute.xlu0 %4151
      %4154 = vset.pattern.permute.xlu0 1
      %4155 = vperm.xlu0 %4154, %v536
      %v4156 = vpop.permute.xlu0 %4155
      %v4158 = vmul.f32 %v3998, %v4032
      %v4159 = vmul.f32 %v3999, %v4036
      %v4160 = vmul.f32 %v4000, %v4040
      %v4161 = vmul.f32 %v4001, %v4044
      %v4162 = vmul.f32 %v4002, %v4048
      %v4163 = vmul.f32 %v4003, %v4052
      %v4164 = vmul.f32 %v4004, %v4056
      %v4165 = vmul.f32 %v4005, %v4060
      %v4166 = vmul.f32 %v4006, %v4064
      %v4167 = vmul.f32 %v4007, %v4068
      %v4168 = vmul.f32 %v4008, %v4072
      %v4169 = vmul.f32 %v4009, %v4076
      %v4170 = vmul.f32 %v4010, %v4080
      %v4171 = vmul.f32 %v4011, %v4084
      %v4172 = vmul.f32 %v4012, %v4088
      %v4173 = vmul.f32 %v4013, %v4092
      %v4174 = vmul.f32 %v4014, %v4096
      %v4175 = vmul.f32 %v4015, %v4100
      %v4176 = vmul.f32 %v4016, %v4104
      %v4177 = vmul.f32 %v4017, %v4108
      %v4178 = vmul.f32 %v4018, %v4112
      %v4179 = vmul.f32 %v4019, %v4116
      %v4180 = vmul.f32 %v4020, %v4120
      %v4181 = vmul.f32 %v4021, %v4124
      %v4182 = vmul.f32 %v4022, %v4128
      %v4183 = vmul.f32 %v4023, %v4132
      %v4184 = vmul.f32 %v4024, %v4136
      %v4185 = vmul.f32 %v4025, %v4140
      %v4186 = vmul.f32 %v4026, %v4144
      %v4187 = vmul.f32 %v4027, %v4148
      %v4188 = vmul.f32 %v4028, %v4152
      %v4189 = vmul.f32 %v4029, %v4156
      %v4190 = vadd.f32 %v1773, %v4158
      %v4191 = vadd.f32 %v1774, %v4159
      %v4192 = vadd.f32 %v1775, %v4160
      %v4193 = vadd.f32 %v1776, %v4161
      %v4194 = vadd.f32 %v1777, %v4162
      %v4195 = vadd.f32 %v1778, %v4163
      %v4196 = vadd.f32 %v1779, %v4164
      %v4197 = vadd.f32 %v1780, %v4165
      %v4198 = vadd.f32 %v1781, %v4166
      %v4199 = vadd.f32 %v1782, %v4167
      %v4200 = vadd.f32 %v1783, %v4168
      %v4201 = vadd.f32 %v1784, %v4169
      %v4202 = vadd.f32 %v1785, %v4170
      %v4203 = vadd.f32 %v1786, %v4171
      %v4204 = vadd.f32 %v1787, %v4172
      %v4205 = vadd.f32 %v1788, %v4173
      %v4206 = vadd.f32 %v1789, %v4174
      %v4207 = vadd.f32 %v1790, %v4175
      %v4208 = vadd.f32 %v1791, %v4176
      %v4209 = vadd.f32 %v1792, %v4177
      %v4210 = vadd.f32 %v1793, %v4178
      %v4211 = vadd.f32 %v1794, %v4179
      %v4212 = vadd.f32 %v1795, %v4180
      %v4213 = vadd.f32 %v1796, %v4181
      %v4214 = vadd.f32 %v1797, %v4182
      %v4215 = vadd.f32 %v1798, %v4183
      %v4216 = vadd.f32 %v1799, %v4184
      %v4217 = vadd.f32 %v1800, %v4185
      %v4218 = vadd.f32 %v1801, %v4186
      %v4219 = vadd.f32 %v1802, %v4187
      %v4220 = vadd.f32 %v1803, %v4188
      %v4221 = vadd.f32 %v1804, %v4189
      %v4222 = vpack.c.bf16 %v4191, %v4190
      %v4223 = vpack.c.bf16 %v4193, %v4192
      %v4224 = vpack.c.bf16 %v4195, %v4194
      %v4225 = vpack.c.bf16 %v4197, %v4196
      %v4226 = vpack.c.bf16 %v4199, %v4198
      %v4227 = vpack.c.bf16 %v4201, %v4200
      %v4228 = vpack.c.bf16 %v4203, %v4202
      %v4229 = vpack.c.bf16 %v4205, %v4204
      %v4230 = vpack.c.bf16 %v4207, %v4206
      %v4231 = vpack.c.bf16 %v4209, %v4208
      %v4232 = vpack.c.bf16 %v4211, %v4210
      %v4233 = vpack.c.bf16 %v4213, %v4212
      %v4234 = vpack.c.bf16 %v4215, %v4214
      %v4235 = vpack.c.bf16 %v4217, %v4216
      %v4236 = vpack.c.bf16 %v4219, %v4218
      %v4237 = vpack.c.bf16 %v4221, %v4220
      %v4254 = vunpack.c.l.b16 %v4222
      %v4255 = vunpack.c.h.b16 %v4222
      %v4256 = vunpack.c.l.b16 %v4223
      %v4257 = vunpack.c.h.b16 %v4223
      %v4258 = vunpack.c.l.b16 %v4224
      %v4259 = vunpack.c.h.b16 %v4224
      %v4260 = vunpack.c.l.b16 %v4225
      %v4261 = vunpack.c.h.b16 %v4225
      %v4262 = vunpack.c.l.b16 %v4226
      %v4263 = vunpack.c.h.b16 %v4226
      %v4264 = vunpack.c.l.b16 %v4227
      %v4265 = vunpack.c.h.b16 %v4227
      %v4266 = vunpack.c.l.b16 %v4228
      %v4267 = vunpack.c.h.b16 %v4228
      %v4268 = vunpack.c.l.b16 %v4229
      %v4269 = vunpack.c.h.b16 %v4229
      %v4270 = vunpack.c.l.b16 %v4230
      %v4271 = vunpack.c.h.b16 %v4230
      %v4272 = vunpack.c.l.b16 %v4231
      %v4273 = vunpack.c.h.b16 %v4231
      %v4274 = vunpack.c.l.b16 %v4232
      %v4275 = vunpack.c.h.b16 %v4232
      %v4276 = vunpack.c.l.b16 %v4233
      %v4277 = vunpack.c.h.b16 %v4233
      %v4278 = vunpack.c.l.b16 %v4234
      %v4279 = vunpack.c.h.b16 %v4234
      %v4280 = vunpack.c.l.b16 %v4235
      %v4281 = vunpack.c.h.b16 %v4235
      %v4282 = vunpack.c.l.b16 %v4236
      %v4283 = vunpack.c.h.b16 %v4236
      %v4284 = vunpack.c.l.b16 %v4237
      %v4285 = vunpack.c.h.b16 %v4237
      %v4286 = vpack.c.b16 %v4254, %v4254
      %v4287 = vpack.c.b16 %v4255, %v4255
      %v4288 = vpack.c.b16 %v4256, %v4256
      %v4289 = vpack.c.b16 %v4257, %v4257
      %v4290 = vpack.c.b16 %v4258, %v4258
      %v4291 = vpack.c.b16 %v4259, %v4259
      %v4292 = vpack.c.b16 %v4260, %v4260
      %v4293 = vpack.c.b16 %v4261, %v4261
      %v4294 = vpack.c.b16 %v4262, %v4262
      %v4295 = vpack.c.b16 %v4263, %v4263
      %v4296 = vpack.c.b16 %v4264, %v4264
      %v4297 = vpack.c.b16 %v4265, %v4265
      %v4298 = vpack.c.b16 %v4266, %v4266
      %v4299 = vpack.c.b16 %v4267, %v4267
      %v4300 = vpack.c.b16 %v4268, %v4268
      %v4301 = vpack.c.b16 %v4269, %v4269
      %v4302 = vpack.c.b16 %v4270, %v4270
      %v4303 = vpack.c.b16 %v4271, %v4271
      %v4304 = vpack.c.b16 %v4272, %v4272
      %v4305 = vpack.c.b16 %v4273, %v4273
      %v4306 = vpack.c.b16 %v4274, %v4274
      %v4307 = vpack.c.b16 %v4275, %v4275
      %v4308 = vpack.c.b16 %v4276, %v4276
      %v4309 = vpack.c.b16 %v4277, %v4277
      %v4310 = vpack.c.b16 %v4278, %v4278
      %v4311 = vpack.c.b16 %v4279, %v4279
      %v4312 = vpack.c.b16 %v4280, %v4280
      %v4313 = vpack.c.b16 %v4281, %v4281
      %v4314 = vpack.c.b16 %v4282, %v4282
      %v4315 = vpack.c.b16 %v4283, %v4283
      %v4316 = vpack.c.b16 %v4284, %v4284
      %v4317 = vpack.c.b16 %v4285, %v4285
      %vm4350 = vcmask 257024
      %4351 = vst.msk [vmem:[%s320] sm:$0xf] %vm4350, %v4286
      %4352 = vst.msk [vmem:[%s320 + $0x4] sm:$0xf] %vm4350, %v4287
      %4353 = vst.msk [vmem:[%s320 + $0x8] sm:$0xf] %vm4350, %v4288
      %4354 = vst.msk [vmem:[%s320 + $0xc] sm:$0xf] %vm4350, %v4289
      %4355 = vst.msk [vmem:[%s320 + $0x10] sm:$0xf] %vm4350, %v4290
      %4356 = vst.msk [vmem:[%s320 + $0x14] sm:$0xf] %vm4350, %v4291
      %4357 = vst.msk [vmem:[%s320 + $0x18] sm:$0xf] %vm4350, %v4292
      %4358 = vst.msk [vmem:[%s320 + $0x1c] sm:$0xf] %vm4350, %v4293
      %4359 = vst.msk [vmem:[%s320 + $0x20] sm:$0xf] %vm4350, %v4294
      %4360 = vst.msk [vmem:[%s320 + $0x24] sm:$0xf] %vm4350, %v4295
      %4361 = vst.msk [vmem:[%s320 + $0x28] sm:$0xf] %vm4350, %v4296
      %4362 = vst.msk [vmem:[%s320 + $0x2c] sm:$0xf] %vm4350, %v4297
      %4363 = vst.msk [vmem:[%s320 + $0x30] sm:$0xf] %vm4350, %v4298
      %4364 = vst.msk [vmem:[%s320 + $0x34] sm:$0xf] %vm4350, %v4299
      %4365 = vst.msk [vmem:[%s320 + $0x38] sm:$0xf] %vm4350, %v4300
      %4366 = vst.msk [vmem:[%s320 + $0x3c] sm:$0xf] %vm4350, %v4301
      %4367 = vst.msk [vmem:[%s320 + $0x40] sm:$0xf] %vm4350, %v4302
      %4368 = vst.msk [vmem:[%s320 + $0x44] sm:$0xf] %vm4350, %v4303
      %4369 = vst.msk [vmem:[%s320 + $0x48] sm:$0xf] %vm4350, %v4304
      %4370 = vst.msk [vmem:[%s320 + $0x4c] sm:$0xf] %vm4350, %v4305
      %4371 = vst.msk [vmem:[%s320 + $0x50] sm:$0xf] %vm4350, %v4306
      %4372 = vst.msk [vmem:[%s320 + $0x54] sm:$0xf] %vm4350, %v4307
      %4373 = vst.msk [vmem:[%s320 + $0x58] sm:$0xf] %vm4350, %v4308
      %4374 = vst.msk [vmem:[%s320 + $0x5c] sm:$0xf] %vm4350, %v4309
      %4375 = vst.msk [vmem:[%s320 + $0x60] sm:$0xf] %vm4350, %v4310
      %4376 = vst.msk [vmem:[%s320 + $0x64] sm:$0xf] %vm4350, %v4311
      %4377 = vst.msk [vmem:[%s320 + $0x68] sm:$0xf] %vm4350, %v4312
      %4378 = vst.msk [vmem:[%s320 + $0x6c] sm:$0xf] %vm4350, %v4313
      %4379 = vst.msk [vmem:[%s320 + $0x70] sm:$0xf] %vm4350, %v4314
      %4380 = vst.msk [vmem:[%s320 + $0x74] sm:$0xf] %vm4350, %v4315
      %4381 = vst.msk [vmem:[%s320 + $0x78] sm:$0xf] %vm4350, %v4316
      %4382 = vst.msk [vmem:[%s320 + $0x7c] sm:$0xf] %vm4350, %v4317
      %v4383 = vsel %vm327, %v4190, 0.0
      %v4384 = vsel %vm327, %v4191, 0.0
      %v4385 = vadd.f32 %v4383, %v4384
      %v4386 = vsel %vm327, %v4192, 0.0
      %v4387 = vadd.f32 %v4385, %v4386
      %v4388 = vsel %vm327, %v4193, 0.0
      %v4389 = vadd.f32 %v4387, %v4388
      %v4390 = vsel %vm327, %v4194, 0.0
      %v4391 = vadd.f32 %v4389, %v4390
      %v4392 = vsel %vm327, %v4195, 0.0
      %v4393 = vadd.f32 %v4391, %v4392
      %v4394 = vsel %vm327, %v4196, 0.0
      %v4395 = vadd.f32 %v4393, %v4394
      %v4396 = vsel %vm327, %v4197, 0.0
      %v4397 = vadd.f32 %v4395, %v4396
      %v4398 = vsel %vm327, %v4198, 0.0
      %v4399 = vadd.f32 %v4397, %v4398
      %v4400 = vsel %vm327, %v4199, 0.0
      %v4401 = vadd.f32 %v4399, %v4400
      %v4402 = vsel %vm327, %v4200, 0.0
      %v4403 = vadd.f32 %v4401, %v4402
      %v4404 = vsel %vm327, %v4201, 0.0
      %v4405 = vadd.f32 %v4403, %v4404
      %v4406 = vsel %vm327, %v4202, 0.0
      %v4407 = vadd.f32 %v4405, %v4406
      %v4408 = vsel %vm327, %v4203, 0.0
      %v4409 = vadd.f32 %v4407, %v4408
      %v4410 = vsel %vm327, %v4204, 0.0
      %v4411 = vadd.f32 %v4409, %v4410
      %v4412 = vsel %vm327, %v4205, 0.0
      %v4413 = vadd.f32 %v4411, %v4412
      %v4414 = vsel %vm327, %v4206, 0.0
      %v4415 = vadd.f32 %v4413, %v4414
      %v4416 = vsel %vm327, %v4207, 0.0
      %v4417 = vadd.f32 %v4415, %v4416
      %v4418 = vsel %vm327, %v4208, 0.0
      %v4419 = vadd.f32 %v4417, %v4418
      %v4420 = vsel %vm327, %v4209, 0.0
      %v4421 = vadd.f32 %v4419, %v4420
      %v4422 = vsel %vm327, %v4210, 0.0
      %v4423 = vadd.f32 %v4421, %v4422
      %v4424 = vsel %vm327, %v4211, 0.0
      %v4425 = vadd.f32 %v4423, %v4424
      %v4426 = vsel %vm327, %v4212, 0.0
      %v4427 = vadd.f32 %v4425, %v4426
      %v4428 = vsel %vm327, %v4213, 0.0
      %v4429 = vadd.f32 %v4427, %v4428
      %v4430 = vsel %vm327, %v4214, 0.0
      %v4431 = vadd.f32 %v4429, %v4430
      %v4432 = vsel %vm327, %v4215, 0.0
      %v4433 = vadd.f32 %v4431, %v4432
      %v4434 = vsel %vm327, %v4216, 0.0
      %v4435 = vadd.f32 %v4433, %v4434
      %v4436 = vsel %vm327, %v4217, 0.0
      %v4437 = vadd.f32 %v4435, %v4436
      %v4438 = vsel %vm327, %v4218, 0.0
      %v4439 = vadd.f32 %v4437, %v4438
      %v4440 = vsel %vm327, %v4219, 0.0
      %v4441 = vadd.f32 %v4439, %v4440
      %v4442 = vsel %vm327, %v4220, 0.0
      %v4443 = vadd.f32 %v4441, %v4442
      %v4444 = vsel %vm327, %v4221, 0.0
      %v4445 = vadd.f32 %v4443, %v4444
      %v4446 = vrot.slane %v4445, 4
      %v4447 = vadd.f32 %v4445, %v4446
      %v4448 = vrot.slane %v4447, 2
      %v4449 = vadd.f32 %v4447, %v4448
      %v4450 = vrot.slane %v4449, 1
      %v4451 = vadd.f32 %v4449, %v4450
      %v4452 = vrcp.pop 256.0
      %v4453 = vmul.f32 %v4451, %v4452
      %vm4454 = vcmask 253952
      %4455 = vst.msk [vmem:[%s326] sm:$0x1] %vm4454, %v4453
      %p4456 = scmp.lt.s32.totalorder %s21, 1
      %s4457 = scalar_select %p4456, %s21, 1
      %p4458 = scmp.lt.s32.totalorder %s22, 0
      %s4459 = scalar_select %p4458, %s22, 0
      %s4460 = smul.addr %s4457, 32
      %s4461 = sadd.s32 %s4459, %s4460
      %s4462 = smul.addr %s4461, 4
      %s4463 = scalar_lea.vmem %s4, %s4462
      %p4464 = scmp.lt.s32.totalorder %s21, 1
      %s4465 = scalar_select %p4464, %s21, 1
      %p4466 = scmp.lt.s32.totalorder %s22, 0
      %s4467 = scalar_select %p4466, %s22, 0
      %s4468 = sadd.s32 %s4467, %s4465
      %s4469 = scalar_lea.vmem %s5, %s4468
      // Predicated region
      $region37: #{focalnet_block_fwd.5} parent=35 // pred_check
        %p4470 = pneg %p155
      $region38: #{focalnet_block_fwd.5} parent=35 // pred_check_branch
        %4472 = sbr.rel (%p4470) target = $region40
      $region39: #{focalnet_block_fwd.5} parent=35 // pred_region
        _
      $region40: #{focalnet_block_fwd.5} parent=35 // pred_fallthru
        _
      // Predicated region
      $region41: #{focalnet_block_fwd.5} parent=35 // pred_check
        %p4473 = pneg %p183
      $region42: #{focalnet_block_fwd.5} parent=35 // pred_check_branch
        %4475 = sbr.rel (%p4473) target = $region44
      $region43: #{focalnet_block_fwd.5} parent=35 // pred_region
        _
      $region44: #{focalnet_block_fwd.5} parent=35 // pred_fallthru
        _
    $region36: #{focalnet_block_fwd.5} parent=5 // pred_fallthru
      _
    %p4476 = scmp.le.s32.totalorder 2, %s12
    // Predicated region
    $region45: #{focalnet_block_fwd.5} parent=5 // pred_check
      %p4477 = pneg %p4476
    $region46: #{focalnet_block_fwd.5} parent=5 // pred_check_branch
      %4479 = sbr.rel (%p4477) target = $region48
    $region47: #{focalnet_block_fwd.5} parent=5 // pred_region
      %s4480 = ssub.s32 %s12, 2
      // Predicated region
      $region49: #{focalnet_block_fwd.5} parent=47 // pred_check
        %p4481 = pneg %p161
      $region50: #{focalnet_block_fwd.5} parent=47 // pred_check_branch
        %4483 = sbr.rel (%p4481) target = $region52
      $region51: #{focalnet_block_fwd.5} parent=47 // pred_region
        %p4484 = scmp.lt.s32.totalorder %s23, 1
        %s4485 = scalar_select %p4484, %s23, 1
        %p4486 = scmp.lt.s32.totalorder %s24, 0
        %s4487 = scalar_select %p4486, %s24, 0
        %s4488 = smul.addr %s4485, 32
        %s4489 = sadd.s32 %s4487, %s4488
        %s4490 = smul.addr %s4489, 4
        %s4491 = scalar_lea.vmem %s4, %s4490
      $region52: #{focalnet_block_fwd.5} parent=47 // pred_fallthru
        _
      // Predicated region
      $region53: #{focalnet_block_fwd.5} parent=47 // pred_check
        %p4492 = pneg %p189
      $region54: #{focalnet_block_fwd.5} parent=47 // pred_check_branch
        %4494 = sbr.rel (%p4492) target = $region56
      $region55: #{focalnet_block_fwd.5} parent=47 // pred_region
        %p4495 = scmp.lt.s32.totalorder %s23, 1
        %s4496 = scalar_select %p4495, %s23, 1
        %p4497 = scmp.lt.s32.totalorder %s24, 0
        %s4498 = scalar_select %p4497, %s24, 0
        %s4499 = sadd.s32 %s4498, %s4496
        %s4500 = scalar_lea.vmem %s5, %s4499
      $region56: #{focalnet_block_fwd.5} parent=47 // pred_fallthru
        _
    $region48: #{focalnet_block_fwd.5} parent=5 // pred_fallthru
      _
  $region6: #{focalnet_block_fwd.5} parent=0 // loop_footer
    %s16 = sadd.s32 1, %s12
  $region7: #{focalnet_block_fwd.5} parent=0 // loop_footer_branch
    %11 = sbr.rel target = $region3
  $region8: #{focalnet_block_fwd.5} parent=0 // loop_exit
    _

</llo_original>
